<compile_context>
chip_gen: v7x
topology: tpu7x:2x2x1
jax: 0.10.0
libtpu: 0.0.40
codegen_flags: <defaults>
</compile_context>

<pallas_src>
import jax
import jax.numpy as jnp
from jax.experimental import pallas as pl
from jax.experimental.pallas import tpu as pltpu


# ----------------------------------------------------------------------------
# Pallas kernel: one output row-band of a 'same' conv.
# Input ref:  (TH+KH-1, W+KW-1, Cin)  bf16   (pre-padded band incl. halo)
# Weight ref: (KH*KW*Cin, Cout)       bf16   (im2col matrix, stays resident)
# Bias ref:   (1, Cout)               f32
# Output ref: (TH*W, Cout)            f32    (fused bias + optional ReLU)
# ----------------------------------------------------------------------------
def _make_conv_band_kernel(TH, W, Cin, Cout, KH, KW, relu_out):
    def kernel(x_ref, w_ref, b_ref, o_ref):
        xb = x_ref[...]                                    # (TH+KH-1, W+KW-1, Cin)
        # im2col: concat shifted windows along channels, ordering (kh, kw, ci)
        # to match w_hwio.reshape(KH*KW*Cin, Cout).
        rows = []
        for kh in range(KH):
            cols = [xb[kh:kh + TH, kw:kw + W, :] for kw in range(KW)]
            rows.append(cols[0] if KW == 1 else jnp.concatenate(cols, axis=-1))
        slab = rows[0] if KH == 1 else jnp.concatenate(rows, axis=-1)
        patches = slab.reshape(TH * W, KH * KW * Cin)      # collapse leading dims
        acc = jnp.dot(patches, w_ref[...],                 # single MXU dot
                      preferred_element_type=jnp.float32)
        acc = acc + b_ref[...]                             # f32 bias
        if relu_out:
            acc = jnp.maximum(acc, 0.0)                    # fused producer ReLU
        o_ref[...] = acc.astype(o_ref.dtype)
    return kernel


def _conv2d_same_banded(x_nhwc, w_hwio, b, *, relu_out, band_rows=8,
                        out_dtype=jnp.float32):
    """'same'-padded stride-1 conv, gridded over (batch, output row bands)."""
    N, H, W, Cin = x_nhwc.shape
    KH, KW, _, Cout = w_hwio.shape
    TH = band_rows if (H % band_rows == 0) else H
    nb = H // TH
    BH, WP = TH + KH - 1, W + KW - 1
    K = KH * KW * Cin

    ph, pw = KH // 2, KW // 2
    x_bf = x_nhwc.astype(jnp.bfloat16)                      # bf16 MXU inputs
    xp = jnp.pad(x_bf, ((0, 0), (ph, KH - 1 - ph), (pw, KW - 1 - pw), (0, 0)))
    # Host-side halo duplication -> non-overlapping blocks, plain BlockSpec
    # pipelining, only a band (not the whole frame) resident in VMEM.
    x_bands = jnp.stack([xp[:, i * TH:i * TH + BH] for i in range(nb)], axis=1)

    w_mat = w_hwio.reshape(K, Cout).astype(jnp.bfloat16)
    b_row = b.reshape(1, Cout).astype(jnp.float32)

    kernel = _make_conv_band_kernel(TH, W, Cin, Cout, KH, KW, relu_out)
    out = pl.pallas_call(
        kernel,
        out_shape=jax.ShapeDtypeStruct((N, H * W, Cout), out_dtype),
        grid=(N, nb),
        in_specs=[
            pl.BlockSpec((None, None, BH, WP, Cin),
                         lambda n, i: (n, i, 0, 0, 0)),
            pl.BlockSpec((K, Cout), lambda n, i: (0, 0)),
            pl.BlockSpec((1, Cout), lambda n, i: (0, 0)),
        ],
        out_specs=pl.BlockSpec((None, TH * W, Cout), lambda n, i: (n, i, 0)),
        compiler_params=pltpu.CompilerParams(
            dimension_semantics=("parallel", "parallel")),
    )(x_bands, w_mat, b_row)
    return out.reshape(N, H, W, Cout)


# ----------------------------------------------------------------------------
# ConvTranspose2d(k=9, stride=2, padding=4, output_padding=1) via sub-pixel /
# phase decomposition: one 5x5 'same' conv with 4 phase output channels,
# followed by depth-to-space in the wrapper (no dilated buffer, ~4x fewer taps).
# ----------------------------------------------------------------------------
def _deconv_phase_weights(w_iohw):
    """(Cin, 1, 9, 9) PyTorch transposed-conv weight -> (5, 5, Cin, 4) HWIO
    stride-1 conv weight whose output channels are the phases ph = 2*py + px."""
    Cin, Cout, KH, KW = w_iohw.shape
    assert Cout == 1 and KH == 9 and KW == 9
    # Conv-equivalent kernel: spatial flip + IOHW -> HWIO.
    w_conv = jnp.transpose(w_iohw[:, :, ::-1, ::-1], (2, 3, 0, 1))  # (9,9,Cin,1)

    # Row taps: phase 0 uses taps 0,2,4,6,8; phase 1 uses 1,3,5,7 (left-pad 0).
    r_even = w_conv[0::2]                                            # (5,9,Cin,1)
    r_odd = jnp.pad(w_conv[1::2], ((1, 0), (0, 0), (0, 0), (0, 0)))  # (5,9,Cin,1)
    phases = []
    for wr in (r_even, r_odd):                                       # py = 0, 1
        c_even = wr[:, 0::2]                                         # (5,5,Cin,1)
        c_odd = jnp.pad(wr[:, 1::2], ((0, 0), (1, 0), (0, 0), (0, 0)))
        phases.extend([c_even, c_odd])                               # px = 0, 1
    return jnp.concatenate(phases, axis=-1)                          # (5,5,Cin,4)


def conv_transpose2d_x2(x_nhwc, w_iohw, b, *, band_rows=8):
    N, H, W, _ = x_nhwc.shape
    w_phase = _deconv_phase_weights(w_iohw)                # (5,5,Cin,4)
    b_phase = jnp.broadcast_to(b, (4,))
    p = _conv2d_same_banded(x_nhwc, w_phase, b_phase, relu_out=False,
                            band_rows=band_rows, out_dtype=jnp.float32)
    # depth-to-space: (N,H,W,4) -> (N,2H,2W,1), channel ph = 2*py + px
    p = p.reshape(N, H, W, 2, 2)
    p = jnp.transpose(p, (0, 1, 3, 2, 4)).reshape(N, 2 * H, 2 * W, 1)
    return p


# ----------------------------------------------------------------------------
# Parameter construction (deterministic, synthetic). No static config in the
# params pytree (fixes the jit ConcretizationTypeError).
# ----------------------------------------------------------------------------
def init_params(key, feature_channels=56, shrinking_channels=12,
                mapping_depth=1,
                kernels=((5, 5), (5, 5), (3, 3), (1, 1), (9, 9))):
    if len(kernels) != 2 + mapping_depth + 2:
        raise ValueError("Not Enough Kernels")
    fc, sc = feature_channels, shrinking_channels

    def conv_w(k, shape):
        fan_in = shape[0] * shape[1] * shape[2]
        return 0.1 * jax.random.normal(k, shape, jnp.float32) / jnp.sqrt(fan_in)

    keys = jax.random.split(key, 4 + mapping_depth)
    params = {
        "fe_w": conv_w(keys[0], (*kernels[0], 1, fc)),
        "fe_b": 0.01 * jnp.ones((fc,), jnp.float32),
        "sh_w": conv_w(keys[1], (*kernels[1], fc, sc)),
        "sh_b": 0.01 * jnp.ones((sc,), jnp.float32),
        "map": [],
        "ex_w": conv_w(keys[2], (*kernels[3], sc, fc)),   # kernels[3], as in module
        "ex_b": 0.01 * jnp.ones((fc,), jnp.float32),
        # PyTorch ConvTranspose2d weight layout (Cin, Cout, KH, KW)
        "dc_w": 0.1 * jax.random.normal(keys[3], (fc, 1, *kernels[4]),
                                        jnp.float32) / jnp.sqrt(fc * 81.0),
        "dc_b": jnp.zeros((1,), jnp.float32),
    }
    map_kernels = kernels[2:-2]
    for i in range(mapping_depth):
        params["map"].append((
            conv_w(keys[4 + i], (*map_kernels[i], sc, sc)),
            0.01 * jnp.ones((sc,), jnp.float32),
        ))
    return params


# ----------------------------------------------------------------------------
# Forward pass (matches ShrinkNet.forward). ReLU is fused into the PRODUCING
# layer's store, which is identical to applying self.activation to each
# layer's output before the next layer consumes it.
# ----------------------------------------------------------------------------
def shrinknet_forward(x_nchw, params, *, band_rows=8):
    x = jnp.transpose(x_nchw, (0, 2, 3, 1))  # NCHW -> NHWC
    out = _conv2d_same_banded(x, params["fe_w"], params["fe_b"],
                              relu_out=True, band_rows=band_rows)
    out = _conv2d_same_banded(out, params["sh_w"], params["sh_b"],
                              relu_out=True, band_rows=band_rows)
    for mw, mb in params["map"]:
        out = _conv2d_same_banded(out, mw, mb,
                                  relu_out=True, band_rows=band_rows)
    out = _conv2d_same_banded(out, params["ex_w"], params["ex_b"],
                              relu_out=True, band_rows=band_rows)
    out = conv_transpose2d_x2(out, params["dc_w"], params["dc_b"],
                              band_rows=band_rows)          # no ReLU after
    return jnp.transpose(out, (0, 3, 1, 2))  # NHWC -> NCHW


if __name__ == "__main__":
    key = jax.random.PRNGKey(0)
    kx, kp = jax.random.split(key)
    # Input: batch=2, channels=1 (self.channels), spatial 16x16 (NCHW)
    x = jax.random.normal(kx, (2, 1, 16, 16), jnp.float32)
    params = init_params(kp)

    y = jax.jit(shrinknet_forward)(x, params)
    jax.block_until_ready(y)

    assert y.shape == (2, 1, 32, 32), y.shape       # 2x spatial upscale
    assert y.dtype == jnp.float32
    assert bool(jnp.all(jnp.isfinite(y)))
    print("KERNEL_OK")
</pallas_src>

<mosaic_0001>
module attributes {stable_mosaic.version = 11 : i64} {
  func.func @kernel(%arg0: i32, %arg1: i32, %arg2: memref<1x1x12x20x1xbf16, #tpu.memory_space<vmem>>, %arg3: memref<25x56xbf16, #tpu.memory_space<vmem>>, %arg4: memref<1x56xf32, #tpu.memory_space<vmem>>, %arg5: memref<1x128x56xf32, #tpu.memory_space<vmem>>) attributes {dimension_semantics = [#tpu.dimension_semantics<parallel>, #tpu.dimension_semantics<parallel>], iteration_bounds = array<i64: 2, 2>, scalar_prefetch = 0 : i64, scratch_operands = 0 : i64, tpu.core_type = #tpu.core_type<tc>, window_params = [{transform_indices = @transform_0, window_bounds = array<i64: 1, 1, 12, 20, 1>}, {pipeline_mode = #tpu.pipeline_mode<synchronous>, transform_indices = @transform_1, window_bounds = array<i64: 25, 56>}, {pipeline_mode = #tpu.pipeline_mode<synchronous>, transform_indices = @transform_2, window_bounds = array<i64: 1, 56>}, {transform_indices = @transform_3, window_bounds = array<i64: 1, 128, 56>}]} {
    %c0 = arith.constant 0 : index
    %c0_0 = arith.constant 0 : index
    %c0_1 = arith.constant 0 : index
    %c0_2 = arith.constant 0 : index
    %c0_3 = arith.constant 0 : index
    %0 = vector.load %arg2[%c0, %c0_0, %c0_1, %c0_2, %c0_3] : memref<1x1x12x20x1xbf16, #tpu.memory_space<vmem>>, vector<1x1x12x20x1xbf16>
    %1 = vector.shape_cast %0 : vector<1x1x12x20x1xbf16> to vector<12x20x1xbf16>
    %2 = vector.extract_strided_slice %1 {offsets = [0, 0, 0], sizes = [8, 16, 1], strides = [1, 1, 1]} : vector<12x20x1xbf16> to vector<8x16x1xbf16>
    %3 = vector.extract_strided_slice %1 {offsets = [0, 1, 0], sizes = [8, 16, 1], strides = [1, 1, 1]} : vector<12x20x1xbf16> to vector<8x16x1xbf16>
    %4 = vector.extract_strided_slice %1 {offsets = [0, 2, 0], sizes = [8, 16, 1], strides = [1, 1, 1]} : vector<12x20x1xbf16> to vector<8x16x1xbf16>
    %5 = vector.extract_strided_slice %1 {offsets = [0, 3, 0], sizes = [8, 16, 1], strides = [1, 1, 1]} : vector<12x20x1xbf16> to vector<8x16x1xbf16>
    %6 = vector.extract_strided_slice %1 {offsets = [0, 4, 0], sizes = [8, 16, 1], strides = [1, 1, 1]} : vector<12x20x1xbf16> to vector<8x16x1xbf16>
    %7 = tpu.concatenate %2, %3, %4, %5, %6 in 2 : vector<8x16x1xbf16>, vector<8x16x1xbf16>, vector<8x16x1xbf16>, vector<8x16x1xbf16>, vector<8x16x1xbf16> -> vector<8x16x5xbf16>
    %8 = vector.extract_strided_slice %1 {offsets = [1, 0, 0], sizes = [8, 16, 1], strides = [1, 1, 1]} : vector<12x20x1xbf16> to vector<8x16x1xbf16>
    %9 = vector.extract_strided_slice %1 {offsets = [1, 1, 0], sizes = [8, 16, 1], strides = [1, 1, 1]} : vector<12x20x1xbf16> to vector<8x16x1xbf16>
    %10 = vector.extract_strided_slice %1 {offsets = [1, 2, 0], sizes = [8, 16, 1], strides = [1, 1, 1]} : vector<12x20x1xbf16> to vector<8x16x1xbf16>
    %11 = vector.extract_strided_slice %1 {offsets = [1, 3, 0], sizes = [8, 16, 1], strides = [1, 1, 1]} : vector<12x20x1xbf16> to vector<8x16x1xbf16>
    %12 = vector.extract_strided_slice %1 {offsets = [1, 4, 0], sizes = [8, 16, 1], strides = [1, 1, 1]} : vector<12x20x1xbf16> to vector<8x16x1xbf16>
    %13 = tpu.concatenate %8, %9, %10, %11, %12 in 2 : vector<8x16x1xbf16>, vector<8x16x1xbf16>, vector<8x16x1xbf16>, vector<8x16x1xbf16>, vector<8x16x1xbf16> -> vector<8x16x5xbf16>
    %14 = vector.extract_strided_slice %1 {offsets = [2, 0, 0], sizes = [8, 16, 1], strides = [1, 1, 1]} : vector<12x20x1xbf16> to vector<8x16x1xbf16>
    %15 = vector.extract_strided_slice %1 {offsets = [2, 1, 0], sizes = [8, 16, 1], strides = [1, 1, 1]} : vector<12x20x1xbf16> to vector<8x16x1xbf16>
    %16 = vector.extract_strided_slice %1 {offsets = [2, 2, 0], sizes = [8, 16, 1], strides = [1, 1, 1]} : vector<12x20x1xbf16> to vector<8x16x1xbf16>
    %17 = vector.extract_strided_slice %1 {offsets = [2, 3, 0], sizes = [8, 16, 1], strides = [1, 1, 1]} : vector<12x20x1xbf16> to vector<8x16x1xbf16>
    %18 = vector.extract_strided_slice %1 {offsets = [2, 4, 0], sizes = [8, 16, 1], strides = [1, 1, 1]} : vector<12x20x1xbf16> to vector<8x16x1xbf16>
    %19 = tpu.concatenate %14, %15, %16, %17, %18 in 2 : vector<8x16x1xbf16>, vector<8x16x1xbf16>, vector<8x16x1xbf16>, vector<8x16x1xbf16>, vector<8x16x1xbf16> -> vector<8x16x5xbf16>
    %20 = vector.extract_strided_slice %1 {offsets = [3, 0, 0], sizes = [8, 16, 1], strides = [1, 1, 1]} : vector<12x20x1xbf16> to vector<8x16x1xbf16>
    %21 = vector.extract_strided_slice %1 {offsets = [3, 1, 0], sizes = [8, 16, 1], strides = [1, 1, 1]} : vector<12x20x1xbf16> to vector<8x16x1xbf16>
    %22 = vector.extract_strided_slice %1 {offsets = [3, 2, 0], sizes = [8, 16, 1], strides = [1, 1, 1]} : vector<12x20x1xbf16> to vector<8x16x1xbf16>
    %23 = vector.extract_strided_slice %1 {offsets = [3, 3, 0], sizes = [8, 16, 1], strides = [1, 1, 1]} : vector<12x20x1xbf16> to vector<8x16x1xbf16>
    %24 = vector.extract_strided_slice %1 {offsets = [3, 4, 0], sizes = [8, 16, 1], strides = [1, 1, 1]} : vector<12x20x1xbf16> to vector<8x16x1xbf16>
    %25 = tpu.concatenate %20, %21, %22, %23, %24 in 2 : vector<8x16x1xbf16>, vector<8x16x1xbf16>, vector<8x16x1xbf16>, vector<8x16x1xbf16>, vector<8x16x1xbf16> -> vector<8x16x5xbf16>
    %26 = vector.extract_strided_slice %1 {offsets = [4, 0, 0], sizes = [8, 16, 1], strides = [1, 1, 1]} : vector<12x20x1xbf16> to vector<8x16x1xbf16>
    %27 = vector.extract_strided_slice %1 {offsets = [4, 1, 0], sizes = [8, 16, 1], strides = [1, 1, 1]} : vector<12x20x1xbf16> to vector<8x16x1xbf16>
    %28 = vector.extract_strided_slice %1 {offsets = [4, 2, 0], sizes = [8, 16, 1], strides = [1, 1, 1]} : vector<12x20x1xbf16> to vector<8x16x1xbf16>
    %29 = vector.extract_strided_slice %1 {offsets = [4, 3, 0], sizes = [8, 16, 1], strides = [1, 1, 1]} : vector<12x20x1xbf16> to vector<8x16x1xbf16>
    %30 = vector.extract_strided_slice %1 {offsets = [4, 4, 0], sizes = [8, 16, 1], strides = [1, 1, 1]} : vector<12x20x1xbf16> to vector<8x16x1xbf16>
    %31 = tpu.concatenate %26, %27, %28, %29, %30 in 2 : vector<8x16x1xbf16>, vector<8x16x1xbf16>, vector<8x16x1xbf16>, vector<8x16x1xbf16>, vector<8x16x1xbf16> -> vector<8x16x5xbf16>
    %32 = tpu.concatenate %7, %13, %19, %25, %31 in 2 : vector<8x16x5xbf16>, vector<8x16x5xbf16>, vector<8x16x5xbf16>, vector<8x16x5xbf16>, vector<8x16x5xbf16> -> vector<8x16x25xbf16>
    %33 = vector.shape_cast %32 : vector<8x16x25xbf16> to vector<128x25xbf16>
    %c0_4 = arith.constant 0 : index
    %c0_5 = arith.constant 0 : index
    %34 = vector.load %arg3[%c0_4, %c0_5] : memref<25x56xbf16, #tpu.memory_space<vmem>>, vector<25x56xbf16>
    %cst = arith.constant dense<0.000000e+00> : vector<128x56xf32>
    %35 = tpu.matmul %33, %34, %cst {dimension_numbers = #tpu.dot_dimension_numbers<[1], [0], [0], [1], [0, 0, 1, 1], [], []>} : vector<128x25xbf16>, vector<25x56xbf16>, vector<128x56xf32> -> vector<128x56xf32>
    %c0_6 = arith.constant 0 : index
    %c0_7 = arith.constant 0 : index
    %36 = vector.load %arg4[%c0_6, %c0_7] : memref<1x56xf32, #tpu.memory_space<vmem>>, vector<1x56xf32>
    %37 = vector.broadcast %36 : vector<1x56xf32> to vector<128x56xf32>
    %38 = arith.addf %35, %37 : vector<128x56xf32>
    %cst_8 = arith.constant 0.000000e+00 : f32
    %39 = vector.broadcast %cst_8 : f32 to vector<128x56xf32>
    %40 = arith.maximumf %38, %39 : vector<128x56xf32>
    %c0_9 = arith.constant 0 : index
    %c0_10 = arith.constant 0 : index
    %c0_11 = arith.constant 0 : index
    %41 = vector.load %arg5[%c0_9, %c0_10, %c0_11] : memref<1x128x56xf32, #tpu.memory_space<vmem>>, vector<1x128x56xf32>
    %42 = vector.shape_cast %41 : vector<1x128x56xf32> to vector<128x56xf32>
    %43 = vector.shape_cast %40 : vector<128x56xf32> to vector<1x128x56xf32>
    tpu.vector_store %arg5[%c0_9, %c0_10, %c0_11], %43 {strides = array<i32>} : memref<1x128x56xf32, #tpu.memory_space<vmem>>, vector<1x128x56xf32>,
    return
  }
  func.func @transform_0(%arg0: i32, %arg1: i32) -> (i32, i32, i32, i32, i32) {
    %c0_i32 = arith.constant 0 : i32
    %c0_i32_0 = arith.constant 0 : i32
    %c0_i32_1 = arith.constant 0 : i32
    %c0_i32_2 = arith.constant 0 : i32
    return %arg0, %arg1, %c0_i32, %c0_i32_0, %c0_i32_1 : i32, i32, i32, i32, i32
  }
  func.func @transform_1(%arg0: i32, %arg1: i32) -> (i32, i32) {
    %c0_i32 = arith.constant 0 : i32
    %c0_i32_0 = arith.constant 0 : i32
    %c0_i32_1 = arith.constant 0 : i32
    return %c0_i32, %c0_i32_0 : i32, i32
  }
  func.func @transform_2(%arg0: i32, %arg1: i32) -> (i32, i32) {
    %c0_i32 = arith.constant 0 : i32
    %c0_i32_0 = arith.constant 0 : i32
    %c0_i32_1 = arith.constant 0 : i32
    return %c0_i32, %c0_i32_0 : i32, i32
  }
  func.func @transform_3(%arg0: i32, %arg1: i32) -> (i32, i32, i32) {
    %c0_i32 = arith.constant 0 : i32
    %c0_i32_0 = arith.constant 0 : i32
    return %arg0, %arg1, %c0_i32 : i32, i32, i32
  }
}

module attributes {stable_mosaic.version = 11 : i64} {
  func.func @kernel(%arg0: i32, %arg1: i32, %arg2: memref<1x1x12x20x56xbf16, #tpu.memory_space<vmem>>, %arg3: memref<1400x12xbf16, #tpu.memory_space<vmem>>, %arg4: memref<1x12xf32, #tpu.memory_space<vmem>>, %arg5: memref<1x128x12xf32, #tpu.memory_space<vmem>>) attributes {dimension_semantics = [#tpu.dimension_semantics<parallel>, #tpu.dimension_semantics<parallel>], iteration_bounds = array<i64: 2, 2>, scalar_prefetch = 0 : i64, scratch_operands = 0 : i64, tpu.core_type = #tpu.core_type<tc>, window_params = [{transform_indices = @transform_0, window_bounds = array<i64: 1, 1, 12, 20, 56>}, {pipeline_mode = #tpu.pipeline_mode<synchronous>, transform_indices = @transform_1, window_bounds = array<i64: 1400, 12>}, {pipeline_mode = #tpu.pipeline_mode<synchronous>, transform_indices = @transform_2, window_bounds = array<i64: 1, 12>}, {transform_indices = @transform_3, window_bounds = array<i64: 1, 128, 12>}]} {
    %c0 = arith.constant 0 : index
    %c0_0 = arith.constant 0 : index
    %c0_1 = arith.constant 0 : index
    %c0_2 = arith.constant 0 : index
    %c0_3 = arith.constant 0 : index
    %0 = vector.load %arg2[%c0, %c0_0, %c0_1, %c0_2, %c0_3] : memref<1x1x12x20x56xbf16, #tpu.memory_space<vmem>>, vector<1x1x12x20x56xbf16>
    %1 = vector.shape_cast %0 : vector<1x1x12x20x56xbf16> to vector<12x20x56xbf16>
    %2 = vector.extract_strided_slice %1 {offsets = [0, 0, 0], sizes = [8, 16, 56], strides = [1, 1, 1]} : vector<12x20x56xbf16> to vector<8x16x56xbf16>
    %3 = vector.extract_strided_slice %1 {offsets = [0, 1, 0], sizes = [8, 16, 56], strides = [1, 1, 1]} : vector<12x20x56xbf16> to vector<8x16x56xbf16>
    %4 = vector.extract_strided_slice %1 {offsets = [0, 2, 0], sizes = [8, 16, 56], strides = [1, 1, 1]} : vector<12x20x56xbf16> to vector<8x16x56xbf16>
    %5 = vector.extract_strided_slice %1 {offsets = [0, 3, 0], sizes = [8, 16, 56], strides = [1, 1, 1]} : vector<12x20x56xbf16> to vector<8x16x56xbf16>
    %6 = vector.extract_strided_slice %1 {offsets = [0, 4, 0], sizes = [8, 16, 56], strides = [1, 1, 1]} : vector<12x20x56xbf16> to vector<8x16x56xbf16>
    %7 = tpu.concatenate %2, %3, %4, %5, %6 in 2 : vector<8x16x56xbf16>, vector<8x16x56xbf16>, vector<8x16x56xbf16>, vector<8x16x56xbf16>, vector<8x16x56xbf16> -> vector<8x16x280xbf16>
    %8 = vector.extract_strided_slice %1 {offsets = [1, 0, 0], sizes = [8, 16, 56], strides = [1, 1, 1]} : vector<12x20x56xbf16> to vector<8x16x56xbf16>
    %9 = vector.extract_strided_slice %1 {offsets = [1, 1, 0], sizes = [8, 16, 56], strides = [1, 1, 1]} : vector<12x20x56xbf16> to vector<8x16x56xbf16>
    %10 = vector.extract_strided_slice %1 {offsets = [1, 2, 0], sizes = [8, 16, 56], strides = [1, 1, 1]} : vector<12x20x56xbf16> to vector<8x16x56xbf16>
    %11 = vector.extract_strided_slice %1 {offsets = [1, 3, 0], sizes = [8, 16, 56], strides = [1, 1, 1]} : vector<12x20x56xbf16> to vector<8x16x56xbf16>
    %12 = vector.extract_strided_slice %1 {offsets = [1, 4, 0], sizes = [8, 16, 56], strides = [1, 1, 1]} : vector<12x20x56xbf16> to vector<8x16x56xbf16>
    %13 = tpu.concatenate %8, %9, %10, %11, %12 in 2 : vector<8x16x56xbf16>, vector<8x16x56xbf16>, vector<8x16x56xbf16>, vector<8x16x56xbf16>, vector<8x16x56xbf16> -> vector<8x16x280xbf16>
    %14 = vector.extract_strided_slice %1 {offsets = [2, 0, 0], sizes = [8, 16, 56], strides = [1, 1, 1]} : vector<12x20x56xbf16> to vector<8x16x56xbf16>
    %15 = vector.extract_strided_slice %1 {offsets = [2, 1, 0], sizes = [8, 16, 56], strides = [1, 1, 1]} : vector<12x20x56xbf16> to vector<8x16x56xbf16>
    %16 = vector.extract_strided_slice %1 {offsets = [2, 2, 0], sizes = [8, 16, 56], strides = [1, 1, 1]} : vector<12x20x56xbf16> to vector<8x16x56xbf16>
    %17 = vector.extract_strided_slice %1 {offsets = [2, 3, 0], sizes = [8, 16, 56], strides = [1, 1, 1]} : vector<12x20x56xbf16> to vector<8x16x56xbf16>
    %18 = vector.extract_strided_slice %1 {offsets = [2, 4, 0], sizes = [8, 16, 56], strides = [1, 1, 1]} : vector<12x20x56xbf16> to vector<8x16x56xbf16>
    %19 = tpu.concatenate %14, %15, %16, %17, %18 in 2 : vector<8x16x56xbf16>, vector<8x16x56xbf16>, vector<8x16x56xbf16>, vector<8x16x56xbf16>, vector<8x16x56xbf16> -> vector<8x16x280xbf16>
    %20 = vector.extract_strided_slice %1 {offsets = [3, 0, 0], sizes = [8, 16, 56], strides = [1, 1, 1]} : vector<12x20x56xbf16> to vector<8x16x56xbf16>
    %21 = vector.extract_strided_slice %1 {offsets = [3, 1, 0], sizes = [8, 16, 56], strides = [1, 1, 1]} : vector<12x20x56xbf16> to vector<8x16x56xbf16>
    %22 = vector.extract_strided_slice %1 {offsets = [3, 2, 0], sizes = [8, 16, 56], strides = [1, 1, 1]} : vector<12x20x56xbf16> to vector<8x16x56xbf16>
    %23 = vector.extract_strided_slice %1 {offsets = [3, 3, 0], sizes = [8, 16, 56], strides = [1, 1, 1]} : vector<12x20x56xbf16> to vector<8x16x56xbf16>
    %24 = vector.extract_strided_slice %1 {offsets = [3, 4, 0], sizes = [8, 16, 56], strides = [1, 1, 1]} : vector<12x20x56xbf16> to vector<8x16x56xbf16>
    %25 = tpu.concatenate %20, %21, %22, %23, %24 in 2 : vector<8x16x56xbf16>, vector<8x16x56xbf16>, vector<8x16x56xbf16>, vector<8x16x56xbf16>, vector<8x16x56xbf16> -> vector<8x16x280xbf16>
    %26 = vector.extract_strided_slice %1 {offsets = [4, 0, 0], sizes = [8, 16, 56], strides = [1, 1, 1]} : vector<12x20x56xbf16> to vector<8x16x56xbf16>
    %27 = vector.extract_strided_slice %1 {offsets = [4, 1, 0], sizes = [8, 16, 56], strides = [1, 1, 1]} : vector<12x20x56xbf16> to vector<8x16x56xbf16>
    %28 = vector.extract_strided_slice %1 {offsets = [4, 2, 0], sizes = [8, 16, 56], strides = [1, 1, 1]} : vector<12x20x56xbf16> to vector<8x16x56xbf16>
    %29 = vector.extract_strided_slice %1 {offsets = [4, 3, 0], sizes = [8, 16, 56], strides = [1, 1, 1]} : vector<12x20x56xbf16> to vector<8x16x56xbf16>
    %30 = vector.extract_strided_slice %1 {offsets = [4, 4, 0], sizes = [8, 16, 56], strides = [1, 1, 1]} : vector<12x20x56xbf16> to vector<8x16x56xbf16>
    %31 = tpu.concatenate %26, %27, %28, %29, %30 in 2 : vector<8x16x56xbf16>, vector<8x16x56xbf16>, vector<8x16x56xbf16>, vector<8x16x56xbf16>, vector<8x16x56xbf16> -> vector<8x16x280xbf16>
    %32 = tpu.concatenate %7, %13, %19, %25, %31 in 2 : vector<8x16x280xbf16>, vector<8x16x280xbf16>, vector<8x16x280xbf16>, vector<8x16x280xbf16>, vector<8x16x280xbf16> -> vector<8x16x1400xbf16>
    %33 = vector.shape_cast %32 : vector<8x16x1400xbf16> to vector<128x1400xbf16>
    %c0_4 = arith.constant 0 : index
    %c0_5 = arith.constant 0 : index
    %34 = vector.load %arg3[%c0_4, %c0_5] : memref<1400x12xbf16, #tpu.memory_space<vmem>>, vector<1400x12xbf16>
    %cst = arith.constant dense<0.000000e+00> : vector<128x12xf32>
    %35 = tpu.matmul %33, %34, %cst {dimension_numbers = #tpu.dot_dimension_numbers<[1], [0], [0], [1], [0, 0, 1, 1], [], []>} : vector<128x1400xbf16>, vector<1400x12xbf16>, vector<128x12xf32> -> vector<128x12xf32>
    %c0_6 = arith.constant 0 : index
    %c0_7 = arith.constant 0 : index
    %36 = vector.load %arg4[%c0_6, %c0_7] : memref<1x12xf32, #tpu.memory_space<vmem>>, vector<1x12xf32>
    %37 = vector.broadcast %36 : vector<1x12xf32> to vector<128x12xf32>
    %38 = arith.addf %35, %37 : vector<128x12xf32>
    %cst_8 = arith.constant 0.000000e+00 : f32
    %39 = vector.broadcast %cst_8 : f32 to vector<128x12xf32>
    %40 = arith.maximumf %38, %39 : vector<128x12xf32>
    %c0_9 = arith.constant 0 : index
    %c0_10 = arith.constant 0 : index
    %c0_11 = arith.constant 0 : index
    %41 = vector.load %arg5[%c0_9, %c0_10, %c0_11] : memref<1x128x12xf32, #tpu.memory_space<vmem>>, vector<1x128x12xf32>
    %42 = vector.shape_cast %41 : vector<1x128x12xf32> to vector<128x12xf32>
    %43 = vector.shape_cast %40 : vector<128x12xf32> to vector<1x128x12xf32>
    tpu.vector_store %arg5[%c0_9, %c0_10, %c0_11], %43 {strides = array<i32>} : memref<1x128x12xf32, #tpu.memory_space<vmem>>, vector<1x128x12xf32>,
    return
  }
  func.func @transform_0(%arg0: i32, %arg1: i32) -> (i32, i32, i32, i32, i32) {
    %c0_i32 = arith.constant 0 : i32
    %c0_i32_0 = arith.constant 0 : i32
    %c0_i32_1 = arith.constant 0 : i32
    %c0_i32_2 = arith.constant 0 : i32
    return %arg0, %arg1, %c0_i32, %c0_i32_0, %c0_i32_1 : i32, i32, i32, i32, i32
  }
  func.func @transform_1(%arg0: i32, %arg1: i32) -> (i32, i32) {
    %c0_i32 = arith.constant 0 : i32
    %c0_i32_0 = arith.constant 0 : i32
    %c0_i32_1 = arith.constant 0 : i32
    return %c0_i32, %c0_i32_0 : i32, i32
  }
  func.func @transform_2(%arg0: i32, %arg1: i32) -> (i32, i32) {
    %c0_i32 = arith.constant 0 : i32
    %c0_i32_0 = arith.constant 0 : i32
    %c0_i32_1 = arith.constant 0 : i32
    return %c0_i32, %c0_i32_0 : i32, i32
  }
  func.func @transform_3(%arg0: i32, %arg1: i32) -> (i32, i32, i32) {
    %c0_i32 = arith.constant 0 : i32
    %c0_i32_0 = arith.constant 0 : i32
    return %arg0, %arg1, %c0_i32 : i32, i32, i32
  }
}

module attributes {stable_mosaic.version = 11 : i64} {
  func.func @kernel(%arg0: i32, %arg1: i32, %arg2: memref<1x1x10x18x12xbf16, #tpu.memory_space<vmem>>, %arg3: memref<108x12xbf16, #tpu.memory_space<vmem>>, %arg4: memref<1x12xf32, #tpu.memory_space<vmem>>, %arg5: memref<1x128x12xf32, #tpu.memory_space<vmem>>) attributes {dimension_semantics = [#tpu.dimension_semantics<parallel>, #tpu.dimension_semantics<parallel>], iteration_bounds = array<i64: 2, 2>, scalar_prefetch = 0 : i64, scratch_operands = 0 : i64, tpu.core_type = #tpu.core_type<tc>, window_params = [{transform_indices = @transform_0, window_bounds = array<i64: 1, 1, 10, 18, 12>}, {pipeline_mode = #tpu.pipeline_mode<synchronous>, transform_indices = @transform_1, window_bounds = array<i64: 108, 12>}, {pipeline_mode = #tpu.pipeline_mode<synchronous>, transform_indices = @transform_2, window_bounds = array<i64: 1, 12>}, {transform_indices = @transform_3, window_bounds = array<i64: 1, 128, 12>}]} {
    %c0 = arith.constant 0 : index
    %c0_0 = arith.constant 0 : index
    %c0_1 = arith.constant 0 : index
    %c0_2 = arith.constant 0 : index
    %c0_3 = arith.constant 0 : index
    %0 = vector.load %arg2[%c0, %c0_0, %c0_1, %c0_2, %c0_3] : memref<1x1x10x18x12xbf16, #tpu.memory_space<vmem>>, vector<1x1x10x18x12xbf16>
    %1 = vector.shape_cast %0 : vector<1x1x10x18x12xbf16> to vector<10x18x12xbf16>
    %2 = vector.extract_strided_slice %1 {offsets = [0, 0, 0], sizes = [8, 16, 12], strides = [1, 1, 1]} : vector<10x18x12xbf16> to vector<8x16x12xbf16>
    %3 = vector.extract_strided_slice %1 {offsets = [0, 1, 0], sizes = [8, 16, 12], strides = [1, 1, 1]} : vector<10x18x12xbf16> to vector<8x16x12xbf16>
    %4 = vector.extract_strided_slice %1 {offsets = [0, 2, 0], sizes = [8, 16, 12], strides = [1, 1, 1]} : vector<10x18x12xbf16> to vector<8x16x12xbf16>
    %5 = tpu.concatenate %2, %3, %4 in 2 : vector<8x16x12xbf16>, vector<8x16x12xbf16>, vector<8x16x12xbf16> -> vector<8x16x36xbf16>
    %6 = vector.extract_strided_slice %1 {offsets = [1, 0, 0], sizes = [8, 16, 12], strides = [1, 1, 1]} : vector<10x18x12xbf16> to vector<8x16x12xbf16>
    %7 = vector.extract_strided_slice %1 {offsets = [1, 1, 0], sizes = [8, 16, 12], strides = [1, 1, 1]} : vector<10x18x12xbf16> to vector<8x16x12xbf16>
    %8 = vector.extract_strided_slice %1 {offsets = [1, 2, 0], sizes = [8, 16, 12], strides = [1, 1, 1]} : vector<10x18x12xbf16> to vector<8x16x12xbf16>
    %9 = tpu.concatenate %6, %7, %8 in 2 : vector<8x16x12xbf16>, vector<8x16x12xbf16>, vector<8x16x12xbf16> -> vector<8x16x36xbf16>
    %10 = vector.extract_strided_slice %1 {offsets = [2, 0, 0], sizes = [8, 16, 12], strides = [1, 1, 1]} : vector<10x18x12xbf16> to vector<8x16x12xbf16>
    %11 = vector.extract_strided_slice %1 {offsets = [2, 1, 0], sizes = [8, 16, 12], strides = [1, 1, 1]} : vector<10x18x12xbf16> to vector<8x16x12xbf16>
    %12 = vector.extract_strided_slice %1 {offsets = [2, 2, 0], sizes = [8, 16, 12], strides = [1, 1, 1]} : vector<10x18x12xbf16> to vector<8x16x12xbf16>
    %13 = tpu.concatenate %10, %11, %12 in 2 : vector<8x16x12xbf16>, vector<8x16x12xbf16>, vector<8x16x12xbf16> -> vector<8x16x36xbf16>
    %14 = tpu.concatenate %5, %9, %13 in 2 : vector<8x16x36xbf16>, vector<8x16x36xbf16>, vector<8x16x36xbf16> -> vector<8x16x108xbf16>
    %15 = vector.shape_cast %14 : vector<8x16x108xbf16> to vector<128x108xbf16>
    %c0_4 = arith.constant 0 : index
    %c0_5 = arith.constant 0 : index
    %16 = vector.load %arg3[%c0_4, %c0_5] : memref<108x12xbf16, #tpu.memory_space<vmem>>, vector<108x12xbf16>
    %cst = arith.constant dense<0.000000e+00> : vector<128x12xf32>
    %17 = tpu.matmul %15, %16, %cst {dimension_numbers = #tpu.dot_dimension_numbers<[1], [0], [0], [1], [0, 0, 1, 1], [], []>} : vector<128x108xbf16>, vector<108x12xbf16>, vector<128x12xf32> -> vector<128x12xf32>
    %c0_6 = arith.constant 0 : index
    %c0_7 = arith.constant 0 : index
    %18 = vector.load %arg4[%c0_6, %c0_7] : memref<1x12xf32, #tpu.memory_space<vmem>>, vector<1x12xf32>
    %19 = vector.broadcast %18 : vector<1x12xf32> to vector<128x12xf32>
    %20 = arith.addf %17, %19 : vector<128x12xf32>
    %cst_8 = arith.constant 0.000000e+00 : f32
    %21 = vector.broadcast %cst_8 : f32 to vector<128x12xf32>
    %22 = arith.maximumf %20, %21 : vector<128x12xf32>
    %c0_9 = arith.constant 0 : index
    %c0_10 = arith.constant 0 : index
    %c0_11 = arith.constant 0 : index
    %23 = vector.load %arg5[%c0_9, %c0_10, %c0_11] : memref<1x128x12xf32, #tpu.memory_space<vmem>>, vector<1x128x12xf32>
    %24 = vector.shape_cast %23 : vector<1x128x12xf32> to vector<128x12xf32>
    %25 = vector.shape_cast %22 : vector<128x12xf32> to vector<1x128x12xf32>
    tpu.vector_store %arg5[%c0_9, %c0_10, %c0_11], %25 {strides = array<i32>} : memref<1x128x12xf32, #tpu.memory_space<vmem>>, vector<1x128x12xf32>,
    return
  }
  func.func @transform_0(%arg0: i32, %arg1: i32) -> (i32, i32, i32, i32, i32) {
    %c0_i32 = arith.constant 0 : i32
    %c0_i32_0 = arith.constant 0 : i32
    %c0_i32_1 = arith.constant 0 : i32
    %c0_i32_2 = arith.constant 0 : i32
    return %arg0, %arg1, %c0_i32, %c0_i32_0, %c0_i32_1 : i32, i32, i32, i32, i32
  }
  func.func @transform_1(%arg0: i32, %arg1: i32) -> (i32, i32) {
    %c0_i32 = arith.constant 0 : i32
    %c0_i32_0 = arith.constant 0 : i32
    %c0_i32_1 = arith.constant 0 : i32
    return %c0_i32, %c0_i32_0 : i32, i32
  }
  func.func @transform_2(%arg0: i32, %arg1: i32) -> (i32, i32) {
    %c0_i32 = arith.constant 0 : i32
    %c0_i32_0 = arith.constant 0 : i32
    %c0_i32_1 = arith.constant 0 : i32
    return %c0_i32, %c0_i32_0 : i32, i32
  }
  func.func @transform_3(%arg0: i32, %arg1: i32) -> (i32, i32, i32) {
    %c0_i32 = arith.constant 0 : i32
    %c0_i32_0 = arith.constant 0 : i32
    return %arg0, %arg1, %c0_i32 : i32, i32, i32
  }
}

module attributes {stable_mosaic.version = 11 : i64} {
  func.func @kernel(%arg0: i32, %arg1: i32, %arg2: memref<1x1x8x16x12xbf16, #tpu.memory_space<vmem>>, %arg3: memref<12x56xbf16, #tpu.memory_space<vmem>>, %arg4: memref<1x56xf32, #tpu.memory_space<vmem>>, %arg5: memref<1x128x56xf32, #tpu.memory_space<vmem>>) attributes {dimension_semantics = [#tpu.dimension_semantics<parallel>, #tpu.dimension_semantics<parallel>], iteration_bounds = array<i64: 2, 2>, scalar_prefetch = 0 : i64, scratch_operands = 0 : i64, tpu.core_type = #tpu.core_type<tc>, window_params = [{transform_indices = @transform_0, window_bounds = array<i64: 1, 1, 8, 16, 12>}, {pipeline_mode = #tpu.pipeline_mode<synchronous>, transform_indices = @transform_1, window_bounds = array<i64: 12, 56>}, {pipeline_mode = #tpu.pipeline_mode<synchronous>, transform_indices = @transform_2, window_bounds = array<i64: 1, 56>}, {transform_indices = @transform_3, window_bounds = array<i64: 1, 128, 56>}]} {
    %c0 = arith.constant 0 : index
    %c0_0 = arith.constant 0 : index
    %c0_1 = arith.constant 0 : index
    %c0_2 = arith.constant 0 : index
    %c0_3 = arith.constant 0 : index
    %0 = vector.load %arg2[%c0, %c0_0, %c0_1, %c0_2, %c0_3] : memref<1x1x8x16x12xbf16, #tpu.memory_space<vmem>>, vector<1x1x8x16x12xbf16>
    %1 = vector.shape_cast %0 : vector<1x1x8x16x12xbf16> to vector<8x16x12xbf16>
    %2 = vector.shape_cast %1 : vector<8x16x12xbf16> to vector<128x12xbf16>
    %c0_4 = arith.constant 0 : index
    %c0_5 = arith.constant 0 : index
    %3 = vector.load %arg3[%c0_4, %c0_5] : memref<12x56xbf16, #tpu.memory_space<vmem>>, vector<12x56xbf16>
    %cst = arith.constant dense<0.000000e+00> : vector<128x56xf32>
    %4 = tpu.matmul %2, %3, %cst {dimension_numbers = #tpu.dot_dimension_numbers<[1], [0], [0], [1], [0, 0, 1, 1], [], []>} : vector<128x12xbf16>, vector<12x56xbf16>, vector<128x56xf32> -> vector<128x56xf32>
    %c0_6 = arith.constant 0 : index
    %c0_7 = arith.constant 0 : index
    %5 = vector.load %arg4[%c0_6, %c0_7] : memref<1x56xf32, #tpu.memory_space<vmem>>, vector<1x56xf32>
    %6 = vector.broadcast %5 : vector<1x56xf32> to vector<128x56xf32>
    %7 = arith.addf %4, %6 : vector<128x56xf32>
    %cst_8 = arith.constant 0.000000e+00 : f32
    %8 = vector.broadcast %cst_8 : f32 to vector<128x56xf32>
    %9 = arith.maximumf %7, %8 : vector<128x56xf32>
    %c0_9 = arith.constant 0 : index
    %c0_10 = arith.constant 0 : index
    %c0_11 = arith.constant 0 : index
    %10 = vector.load %arg5[%c0_9, %c0_10, %c0_11] : memref<1x128x56xf32, #tpu.memory_space<vmem>>, vector<1x128x56xf32>
    %11 = vector.shape_cast %10 : vector<1x128x56xf32> to vector<128x56xf32>
    %12 = vector.shape_cast %9 : vector<128x56xf32> to vector<1x128x56xf32>
    tpu.vector_store %arg5[%c0_9, %c0_10, %c0_11], %12 {strides = array<i32>} : memref<1x128x56xf32, #tpu.memory_space<vmem>>, vector<1x128x56xf32>,
    return
  }
  func.func @transform_0(%arg0: i32, %arg1: i32) -> (i32, i32, i32, i32, i32) {
    %c0_i32 = arith.constant 0 : i32
    %c0_i32_0 = arith.constant 0 : i32
    %c0_i32_1 = arith.constant 0 : i32
    %c0_i32_2 = arith.constant 0 : i32
    return %arg0, %arg1, %c0_i32, %c0_i32_0, %c0_i32_1 : i32, i32, i32, i32, i32
  }
  func.func @transform_1(%arg0: i32, %arg1: i32) -> (i32, i32) {
    %c0_i32 = arith.constant 0 : i32
    %c0_i32_0 = arith.constant 0 : i32
    %c0_i32_1 = arith.constant 0 : i32
    return %c0_i32, %c0_i32_0 : i32, i32
  }
  func.func @transform_2(%arg0: i32, %arg1: i32) -> (i32, i32) {
    %c0_i32 = arith.constant 0 : i32
    %c0_i32_0 = arith.constant 0 : i32
    %c0_i32_1 = arith.constant 0 : i32
    return %c0_i32, %c0_i32_0 : i32, i32
  }
  func.func @transform_3(%arg0: i32, %arg1: i32) -> (i32, i32, i32) {
    %c0_i32 = arith.constant 0 : i32
    %c0_i32_0 = arith.constant 0 : i32
    return %arg0, %arg1, %c0_i32 : i32, i32, i32
  }
}

module attributes {stable_mosaic.version = 11 : i64} {
  func.func @kernel(%arg0: i32, %arg1: i32, %arg2: memref<1x1x12x20x56xbf16, #tpu.memory_space<vmem>>, %arg3: memref<1400x4xbf16, #tpu.memory_space<vmem>>, %arg4: memref<1x4xf32, #tpu.memory_space<vmem>>, %arg5: memref<1x128x4xf32, #tpu.memory_space<vmem>>) attributes {dimension_semantics = [#tpu.dimension_semantics<parallel>, #tpu.dimension_semantics<parallel>], iteration_bounds = array<i64: 2, 2>, scalar_prefetch = 0 : i64, scratch_operands = 0 : i64, tpu.core_type = #tpu.core_type<tc>, window_params = [{transform_indices = @transform_0, window_bounds = array<i64: 1, 1, 12, 20, 56>}, {pipeline_mode = #tpu.pipeline_mode<synchronous>, transform_indices = @transform_1, window_bounds = array<i64: 1400, 4>}, {pipeline_mode = #tpu.pipeline_mode<synchronous>, transform_indices = @transform_2, window_bounds = array<i64: 1, 4>}, {transform_indices = @transform_3, window_bounds = array<i64: 1, 128, 4>}]} {
    %c0 = arith.constant 0 : index
    %c0_0 = arith.constant 0 : index
    %c0_1 = arith.constant 0 : index
    %c0_2 = arith.constant 0 : index
    %c0_3 = arith.constant 0 : index
    %0 = vector.load %arg2[%c0, %c0_0, %c0_1, %c0_2, %c0_3] : memref<1x1x12x20x56xbf16, #tpu.memory_space<vmem>>, vector<1x1x12x20x56xbf16>
    %1 = vector.shape_cast %0 : vector<1x1x12x20x56xbf16> to vector<12x20x56xbf16>
    %2 = vector.extract_strided_slice %1 {offsets = [0, 0, 0], sizes = [8, 16, 56], strides = [1, 1, 1]} : vector<12x20x56xbf16> to vector<8x16x56xbf16>
    %3 = vector.extract_strided_slice %1 {offsets = [0, 1, 0], sizes = [8, 16, 56], strides = [1, 1, 1]} : vector<12x20x56xbf16> to vector<8x16x56xbf16>
    %4 = vector.extract_strided_slice %1 {offsets = [0, 2, 0], sizes = [8, 16, 56], strides = [1, 1, 1]} : vector<12x20x56xbf16> to vector<8x16x56xbf16>
    %5 = vector.extract_strided_slice %1 {offsets = [0, 3, 0], sizes = [8, 16, 56], strides = [1, 1, 1]} : vector<12x20x56xbf16> to vector<8x16x56xbf16>
    %6 = vector.extract_strided_slice %1 {offsets = [0, 4, 0], sizes = [8, 16, 56], strides = [1, 1, 1]} : vector<12x20x56xbf16> to vector<8x16x56xbf16>
    %7 = tpu.concatenate %2, %3, %4, %5, %6 in 2 : vector<8x16x56xbf16>, vector<8x16x56xbf16>, vector<8x16x56xbf16>, vector<8x16x56xbf16>, vector<8x16x56xbf16> -> vector<8x16x280xbf16>
    %8 = vector.extract_strided_slice %1 {offsets = [1, 0, 0], sizes = [8, 16, 56], strides = [1, 1, 1]} : vector<12x20x56xbf16> to vector<8x16x56xbf16>
    %9 = vector.extract_strided_slice %1 {offsets = [1, 1, 0], sizes = [8, 16, 56], strides = [1, 1, 1]} : vector<12x20x56xbf16> to vector<8x16x56xbf16>
    %10 = vector.extract_strided_slice %1 {offsets = [1, 2, 0], sizes = [8, 16, 56], strides = [1, 1, 1]} : vector<12x20x56xbf16> to vector<8x16x56xbf16>
    %11 = vector.extract_strided_slice %1 {offsets = [1, 3, 0], sizes = [8, 16, 56], strides = [1, 1, 1]} : vector<12x20x56xbf16> to vector<8x16x56xbf16>
    %12 = vector.extract_strided_slice %1 {offsets = [1, 4, 0], sizes = [8, 16, 56], strides = [1, 1, 1]} : vector<12x20x56xbf16> to vector<8x16x56xbf16>
    %13 = tpu.concatenate %8, %9, %10, %11, %12 in 2 : vector<8x16x56xbf16>, vector<8x16x56xbf16>, vector<8x16x56xbf16>, vector<8x16x56xbf16>, vector<8x16x56xbf16> -> vector<8x16x280xbf16>
    %14 = vector.extract_strided_slice %1 {offsets = [2, 0, 0], sizes = [8, 16, 56], strides = [1, 1, 1]} : vector<12x20x56xbf16> to vector<8x16x56xbf16>
    %15 = vector.extract_strided_slice %1 {offsets = [2, 1, 0], sizes = [8, 16, 56], strides = [1, 1, 1]} : vector<12x20x56xbf16> to vector<8x16x56xbf16>
    %16 = vector.extract_strided_slice %1 {offsets = [2, 2, 0], sizes = [8, 16, 56], strides = [1, 1, 1]} : vector<12x20x56xbf16> to vector<8x16x56xbf16>
    %17 = vector.extract_strided_slice %1 {offsets = [2, 3, 0], sizes = [8, 16, 56], strides = [1, 1, 1]} : vector<12x20x56xbf16> to vector<8x16x56xbf16>
    %18 = vector.extract_strided_slice %1 {offsets = [2, 4, 0], sizes = [8, 16, 56], strides = [1, 1, 1]} : vector<12x20x56xbf16> to vector<8x16x56xbf16>
    %19 = tpu.concatenate %14, %15, %16, %17, %18 in 2 : vector<8x16x56xbf16>, vector<8x16x56xbf16>, vector<8x16x56xbf16>, vector<8x16x56xbf16>, vector<8x16x56xbf16> -> vector<8x16x280xbf16>
    %20 = vector.extract_strided_slice %1 {offsets = [3, 0, 0], sizes = [8, 16, 56], strides = [1, 1, 1]} : vector<12x20x56xbf16> to vector<8x16x56xbf16>
    %21 = vector.extract_strided_slice %1 {offsets = [3, 1, 0], sizes = [8, 16, 56], strides = [1, 1, 1]} : vector<12x20x56xbf16> to vector<8x16x56xbf16>
    %22 = vector.extract_strided_slice %1 {offsets = [3, 2, 0], sizes = [8, 16, 56], strides = [1, 1, 1]} : vector<12x20x56xbf16> to vector<8x16x56xbf16>
    %23 = vector.extract_strided_slice %1 {offsets = [3, 3, 0], sizes = [8, 16, 56], strides = [1, 1, 1]} : vector<12x20x56xbf16> to vector<8x16x56xbf16>
    %24 = vector.extract_strided_slice %1 {offsets = [3, 4, 0], sizes = [8, 16, 56], strides = [1, 1, 1]} : vector<12x20x56xbf16> to vector<8x16x56xbf16>
    %25 = tpu.concatenate %20, %21, %22, %23, %24 in 2 : vector<8x16x56xbf16>, vector<8x16x56xbf16>, vector<8x16x56xbf16>, vector<8x16x56xbf16>, vector<8x16x56xbf16> -> vector<8x16x280xbf16>
    %26 = vector.extract_strided_slice %1 {offsets = [4, 0, 0], sizes = [8, 16, 56], strides = [1, 1, 1]} : vector<12x20x56xbf16> to vector<8x16x56xbf16>
    %27 = vector.extract_strided_slice %1 {offsets = [4, 1, 0], sizes = [8, 16, 56], strides = [1, 1, 1]} : vector<12x20x56xbf16> to vector<8x16x56xbf16>
    %28 = vector.extract_strided_slice %1 {offsets = [4, 2, 0], sizes = [8, 16, 56], strides = [1, 1, 1]} : vector<12x20x56xbf16> to vector<8x16x56xbf16>
    %29 = vector.extract_strided_slice %1 {offsets = [4, 3, 0], sizes = [8, 16, 56], strides = [1, 1, 1]} : vector<12x20x56xbf16> to vector<8x16x56xbf16>
    %30 = vector.extract_strided_slice %1 {offsets = [4, 4, 0], sizes = [8, 16, 56], strides = [1, 1, 1]} : vector<12x20x56xbf16> to vector<8x16x56xbf16>
    %31 = tpu.concatenate %26, %27, %28, %29, %30 in 2 : vector<8x16x56xbf16>, vector<8x16x56xbf16>, vector<8x16x56xbf16>, vector<8x16x56xbf16>, vector<8x16x56xbf16> -> vector<8x16x280xbf16>
    %32 = tpu.concatenate %7, %13, %19, %25, %31 in 2 : vector<8x16x280xbf16>, vector<8x16x280xbf16>, vector<8x16x280xbf16>, vector<8x16x280xbf16>, vector<8x16x280xbf16> -> vector<8x16x1400xbf16>
    %33 = vector.shape_cast %32 : vector<8x16x1400xbf16> to vector<128x1400xbf16>
    %c0_4 = arith.constant 0 : index
    %c0_5 = arith.constant 0 : index
    %34 = vector.load %arg3[%c0_4, %c0_5] : memref<1400x4xbf16, #tpu.memory_space<vmem>>, vector<1400x4xbf16>
    %cst = arith.constant dense<0.000000e+00> : vector<128x4xf32>
    %35 = tpu.matmul %33, %34, %cst {dimension_numbers = #tpu.dot_dimension_numbers<[1], [0], [0], [1], [0, 0, 1, 1], [], []>} : vector<128x1400xbf16>, vector<1400x4xbf16>, vector<128x4xf32> -> vector<128x4xf32>
    %c0_6 = arith.constant 0 : index
    %c0_7 = arith.constant 0 : index
    %36 = vector.load %arg4[%c0_6, %c0_7] : memref<1x4xf32, #tpu.memory_space<vmem>>, vector<1x4xf32>
    %37 = vector.broadcast %36 : vector<1x4xf32> to vector<128x4xf32>
    %38 = arith.addf %35, %37 : vector<128x4xf32>
    %c0_8 = arith.constant 0 : index
    %c0_9 = arith.constant 0 : index
    %c0_10 = arith.constant 0 : index
    %39 = vector.load %arg5[%c0_8, %c0_9, %c0_10] : memref<1x128x4xf32, #tpu.memory_space<vmem>>, vector<1x128x4xf32>
    %40 = vector.shape_cast %39 : vector<1x128x4xf32> to vector<128x4xf32>
    %41 = vector.shape_cast %38 : vector<128x4xf32> to vector<1x128x4xf32>
    tpu.vector_store %arg5[%c0_8, %c0_9, %c0_10], %41 {strides = array<i32>} : memref<1x128x4xf32, #tpu.memory_space<vmem>>, vector<1x128x4xf32>,
    return
  }
  func.func @transform_0(%arg0: i32, %arg1: i32) -> (i32, i32, i32, i32, i32) {
    %c0_i32 = arith.constant 0 : i32
    %c0_i32_0 = arith.constant 0 : i32
    %c0_i32_1 = arith.constant 0 : i32
    %c0_i32_2 = arith.constant 0 : i32
    return %arg0, %arg1, %c0_i32, %c0_i32_0, %c0_i32_1 : i32, i32, i32, i32, i32
  }
  func.func @transform_1(%arg0: i32, %arg1: i32) -> (i32, i32) {
    %c0_i32 = arith.constant 0 : i32
    %c0_i32_0 = arith.constant 0 : i32
    %c0_i32_1 = arith.constant 0 : i32
    return %c0_i32, %c0_i32_0 : i32, i32
  }
  func.func @transform_2(%arg0: i32, %arg1: i32) -> (i32, i32) {
    %c0_i32 = arith.constant 0 : i32
    %c0_i32_0 = arith.constant 0 : i32
    %c0_i32_1 = arith.constant 0 : i32
    return %c0_i32, %c0_i32_0 : i32, i32
  }
  func.func @transform_3(%arg0: i32, %arg1: i32) -> (i32, i32, i32) {
    %c0_i32 = arith.constant 0 : i32
    %c0_i32_0 = arith.constant 0 : i32
    return %arg0, %arg1, %c0_i32 : i32, i32, i32
  }
}

</mosaic_0001>

<llo_original>
// kernel: shrinknet_forward.5
$region0: #{shrinknet_forward.5}
  #allocation0 [shape = 'u32[]', space=smem, size = 0x4, offset = 0x4, fixed_abs, tag = 'smem constant byte address 0x4 - core index']
  #allocation1 [shape = 'u32[144,128]{1,0:T(1,128)}', space=vmem, size = 0x12000, scoped, tag = 'internal scratch']
  %s0 = inlined_call_operand.vmem [shape: bf16[2,2,12,20,1], index: 0, kind: input, shape index: {}]
  %s1 = inlined_call_operand.vmem [shape: bf16[25,56], index: 1, kind: input, shape index: {}]
  %s2 = inlined_call_operand.vmem [shape: f32[1,56], index: 2, kind: input, shape index: {}]
  %s3 = inlined_call_operand.vmem [shape: f32[2,256,56], index: 3, kind: output, shape index: {}]
  %s4 = sld [smem:[#allocation0]]
  $region45: #{shrinknet_forward.5} parent=0
    _
  %s6 = ssub.s32 1, %s4
  %s7 = scalar_select 0, %s6, %s4
  loop: start=0, step=1, limit=6
  $region2: #{shrinknet_forward.5} parent=0 // loop_pre_header
    _
  $region3: #{shrinknet_forward.5} parent=0 // loop_header
    %s9 = sphi 0, %s13
    %p10 = scmp.ge.s32.totalorder %s9, 6
    %s16 = sphi 0, %s28
    %s17 = sphi 0, %s24
    %s18 = sphi 0, %s16
    %s19 = sphi 0, %s17
    %s20 = sphi 0, %s18
    %s21 = sphi 0, %s19
    %s33 = sphi 0, %s35
    %s36 = sphi 0, %s33
    %s37 = sphi 0, %s36
    %s53 = sphi 0, %s37
    %s57 = sphi 0, %s57
    %s59 = sphi 0, %s57
    %s60 = sphi 0, %s59
    %s74 = sphi 0, %s60
    %s78 = sphi 0, %s78
    %s80 = sphi 0, %s78
    %s81 = sphi 0, %s80
    %s95 = sphi 0, %s81
    %s103 = sphi 0, %s105
    %s106 = sphi 0, %s103
    %s107 = sphi 0, %s106
    %s123 = sphi 0, %s107
  $region4: #{shrinknet_forward.5} parent=0 // loop_header_branch
    %12 = sbr.rel (%p10) target = $region8
  $region5: #{shrinknet_forward.5} parent=0 // loop_body
    %s14 = ssub.s32 %s9, 1
    %s15 = ssub.s32 %s9, 2
    %s22 = sadd.s32 1, %s17
    %p23 = scmp.ge.s32.totalorder %s22, 2
    %s24 = scalar_select %p23, 0, %s22
    %s25 = sadd.s32 1, %s16
    %s26 = scalar_select %p23, %s25, %s16
    %p27 = scmp.ge.s32.totalorder %s26, 2
    %s28 = scalar_select %p27, 0, %s26
    %s29 = ssub.s32 %s16, %s28
    %s30 = ssub.s32 %s17, %s24
    %s31 = sor.u32 %s29, %s30
    %p32 = scmp.eq.s32.totalorder %s31, 0
    %s34 = sadd.s32 %s33, 1
    %s35 = scalar_select %p32, %s33, %s34
    %p38 = pneg %p32
    %p39 = scmp.eq.s32.totalorder %s9, 3
    %p40 = por %p38, %p39
    %p41 = scmp.ne.s32.totalorder %s33, %s36
    %p42 = scmp.eq.s32.totalorder %s9, 0
    %p43 = por %p41, %p42
    %p44 = scmp.ne.s32.totalorder %s33, %s36
    %p45 = scmp.eq.s32.totalorder %s14, 3
    %p46 = por %p44, %p45
    %p47 = scmp.ne.s32.totalorder %s36, %s37
    %p48 = scmp.eq.s32.totalorder %s14, 0
    %p49 = por %p47, %p48
    %p50 = scmp.ne.s32.totalorder %s36, %s37
    %p51 = scmp.eq.s32.totalorder %s15, 3
    %p52 = por %p50, %p51
    %p54 = scmp.ne.s32.totalorder %s37, %s53
    %p55 = scmp.eq.s32.totalorder %s15, 0
    %p56 = por %p54, %p55
    %s58 = sadd.s32 %s57, 1
    %p61 = scmp.eq.s32.totalorder %s9, 3
    %p62 = scmp.ne.s32.totalorder %s57, %s59
    %p63 = scmp.eq.s32.totalorder %s9, 0
    %p64 = por %p62, %p63
    %p65 = scmp.ne.s32.totalorder %s57, %s59
    %p66 = scmp.eq.s32.totalorder %s14, 3
    %p67 = por %p65, %p66
    %p68 = scmp.ne.s32.totalorder %s59, %s60
    %p69 = scmp.eq.s32.totalorder %s14, 0
    %p70 = por %p68, %p69
    %p71 = scmp.ne.s32.totalorder %s59, %s60
    %p72 = scmp.eq.s32.totalorder %s15, 3
    %p73 = por %p71, %p72
    %p75 = scmp.ne.s32.totalorder %s60, %s74
    %p76 = scmp.eq.s32.totalorder %s15, 0
    %p77 = por %p75, %p76
    %s79 = sadd.s32 %s78, 1
    %p82 = scmp.eq.s32.totalorder %s9, 3
    %p83 = scmp.ne.s32.totalorder %s78, %s80
    %p84 = scmp.eq.s32.totalorder %s9, 0
    %p85 = por %p83, %p84
    %p86 = scmp.ne.s32.totalorder %s78, %s80
    %p87 = scmp.eq.s32.totalorder %s14, 3
    %p88 = por %p86, %p87
    %p89 = scmp.ne.s32.totalorder %s80, %s81
    %p90 = scmp.eq.s32.totalorder %s14, 0
    %p91 = por %p89, %p90
    %p92 = scmp.ne.s32.totalorder %s80, %s81
    %p93 = scmp.eq.s32.totalorder %s15, 3
    %p94 = por %p92, %p93
    %p96 = scmp.ne.s32.totalorder %s81, %s95
    %p97 = scmp.eq.s32.totalorder %s15, 0
    %p98 = por %p96, %p97
    %s99 = ssub.s32 %s16, %s28
    %s100 = ssub.s32 %s17, %s24
    %s101 = sor.u32 %s99, %s100
    %p102 = scmp.eq.s32.totalorder %s101, 0
    %s104 = sadd.s32 %s103, 1
    %s105 = scalar_select %p102, %s103, %s104
    %p108 = pneg %p102
    %p109 = scmp.eq.s32.totalorder %s9, 3
    %p110 = por %p108, %p109
    %p111 = scmp.ne.s32.totalorder %s103, %s106
    %p112 = scmp.eq.s32.totalorder %s9, 0
    %p113 = por %p111, %p112
    %p114 = scmp.ne.s32.totalorder %s103, %s106
    %p115 = scmp.eq.s32.totalorder %s14, 3
    %p116 = por %p114, %p115
    %p117 = scmp.ne.s32.totalorder %s106, %s107
    %p118 = scmp.eq.s32.totalorder %s14, 0
    %p119 = por %p117, %p118
    %p120 = scmp.ne.s32.totalorder %s106, %s107
    %p121 = scmp.eq.s32.totalorder %s15, 3
    %p122 = por %p120, %p121
    %p124 = scmp.ne.s32.totalorder %s107, %s123
    %p125 = scmp.eq.s32.totalorder %s15, 0
    %p126 = por %p124, %p125
    %p127 = scmp.le.s32.totalorder 1, %s9
    %p128 = scmp.lt.s32.totalorder %s9, 5
    %p129 = pnand %p127, %p128
    %p130 = pneg %p129
    // Predicated region
    $region9: #{shrinknet_forward.5} parent=5 // pred_check
      _
    $region10: #{shrinknet_forward.5} parent=5 // pred_check_branch
      %132 = sbr.rel (%p129) target = $region12
    $region11: #{shrinknet_forward.5} parent=5 // pred_region
      %s133 = ssub.s32 %s9, 1
      // Predicated region
      $region13: #{shrinknet_forward.5} parent=11 // pred_check
        %p134 = pneg %p70
      $region14: #{shrinknet_forward.5} parent=11 // pred_check_branch
        %136 = sbr.rel (%p134) target = $region16
      $region15: #{shrinknet_forward.5} parent=11 // pred_region
        _
      $region16: #{shrinknet_forward.5} parent=11 // pred_fallthru
        _
      // Predicated region
      $region17: #{shrinknet_forward.5} parent=11 // pred_check
        %p137 = pneg %p91
      $region18: #{shrinknet_forward.5} parent=11 // pred_check_branch
        %139 = sbr.rel (%p137) target = $region20
      $region19: #{shrinknet_forward.5} parent=11 // pred_region
        _
      $region20: #{shrinknet_forward.5} parent=11 // pred_fallthru
        _
    $region12: #{shrinknet_forward.5} parent=5 // pred_fallthru
      _
    %p140 = scmp.lt.s32.totalorder %s9, 4
    // Predicated region
    $region21: #{shrinknet_forward.5} parent=5 // pred_check
      %p141 = pneg %p140
    $region22: #{shrinknet_forward.5} parent=5 // pred_check_branch
      %143 = sbr.rel (%p141) target = $region24
    $region23: #{shrinknet_forward.5} parent=5 // pred_region
      // Predicated region
      $region25: #{shrinknet_forward.5} parent=23 // pred_check
        %p144 = pneg %p43
      $region26: #{shrinknet_forward.5} parent=23 // pred_check_branch
        %146 = sbr.rel (%p144) target = $region28
      $region27: #{shrinknet_forward.5} parent=23 // pred_region
        %p147 = scmp.lt.s32.totalorder %s16, 1
        %s148 = scalar_select %p147, %s16, 1
        %p149 = scmp.lt.s32.totalorder %s17, 1
        %s150 = scalar_select %p149, %s17, 1
        %s151 = smul.addr %s150, 36
        %s152 = smul.addr %s148, 72
        %s153 = sadd.s32 %s151, %s152
        %s154 = smul.addr %s153, 4
        %s155 = scalar_lea.vmem %s0, %s154
      $region28: #{shrinknet_forward.5} parent=23 // pred_fallthru
        _
    $region24: #{shrinknet_forward.5} parent=5 // pred_fallthru
      _
    %p156 = scmp.le.s32.totalorder 1, %s9
    %p157 = scmp.lt.s32.totalorder %s9, 5
    %p158 = pnand %p156, %p157
    %p159 = pneg %p158
    // Predicated region
    $region29: #{shrinknet_forward.5} parent=5 // pred_check
      _
    $region30: #{shrinknet_forward.5} parent=5 // pred_check_branch
      %161 = sbr.rel (%p158) target = $region32
    $region31: #{shrinknet_forward.5} parent=5 // pred_region
      %s162 = ssub.s32 %s9, 1
      %p163 = scmp.lt.s32.totalorder %s18, 1
      %s164 = scalar_select %p163, %s18, 1
      %p165 = scmp.lt.s32.totalorder %s19, 1
      %s166 = scalar_select %p165, %s19, 1
      %s167 = smul.addr %s166, 36
      %s168 = smul.addr %s164, 72
      %s169 = sadd.s32 %s167, %s168
      %s170 = smul.addr %s169, 4
      %s171 = scalar_lea.vmem %s0, %s170
      %p172 = pneg %p49
      %p173 = pneg %p46
      %p174 = pneg %p70
      %p175 = pneg %p67
      %p176 = pneg %p91
      %p177 = pneg %p88
      %p178 = pneg %p119
      %p179 = pneg %p116
      %s180 = smul.u32 16, %s19
      %p181 = scmp.lt.s32.totalorder %s18, 1
      %s182 = scalar_select %p181, %s18, 1
      %p183 = scmp.lt.s32.totalorder %s180, 31
      %s184 = scalar_select %p183, %s180, 31
      %s185 = smul.addr %s182, 32
      %s186 = sadd.s32 %s184, %s185
      %s187 = smul.addr %s186, 8
      %s188 = scalar_lea.vmem %s3, %s187
      %p189 = scmp.lt.s32.totalorder %s18, 1
      %s190 = scalar_select %p189, %s18, 1
      %p191 = scmp.lt.s32.totalorder %s19, 1
      %s192 = scalar_select %p191, %s19, 1
      %s193 = smul.addr %s192, 36
      %s194 = smul.addr %s190, 72
      %s195 = sadd.s32 %s193, %s194
      %s196 = smul.addr %s195, 4
      %s197 = scalar_lea.vmem %s0, %s196
      %s198 = smul.u32 16, %s19
      %p199 = scmp.lt.s32.totalorder %s18, 1
      %s200 = scalar_select %p199, %s18, 1
      %p201 = scmp.lt.s32.totalorder %s198, 31
      %s202 = scalar_select %p201, %s198, 31
      %s203 = smul.addr %s200, 32
      %s204 = sadd.s32 %s202, %s203
      %s205 = smul.addr %s204, 8
      %s206 = scalar_lea.vmem %s3, %s205
      %s207 = smul.u32 16, %s19
      %v209 = vld [vmem:[%s197] sm:$0xf]
      %v210 = vld [vmem:[%s197 + $0x4] sm:$0xf]
      %v211 = vld [vmem:[%s197 + $0x8] sm:$0x3]
      %v212 = vld [vmem:[%s197 + $0xc] sm:$0xf]
      %v213 = vld [vmem:[%s197 + $0x10] sm:$0xf]
      %v214 = vld [vmem:[%s197 + $0x14] sm:$0x3]
      %v215 = vld [vmem:[%s197 + $0x18] sm:$0xf]
      %v216 = vld [vmem:[%s197 + $0x1c] sm:$0xf]
      %v217 = vld [vmem:[%s197 + $0x20] sm:$0x3]
      %v218 = vld [vmem:[%s197 + $0x24] sm:$0xf]
      %v219 = vld [vmem:[%s197 + $0x28] sm:$0xf]
      %v220 = vld [vmem:[%s197 + $0x2c] sm:$0x3]
      %v221 = vld [vmem:[%s197 + $0x30] sm:$0xf]
      %v222 = vld [vmem:[%s197 + $0x34] sm:$0xf]
      %v223 = vld [vmem:[%s197 + $0x38] sm:$0x3]
      %v224 = vld [vmem:[%s197 + $0x3c] sm:$0xf]
      %v225 = vld [vmem:[%s197 + $0x40] sm:$0xf]
      %v226 = vld [vmem:[%s197 + $0x44] sm:$0x3]
      %v227 = vld [vmem:[%s197 + $0x48] sm:$0xf]
      %v228 = vld [vmem:[%s197 + $0x4c] sm:$0xf]
      %v229 = vld [vmem:[%s197 + $0x50] sm:$0x3]
      %v230 = vld [vmem:[%s197 + $0x54] sm:$0xf]
      %v231 = vld [vmem:[%s197 + $0x58] sm:$0xf]
      %v232 = vld [vmem:[%s197 + $0x5c] sm:$0x3]
      %v233 = vld [vmem:[%s197 + $0x60] sm:$0xf]
      %v234 = vld [vmem:[%s197 + $0x64] sm:$0xf]
      %v235 = vld [vmem:[%s197 + $0x68] sm:$0x3]
      %v236 = vld [vmem:[%s197 + $0x6c] sm:$0xf]
      %v237 = vld [vmem:[%s197 + $0x70] sm:$0xf]
      %v238 = vld [vmem:[%s197 + $0x74] sm:$0x3]
      %v239 = vld [vmem:[%s197 + $0x78] sm:$0xf]
      %v240 = vld [vmem:[%s197 + $0x7c] sm:$0xf]
      %v241 = vld [vmem:[%s197 + $0x80] sm:$0x3]
      %v242 = vld [vmem:[%s197 + $0x84] sm:$0xf]
      %v243 = vld [vmem:[%s197 + $0x88] sm:$0xf]
      %v244 = vld [vmem:[%s197 + $0x8c] sm:$0x3]
      %v261 = vunpack.c.l.b16 %v209
      %v262 = vunpack.c.l.b16 %v210
      %v263 = vunpack.c.l.b16 %v212
      %v264 = vunpack.c.l.b16 %v213
      %v265 = vunpack.c.l.b16 %v215
      %v266 = vunpack.c.l.b16 %v216
      %v267 = vunpack.c.l.b16 %v218
      %v268 = vunpack.c.l.b16 %v219
      %v269 = vunpack.c.l.b16 %v221
      %v270 = vunpack.c.l.b16 %v222
      %v271 = vunpack.c.l.b16 %v224
      %v272 = vunpack.c.l.b16 %v225
      %v273 = vunpack.c.l.b16 %v227
      %v274 = vunpack.c.l.b16 %v228
      %v275 = vunpack.c.l.b16 %v230
      %v276 = vunpack.c.l.b16 %v231
      %v277 = vpack.c.b16 %v262, %v261
      %v278 = vpack.c.b16 %v264, %v263
      %v279 = vpack.c.b16 %v266, %v265
      %v280 = vpack.c.b16 %v268, %v267
      %v281 = vpack.c.b16 %v270, %v269
      %v282 = vpack.c.b16 %v272, %v271
      %v283 = vpack.c.b16 %v274, %v273
      %v284 = vpack.c.b16 %v276, %v275
      %v293 = vunpack.c.l.b16 %v211
      %v294 = vunpack.c.l.b16 %v214
      %v295 = vunpack.c.l.b16 %v217
      %v296 = vunpack.c.l.b16 %v220
      %v297 = vunpack.c.l.b16 %v223
      %v298 = vunpack.c.l.b16 %v226
      %v299 = vunpack.c.l.b16 %v229
      %v300 = vunpack.c.l.b16 %v232
      %v301 = vpack.c.b16 %v293, %v293
      %v302 = vpack.c.b16 %v294, %v294
      %v303 = vpack.c.b16 %v295, %v295
      %v304 = vpack.c.b16 %v296, %v296
      %v305 = vpack.c.b16 %v297, %v297
      %v306 = vpack.c.b16 %v298, %v298
      %v307 = vpack.c.b16 %v299, %v299
      %v308 = vpack.c.b16 %v300, %v300
      %vm309 = vsmask.f32 7424
      %v311 = vshrl.u32 %v277, 16
      %v313 = vshll.u32 %v277, 16
      %v315 = vrot.slane %v313, 1
      %v316 = vor.u32 %v311, %v315
      %v318 = vshll.u32 %v301, 16
      %v320 = vrot.slane %v318, 1
      %v321 = vsel %vm309, %v316, %v320
      %v323 = vshrl.u32 %v278, 16
      %v325 = vshll.u32 %v278, 16
      %v327 = vrot.slane %v325, 1
      %v328 = vor.u32 %v323, %v327
      %v330 = vshll.u32 %v302, 16
      %v332 = vrot.slane %v330, 1
      %v333 = vsel %vm309, %v328, %v332
      %v335 = vshrl.u32 %v279, 16
      %v337 = vshll.u32 %v279, 16
      %v339 = vrot.slane %v337, 1
      %v340 = vor.u32 %v335, %v339
      %v342 = vshll.u32 %v303, 16
      %v344 = vrot.slane %v342, 1
      %v345 = vsel %vm309, %v340, %v344
      %v347 = vshrl.u32 %v280, 16
      %v349 = vshll.u32 %v280, 16
      %v351 = vrot.slane %v349, 1
      %v352 = vor.u32 %v347, %v351
      %v354 = vshll.u32 %v304, 16
      %v356 = vrot.slane %v354, 1
      %v357 = vsel %vm309, %v352, %v356
      %v359 = vshrl.u32 %v281, 16
      %v361 = vshll.u32 %v281, 16
      %v363 = vrot.slane %v361, 1
      %v364 = vor.u32 %v359, %v363
      %v366 = vshll.u32 %v305, 16
      %v368 = vrot.slane %v366, 1
      %v369 = vsel %vm309, %v364, %v368
      %v371 = vshrl.u32 %v282, 16
      %v373 = vshll.u32 %v282, 16
      %v375 = vrot.slane %v373, 1
      %v376 = vor.u32 %v371, %v375
      %v378 = vshll.u32 %v306, 16
      %v380 = vrot.slane %v378, 1
      %v381 = vsel %vm309, %v376, %v380
      %v383 = vshrl.u32 %v283, 16
      %v385 = vshll.u32 %v283, 16
      %v387 = vrot.slane %v385, 1
      %v388 = vor.u32 %v383, %v387
      %v390 = vshll.u32 %v307, 16
      %v392 = vrot.slane %v390, 1
      %v393 = vsel %vm309, %v388, %v392
      %v395 = vshrl.u32 %v284, 16
      %v397 = vshll.u32 %v284, 16
      %v399 = vrot.slane %v397, 1
      %v400 = vor.u32 %v395, %v399
      %v402 = vshll.u32 %v308, 16
      %v404 = vrot.slane %v402, 1
      %v405 = vsel %vm309, %v400, %v404
      %406 = vrot.lane.b32.xlu0 %v321, 1
      %v407 = vpop.permute.xlu0 %406
      %408 = vrot.lane.b32.xlu0 %v333, 1
      %v409 = vpop.permute.xlu0 %408
      %410 = vrot.lane.b32.xlu0 %v345, 1
      %v411 = vpop.permute.xlu0 %410
      %412 = vrot.lane.b32.xlu0 %v357, 1
      %v413 = vpop.permute.xlu0 %412
      %414 = vrot.lane.b32.xlu0 %v369, 1
      %v415 = vpop.permute.xlu0 %414
      %416 = vrot.lane.b32.xlu0 %v381, 1
      %v417 = vpop.permute.xlu0 %416
      %418 = vrot.lane.b32.xlu0 %v393, 1
      %v419 = vpop.permute.xlu0 %418
      %420 = vrot.lane.b32.xlu0 %v405, 1
      %v421 = vpop.permute.xlu0 %420
      %vm422 = vcmask 1046528
      %v423 = vrot.slane %v277, 1
      %v424 = vrot.slane %v301, 1
      %v425 = vsel %vm422, %v423, %v424
      %v426 = vrot.slane %v278, 1
      %v427 = vrot.slane %v302, 1
      %v428 = vsel %vm422, %v426, %v427
      %v429 = vrot.slane %v279, 1
      %v430 = vrot.slane %v303, 1
      %v431 = vsel %vm422, %v429, %v430
      %v432 = vrot.slane %v280, 1
      %v433 = vrot.slane %v304, 1
      %v434 = vsel %vm422, %v432, %v433
      %v435 = vrot.slane %v281, 1
      %v436 = vrot.slane %v305, 1
      %v437 = vsel %vm422, %v435, %v436
      %v438 = vrot.slane %v282, 1
      %v439 = vrot.slane %v306, 1
      %v440 = vsel %vm422, %v438, %v439
      %v441 = vrot.slane %v283, 1
      %v442 = vrot.slane %v307, 1
      %v443 = vsel %vm422, %v441, %v442
      %v444 = vrot.slane %v284, 1
      %v445 = vrot.slane %v308, 1
      %v446 = vsel %vm422, %v444, %v445
      %447 = vrot.lane.b32.xlu0 %v425, 2
      %v448 = vpop.permute.xlu0 %447
      %449 = vrot.lane.b32.xlu0 %v428, 2
      %v450 = vpop.permute.xlu0 %449
      %451 = vrot.lane.b32.xlu0 %v431, 2
      %v452 = vpop.permute.xlu0 %451
      %453 = vrot.lane.b32.xlu0 %v434, 2
      %v454 = vpop.permute.xlu0 %453
      %455 = vrot.lane.b32.xlu0 %v437, 2
      %v456 = vpop.permute.xlu0 %455
      %457 = vrot.lane.b32.xlu0 %v440, 2
      %v458 = vpop.permute.xlu0 %457
      %459 = vrot.lane.b32.xlu0 %v443, 2
      %v460 = vpop.permute.xlu0 %459
      %461 = vrot.lane.b32.xlu0 %v446, 2
      %v462 = vpop.permute.xlu0 %461
      %vm463 = vsmask.f32 6400
      %v464 = vrot.slane %v311, 1
      %v465 = vrot.slane %v313, 2
      %v466 = vor.u32 %v464, %v465
      %v467 = vshrl.u32 %v301, 16
      %v469 = vrot.slane %v467, 1
      %v470 = vrot.slane %v318, 2
      %v471 = vor.u32 %v469, %v470
      %v472 = vsel %vm463, %v466, %v471
      %v473 = vrot.slane %v323, 1
      %v474 = vrot.slane %v325, 2
      %v475 = vor.u32 %v473, %v474
      %v476 = vshrl.u32 %v302, 16
      %v478 = vrot.slane %v476, 1
      %v479 = vrot.slane %v330, 2
      %v480 = vor.u32 %v478, %v479
      %v481 = vsel %vm463, %v475, %v480
      %v482 = vrot.slane %v335, 1
      %v483 = vrot.slane %v337, 2
      %v484 = vor.u32 %v482, %v483
      %v485 = vshrl.u32 %v303, 16
      %v487 = vrot.slane %v485, 1
      %v488 = vrot.slane %v342, 2
      %v489 = vor.u32 %v487, %v488
      %v490 = vsel %vm463, %v484, %v489
      %v491 = vrot.slane %v347, 1
      %v492 = vrot.slane %v349, 2
      %v493 = vor.u32 %v491, %v492
      %v494 = vshrl.u32 %v304, 16
      %v496 = vrot.slane %v494, 1
      %v497 = vrot.slane %v354, 2
      %v498 = vor.u32 %v496, %v497
      %v499 = vsel %vm463, %v493, %v498
      %v500 = vrot.slane %v359, 1
      %v501 = vrot.slane %v361, 2
      %v502 = vor.u32 %v500, %v501
      %v503 = vshrl.u32 %v305, 16
      %v505 = vrot.slane %v503, 1
      %v506 = vrot.slane %v366, 2
      %v507 = vor.u32 %v505, %v506
      %v508 = vsel %vm463, %v502, %v507
      %v509 = vrot.slane %v371, 1
      %v510 = vrot.slane %v373, 2
      %v511 = vor.u32 %v509, %v510
      %v512 = vshrl.u32 %v306, 16
      %v514 = vrot.slane %v512, 1
      %v515 = vrot.slane %v378, 2
      %v516 = vor.u32 %v514, %v515
      %v517 = vsel %vm463, %v511, %v516
      %v518 = vrot.slane %v383, 1
      %v519 = vrot.slane %v385, 2
      %v520 = vor.u32 %v518, %v519
      %v521 = vshrl.u32 %v307, 16
      %v523 = vrot.slane %v521, 1
      %v524 = vrot.slane %v390, 2
      %v525 = vor.u32 %v523, %v524
      %v526 = vsel %vm463, %v520, %v525
      %v527 = vrot.slane %v395, 1
      %v528 = vrot.slane %v397, 2
      %v529 = vor.u32 %v527, %v528
      %v530 = vshrl.u32 %v308, 16
      %v532 = vrot.slane %v530, 1
      %v533 = vrot.slane %v402, 2
      %v534 = vor.u32 %v532, %v533
      %v535 = vsel %vm463, %v529, %v534
      %536 = vrot.lane.b32.xlu0 %v472, 3
      %v537 = vpop.permute.xlu0 %536
      %538 = vrot.lane.b32.xlu0 %v481, 3
      %v539 = vpop.permute.xlu0 %538
      %540 = vrot.lane.b32.xlu0 %v490, 3
      %v541 = vpop.permute.xlu0 %540
      %542 = vrot.lane.b32.xlu0 %v499, 3
      %v543 = vpop.permute.xlu0 %542
      %544 = vrot.lane.b32.xlu0 %v508, 3
      %v545 = vpop.permute.xlu0 %544
      %546 = vrot.lane.b32.xlu0 %v517, 3
      %v547 = vpop.permute.xlu0 %546
      %548 = vrot.lane.b32.xlu0 %v526, 3
      %v549 = vpop.permute.xlu0 %548
      %550 = vrot.lane.b32.xlu0 %v535, 3
      %v551 = vpop.permute.xlu0 %550
      %vm552 = vcmask 1045504
      %v553 = vrot.slane %v277, 2
      %v554 = vrot.slane %v301, 2
      %v555 = vsel %vm552, %v553, %v554
      %v556 = vrot.slane %v278, 2
      %v557 = vrot.slane %v302, 2
      %v558 = vsel %vm552, %v556, %v557
      %v559 = vrot.slane %v279, 2
      %v560 = vrot.slane %v303, 2
      %v561 = vsel %vm552, %v559, %v560
      %v562 = vrot.slane %v280, 2
      %v563 = vrot.slane %v304, 2
      %v564 = vsel %vm552, %v562, %v563
      %v565 = vrot.slane %v281, 2
      %v566 = vrot.slane %v305, 2
      %v567 = vsel %vm552, %v565, %v566
      %v568 = vrot.slane %v282, 2
      %v569 = vrot.slane %v306, 2
      %v570 = vsel %vm552, %v568, %v569
      %v571 = vrot.slane %v283, 2
      %v572 = vrot.slane %v307, 2
      %v573 = vsel %vm552, %v571, %v572
      %v574 = vrot.slane %v284, 2
      %v575 = vrot.slane %v308, 2
      %v576 = vsel %vm552, %v574, %v575
      %577 = vrot.lane.b32.xlu0 %v555, 4
      %v578 = vpop.permute.xlu0 %577
      %579 = vrot.lane.b32.xlu0 %v558, 4
      %v580 = vpop.permute.xlu0 %579
      %581 = vrot.lane.b32.xlu0 %v561, 4
      %v582 = vpop.permute.xlu0 %581
      %583 = vrot.lane.b32.xlu0 %v564, 4
      %v584 = vpop.permute.xlu0 %583
      %585 = vrot.lane.b32.xlu0 %v567, 4
      %v586 = vpop.permute.xlu0 %585
      %587 = vrot.lane.b32.xlu0 %v570, 4
      %v588 = vpop.permute.xlu0 %587
      %589 = vrot.lane.b32.xlu0 %v573, 4
      %v590 = vpop.permute.xlu0 %589
      %591 = vrot.lane.b32.xlu0 %v576, 4
      %v592 = vpop.permute.xlu0 %591
      %vm593 = vcmask 7168
      %v595 = vsel %vm593, %v277, %v407
      %v597 = vsel %vm593, %v278, %v409
      %v599 = vsel %vm593, %v279, %v411
      %v601 = vsel %vm593, %v280, %v413
      %v603 = vsel %vm593, %v281, %v415
      %v605 = vsel %vm593, %v282, %v417
      %v607 = vsel %vm593, %v283, %v419
      %v609 = vsel %vm593, %v284, %v421
      %vm610 = vcmask 15360
      %v612 = vsel %vm610, %v595, %v448
      %v614 = vsel %vm610, %v597, %v450
      %v616 = vsel %vm610, %v599, %v452
      %v618 = vsel %vm610, %v601, %v454
      %v620 = vsel %vm610, %v603, %v456
      %v622 = vsel %vm610, %v605, %v458
      %v624 = vsel %vm610, %v607, %v460
      %v626 = vsel %vm610, %v609, %v462
      %vm627 = vcmask 23552
      %v629 = vsel %vm627, %v612, %v537
      %v631 = vsel %vm627, %v614, %v539
      %v633 = vsel %vm627, %v616, %v541
      %v635 = vsel %vm627, %v618, %v543
      %v637 = vsel %vm627, %v620, %v545
      %v639 = vsel %vm627, %v622, %v547
      %v641 = vsel %vm627, %v624, %v549
      %v643 = vsel %vm627, %v626, %v551
      %vm644 = vcmask 31744
      %v646 = vsel %vm644, %v629, %v578
      %v648 = vsel %vm644, %v631, %v580
      %v650 = vsel %vm644, %v633, %v582
      %v652 = vsel %vm644, %v635, %v584
      %v654 = vsel %vm644, %v637, %v586
      %v656 = vsel %vm644, %v639, %v588
      %v658 = vsel %vm644, %v641, %v590
      %v660 = vsel %vm644, %v643, %v592
      %v663 = vunpack.c.l.b16 %v233
      %v664 = vunpack.c.l.b16 %v234
      %v665 = vpack.c.b16 %v664, %v663
      %v667 = vunpack.c.l.b16 %v235
      %v668 = vpack.c.b16 %v667, %v667
      %v670 = vshrl.u32 %v665, 16
      %v672 = vshll.u32 %v665, 16
      %v674 = vrot.slane %v672, 1
      %v675 = vor.u32 %v670, %v674
      %v677 = vshll.u32 %v668, 16
      %v679 = vrot.slane %v677, 1
      %v680 = vsel %vm309, %v675, %v679
      %681 = vrot.lane.b32.xlu0 %v680, 1
      %v682 = vpop.permute.xlu0 %681
      %v683 = vrot.slane %v665, 1
      %v684 = vrot.slane %v668, 1
      %v685 = vsel %vm422, %v683, %v684
      %686 = vrot.lane.b32.xlu0 %v685, 2
      %v687 = vpop.permute.xlu0 %686
      %v688 = vrot.slane %v670, 1
      %v689 = vrot.slane %v672, 2
      %v690 = vor.u32 %v688, %v689
      %v691 = vshrl.u32 %v668, 16
      %v693 = vrot.slane %v691, 1
      %v694 = vrot.slane %v677, 2
      %v695 = vor.u32 %v693, %v694
      %v696 = vsel %vm463, %v690, %v695
      %697 = vrot.lane.b32.xlu0 %v696, 3
      %v698 = vpop.permute.xlu0 %697
      %v699 = vrot.slane %v665, 2
      %v700 = vrot.slane %v668, 2
      %v701 = vsel %vm552, %v699, %v700
      %702 = vrot.lane.b32.xlu0 %v701, 4
      %v703 = vpop.permute.xlu0 %702
      %v705 = vsel %vm593, %v665, %v682
      %v707 = vsel %vm610, %v705, %v687
      %v709 = vsel %vm627, %v707, %v698
      %v711 = vsel %vm644, %v709, %v703
      %v714 = vunpack.c.l.b16 %v236
      %v715 = vunpack.c.l.b16 %v237
      %v716 = vpack.c.b16 %v715, %v714
      %v718 = vunpack.c.l.b16 %v238
      %v719 = vpack.c.b16 %v718, %v718
      %v721 = vshrl.u32 %v716, 16
      %v723 = vshll.u32 %v716, 16
      %v725 = vrot.slane %v723, 1
      %v726 = vor.u32 %v721, %v725
      %v728 = vshll.u32 %v719, 16
      %v730 = vrot.slane %v728, 1
      %v731 = vsel %vm309, %v726, %v730
      %732 = vrot.lane.b32.xlu0 %v731, 1
      %v733 = vpop.permute.xlu0 %732
      %v734 = vrot.slane %v716, 1
      %v735 = vrot.slane %v719, 1
      %v736 = vsel %vm422, %v734, %v735
      %737 = vrot.lane.b32.xlu0 %v736, 2
      %v738 = vpop.permute.xlu0 %737
      %v739 = vrot.slane %v721, 1
      %v740 = vrot.slane %v723, 2
      %v741 = vor.u32 %v739, %v740
      %v742 = vshrl.u32 %v719, 16
      %v744 = vrot.slane %v742, 1
      %v745 = vrot.slane %v728, 2
      %v746 = vor.u32 %v744, %v745
      %v747 = vsel %vm463, %v741, %v746
      %748 = vrot.lane.b32.xlu0 %v747, 3
      %v749 = vpop.permute.xlu0 %748
      %v750 = vrot.slane %v716, 2
      %v751 = vrot.slane %v719, 2
      %v752 = vsel %vm552, %v750, %v751
      %753 = vrot.lane.b32.xlu0 %v752, 4
      %v754 = vpop.permute.xlu0 %753
      %v756 = vsel %vm593, %v716, %v733
      %v758 = vsel %vm610, %v756, %v738
      %v760 = vsel %vm627, %v758, %v749
      %v762 = vsel %vm644, %v760, %v754
      %v765 = vunpack.c.l.b16 %v239
      %v766 = vunpack.c.l.b16 %v240
      %v767 = vpack.c.b16 %v766, %v765
      %v769 = vunpack.c.l.b16 %v241
      %v770 = vpack.c.b16 %v769, %v769
      %v772 = vshrl.u32 %v767, 16
      %v774 = vshll.u32 %v767, 16
      %v776 = vrot.slane %v774, 1
      %v777 = vor.u32 %v772, %v776
      %v779 = vshll.u32 %v770, 16
      %v781 = vrot.slane %v779, 1
      %v782 = vsel %vm309, %v777, %v781
      %783 = vrot.lane.b32.xlu0 %v782, 1
      %v784 = vpop.permute.xlu0 %783
      %v785 = vrot.slane %v767, 1
      %v786 = vrot.slane %v770, 1
      %v787 = vsel %vm422, %v785, %v786
      %788 = vrot.lane.b32.xlu0 %v787, 2
      %v789 = vpop.permute.xlu0 %788
      %v790 = vrot.slane %v772, 1
      %v791 = vrot.slane %v774, 2
      %v792 = vor.u32 %v790, %v791
      %v793 = vshrl.u32 %v770, 16
      %v795 = vrot.slane %v793, 1
      %v796 = vrot.slane %v779, 2
      %v797 = vor.u32 %v795, %v796
      %v798 = vsel %vm463, %v792, %v797
      %799 = vrot.lane.b32.xlu0 %v798, 3
      %v800 = vpop.permute.xlu0 %799
      %v801 = vrot.slane %v767, 2
      %v802 = vrot.slane %v770, 2
      %v803 = vsel %vm552, %v801, %v802
      %804 = vrot.lane.b32.xlu0 %v803, 4
      %v805 = vpop.permute.xlu0 %804
      %v807 = vsel %vm593, %v767, %v784
      %v809 = vsel %vm610, %v807, %v789
      %v811 = vsel %vm627, %v809, %v800
      %v813 = vsel %vm644, %v811, %v805
      %v816 = vunpack.c.l.b16 %v242
      %v817 = vunpack.c.l.b16 %v243
      %v818 = vpack.c.b16 %v817, %v816
      %v820 = vunpack.c.l.b16 %v244
      %v821 = vpack.c.b16 %v820, %v820
      %v823 = vshrl.u32 %v818, 16
      %v825 = vshll.u32 %v818, 16
      %v827 = vrot.slane %v825, 1
      %v828 = vor.u32 %v823, %v827
      %v830 = vshll.u32 %v821, 16
      %v832 = vrot.slane %v830, 1
      %v833 = vsel %vm309, %v828, %v832
      %834 = vrot.lane.b32.xlu0 %v833, 1
      %v835 = vpop.permute.xlu0 %834
      %v836 = vrot.slane %v818, 1
      %v837 = vrot.slane %v821, 1
      %v838 = vsel %vm422, %v836, %v837
      %839 = vrot.lane.b32.xlu0 %v838, 2
      %v840 = vpop.permute.xlu0 %839
      %v841 = vrot.slane %v823, 1
      %v842 = vrot.slane %v825, 2
      %v843 = vor.u32 %v841, %v842
      %v844 = vshrl.u32 %v821, 16
      %v846 = vrot.slane %v844, 1
      %v847 = vrot.slane %v830, 2
      %v848 = vor.u32 %v846, %v847
      %v849 = vsel %vm463, %v843, %v848
      %850 = vrot.lane.b32.xlu0 %v849, 3
      %v851 = vpop.permute.xlu0 %850
      %v852 = vrot.slane %v818, 2
      %v853 = vrot.slane %v821, 2
      %v854 = vsel %vm552, %v852, %v853
      %855 = vrot.lane.b32.xlu0 %v854, 4
      %v856 = vpop.permute.xlu0 %855
      %v858 = vsel %vm593, %v818, %v835
      %v860 = vsel %vm610, %v858, %v840
      %v862 = vsel %vm627, %v860, %v851
      %v864 = vsel %vm644, %v862, %v856
      %873 = vrot.lane.b32.xlu0 %v648, 5
      %v874 = vpop.permute.xlu0 %873
      %875 = vrot.lane.b32.xlu0 %v650, 5
      %v876 = vpop.permute.xlu0 %875
      %877 = vrot.lane.b32.xlu0 %v652, 5
      %v878 = vpop.permute.xlu0 %877
      %879 = vrot.lane.b32.xlu0 %v654, 5
      %v880 = vpop.permute.xlu0 %879
      %881 = vrot.lane.b32.xlu0 %v656, 5
      %v882 = vpop.permute.xlu0 %881
      %883 = vrot.lane.b32.xlu0 %v658, 5
      %v884 = vpop.permute.xlu0 %883
      %885 = vrot.lane.b32.xlu0 %v660, 5
      %v886 = vpop.permute.xlu0 %885
      %887 = vrot.lane.b32.xlu0 %v711, 5
      %v888 = vpop.permute.xlu0 %887
      %890 = vrot.lane.b32.xlu0 %v650, 10
      %v891 = vpop.permute.xlu0 %890
      %892 = vrot.lane.b32.xlu0 %v652, 10
      %v893 = vpop.permute.xlu0 %892
      %894 = vrot.lane.b32.xlu0 %v654, 10
      %v895 = vpop.permute.xlu0 %894
      %896 = vrot.lane.b32.xlu0 %v656, 10
      %v897 = vpop.permute.xlu0 %896
      %898 = vrot.lane.b32.xlu0 %v658, 10
      %v899 = vpop.permute.xlu0 %898
      %900 = vrot.lane.b32.xlu0 %v660, 10
      %v901 = vpop.permute.xlu0 %900
      %902 = vrot.lane.b32.xlu0 %v711, 10
      %v903 = vpop.permute.xlu0 %902
      %904 = vrot.lane.b32.xlu0 %v762, 10
      %v905 = vpop.permute.xlu0 %904
      %907 = vrot.lane.b32.xlu0 %v652, 15
      %v908 = vpop.permute.xlu0 %907
      %909 = vrot.lane.b32.xlu0 %v654, 15
      %v910 = vpop.permute.xlu0 %909
      %911 = vrot.lane.b32.xlu0 %v656, 15
      %v912 = vpop.permute.xlu0 %911
      %913 = vrot.lane.b32.xlu0 %v658, 15
      %v914 = vpop.permute.xlu0 %913
      %915 = vrot.lane.b32.xlu0 %v660, 15
      %v916 = vpop.permute.xlu0 %915
      %917 = vrot.lane.b32.xlu0 %v711, 15
      %v918 = vpop.permute.xlu0 %917
      %919 = vrot.lane.b32.xlu0 %v762, 15
      %v920 = vpop.permute.xlu0 %919
      %921 = vrot.lane.b32.xlu0 %v813, 15
      %v922 = vpop.permute.xlu0 %921
      %924 = vrot.lane.b32.xlu0 %v654, 20
      %v925 = vpop.permute.xlu0 %924
      %926 = vrot.lane.b32.xlu0 %v656, 20
      %v927 = vpop.permute.xlu0 %926
      %928 = vrot.lane.b32.xlu0 %v658, 20
      %v929 = vpop.permute.xlu0 %928
      %930 = vrot.lane.b32.xlu0 %v660, 20
      %v931 = vpop.permute.xlu0 %930
      %932 = vrot.lane.b32.xlu0 %v711, 20
      %v933 = vpop.permute.xlu0 %932
      %934 = vrot.lane.b32.xlu0 %v762, 20
      %v935 = vpop.permute.xlu0 %934
      %936 = vrot.lane.b32.xlu0 %v813, 20
      %v937 = vpop.permute.xlu0 %936
      %938 = vrot.lane.b32.xlu0 %v864, 20
      %v939 = vpop.permute.xlu0 %938
      %vm940 = vcmask 39936
      %v942 = vsel %vm940, %v646, %v874
      %v944 = vsel %vm940, %v648, %v876
      %v946 = vsel %vm940, %v650, %v878
      %v948 = vsel %vm940, %v652, %v880
      %v950 = vsel %vm940, %v654, %v882
      %v952 = vsel %vm940, %v656, %v884
      %v954 = vsel %vm940, %v658, %v886
      %v956 = vsel %vm940, %v660, %v888
      %vm957 = vcmask 80896
      %v959 = vsel %vm957, %v942, %v891
      %v961 = vsel %vm957, %v944, %v893
      %v963 = vsel %vm957, %v946, %v895
      %v965 = vsel %vm957, %v948, %v897
      %v967 = vsel %vm957, %v950, %v899
      %v969 = vsel %vm957, %v952, %v901
      %v971 = vsel %vm957, %v954, %v903
      %v973 = vsel %vm957, %v956, %v905
      %vm974 = vcmask 121856
      %v976 = vsel %vm974, %v959, %v908
      %v978 = vsel %vm974, %v961, %v910
      %v980 = vsel %vm974, %v963, %v912
      %v982 = vsel %vm974, %v965, %v914
      %v984 = vsel %vm974, %v967, %v916
      %v986 = vsel %vm974, %v969, %v918
      %v988 = vsel %vm974, %v971, %v920
      %v990 = vsel %vm974, %v973, %v922
      %vm991 = vcmask 162816
      %v993 = vsel %vm991, %v976, %v925
      %v995 = vsel %vm991, %v978, %v927
      %v997 = vsel %vm991, %v980, %v929
      %v999 = vsel %vm991, %v982, %v931
      %v1001 = vsel %vm991, %v984, %v933
      %v1003 = vsel %vm991, %v986, %v935
      %v1005 = vsel %vm991, %v988, %v937
      %v1007 = vsel %vm991, %v990, %v939
      %v1008 = vld [vmem:[%s1] sm:$0xf]
      %v1009 = vld [vmem:[%s1 + $0x4] sm:$0xf]
      %v1010 = vld [vmem:[%s1 + $0x8] sm:$0xf]
      %v1011 = vld [vmem:[%s1 + $0xc] sm:$0x1]
      %v1012 = vld [vmem:[%s2] sm:$0x1]
      %v1014 = vlaneseq
      %v1015 = vshrl.u32 %v1014, 7
      %v1016 = vsub.s32 0, %v1015
      %v1017 = vrot.slane %v1012, %v1016
      %v1023 = vunpack.c.l.b16 %v1008
      %v1024 = vunpack.c.l.b16 %v1009
      %v1025 = vunpack.c.l.b16 %v1010
      %v1026 = vunpack.c.l.b16 %v1011
      %v1027 = vpack.c.b16 %v1024, %v1023
      %v1028 = vpack.c.b16 %v1026, %v1025
      %vm1030 = vcmask 203776
      %v1031 = vsel %vm1030, %v993, 0
      %v1033 = vsel %vm1030, %v995, 0
      %v1035 = vsel %vm1030, %v997, 0
      %v1037 = vsel %vm1030, %v999, 0
      %v1039 = vsel %vm1030, %v1001, 0
      %v1041 = vsel %vm1030, %v1003, 0
      %v1043 = vsel %vm1030, %v1005, 0
      %v1045 = vsel %vm1030, %v1007, 0
      %vm1047 = vcmask 1043456
      %vm1048 = vcmask 1044480
      %v1049 = vsel %vm1047, 4294967295, 65535
      %v1050 = vsel %vm1048, %v1049, 0
      %v1052 = vand.u32 %v1028, %v1050
      %1054 = vmatprep.subr.bf16.mxu0 0
      %1055 = vmatpush1.bf16.msra.mxu0 %v1027
      %1056 = vmatprep.subr.bf16.mxu0 0
      %1057 = vmatpush1.bf16.msra.mxu0 %v1052
      %1058 = vmatprep.subr.bf16.mxu0 0
      %1059 = vmatpush1.bf16.msra.mxu0 0
      %1060 = vmatprep.subr.bf16.mxu0 0
      %1061 = vmatpush1.bf16.msra.mxu0 0
      %1062 = vmatprep.subr.bf16.mxu0 0
      %1063 = vmatpush1.bf16.msra.mxu0 0
      %1064 = vmatprep.subr.bf16.mxu0 0
      %1065 = vmatpush1.bf16.msra.mxu0 0
      %1066 = vmatprep.subr.bf16.mxu0 0
      %1067 = vmatpush1.bf16.msra.mxu0 0
      %1068 = vmatprep.subr.bf16.mxu0 0
      %1069 = vmatpush1.bf16.msra.mxu0 0
      %1070 = vmatprep.subr.bf16.mxu0 0
      %1071 = vmatpush1.bf16.msra.mxu0 0
      %1072 = vmatprep.subr.bf16.mxu0 0
      %1073 = vmatpush1.bf16.msra.mxu0 0
      %1074 = vmatprep.subr.bf16.mxu0 0
      %1075 = vmatpush1.bf16.msra.mxu0 0
      %1076 = vmatprep.subr.bf16.mxu0 0
      %1077 = vmatpush1.bf16.msra.mxu0 0
      %1078 = vmatprep.subr.bf16.mxu0 0
      %1079 = vmatpush1.bf16.msra.mxu0 0
      %1080 = vmatprep.subr.bf16.mxu0 0
      %1081 = vmatpush1.bf16.msra.mxu0 0
      %1082 = vmatprep.subr.bf16.mxu0 0
      %1083 = vmatpush1.bf16.msra.mxu0 0
      %1084 = vmatprep.subr.bf16.mxu0 0
      %1085 = vmatpush1.bf16.msra.mxu0 0
      %1086 = vmatprep.mubr.bf16.mxu0 0
      %1087 = vmatmul.mubr.bf16.gmra.mrb[0].mxu0 %v1031
      %v1088 = vpop.f32.mrb[0].mxu0
      %v1089 = vadd.f32 %v1017, %v1088
      %v1090 = vpop.f32.mrb[0].mxu0
      %v1091 = vpop.f32.mrb[0].mxu0
      %v1092 = vadd.f32 %v1017, %v1091
      %v1093 = vpop.f32.mrb[0].mxu0
      %1094 = vmatprep.mubr.bf16.mxu0 0
      %1095 = vmatmul.mubr.bf16.gmra.mrb[0].mxu0 %v1033
      %v1096 = vpop.f32.mrb[0].mxu0
      %v1097 = vadd.f32 %v1017, %v1096
      %v1098 = vpop.f32.mrb[0].mxu0
      %v1099 = vpop.f32.mrb[0].mxu0
      %v1100 = vadd.f32 %v1017, %v1099
      %v1101 = vpop.f32.mrb[0].mxu0
      %1102 = vmatprep.mubr.bf16.mxu0 0
      %1103 = vmatmul.mubr.bf16.gmra.mrb[0].mxu0 %v1035
      %v1104 = vpop.f32.mrb[0].mxu0
      %v1105 = vadd.f32 %v1017, %v1104
      %v1106 = vpop.f32.mrb[0].mxu0
      %v1107 = vpop.f32.mrb[0].mxu0
      %v1108 = vadd.f32 %v1017, %v1107
      %v1109 = vpop.f32.mrb[0].mxu0
      %1110 = vmatprep.mubr.bf16.mxu0 0
      %1111 = vmatmul.mubr.bf16.gmra.mrb[0].mxu0 %v1037
      %v1112 = vpop.f32.mrb[0].mxu0
      %v1113 = vadd.f32 %v1017, %v1112
      %v1114 = vpop.f32.mrb[0].mxu0
      %v1115 = vpop.f32.mrb[0].mxu0
      %v1116 = vadd.f32 %v1017, %v1115
      %v1117 = vpop.f32.mrb[0].mxu0
      %1118 = vmatprep.mubr.bf16.mxu0 0
      %1119 = vmatmul.mubr.bf16.gmra.mrb[0].mxu0 %v1039
      %v1120 = vpop.f32.mrb[0].mxu0
      %v1121 = vadd.f32 %v1017, %v1120
      %v1122 = vpop.f32.mrb[0].mxu0
      %v1123 = vpop.f32.mrb[0].mxu0
      %v1124 = vadd.f32 %v1017, %v1123
      %v1125 = vpop.f32.mrb[0].mxu0
      %1126 = vmatprep.mubr.bf16.mxu0 0
      %1127 = vmatmul.mubr.bf16.gmra.mrb[0].mxu0 %v1041
      %v1128 = vpop.f32.mrb[0].mxu0
      %v1129 = vadd.f32 %v1017, %v1128
      %v1130 = vpop.f32.mrb[0].mxu0
      %v1131 = vpop.f32.mrb[0].mxu0
      %v1132 = vadd.f32 %v1017, %v1131
      %v1133 = vpop.f32.mrb[0].mxu0
      %1134 = vmatprep.mubr.bf16.mxu0 0
      %1135 = vmatmul.mubr.bf16.gmra.mrb[0].mxu0 %v1043
      %v1136 = vpop.f32.mrb[0].mxu0
      %v1137 = vadd.f32 %v1017, %v1136
      %v1138 = vpop.f32.mrb[0].mxu0
      %v1139 = vpop.f32.mrb[0].mxu0
      %v1140 = vadd.f32 %v1017, %v1139
      %v1141 = vpop.f32.mrb[0].mxu0
      %1142 = vmatprep.mubr.bf16.mxu0 0
      %1143 = vmatmul.mubr.bf16.gmra.mrb[0].mxu0 %v1045
      %v1144 = vpop.f32.mrb[0].mxu0
      %v1145 = vadd.f32 %v1017, %v1144
      %v1146 = vpop.f32.mrb[0].mxu0
      %v1147 = vpop.f32.mrb[0].mxu0
      %v1148 = vadd.f32 %v1017, %v1147
      %v1149 = vpop.f32.mrb[0].mxu0
      %1150 = vdwg.mxu0
      %v1151 = vmax.f32 %v1089, 0.0
      %v1152 = vmax.f32 %v1092, 0.0
      %v1153 = vmax.f32 %v1097, 0.0
      %v1154 = vmax.f32 %v1100, 0.0
      %v1155 = vmax.f32 %v1105, 0.0
      %v1156 = vmax.f32 %v1108, 0.0
      %v1157 = vmax.f32 %v1113, 0.0
      %v1158 = vmax.f32 %v1116, 0.0
      %v1159 = vmax.f32 %v1121, 0.0
      %v1160 = vmax.f32 %v1124, 0.0
      %v1161 = vmax.f32 %v1129, 0.0
      %v1162 = vmax.f32 %v1132, 0.0
      %v1163 = vmax.f32 %v1137, 0.0
      %v1164 = vmax.f32 %v1140, 0.0
      %v1165 = vmax.f32 %v1145, 0.0
      %v1166 = vmax.f32 %v1148, 0.0
      %vm1167 = vcmask 457728
      %1168 = vst.msk [vmem:[%s206] sm:$0xff] %vm1167, %v1151
      %1169 = vst.msk [vmem:[%s206 + $0x8] sm:$0xff] %vm1167, %v1152
      %1170 = vst.msk [vmem:[%s206 + $0x10] sm:$0xff] %vm1167, %v1153
      %1171 = vst.msk [vmem:[%s206 + $0x18] sm:$0xff] %vm1167, %v1154
      %1172 = vst.msk [vmem:[%s206 + $0x20] sm:$0xff] %vm1167, %v1155
      %1173 = vst.msk [vmem:[%s206 + $0x28] sm:$0xff] %vm1167, %v1156
      %1174 = vst.msk [vmem:[%s206 + $0x30] sm:$0xff] %vm1167, %v1157
      %1175 = vst.msk [vmem:[%s206 + $0x38] sm:$0xff] %vm1167, %v1158
      %1176 = vst.msk [vmem:[%s206 + $0x40] sm:$0xff] %vm1167, %v1159
      %1177 = vst.msk [vmem:[%s206 + $0x48] sm:$0xff] %vm1167, %v1160
      %1178 = vst.msk [vmem:[%s206 + $0x50] sm:$0xff] %vm1167, %v1161
      %1179 = vst.msk [vmem:[%s206 + $0x58] sm:$0xff] %vm1167, %v1162
      %1180 = vst.msk [vmem:[%s206 + $0x60] sm:$0xff] %vm1167, %v1163
      %1181 = vst.msk [vmem:[%s206 + $0x68] sm:$0xff] %vm1167, %v1164
      %1182 = vst.msk [vmem:[%s206 + $0x70] sm:$0xff] %vm1167, %v1165
      %1183 = vst.msk [vmem:[%s206 + $0x78] sm:$0xff] %vm1167, %v1166
      %s1184 = smul.u32 16, %s19
      %p1185 = scmp.lt.s32.totalorder %s18, 1
      %s1186 = scalar_select %p1185, %s18, 1
      %p1187 = scmp.lt.s32.totalorder %s1184, 31
      %s1188 = scalar_select %p1187, %s1184, 31
      %s1189 = smul.addr %s1186, 32
      %s1190 = sadd.s32 %s1188, %s1189
      %s1191 = smul.addr %s1190, 8
      %s1192 = scalar_lea.vmem %s3, %s1191
      // Predicated region
      $region33: #{shrinknet_forward.5} parent=31 // pred_check
        %p1193 = pneg %p116
      $region34: #{shrinknet_forward.5} parent=31 // pred_check_branch
        %1195 = sbr.rel (%p1193) target = $region36
      $region35: #{shrinknet_forward.5} parent=31 // pred_region
        %s1196 = smul.u32 16, %s19
      $region36: #{shrinknet_forward.5} parent=31 // pred_fallthru
        _
    $region32: #{shrinknet_forward.5} parent=5 // pred_fallthru
      _
    %p1197 = scmp.le.s32.totalorder 2, %s9
    // Predicated region
    $region37: #{shrinknet_forward.5} parent=5 // pred_check
      %p1198 = pneg %p1197
    $region38: #{shrinknet_forward.5} parent=5 // pred_check_branch
      %1200 = sbr.rel (%p1198) target = $region40
    $region39: #{shrinknet_forward.5} parent=5 // pred_region
      %s1201 = ssub.s32 %s9, 2
      // Predicated region
      $region41: #{shrinknet_forward.5} parent=39 // pred_check
        %p1202 = pneg %p122
      $region42: #{shrinknet_forward.5} parent=39 // pred_check_branch
        %1204 = sbr.rel (%p1202) target = $region44
      $region43: #{shrinknet_forward.5} parent=39 // pred_region
        %s1205 = smul.u32 16, %s21
        %p1206 = scmp.lt.s32.totalorder %s20, 1
        %s1207 = scalar_select %p1206, %s20, 1
        %p1208 = scmp.lt.s32.totalorder %s1205, 31
        %s1209 = scalar_select %p1208, %s1205, 31
        %s1210 = smul.addr %s1207, 32
        %s1211 = sadd.s32 %s1209, %s1210
        %s1212 = smul.addr %s1211, 8
        %s1213 = scalar_lea.vmem %s3, %s1212
      $region44: #{shrinknet_forward.5} parent=39 // pred_fallthru
        _
    $region40: #{shrinknet_forward.5} parent=5 // pred_fallthru
      _
  $region6: #{shrinknet_forward.5} parent=0 // loop_footer
    %s13 = sadd.s32 1, %s9
  $region7: #{shrinknet_forward.5} parent=0 // loop_footer_branch
    %8 = sbr.rel target = $region3
  $region8: #{shrinknet_forward.5} parent=0 // loop_exit
    _

// kernel: shrinknet_forward.8
$region0: #{shrinknet_forward.8}
  #allocation0 [shape = 'u32[]', space=smem, size = 0x4, offset = 0x4, fixed_abs, tag = 'smem constant byte address 0x4 - core index']
  #allocation1 [shape = 'u32[144,128]{1,0:T(1,128)}', space=vmem, size = 0x12000, scoped, tag = 'internal scratch']
  %s0 = inlined_call_operand.vmem [shape: bf16[2,2,8,16,12], index: 0, kind: input, shape index: {}]
  %s1 = inlined_call_operand.vmem [shape: bf16[12,56], index: 1, kind: input, shape index: {}]
  %s2 = inlined_call_operand.vmem [shape: f32[1,56], index: 2, kind: input, shape index: {}]
  %s3 = inlined_call_operand.vmem [shape: f32[2,256,56], index: 3, kind: output, shape index: {}]
  %s4 = sld [smem:[#allocation0]]
  $region45: #{shrinknet_forward.8} parent=0
    _
  %s6 = ssub.s32 1, %s4
  %s7 = scalar_select 0, %s6, %s4
  loop: start=0, step=1, limit=6
  $region2: #{shrinknet_forward.8} parent=0 // loop_pre_header
    _
  $region3: #{shrinknet_forward.8} parent=0 // loop_header
    %s9 = sphi 0, %s13
    %p10 = scmp.ge.s32.totalorder %s9, 6
    %s16 = sphi 0, %s28
    %s17 = sphi 0, %s24
    %s18 = sphi 0, %s16
    %s19 = sphi 0, %s17
    %s20 = sphi 0, %s18
    %s21 = sphi 0, %s19
    %s33 = sphi 0, %s35
    %s36 = sphi 0, %s33
    %s37 = sphi 0, %s36
    %s53 = sphi 0, %s37
    %s57 = sphi 0, %s57
    %s59 = sphi 0, %s57
    %s60 = sphi 0, %s59
    %s74 = sphi 0, %s60
    %s78 = sphi 0, %s78
    %s80 = sphi 0, %s78
    %s81 = sphi 0, %s80
    %s95 = sphi 0, %s81
    %s103 = sphi 0, %s105
    %s106 = sphi 0, %s103
    %s107 = sphi 0, %s106
    %s123 = sphi 0, %s107
  $region4: #{shrinknet_forward.8} parent=0 // loop_header_branch
    %12 = sbr.rel (%p10) target = $region8
  $region5: #{shrinknet_forward.8} parent=0 // loop_body
    %s14 = ssub.s32 %s9, 1
    %s15 = ssub.s32 %s9, 2
    %s22 = sadd.s32 1, %s17
    %p23 = scmp.ge.s32.totalorder %s22, 2
    %s24 = scalar_select %p23, 0, %s22
    %s25 = sadd.s32 1, %s16
    %s26 = scalar_select %p23, %s25, %s16
    %p27 = scmp.ge.s32.totalorder %s26, 2
    %s28 = scalar_select %p27, 0, %s26
    %s29 = ssub.s32 %s16, %s28
    %s30 = ssub.s32 %s17, %s24
    %s31 = sor.u32 %s29, %s30
    %p32 = scmp.eq.s32.totalorder %s31, 0
    %s34 = sadd.s32 %s33, 1
    %s35 = scalar_select %p32, %s33, %s34
    %p38 = pneg %p32
    %p39 = scmp.eq.s32.totalorder %s9, 3
    %p40 = por %p38, %p39
    %p41 = scmp.ne.s32.totalorder %s33, %s36
    %p42 = scmp.eq.s32.totalorder %s9, 0
    %p43 = por %p41, %p42
    %p44 = scmp.ne.s32.totalorder %s33, %s36
    %p45 = scmp.eq.s32.totalorder %s14, 3
    %p46 = por %p44, %p45
    %p47 = scmp.ne.s32.totalorder %s36, %s37
    %p48 = scmp.eq.s32.totalorder %s14, 0
    %p49 = por %p47, %p48
    %p50 = scmp.ne.s32.totalorder %s36, %s37
    %p51 = scmp.eq.s32.totalorder %s15, 3
    %p52 = por %p50, %p51
    %p54 = scmp.ne.s32.totalorder %s37, %s53
    %p55 = scmp.eq.s32.totalorder %s15, 0
    %p56 = por %p54, %p55
    %s58 = sadd.s32 %s57, 1
    %p61 = scmp.eq.s32.totalorder %s9, 3
    %p62 = scmp.ne.s32.totalorder %s57, %s59
    %p63 = scmp.eq.s32.totalorder %s9, 0
    %p64 = por %p62, %p63
    %p65 = scmp.ne.s32.totalorder %s57, %s59
    %p66 = scmp.eq.s32.totalorder %s14, 3
    %p67 = por %p65, %p66
    %p68 = scmp.ne.s32.totalorder %s59, %s60
    %p69 = scmp.eq.s32.totalorder %s14, 0
    %p70 = por %p68, %p69
    %p71 = scmp.ne.s32.totalorder %s59, %s60
    %p72 = scmp.eq.s32.totalorder %s15, 3
    %p73 = por %p71, %p72
    %p75 = scmp.ne.s32.totalorder %s60, %s74
    %p76 = scmp.eq.s32.totalorder %s15, 0
    %p77 = por %p75, %p76
    %s79 = sadd.s32 %s78, 1
    %p82 = scmp.eq.s32.totalorder %s9, 3
    %p83 = scmp.ne.s32.totalorder %s78, %s80
    %p84 = scmp.eq.s32.totalorder %s9, 0
    %p85 = por %p83, %p84
    %p86 = scmp.ne.s32.totalorder %s78, %s80
    %p87 = scmp.eq.s32.totalorder %s14, 3
    %p88 = por %p86, %p87
    %p89 = scmp.ne.s32.totalorder %s80, %s81
    %p90 = scmp.eq.s32.totalorder %s14, 0
    %p91 = por %p89, %p90
    %p92 = scmp.ne.s32.totalorder %s80, %s81
    %p93 = scmp.eq.s32.totalorder %s15, 3
    %p94 = por %p92, %p93
    %p96 = scmp.ne.s32.totalorder %s81, %s95
    %p97 = scmp.eq.s32.totalorder %s15, 0
    %p98 = por %p96, %p97
    %s99 = ssub.s32 %s16, %s28
    %s100 = ssub.s32 %s17, %s24
    %s101 = sor.u32 %s99, %s100
    %p102 = scmp.eq.s32.totalorder %s101, 0
    %s104 = sadd.s32 %s103, 1
    %s105 = scalar_select %p102, %s103, %s104
    %p108 = pneg %p102
    %p109 = scmp.eq.s32.totalorder %s9, 3
    %p110 = por %p108, %p109
    %p111 = scmp.ne.s32.totalorder %s103, %s106
    %p112 = scmp.eq.s32.totalorder %s9, 0
    %p113 = por %p111, %p112
    %p114 = scmp.ne.s32.totalorder %s103, %s106
    %p115 = scmp.eq.s32.totalorder %s14, 3
    %p116 = por %p114, %p115
    %p117 = scmp.ne.s32.totalorder %s106, %s107
    %p118 = scmp.eq.s32.totalorder %s14, 0
    %p119 = por %p117, %p118
    %p120 = scmp.ne.s32.totalorder %s106, %s107
    %p121 = scmp.eq.s32.totalorder %s15, 3
    %p122 = por %p120, %p121
    %p124 = scmp.ne.s32.totalorder %s107, %s123
    %p125 = scmp.eq.s32.totalorder %s15, 0
    %p126 = por %p124, %p125
    %p127 = scmp.le.s32.totalorder 1, %s9
    %p128 = scmp.lt.s32.totalorder %s9, 5
    %p129 = pnand %p127, %p128
    %p130 = pneg %p129
    // Predicated region
    $region9: #{shrinknet_forward.8} parent=5 // pred_check
      _
    $region10: #{shrinknet_forward.8} parent=5 // pred_check_branch
      %132 = sbr.rel (%p129) target = $region12
    $region11: #{shrinknet_forward.8} parent=5 // pred_region
      %s133 = ssub.s32 %s9, 1
      // Predicated region
      $region13: #{shrinknet_forward.8} parent=11 // pred_check
        %p134 = pneg %p70
      $region14: #{shrinknet_forward.8} parent=11 // pred_check_branch
        %136 = sbr.rel (%p134) target = $region16
      $region15: #{shrinknet_forward.8} parent=11 // pred_region
        _
      $region16: #{shrinknet_forward.8} parent=11 // pred_fallthru
        _
      // Predicated region
      $region17: #{shrinknet_forward.8} parent=11 // pred_check
        %p137 = pneg %p91
      $region18: #{shrinknet_forward.8} parent=11 // pred_check_branch
        %139 = sbr.rel (%p137) target = $region20
      $region19: #{shrinknet_forward.8} parent=11 // pred_region
        _
      $region20: #{shrinknet_forward.8} parent=11 // pred_fallthru
        _
    $region12: #{shrinknet_forward.8} parent=5 // pred_fallthru
      _
    %p140 = scmp.lt.s32.totalorder %s9, 4
    // Predicated region
    $region21: #{shrinknet_forward.8} parent=5 // pred_check
      %p141 = pneg %p140
    $region22: #{shrinknet_forward.8} parent=5 // pred_check_branch
      %143 = sbr.rel (%p141) target = $region24
    $region23: #{shrinknet_forward.8} parent=5 // pred_region
      // Predicated region
      $region25: #{shrinknet_forward.8} parent=23 // pred_check
        %p144 = pneg %p43
      $region26: #{shrinknet_forward.8} parent=23 // pred_check_branch
        %146 = sbr.rel (%p144) target = $region28
      $region27: #{shrinknet_forward.8} parent=23 // pred_region
        %p147 = scmp.lt.s32.totalorder %s16, 1
        %s148 = scalar_select %p147, %s16, 1
        %p149 = scmp.lt.s32.totalorder %s17, 1
        %s150 = scalar_select %p149, %s17, 1
        %s151 = smul.addr %s150, 16
        %s152 = smul.addr %s148, 32
        %s153 = sadd.s32 %s151, %s152
        %s154 = smul.addr %s153, 4
        %s155 = scalar_lea.vmem %s0, %s154
      $region28: #{shrinknet_forward.8} parent=23 // pred_fallthru
        _
    $region24: #{shrinknet_forward.8} parent=5 // pred_fallthru
      _
    %p156 = scmp.le.s32.totalorder 1, %s9
    %p157 = scmp.lt.s32.totalorder %s9, 5
    %p158 = pnand %p156, %p157
    %p159 = pneg %p158
    // Predicated region
    $region29: #{shrinknet_forward.8} parent=5 // pred_check
      _
    $region30: #{shrinknet_forward.8} parent=5 // pred_check_branch
      %161 = sbr.rel (%p158) target = $region32
    $region31: #{shrinknet_forward.8} parent=5 // pred_region
      %s162 = ssub.s32 %s9, 1
      %p163 = scmp.lt.s32.totalorder %s18, 1
      %s164 = scalar_select %p163, %s18, 1
      %p165 = scmp.lt.s32.totalorder %s19, 1
      %s166 = scalar_select %p165, %s19, 1
      %s167 = smul.addr %s166, 16
      %s168 = smul.addr %s164, 32
      %s169 = sadd.s32 %s167, %s168
      %s170 = smul.addr %s169, 4
      %s171 = scalar_lea.vmem %s0, %s170
      %p172 = pneg %p49
      %p173 = pneg %p46
      %p174 = pneg %p70
      %p175 = pneg %p67
      %p176 = pneg %p91
      %p177 = pneg %p88
      %p178 = pneg %p119
      %p179 = pneg %p116
      %s180 = smul.u32 16, %s19
      %p181 = scmp.lt.s32.totalorder %s18, 1
      %s182 = scalar_select %p181, %s18, 1
      %p183 = scmp.lt.s32.totalorder %s180, 31
      %s184 = scalar_select %p183, %s180, 31
      %s185 = smul.addr %s182, 32
      %s186 = sadd.s32 %s184, %s185
      %s187 = smul.addr %s186, 8
      %s188 = scalar_lea.vmem %s3, %s187
      %p189 = scmp.lt.s32.totalorder %s18, 1
      %s190 = scalar_select %p189, %s18, 1
      %p191 = scmp.lt.s32.totalorder %s19, 1
      %s192 = scalar_select %p191, %s19, 1
      %s193 = smul.addr %s192, 16
      %s194 = smul.addr %s190, 32
      %s195 = sadd.s32 %s193, %s194
      %s196 = smul.addr %s195, 4
      %s197 = scalar_lea.vmem %s0, %s196
      %s198 = smul.u32 16, %s19
      %p199 = scmp.lt.s32.totalorder %s18, 1
      %s200 = scalar_select %p199, %s18, 1
      %p201 = scmp.lt.s32.totalorder %s198, 31
      %s202 = scalar_select %p201, %s198, 31
      %s203 = smul.addr %s200, 32
      %s204 = sadd.s32 %s202, %s203
      %s205 = smul.addr %s204, 8
      %s206 = scalar_lea.vmem %s3, %s205
      %s207 = smul.u32 16, %s19
      %v209 = vld [vmem:[%s197] sm:$0xf]
      %v210 = vld [vmem:[%s197 + $0x4] sm:$0xf]
      %v211 = vld [vmem:[%s197 + $0x8] sm:$0xf]
      %v212 = vld [vmem:[%s197 + $0xc] sm:$0xf]
      %v213 = vld [vmem:[%s197 + $0x10] sm:$0xf]
      %v214 = vld [vmem:[%s197 + $0x14] sm:$0xf]
      %v215 = vld [vmem:[%s197 + $0x18] sm:$0xf]
      %v216 = vld [vmem:[%s197 + $0x1c] sm:$0xf]
      %v217 = vld [vmem:[%s197 + $0x20] sm:$0xf]
      %v218 = vld [vmem:[%s197 + $0x24] sm:$0xf]
      %v219 = vld [vmem:[%s197 + $0x28] sm:$0xf]
      %v220 = vld [vmem:[%s197 + $0x2c] sm:$0xf]
      %v221 = vld [vmem:[%s197 + $0x30] sm:$0xf]
      %v222 = vld [vmem:[%s197 + $0x34] sm:$0xf]
      %v223 = vld [vmem:[%s197 + $0x38] sm:$0xf]
      %v224 = vld [vmem:[%s197 + $0x3c] sm:$0xf]
      %v225 = vld [vmem:[%s1] sm:$0xf]
      %v226 = vld [vmem:[%s1 + $0x4] sm:$0x3]
      %v227 = vld [vmem:[%s2] sm:$0x1]
      %v229 = vlaneseq
      %v230 = vshrl.u32 %v229, 7
      %v231 = vsub.s32 0, %v230
      %v232 = vrot.slane %v227, %v231
      %v250 = vunpack.c.l.b16 %v209
      %v251 = vunpack.c.l.b16 %v210
      %v252 = vunpack.c.l.b16 %v211
      %v253 = vunpack.c.l.b16 %v212
      %v254 = vunpack.c.l.b16 %v213
      %v255 = vunpack.c.l.b16 %v214
      %v256 = vunpack.c.l.b16 %v215
      %v257 = vunpack.c.l.b16 %v216
      %v258 = vunpack.c.l.b16 %v217
      %v259 = vunpack.c.l.b16 %v218
      %v260 = vunpack.c.l.b16 %v219
      %v261 = vunpack.c.l.b16 %v220
      %v262 = vunpack.c.l.b16 %v221
      %v263 = vunpack.c.l.b16 %v222
      %v264 = vunpack.c.l.b16 %v223
      %v265 = vunpack.c.l.b16 %v224
      %v266 = vpack.c.b16 %v251, %v250
      %v267 = vpack.c.b16 %v253, %v252
      %v268 = vpack.c.b16 %v255, %v254
      %v269 = vpack.c.b16 %v257, %v256
      %v270 = vpack.c.b16 %v259, %v258
      %v271 = vpack.c.b16 %v261, %v260
      %v272 = vpack.c.b16 %v263, %v262
      %v273 = vpack.c.b16 %v265, %v264
      %v276 = vunpack.c.l.b16 %v225
      %v277 = vunpack.c.l.b16 %v226
      %v278 = vpack.c.b16 %v277, %v276
      %vm279 = vcmask 97280
      %v281 = vsel %vm279, %v266, 0
      %v284 = vsel %vm279, %v267, 0
      %v287 = vsel %vm279, %v268, 0
      %v290 = vsel %vm279, %v269, 0
      %v293 = vsel %vm279, %v270, 0
      %v296 = vsel %vm279, %v271, 0
      %v299 = vsel %vm279, %v272, 0
      %v302 = vsel %vm279, %v273, 0
      %vm304 = vcmask 1045504
      %v306 = vsel %vm304, %v278, 0
      %308 = vmatprep.subr.bf16.mxu0 0
      %309 = vmatpush1.bf16.msra.mxu0 %v306
      %310 = vmatprep.subr.bf16.mxu0 0
      %311 = vmatpush1.bf16.msra.mxu0 0
      %312 = vmatprep.subr.bf16.mxu0 0
      %313 = vmatpush1.bf16.msra.mxu0 0
      %314 = vmatprep.subr.bf16.mxu0 0
      %315 = vmatpush1.bf16.msra.mxu0 0
      %316 = vmatprep.subr.bf16.mxu0 0
      %317 = vmatpush1.bf16.msra.mxu0 0
      %318 = vmatprep.subr.bf16.mxu0 0
      %319 = vmatpush1.bf16.msra.mxu0 0
      %320 = vmatprep.subr.bf16.mxu0 0
      %321 = vmatpush1.bf16.msra.mxu0 0
      %322 = vmatprep.subr.bf16.mxu0 0
      %323 = vmatpush1.bf16.msra.mxu0 0
      %324 = vmatprep.subr.bf16.mxu0 0
      %325 = vmatpush1.bf16.msra.mxu0 0
      %326 = vmatprep.subr.bf16.mxu0 0
      %327 = vmatpush1.bf16.msra.mxu0 0
      %328 = vmatprep.subr.bf16.mxu0 0
      %329 = vmatpush1.bf16.msra.mxu0 0
      %330 = vmatprep.subr.bf16.mxu0 0
      %331 = vmatpush1.bf16.msra.mxu0 0
      %332 = vmatprep.subr.bf16.mxu0 0
      %333 = vmatpush1.bf16.msra.mxu0 0
      %334 = vmatprep.subr.bf16.mxu0 0
      %335 = vmatpush1.bf16.msra.mxu0 0
      %336 = vmatprep.subr.bf16.mxu0 0
      %337 = vmatpush1.bf16.msra.mxu0 0
      %338 = vmatprep.subr.bf16.mxu0 0
      %339 = vmatpush1.bf16.msra.mxu0 0
      %340 = vmatprep.mubr.bf16.mxu0 0
      %341 = vmatmul.mubr.bf16.gmra.mrb[0].mxu0 %v281
      %v342 = vpop.f32.mrb[0].mxu0
      %v343 = vadd.f32 %v232, %v342
      %v344 = vpop.f32.mrb[0].mxu0
      %v345 = vpop.f32.mrb[0].mxu0
      %v346 = vadd.f32 %v232, %v345
      %v347 = vpop.f32.mrb[0].mxu0
      %348 = vmatprep.mubr.bf16.mxu0 0
      %349 = vmatmul.mubr.bf16.gmra.mrb[0].mxu0 %v284
      %v350 = vpop.f32.mrb[0].mxu0
      %v351 = vadd.f32 %v232, %v350
      %v352 = vpop.f32.mrb[0].mxu0
      %v353 = vpop.f32.mrb[0].mxu0
      %v354 = vadd.f32 %v232, %v353
      %v355 = vpop.f32.mrb[0].mxu0
      %356 = vmatprep.mubr.bf16.mxu0 0
      %357 = vmatmul.mubr.bf16.gmra.mrb[0].mxu0 %v287
      %v358 = vpop.f32.mrb[0].mxu0
      %v359 = vadd.f32 %v232, %v358
      %v360 = vpop.f32.mrb[0].mxu0
      %v361 = vpop.f32.mrb[0].mxu0
      %v362 = vadd.f32 %v232, %v361
      %v363 = vpop.f32.mrb[0].mxu0
      %364 = vmatprep.mubr.bf16.mxu0 0
      %365 = vmatmul.mubr.bf16.gmra.mrb[0].mxu0 %v290
      %v366 = vpop.f32.mrb[0].mxu0
      %v367 = vadd.f32 %v232, %v366
      %v368 = vpop.f32.mrb[0].mxu0
      %v369 = vpop.f32.mrb[0].mxu0
      %v370 = vadd.f32 %v232, %v369
      %v371 = vpop.f32.mrb[0].mxu0
      %372 = vmatprep.mubr.bf16.mxu0 0
      %373 = vmatmul.mubr.bf16.gmra.mrb[0].mxu0 %v293
      %v374 = vpop.f32.mrb[0].mxu0
      %v375 = vadd.f32 %v232, %v374
      %v376 = vpop.f32.mrb[0].mxu0
      %v377 = vpop.f32.mrb[0].mxu0
      %v378 = vadd.f32 %v232, %v377
      %v379 = vpop.f32.mrb[0].mxu0
      %380 = vmatprep.mubr.bf16.mxu0 0
      %381 = vmatmul.mubr.bf16.gmra.mrb[0].mxu0 %v296
      %v382 = vpop.f32.mrb[0].mxu0
      %v383 = vadd.f32 %v232, %v382
      %v384 = vpop.f32.mrb[0].mxu0
      %v385 = vpop.f32.mrb[0].mxu0
      %v386 = vadd.f32 %v232, %v385
      %v387 = vpop.f32.mrb[0].mxu0
      %388 = vmatprep.mubr.bf16.mxu0 0
      %389 = vmatmul.mubr.bf16.gmra.mrb[0].mxu0 %v299
      %v390 = vpop.f32.mrb[0].mxu0
      %v391 = vadd.f32 %v232, %v390
      %v392 = vpop.f32.mrb[0].mxu0
      %v393 = vpop.f32.mrb[0].mxu0
      %v394 = vadd.f32 %v232, %v393
      %v395 = vpop.f32.mrb[0].mxu0
      %396 = vmatprep.mubr.bf16.mxu0 0
      %397 = vmatmul.mubr.bf16.gmra.mrb[0].mxu0 %v302
      %v398 = vpop.f32.mrb[0].mxu0
      %v399 = vadd.f32 %v232, %v398
      %v400 = vpop.f32.mrb[0].mxu0
      %v401 = vpop.f32.mrb[0].mxu0
      %v402 = vadd.f32 %v232, %v401
      %v403 = vpop.f32.mrb[0].mxu0
      %404 = vdwg.mxu0
      %v405 = vmax.f32 %v343, 0.0
      %v406 = vmax.f32 %v346, 0.0
      %v407 = vmax.f32 %v351, 0.0
      %v408 = vmax.f32 %v354, 0.0
      %v409 = vmax.f32 %v359, 0.0
      %v410 = vmax.f32 %v362, 0.0
      %v411 = vmax.f32 %v367, 0.0
      %v412 = vmax.f32 %v370, 0.0
      %v413 = vmax.f32 %v375, 0.0
      %v414 = vmax.f32 %v378, 0.0
      %v415 = vmax.f32 %v383, 0.0
      %v416 = vmax.f32 %v386, 0.0
      %v417 = vmax.f32 %v391, 0.0
      %v418 = vmax.f32 %v394, 0.0
      %v419 = vmax.f32 %v399, 0.0
      %v420 = vmax.f32 %v402, 0.0
      %vm421 = vcmask 457728
      %422 = vst.msk [vmem:[%s206] sm:$0xff] %vm421, %v405
      %423 = vst.msk [vmem:[%s206 + $0x8] sm:$0xff] %vm421, %v406
      %424 = vst.msk [vmem:[%s206 + $0x10] sm:$0xff] %vm421, %v407
      %425 = vst.msk [vmem:[%s206 + $0x18] sm:$0xff] %vm421, %v408
      %426 = vst.msk [vmem:[%s206 + $0x20] sm:$0xff] %vm421, %v409
      %427 = vst.msk [vmem:[%s206 + $0x28] sm:$0xff] %vm421, %v410
      %428 = vst.msk [vmem:[%s206 + $0x30] sm:$0xff] %vm421, %v411
      %429 = vst.msk [vmem:[%s206 + $0x38] sm:$0xff] %vm421, %v412
      %430 = vst.msk [vmem:[%s206 + $0x40] sm:$0xff] %vm421, %v413
      %431 = vst.msk [vmem:[%s206 + $0x48] sm:$0xff] %vm421, %v414
      %432 = vst.msk [vmem:[%s206 + $0x50] sm:$0xff] %vm421, %v415
      %433 = vst.msk [vmem:[%s206 + $0x58] sm:$0xff] %vm421, %v416
      %434 = vst.msk [vmem:[%s206 + $0x60] sm:$0xff] %vm421, %v417
      %435 = vst.msk [vmem:[%s206 + $0x68] sm:$0xff] %vm421, %v418
      %436 = vst.msk [vmem:[%s206 + $0x70] sm:$0xff] %vm421, %v419
      %437 = vst.msk [vmem:[%s206 + $0x78] sm:$0xff] %vm421, %v420
      %s438 = smul.u32 16, %s19
      %p439 = scmp.lt.s32.totalorder %s18, 1
      %s440 = scalar_select %p439, %s18, 1
      %p441 = scmp.lt.s32.totalorder %s438, 31
      %s442 = scalar_select %p441, %s438, 31
      %s443 = smul.addr %s440, 32
      %s444 = sadd.s32 %s442, %s443
      %s445 = smul.addr %s444, 8
      %s446 = scalar_lea.vmem %s3, %s445
      // Predicated region
      $region33: #{shrinknet_forward.8} parent=31 // pred_check
        %p447 = pneg %p116
      $region34: #{shrinknet_forward.8} parent=31 // pred_check_branch
        %449 = sbr.rel (%p447) target = $region36
      $region35: #{shrinknet_forward.8} parent=31 // pred_region
        %s450 = smul.u32 16, %s19
      $region36: #{shrinknet_forward.8} parent=31 // pred_fallthru
        _
    $region32: #{shrinknet_forward.8} parent=5 // pred_fallthru
      _
    %p451 = scmp.le.s32.totalorder 2, %s9
    // Predicated region
    $region37: #{shrinknet_forward.8} parent=5 // pred_check
      %p452 = pneg %p451
    $region38: #{shrinknet_forward.8} parent=5 // pred_check_branch
      %454 = sbr.rel (%p452) target = $region40
    $region39: #{shrinknet_forward.8} parent=5 // pred_region
      %s455 = ssub.s32 %s9, 2
      // Predicated region
      $region41: #{shrinknet_forward.8} parent=39 // pred_check
        %p456 = pneg %p122
      $region42: #{shrinknet_forward.8} parent=39 // pred_check_branch
        %458 = sbr.rel (%p456) target = $region44
      $region43: #{shrinknet_forward.8} parent=39 // pred_region
        %s459 = smul.u32 16, %s21
        %p460 = scmp.lt.s32.totalorder %s20, 1
        %s461 = scalar_select %p460, %s20, 1
        %p462 = scmp.lt.s32.totalorder %s459, 31
        %s463 = scalar_select %p462, %s459, 31
        %s464 = smul.addr %s461, 32
        %s465 = sadd.s32 %s463, %s464
        %s466 = smul.addr %s465, 8
        %s467 = scalar_lea.vmem %s3, %s466
      $region44: #{shrinknet_forward.8} parent=39 // pred_fallthru
        _
    $region40: #{shrinknet_forward.8} parent=5 // pred_fallthru
      _
  $region6: #{shrinknet_forward.8} parent=0 // loop_footer
    %s13 = sadd.s32 1, %s9
  $region7: #{shrinknet_forward.8} parent=0 // loop_footer_branch
    %8 = sbr.rel target = $region3
  $region8: #{shrinknet_forward.8} parent=0 // loop_exit
    _

// kernel: shrinknet_forward.7
$region0: #{shrinknet_forward.7}
  #allocation0 [shape = 'u32[]', space=smem, size = 0x4, offset = 0x4, fixed_abs, tag = 'smem constant byte address 0x4 - core index']
  #allocation1 [shape = 'u32[144,128]{1,0:T(1,128)}', space=vmem, size = 0x12000, scoped, tag = 'internal scratch']
  %s0 = inlined_call_operand.vmem [shape: bf16[2,2,10,18,12], index: 0, kind: input, shape index: {}]
  %s1 = inlined_call_operand.vmem [shape: bf16[108,12], index: 1, kind: input, shape index: {}]
  %s2 = inlined_call_operand.vmem [shape: f32[1,12], index: 2, kind: input, shape index: {}]
  %s3 = inlined_call_operand.vmem [shape: f32[2,256,12], index: 3, kind: output, shape index: {}]
  %s4 = sld [smem:[#allocation0]]
  $region45: #{shrinknet_forward.7} parent=0
    _
  %s6 = ssub.s32 1, %s4
  %s7 = scalar_select 0, %s6, %s4
  loop: start=0, step=1, limit=6
  $region2: #{shrinknet_forward.7} parent=0 // loop_pre_header
    _
  $region3: #{shrinknet_forward.7} parent=0 // loop_header
    %s9 = sphi 0, %s13
    %p10 = scmp.ge.s32.totalorder %s9, 6
    %s16 = sphi 0, %s28
    %s17 = sphi 0, %s24
    %s18 = sphi 0, %s16
    %s19 = sphi 0, %s17
    %s20 = sphi 0, %s18
    %s21 = sphi 0, %s19
    %s33 = sphi 0, %s35
    %s36 = sphi 0, %s33
    %s37 = sphi 0, %s36
    %s53 = sphi 0, %s37
    %s57 = sphi 0, %s57
    %s59 = sphi 0, %s57
    %s60 = sphi 0, %s59
    %s74 = sphi 0, %s60
    %s78 = sphi 0, %s78
    %s80 = sphi 0, %s78
    %s81 = sphi 0, %s80
    %s95 = sphi 0, %s81
    %s103 = sphi 0, %s105
    %s106 = sphi 0, %s103
    %s107 = sphi 0, %s106
    %s123 = sphi 0, %s107
  $region4: #{shrinknet_forward.7} parent=0 // loop_header_branch
    %12 = sbr.rel (%p10) target = $region8
  $region5: #{shrinknet_forward.7} parent=0 // loop_body
    %s14 = ssub.s32 %s9, 1
    %s15 = ssub.s32 %s9, 2
    %s22 = sadd.s32 1, %s17
    %p23 = scmp.ge.s32.totalorder %s22, 2
    %s24 = scalar_select %p23, 0, %s22
    %s25 = sadd.s32 1, %s16
    %s26 = scalar_select %p23, %s25, %s16
    %p27 = scmp.ge.s32.totalorder %s26, 2
    %s28 = scalar_select %p27, 0, %s26
    %s29 = ssub.s32 %s16, %s28
    %s30 = ssub.s32 %s17, %s24
    %s31 = sor.u32 %s29, %s30
    %p32 = scmp.eq.s32.totalorder %s31, 0
    %s34 = sadd.s32 %s33, 1
    %s35 = scalar_select %p32, %s33, %s34
    %p38 = pneg %p32
    %p39 = scmp.eq.s32.totalorder %s9, 3
    %p40 = por %p38, %p39
    %p41 = scmp.ne.s32.totalorder %s33, %s36
    %p42 = scmp.eq.s32.totalorder %s9, 0
    %p43 = por %p41, %p42
    %p44 = scmp.ne.s32.totalorder %s33, %s36
    %p45 = scmp.eq.s32.totalorder %s14, 3
    %p46 = por %p44, %p45
    %p47 = scmp.ne.s32.totalorder %s36, %s37
    %p48 = scmp.eq.s32.totalorder %s14, 0
    %p49 = por %p47, %p48
    %p50 = scmp.ne.s32.totalorder %s36, %s37
    %p51 = scmp.eq.s32.totalorder %s15, 3
    %p52 = por %p50, %p51
    %p54 = scmp.ne.s32.totalorder %s37, %s53
    %p55 = scmp.eq.s32.totalorder %s15, 0
    %p56 = por %p54, %p55
    %s58 = sadd.s32 %s57, 1
    %p61 = scmp.eq.s32.totalorder %s9, 3
    %p62 = scmp.ne.s32.totalorder %s57, %s59
    %p63 = scmp.eq.s32.totalorder %s9, 0
    %p64 = por %p62, %p63
    %p65 = scmp.ne.s32.totalorder %s57, %s59
    %p66 = scmp.eq.s32.totalorder %s14, 3
    %p67 = por %p65, %p66
    %p68 = scmp.ne.s32.totalorder %s59, %s60
    %p69 = scmp.eq.s32.totalorder %s14, 0
    %p70 = por %p68, %p69
    %p71 = scmp.ne.s32.totalorder %s59, %s60
    %p72 = scmp.eq.s32.totalorder %s15, 3
    %p73 = por %p71, %p72
    %p75 = scmp.ne.s32.totalorder %s60, %s74
    %p76 = scmp.eq.s32.totalorder %s15, 0
    %p77 = por %p75, %p76
    %s79 = sadd.s32 %s78, 1
    %p82 = scmp.eq.s32.totalorder %s9, 3
    %p83 = scmp.ne.s32.totalorder %s78, %s80
    %p84 = scmp.eq.s32.totalorder %s9, 0
    %p85 = por %p83, %p84
    %p86 = scmp.ne.s32.totalorder %s78, %s80
    %p87 = scmp.eq.s32.totalorder %s14, 3
    %p88 = por %p86, %p87
    %p89 = scmp.ne.s32.totalorder %s80, %s81
    %p90 = scmp.eq.s32.totalorder %s14, 0
    %p91 = por %p89, %p90
    %p92 = scmp.ne.s32.totalorder %s80, %s81
    %p93 = scmp.eq.s32.totalorder %s15, 3
    %p94 = por %p92, %p93
    %p96 = scmp.ne.s32.totalorder %s81, %s95
    %p97 = scmp.eq.s32.totalorder %s15, 0
    %p98 = por %p96, %p97
    %s99 = ssub.s32 %s16, %s28
    %s100 = ssub.s32 %s17, %s24
    %s101 = sor.u32 %s99, %s100
    %p102 = scmp.eq.s32.totalorder %s101, 0
    %s104 = sadd.s32 %s103, 1
    %s105 = scalar_select %p102, %s103, %s104
    %p108 = pneg %p102
    %p109 = scmp.eq.s32.totalorder %s9, 3
    %p110 = por %p108, %p109
    %p111 = scmp.ne.s32.totalorder %s103, %s106
    %p112 = scmp.eq.s32.totalorder %s9, 0
    %p113 = por %p111, %p112
    %p114 = scmp.ne.s32.totalorder %s103, %s106
    %p115 = scmp.eq.s32.totalorder %s14, 3
    %p116 = por %p114, %p115
    %p117 = scmp.ne.s32.totalorder %s106, %s107
    %p118 = scmp.eq.s32.totalorder %s14, 0
    %p119 = por %p117, %p118
    %p120 = scmp.ne.s32.totalorder %s106, %s107
    %p121 = scmp.eq.s32.totalorder %s15, 3
    %p122 = por %p120, %p121
    %p124 = scmp.ne.s32.totalorder %s107, %s123
    %p125 = scmp.eq.s32.totalorder %s15, 0
    %p126 = por %p124, %p125
    %p127 = scmp.le.s32.totalorder 1, %s9
    %p128 = scmp.lt.s32.totalorder %s9, 5
    %p129 = pnand %p127, %p128
    %p130 = pneg %p129
    // Predicated region
    $region9: #{shrinknet_forward.7} parent=5 // pred_check
      _
    $region10: #{shrinknet_forward.7} parent=5 // pred_check_branch
      %132 = sbr.rel (%p129) target = $region12
    $region11: #{shrinknet_forward.7} parent=5 // pred_region
      %s133 = ssub.s32 %s9, 1
      // Predicated region
      $region13: #{shrinknet_forward.7} parent=11 // pred_check
        %p134 = pneg %p70
      $region14: #{shrinknet_forward.7} parent=11 // pred_check_branch
        %136 = sbr.rel (%p134) target = $region16
      $region15: #{shrinknet_forward.7} parent=11 // pred_region
        _
      $region16: #{shrinknet_forward.7} parent=11 // pred_fallthru
        _
      // Predicated region
      $region17: #{shrinknet_forward.7} parent=11 // pred_check
        %p137 = pneg %p91
      $region18: #{shrinknet_forward.7} parent=11 // pred_check_branch
        %139 = sbr.rel (%p137) target = $region20
      $region19: #{shrinknet_forward.7} parent=11 // pred_region
        _
      $region20: #{shrinknet_forward.7} parent=11 // pred_fallthru
        _
    $region12: #{shrinknet_forward.7} parent=5 // pred_fallthru
      _
    %p140 = scmp.lt.s32.totalorder %s9, 4
    // Predicated region
    $region21: #{shrinknet_forward.7} parent=5 // pred_check
      %p141 = pneg %p140
    $region22: #{shrinknet_forward.7} parent=5 // pred_check_branch
      %143 = sbr.rel (%p141) target = $region24
    $region23: #{shrinknet_forward.7} parent=5 // pred_region
      // Predicated region
      $region25: #{shrinknet_forward.7} parent=23 // pred_check
        %p144 = pneg %p43
      $region26: #{shrinknet_forward.7} parent=23 // pred_check_branch
        %146 = sbr.rel (%p144) target = $region28
      $region27: #{shrinknet_forward.7} parent=23 // pred_region
        %p147 = scmp.lt.s32.totalorder %s16, 1
        %s148 = scalar_select %p147, %s16, 1
        %p149 = scmp.lt.s32.totalorder %s17, 1
        %s150 = scalar_select %p149, %s17, 1
        %s151 = smul.addr %s150, 30
        %s152 = smul.addr %s148, 60
        %s153 = sadd.s32 %s151, %s152
        %s154 = smul.addr %s153, 4
        %s155 = scalar_lea.vmem %s0, %s154
      $region28: #{shrinknet_forward.7} parent=23 // pred_fallthru
        _
    $region24: #{shrinknet_forward.7} parent=5 // pred_fallthru
      _
    %p156 = scmp.le.s32.totalorder 1, %s9
    %p157 = scmp.lt.s32.totalorder %s9, 5
    %p158 = pnand %p156, %p157
    %p159 = pneg %p158
    // Predicated region
    $region29: #{shrinknet_forward.7} parent=5 // pred_check
      _
    $region30: #{shrinknet_forward.7} parent=5 // pred_check_branch
      %161 = sbr.rel (%p158) target = $region32
    $region31: #{shrinknet_forward.7} parent=5 // pred_region
      %s162 = ssub.s32 %s9, 1
      %p163 = scmp.lt.s32.totalorder %s18, 1
      %s164 = scalar_select %p163, %s18, 1
      %p165 = scmp.lt.s32.totalorder %s19, 1
      %s166 = scalar_select %p165, %s19, 1
      %s167 = smul.addr %s166, 30
      %s168 = smul.addr %s164, 60
      %s169 = sadd.s32 %s167, %s168
      %s170 = smul.addr %s169, 4
      %s171 = scalar_lea.vmem %s0, %s170
      %p172 = pneg %p49
      %p173 = pneg %p46
      %p174 = pneg %p70
      %p175 = pneg %p67
      %p176 = pneg %p91
      %p177 = pneg %p88
      %p178 = pneg %p119
      %p179 = pneg %p116
      %s180 = smul.u32 16, %s19
      %p181 = scmp.lt.s32.totalorder %s18, 1
      %s182 = scalar_select %p181, %s18, 1
      %p183 = scmp.lt.s32.totalorder %s180, 31
      %s184 = scalar_select %p183, %s180, 31
      %s185 = smul.addr %s182, 32
      %s186 = sadd.s32 %s184, %s185
      %s187 = smul.addr %s186, 8
      %s188 = scalar_lea.vmem %s3, %s187
      %p189 = scmp.lt.s32.totalorder %s18, 1
      %s190 = scalar_select %p189, %s18, 1
      %p191 = scmp.lt.s32.totalorder %s19, 1
      %s192 = scalar_select %p191, %s19, 1
      %s193 = smul.addr %s192, 30
      %s194 = smul.addr %s190, 60
      %s195 = sadd.s32 %s193, %s194
      %s196 = smul.addr %s195, 4
      %s197 = scalar_lea.vmem %s0, %s196
      %s198 = smul.u32 16, %s19
      %p199 = scmp.lt.s32.totalorder %s18, 1
      %s200 = scalar_select %p199, %s18, 1
      %p201 = scmp.lt.s32.totalorder %s198, 31
      %s202 = scalar_select %p201, %s198, 31
      %s203 = smul.addr %s200, 32
      %s204 = sadd.s32 %s202, %s203
      %s205 = smul.addr %s204, 8
      %s206 = scalar_lea.vmem %s3, %s205
      %s207 = smul.u32 16, %s19
      %v209 = vld [vmem:[%s197] sm:$0xf]
      %v210 = vld [vmem:[%s197 + $0x4] sm:$0xf]
      %v211 = vld [vmem:[%s197 + $0x8] sm:$0x1]
      %v212 = vld [vmem:[%s197 + $0xc] sm:$0xf]
      %v213 = vld [vmem:[%s197 + $0x10] sm:$0xf]
      %v214 = vld [vmem:[%s197 + $0x14] sm:$0x1]
      %v215 = vld [vmem:[%s197 + $0x18] sm:$0xf]
      %v216 = vld [vmem:[%s197 + $0x1c] sm:$0xf]
      %v217 = vld [vmem:[%s197 + $0x20] sm:$0x1]
      %v218 = vld [vmem:[%s197 + $0x24] sm:$0xf]
      %v219 = vld [vmem:[%s197 + $0x28] sm:$0xf]
      %v220 = vld [vmem:[%s197 + $0x2c] sm:$0x1]
      %v221 = vld [vmem:[%s197 + $0x30] sm:$0xf]
      %v222 = vld [vmem:[%s197 + $0x34] sm:$0xf]
      %v223 = vld [vmem:[%s197 + $0x38] sm:$0x1]
      %v224 = vld [vmem:[%s197 + $0x3c] sm:$0xf]
      %v225 = vld [vmem:[%s197 + $0x40] sm:$0xf]
      %v226 = vld [vmem:[%s197 + $0x44] sm:$0x1]
      %v227 = vld [vmem:[%s197 + $0x48] sm:$0xf]
      %v228 = vld [vmem:[%s197 + $0x4c] sm:$0xf]
      %v229 = vld [vmem:[%s197 + $0x50] sm:$0x1]
      %v230 = vld [vmem:[%s197 + $0x54] sm:$0xf]
      %v231 = vld [vmem:[%s197 + $0x58] sm:$0xf]
      %v232 = vld [vmem:[%s197 + $0x5c] sm:$0x1]
      %v233 = vld [vmem:[%s197 + $0x60] sm:$0xf]
      %v234 = vld [vmem:[%s197 + $0x64] sm:$0xf]
      %v235 = vld [vmem:[%s197 + $0x68] sm:$0x1]
      %v236 = vld [vmem:[%s197 + $0x6c] sm:$0xf]
      %v237 = vld [vmem:[%s197 + $0x70] sm:$0xf]
      %v238 = vld [vmem:[%s197 + $0x74] sm:$0x1]
      %v255 = vunpack.c.l.b16 %v209
      %v256 = vunpack.c.l.b16 %v210
      %v257 = vunpack.c.l.b16 %v212
      %v258 = vunpack.c.l.b16 %v213
      %v259 = vunpack.c.l.b16 %v215
      %v260 = vunpack.c.l.b16 %v216
      %v261 = vunpack.c.l.b16 %v218
      %v262 = vunpack.c.l.b16 %v219
      %v263 = vunpack.c.l.b16 %v221
      %v264 = vunpack.c.l.b16 %v222
      %v265 = vunpack.c.l.b16 %v224
      %v266 = vunpack.c.l.b16 %v225
      %v267 = vunpack.c.l.b16 %v227
      %v268 = vunpack.c.l.b16 %v228
      %v269 = vunpack.c.l.b16 %v230
      %v270 = vunpack.c.l.b16 %v231
      %v271 = vpack.c.b16 %v256, %v255
      %v272 = vpack.c.b16 %v258, %v257
      %v273 = vpack.c.b16 %v260, %v259
      %v274 = vpack.c.b16 %v262, %v261
      %v275 = vpack.c.b16 %v264, %v263
      %v276 = vpack.c.b16 %v266, %v265
      %v277 = vpack.c.b16 %v268, %v267
      %v278 = vpack.c.b16 %v270, %v269
      %v287 = vunpack.c.l.b16 %v211
      %v288 = vunpack.c.l.b16 %v214
      %v289 = vunpack.c.l.b16 %v217
      %v290 = vunpack.c.l.b16 %v220
      %v291 = vunpack.c.l.b16 %v223
      %v292 = vunpack.c.l.b16 %v226
      %v293 = vunpack.c.l.b16 %v229
      %v294 = vunpack.c.l.b16 %v232
      %v295 = vpack.c.b16 %v287, %v287
      %v296 = vpack.c.b16 %v288, %v288
      %v297 = vpack.c.b16 %v289, %v289
      %v298 = vpack.c.b16 %v290, %v290
      %v299 = vpack.c.b16 %v291, %v291
      %v300 = vpack.c.b16 %v292, %v292
      %v301 = vpack.c.b16 %v293, %v293
      %v302 = vpack.c.b16 %v294, %v294
      %vm303 = vsmask.f32 7424
      %v305 = vshrl.u32 %v271, 16
      %v307 = vshll.u32 %v271, 16
      %v309 = vrot.slane %v307, 1
      %v310 = vor.u32 %v305, %v309
      %v312 = vshll.u32 %v295, 16
      %v314 = vrot.slane %v312, 1
      %v315 = vsel %vm303, %v310, %v314
      %v317 = vshrl.u32 %v272, 16
      %v319 = vshll.u32 %v272, 16
      %v321 = vrot.slane %v319, 1
      %v322 = vor.u32 %v317, %v321
      %v324 = vshll.u32 %v296, 16
      %v326 = vrot.slane %v324, 1
      %v327 = vsel %vm303, %v322, %v326
      %v329 = vshrl.u32 %v273, 16
      %v331 = vshll.u32 %v273, 16
      %v333 = vrot.slane %v331, 1
      %v334 = vor.u32 %v329, %v333
      %v336 = vshll.u32 %v297, 16
      %v338 = vrot.slane %v336, 1
      %v339 = vsel %vm303, %v334, %v338
      %v341 = vshrl.u32 %v274, 16
      %v343 = vshll.u32 %v274, 16
      %v345 = vrot.slane %v343, 1
      %v346 = vor.u32 %v341, %v345
      %v348 = vshll.u32 %v298, 16
      %v350 = vrot.slane %v348, 1
      %v351 = vsel %vm303, %v346, %v350
      %v353 = vshrl.u32 %v275, 16
      %v355 = vshll.u32 %v275, 16
      %v357 = vrot.slane %v355, 1
      %v358 = vor.u32 %v353, %v357
      %v360 = vshll.u32 %v299, 16
      %v362 = vrot.slane %v360, 1
      %v363 = vsel %vm303, %v358, %v362
      %v365 = vshrl.u32 %v276, 16
      %v367 = vshll.u32 %v276, 16
      %v369 = vrot.slane %v367, 1
      %v370 = vor.u32 %v365, %v369
      %v372 = vshll.u32 %v300, 16
      %v374 = vrot.slane %v372, 1
      %v375 = vsel %vm303, %v370, %v374
      %v377 = vshrl.u32 %v277, 16
      %v379 = vshll.u32 %v277, 16
      %v381 = vrot.slane %v379, 1
      %v382 = vor.u32 %v377, %v381
      %v384 = vshll.u32 %v301, 16
      %v386 = vrot.slane %v384, 1
      %v387 = vsel %vm303, %v382, %v386
      %v389 = vshrl.u32 %v278, 16
      %v391 = vshll.u32 %v278, 16
      %v393 = vrot.slane %v391, 1
      %v394 = vor.u32 %v389, %v393
      %v396 = vshll.u32 %v302, 16
      %v398 = vrot.slane %v396, 1
      %v399 = vsel %vm303, %v394, %v398
      %400 = vrot.lane.b32.xlu0 %v315, 12
      %v401 = vpop.permute.xlu0 %400
      %402 = vrot.lane.b32.xlu0 %v327, 12
      %v403 = vpop.permute.xlu0 %402
      %404 = vrot.lane.b32.xlu0 %v339, 12
      %v405 = vpop.permute.xlu0 %404
      %406 = vrot.lane.b32.xlu0 %v351, 12
      %v407 = vpop.permute.xlu0 %406
      %408 = vrot.lane.b32.xlu0 %v363, 12
      %v409 = vpop.permute.xlu0 %408
      %410 = vrot.lane.b32.xlu0 %v375, 12
      %v411 = vpop.permute.xlu0 %410
      %412 = vrot.lane.b32.xlu0 %v387, 12
      %v413 = vpop.permute.xlu0 %412
      %414 = vrot.lane.b32.xlu0 %v399, 12
      %v415 = vpop.permute.xlu0 %414
      %vm416 = vcmask 1046528
      %v417 = vrot.slane %v271, 1
      %v418 = vrot.slane %v295, 1
      %v419 = vsel %vm416, %v417, %v418
      %v420 = vrot.slane %v272, 1
      %v421 = vrot.slane %v296, 1
      %v422 = vsel %vm416, %v420, %v421
      %v423 = vrot.slane %v273, 1
      %v424 = vrot.slane %v297, 1
      %v425 = vsel %vm416, %v423, %v424
      %v426 = vrot.slane %v274, 1
      %v427 = vrot.slane %v298, 1
      %v428 = vsel %vm416, %v426, %v427
      %v429 = vrot.slane %v275, 1
      %v430 = vrot.slane %v299, 1
      %v431 = vsel %vm416, %v429, %v430
      %v432 = vrot.slane %v276, 1
      %v433 = vrot.slane %v300, 1
      %v434 = vsel %vm416, %v432, %v433
      %v435 = vrot.slane %v277, 1
      %v436 = vrot.slane %v301, 1
      %v437 = vsel %vm416, %v435, %v436
      %v438 = vrot.slane %v278, 1
      %v439 = vrot.slane %v302, 1
      %v440 = vsel %vm416, %v438, %v439
      %441 = vrot.lane.b32.xlu0 %v419, 24
      %v442 = vpop.permute.xlu0 %441
      %443 = vrot.lane.b32.xlu0 %v422, 24
      %v444 = vpop.permute.xlu0 %443
      %445 = vrot.lane.b32.xlu0 %v425, 24
      %v446 = vpop.permute.xlu0 %445
      %447 = vrot.lane.b32.xlu0 %v428, 24
      %v448 = vpop.permute.xlu0 %447
      %449 = vrot.lane.b32.xlu0 %v431, 24
      %v450 = vpop.permute.xlu0 %449
      %451 = vrot.lane.b32.xlu0 %v434, 24
      %v452 = vpop.permute.xlu0 %451
      %453 = vrot.lane.b32.xlu0 %v437, 24
      %v454 = vpop.permute.xlu0 %453
      %455 = vrot.lane.b32.xlu0 %v440, 24
      %v456 = vpop.permute.xlu0 %455
      %vm457 = vcmask 97280
      %v459 = vsel %vm457, %v271, %v401
      %v461 = vsel %vm457, %v272, %v403
      %v463 = vsel %vm457, %v273, %v405
      %v465 = vsel %vm457, %v274, %v407
      %v467 = vsel %vm457, %v275, %v409
      %v469 = vsel %vm457, %v276, %v411
      %v471 = vsel %vm457, %v277, %v413
      %v473 = vsel %vm457, %v278, %v415
      %vm474 = vcmask 195584
      %v476 = vsel %vm474, %v459, %v442
      %v478 = vsel %vm474, %v461, %v444
      %v480 = vsel %vm474, %v463, %v446
      %v482 = vsel %vm474, %v465, %v448
      %v484 = vsel %vm474, %v467, %v450
      %v486 = vsel %vm474, %v469, %v452
      %v488 = vsel %vm474, %v471, %v454
      %v490 = vsel %vm474, %v473, %v456
      %v493 = vunpack.c.l.b16 %v233
      %v494 = vunpack.c.l.b16 %v234
      %v495 = vpack.c.b16 %v494, %v493
      %v497 = vunpack.c.l.b16 %v235
      %v498 = vpack.c.b16 %v497, %v497
      %v500 = vshrl.u32 %v495, 16
      %v502 = vshll.u32 %v495, 16
      %v504 = vrot.slane %v502, 1
      %v505 = vor.u32 %v500, %v504
      %v507 = vshll.u32 %v498, 16
      %v509 = vrot.slane %v507, 1
      %v510 = vsel %vm303, %v505, %v509
      %511 = vrot.lane.b32.xlu0 %v510, 12
      %v512 = vpop.permute.xlu0 %511
      %v513 = vrot.slane %v495, 1
      %v514 = vrot.slane %v498, 1
      %v515 = vsel %vm416, %v513, %v514
      %516 = vrot.lane.b32.xlu0 %v515, 24
      %v517 = vpop.permute.xlu0 %516
      %v519 = vsel %vm457, %v495, %v512
      %v521 = vsel %vm474, %v519, %v517
      %v524 = vunpack.c.l.b16 %v236
      %v525 = vunpack.c.l.b16 %v237
      %v526 = vpack.c.b16 %v525, %v524
      %v528 = vunpack.c.l.b16 %v238
      %v529 = vpack.c.b16 %v528, %v528
      %v531 = vshrl.u32 %v526, 16
      %v533 = vshll.u32 %v526, 16
      %v535 = vrot.slane %v533, 1
      %v536 = vor.u32 %v531, %v535
      %v538 = vshll.u32 %v529, 16
      %v540 = vrot.slane %v538, 1
      %v541 = vsel %vm303, %v536, %v540
      %542 = vrot.lane.b32.xlu0 %v541, 12
      %v543 = vpop.permute.xlu0 %542
      %v544 = vrot.slane %v526, 1
      %v545 = vrot.slane %v529, 1
      %v546 = vsel %vm416, %v544, %v545
      %547 = vrot.lane.b32.xlu0 %v546, 24
      %v548 = vpop.permute.xlu0 %547
      %v550 = vsel %vm457, %v526, %v543
      %v552 = vsel %vm474, %v550, %v548
      %561 = vrot.lane.b32.xlu0 %v478, 36
      %v562 = vpop.permute.xlu0 %561
      %563 = vrot.lane.b32.xlu0 %v480, 36
      %v564 = vpop.permute.xlu0 %563
      %565 = vrot.lane.b32.xlu0 %v482, 36
      %v566 = vpop.permute.xlu0 %565
      %567 = vrot.lane.b32.xlu0 %v484, 36
      %v568 = vpop.permute.xlu0 %567
      %569 = vrot.lane.b32.xlu0 %v486, 36
      %v570 = vpop.permute.xlu0 %569
      %571 = vrot.lane.b32.xlu0 %v488, 36
      %v572 = vpop.permute.xlu0 %571
      %573 = vrot.lane.b32.xlu0 %v490, 36
      %v574 = vpop.permute.xlu0 %573
      %575 = vrot.lane.b32.xlu0 %v521, 36
      %v576 = vpop.permute.xlu0 %575
      %578 = vrot.lane.b32.xlu0 %v480, 72
      %v579 = vpop.permute.xlu0 %578
      %580 = vrot.lane.b32.xlu0 %v482, 72
      %v581 = vpop.permute.xlu0 %580
      %582 = vrot.lane.b32.xlu0 %v484, 72
      %v583 = vpop.permute.xlu0 %582
      %584 = vrot.lane.b32.xlu0 %v486, 72
      %v585 = vpop.permute.xlu0 %584
      %586 = vrot.lane.b32.xlu0 %v488, 72
      %v587 = vpop.permute.xlu0 %586
      %588 = vrot.lane.b32.xlu0 %v490, 72
      %v589 = vpop.permute.xlu0 %588
      %590 = vrot.lane.b32.xlu0 %v521, 72
      %v591 = vpop.permute.xlu0 %590
      %592 = vrot.lane.b32.xlu0 %v552, 72
      %v593 = vpop.permute.xlu0 %592
      %vm594 = vcmask 293888
      %v596 = vsel %vm594, %v476, %v562
      %v598 = vsel %vm594, %v478, %v564
      %v600 = vsel %vm594, %v480, %v566
      %v602 = vsel %vm594, %v482, %v568
      %v604 = vsel %vm594, %v484, %v570
      %v606 = vsel %vm594, %v486, %v572
      %v608 = vsel %vm594, %v488, %v574
      %v610 = vsel %vm594, %v490, %v576
      %vm611 = vcmask 588800
      %v613 = vsel %vm611, %v596, %v579
      %v615 = vsel %vm611, %v598, %v581
      %v617 = vsel %vm611, %v600, %v583
      %v619 = vsel %vm611, %v602, %v585
      %v621 = vsel %vm611, %v604, %v587
      %v623 = vsel %vm611, %v606, %v589
      %v625 = vsel %vm611, %v608, %v591
      %v627 = vsel %vm611, %v610, %v593
      %v628 = vld [vmem:[%s1] sm:$0xf]
      %v629 = vld [vmem:[%s1 + $0x4] sm:$0xf]
      %v630 = vld [vmem:[%s1 + $0x8] sm:$0xf]
      %v631 = vld [vmem:[%s1 + $0xc] sm:$0xf]
      %v632 = vld [vmem:[%s1 + $0x10] sm:$0xf]
      %v633 = vld [vmem:[%s1 + $0x14] sm:$0xf]
      %v634 = vld [vmem:[%s1 + $0x18] sm:$0xf]
      %v635 = vld [vmem:[%s1 + $0x1c] sm:$0xf]
      %v636 = vld [vmem:[%s1 + $0x20] sm:$0xf]
      %v637 = vld [vmem:[%s1 + $0x24] sm:$0xf]
      %v638 = vld [vmem:[%s1 + $0x28] sm:$0xf]
      %v639 = vld [vmem:[%s1 + $0x2c] sm:$0xf]
      %v640 = vld [vmem:[%s1 + $0x30] sm:$0xf]
      %v641 = vld [vmem:[%s1 + $0x34] sm:$0x3]
      %v642 = vld [vmem:[%s2] sm:$0x1]
      %v644 = vlaneseq
      %v645 = vshrl.u32 %v644, 7
      %v646 = vsub.s32 0, %v645
      %v647 = vrot.slane %v642, %v646
      %v663 = vunpack.c.l.b16 %v628
      %v664 = vunpack.c.l.b16 %v629
      %v665 = vunpack.c.l.b16 %v630
      %v666 = vunpack.c.l.b16 %v631
      %v667 = vunpack.c.l.b16 %v632
      %v668 = vunpack.c.l.b16 %v633
      %v669 = vunpack.c.l.b16 %v634
      %v670 = vunpack.c.l.b16 %v635
      %v671 = vunpack.c.l.b16 %v636
      %v672 = vunpack.c.l.b16 %v637
      %v673 = vunpack.c.l.b16 %v638
      %v674 = vunpack.c.l.b16 %v639
      %v675 = vunpack.c.l.b16 %v640
      %v676 = vunpack.c.l.b16 %v641
      %v677 = vpack.c.b16 %v664, %v663
      %v678 = vpack.c.b16 %v666, %v665
      %v679 = vpack.c.b16 %v668, %v667
      %v680 = vpack.c.b16 %v670, %v669
      %v681 = vpack.c.b16 %v672, %v671
      %v682 = vpack.c.b16 %v674, %v673
      %v683 = vpack.c.b16 %v676, %v675
      %vm690 = vcmask 883712
      %v691 = vsel %vm690, %v613, 0
      %v693 = vsel %vm690, %v615, 0
      %v695 = vsel %vm690, %v617, 0
      %v697 = vsel %vm690, %v619, 0
      %v699 = vsel %vm690, %v621, 0
      %v701 = vsel %vm690, %v623, 0
      %v703 = vsel %vm690, %v625, 0
      %v705 = vsel %vm690, %v627, 0
      %vm707 = vcmask 1045504
      %v709 = vsel %vm707, %v683, 0
      %711 = vmatprep.subr.bf16.mxu0 0
      %712 = vmatpush1.bf16.msra.mxu0 %v677
      %713 = vmatprep.subr.bf16.mxu0 0
      %714 = vmatpush1.bf16.msra.mxu0 %v678
      %715 = vmatprep.subr.bf16.mxu0 0
      %716 = vmatpush1.bf16.msra.mxu0 %v679
      %717 = vmatprep.subr.bf16.mxu0 0
      %718 = vmatpush1.bf16.msra.mxu0 %v680
      %719 = vmatprep.subr.bf16.mxu0 0
      %720 = vmatpush1.bf16.msra.mxu0 %v681
      %721 = vmatprep.subr.bf16.mxu0 0
      %722 = vmatpush1.bf16.msra.mxu0 %v682
      %723 = vmatprep.subr.bf16.mxu0 0
      %724 = vmatpush1.bf16.msra.mxu0 %v709
      %725 = vmatprep.subr.bf16.mxu0 0
      %726 = vmatpush1.bf16.msra.mxu0 0
      %727 = vmatprep.subr.bf16.mxu0 0
      %728 = vmatpush1.bf16.msra.mxu0 0
      %729 = vmatprep.subr.bf16.mxu0 0
      %730 = vmatpush1.bf16.msra.mxu0 0
      %731 = vmatprep.subr.bf16.mxu0 0
      %732 = vmatpush1.bf16.msra.mxu0 0
      %733 = vmatprep.subr.bf16.mxu0 0
      %734 = vmatpush1.bf16.msra.mxu0 0
      %735 = vmatprep.subr.bf16.mxu0 0
      %736 = vmatpush1.bf16.msra.mxu0 0
      %737 = vmatprep.subr.bf16.mxu0 0
      %738 = vmatpush1.bf16.msra.mxu0 0
      %739 = vmatprep.subr.bf16.mxu0 0
      %740 = vmatpush1.bf16.msra.mxu0 0
      %741 = vmatprep.subr.bf16.mxu0 0
      %742 = vmatpush1.bf16.msra.mxu0 0
      %743 = vmatprep.mubr.bf16.mxu0 0
      %744 = vmatmul.mubr.bf16.gmra.mrb[0].mxu0 %v691
      %v745 = vpop.f32.mrb[0].mxu0
      %v746 = vadd.f32 %v647, %v745
      %v747 = vpop.f32.mrb[0].mxu0
      %v748 = vpop.f32.mrb[0].mxu0
      %v749 = vadd.f32 %v647, %v748
      %v750 = vpop.f32.mrb[0].mxu0
      %751 = vmatprep.mubr.bf16.mxu0 0
      %752 = vmatmul.mubr.bf16.gmra.mrb[0].mxu0 %v693
      %v753 = vpop.f32.mrb[0].mxu0
      %v754 = vadd.f32 %v647, %v753
      %v755 = vpop.f32.mrb[0].mxu0
      %v756 = vpop.f32.mrb[0].mxu0
      %v757 = vadd.f32 %v647, %v756
      %v758 = vpop.f32.mrb[0].mxu0
      %759 = vmatprep.mubr.bf16.mxu0 0
      %760 = vmatmul.mubr.bf16.gmra.mrb[0].mxu0 %v695
      %v761 = vpop.f32.mrb[0].mxu0
      %v762 = vadd.f32 %v647, %v761
      %v763 = vpop.f32.mrb[0].mxu0
      %v764 = vpop.f32.mrb[0].mxu0
      %v765 = vadd.f32 %v647, %v764
      %v766 = vpop.f32.mrb[0].mxu0
      %767 = vmatprep.mubr.bf16.mxu0 0
      %768 = vmatmul.mubr.bf16.gmra.mrb[0].mxu0 %v697
      %v769 = vpop.f32.mrb[0].mxu0
      %v770 = vadd.f32 %v647, %v769
      %v771 = vpop.f32.mrb[0].mxu0
      %v772 = vpop.f32.mrb[0].mxu0
      %v773 = vadd.f32 %v647, %v772
      %v774 = vpop.f32.mrb[0].mxu0
      %775 = vmatprep.mubr.bf16.mxu0 0
      %776 = vmatmul.mubr.bf16.gmra.mrb[0].mxu0 %v699
      %v777 = vpop.f32.mrb[0].mxu0
      %v778 = vadd.f32 %v647, %v777
      %v779 = vpop.f32.mrb[0].mxu0
      %v780 = vpop.f32.mrb[0].mxu0
      %v781 = vadd.f32 %v647, %v780
      %v782 = vpop.f32.mrb[0].mxu0
      %783 = vmatprep.mubr.bf16.mxu0 0
      %784 = vmatmul.mubr.bf16.gmra.mrb[0].mxu0 %v701
      %v785 = vpop.f32.mrb[0].mxu0
      %v786 = vadd.f32 %v647, %v785
      %v787 = vpop.f32.mrb[0].mxu0
      %v788 = vpop.f32.mrb[0].mxu0
      %v789 = vadd.f32 %v647, %v788
      %v790 = vpop.f32.mrb[0].mxu0
      %791 = vmatprep.mubr.bf16.mxu0 0
      %792 = vmatmul.mubr.bf16.gmra.mrb[0].mxu0 %v703
      %v793 = vpop.f32.mrb[0].mxu0
      %v794 = vadd.f32 %v647, %v793
      %v795 = vpop.f32.mrb[0].mxu0
      %v796 = vpop.f32.mrb[0].mxu0
      %v797 = vadd.f32 %v647, %v796
      %v798 = vpop.f32.mrb[0].mxu0
      %799 = vmatprep.mubr.bf16.mxu0 0
      %800 = vmatmul.mubr.bf16.gmra.mrb[0].mxu0 %v705
      %v801 = vpop.f32.mrb[0].mxu0
      %v802 = vadd.f32 %v647, %v801
      %v803 = vpop.f32.mrb[0].mxu0
      %v804 = vpop.f32.mrb[0].mxu0
      %v805 = vadd.f32 %v647, %v804
      %v806 = vpop.f32.mrb[0].mxu0
      %807 = vdwg.mxu0
      %v808 = vmax.f32 %v746, 0.0
      %v809 = vmax.f32 %v749, 0.0
      %v810 = vmax.f32 %v754, 0.0
      %v811 = vmax.f32 %v757, 0.0
      %v812 = vmax.f32 %v762, 0.0
      %v813 = vmax.f32 %v765, 0.0
      %v814 = vmax.f32 %v770, 0.0
      %v815 = vmax.f32 %v773, 0.0
      %v816 = vmax.f32 %v778, 0.0
      %v817 = vmax.f32 %v781, 0.0
      %v818 = vmax.f32 %v786, 0.0
      %v819 = vmax.f32 %v789, 0.0
      %v820 = vmax.f32 %v794, 0.0
      %v821 = vmax.f32 %v797, 0.0
      %v822 = vmax.f32 %v802, 0.0
      %v823 = vmax.f32 %v805, 0.0
      %824 = vst.msk [vmem:[%s206] sm:$0xff] %vm457, %v808
      %825 = vst.msk [vmem:[%s206 + $0x8] sm:$0xff] %vm457, %v809
      %826 = vst.msk [vmem:[%s206 + $0x10] sm:$0xff] %vm457, %v810
      %827 = vst.msk [vmem:[%s206 + $0x18] sm:$0xff] %vm457, %v811
      %828 = vst.msk [vmem:[%s206 + $0x20] sm:$0xff] %vm457, %v812
      %829 = vst.msk [vmem:[%s206 + $0x28] sm:$0xff] %vm457, %v813
      %830 = vst.msk [vmem:[%s206 + $0x30] sm:$0xff] %vm457, %v814
      %831 = vst.msk [vmem:[%s206 + $0x38] sm:$0xff] %vm457, %v815
      %832 = vst.msk [vmem:[%s206 + $0x40] sm:$0xff] %vm457, %v816
      %833 = vst.msk [vmem:[%s206 + $0x48] sm:$0xff] %vm457, %v817
      %834 = vst.msk [vmem:[%s206 + $0x50] sm:$0xff] %vm457, %v818
      %835 = vst.msk [vmem:[%s206 + $0x58] sm:$0xff] %vm457, %v819
      %836 = vst.msk [vmem:[%s206 + $0x60] sm:$0xff] %vm457, %v820
      %837 = vst.msk [vmem:[%s206 + $0x68] sm:$0xff] %vm457, %v821
      %838 = vst.msk [vmem:[%s206 + $0x70] sm:$0xff] %vm457, %v822
      %839 = vst.msk [vmem:[%s206 + $0x78] sm:$0xff] %vm457, %v823
      %s840 = smul.u32 16, %s19
      %p841 = scmp.lt.s32.totalorder %s18, 1
      %s842 = scalar_select %p841, %s18, 1
      %p843 = scmp.lt.s32.totalorder %s840, 31
      %s844 = scalar_select %p843, %s840, 31
      %s845 = smul.addr %s842, 32
      %s846 = sadd.s32 %s844, %s845
      %s847 = smul.addr %s846, 8
      %s848 = scalar_lea.vmem %s3, %s847
      // Predicated region
      $region33: #{shrinknet_forward.7} parent=31 // pred_check
        %p849 = pneg %p116
      $region34: #{shrinknet_forward.7} parent=31 // pred_check_branch
        %851 = sbr.rel (%p849) target = $region36
      $region35: #{shrinknet_forward.7} parent=31 // pred_region
        %s852 = smul.u32 16, %s19
      $region36: #{shrinknet_forward.7} parent=31 // pred_fallthru
        _
    $region32: #{shrinknet_forward.7} parent=5 // pred_fallthru
      _
    %p853 = scmp.le.s32.totalorder 2, %s9
    // Predicated region
    $region37: #{shrinknet_forward.7} parent=5 // pred_check
      %p854 = pneg %p853
    $region38: #{shrinknet_forward.7} parent=5 // pred_check_branch
      %856 = sbr.rel (%p854) target = $region40
    $region39: #{shrinknet_forward.7} parent=5 // pred_region
      %s857 = ssub.s32 %s9, 2
      // Predicated region
      $region41: #{shrinknet_forward.7} parent=39 // pred_check
        %p858 = pneg %p122
      $region42: #{shrinknet_forward.7} parent=39 // pred_check_branch
        %860 = sbr.rel (%p858) target = $region44
      $region43: #{shrinknet_forward.7} parent=39 // pred_region
        %s861 = smul.u32 16, %s21
        %p862 = scmp.lt.s32.totalorder %s20, 1
        %s863 = scalar_select %p862, %s20, 1
        %p864 = scmp.lt.s32.totalorder %s861, 31
        %s865 = scalar_select %p864, %s861, 31
        %s866 = smul.addr %s863, 32
        %s867 = sadd.s32 %s865, %s866
        %s868 = smul.addr %s867, 8
        %s869 = scalar_lea.vmem %s3, %s868
      $region44: #{shrinknet_forward.7} parent=39 // pred_fallthru
        _
    $region40: #{shrinknet_forward.7} parent=5 // pred_fallthru
      _
  $region6: #{shrinknet_forward.7} parent=0 // loop_footer
    %s13 = sadd.s32 1, %s9
  $region7: #{shrinknet_forward.7} parent=0 // loop_footer_branch
    %8 = sbr.rel target = $region3
  $region8: #{shrinknet_forward.7} parent=0 // loop_exit
    _

// kernel: shrinknet_forward.6
$region0: #{shrinknet_forward.6}
  #allocation0 [shape = 'u32[]', space=smem, size = 0x4, offset = 0x4, fixed_abs, tag = 'smem constant byte address 0x4 - core index']
  #allocation1 [shape = 'u32[144,128]{1,0:T(1,128)}', space=vmem, size = 0x12000, scoped, tag = 'internal scratch']
  %s0 = inlined_call_operand.vmem [shape: bf16[2,2,12,20,56], index: 0, kind: input, shape index: {}]
  %s1 = inlined_call_operand.vmem [shape: bf16[1400,12], index: 1, kind: input, shape index: {}]
  %s2 = inlined_call_operand.vmem [shape: f32[1,12], index: 2, kind: input, shape index: {}]
  %s3 = inlined_call_operand.vmem [shape: f32[2,256,12], index: 3, kind: output, shape index: {}]
  %s4 = sld [smem:[#allocation0]]
  $region45: #{shrinknet_forward.6} parent=0
    _
  %s6 = ssub.s32 1, %s4
  %s7 = scalar_select 0, %s6, %s4
  loop: start=0, step=1, limit=6
  $region2: #{shrinknet_forward.6} parent=0 // loop_pre_header
    _
  $region3: #{shrinknet_forward.6} parent=0 // loop_header
    %s9 = sphi 0, %s13
    %p10 = scmp.ge.s32.totalorder %s9, 6
    %s16 = sphi 0, %s28
    %s17 = sphi 0, %s24
    %s18 = sphi 0, %s16
    %s19 = sphi 0, %s17
    %s20 = sphi 0, %s18
    %s21 = sphi 0, %s19
    %s33 = sphi 0, %s35
    %s36 = sphi 0, %s33
    %s37 = sphi 0, %s36
    %s53 = sphi 0, %s37
    %s57 = sphi 0, %s57
    %s59 = sphi 0, %s57
    %s60 = sphi 0, %s59
    %s74 = sphi 0, %s60
    %s78 = sphi 0, %s78
    %s80 = sphi 0, %s78
    %s81 = sphi 0, %s80
    %s95 = sphi 0, %s81
    %s103 = sphi 0, %s105
    %s106 = sphi 0, %s103
    %s107 = sphi 0, %s106
    %s123 = sphi 0, %s107
  $region4: #{shrinknet_forward.6} parent=0 // loop_header_branch
    %12 = sbr.rel (%p10) target = $region8
  $region5: #{shrinknet_forward.6} parent=0 // loop_body
    %s14 = ssub.s32 %s9, 1
    %s15 = ssub.s32 %s9, 2
    %s22 = sadd.s32 1, %s17
    %p23 = scmp.ge.s32.totalorder %s22, 2
    %s24 = scalar_select %p23, 0, %s22
    %s25 = sadd.s32 1, %s16
    %s26 = scalar_select %p23, %s25, %s16
    %p27 = scmp.ge.s32.totalorder %s26, 2
    %s28 = scalar_select %p27, 0, %s26
    %s29 = ssub.s32 %s16, %s28
    %s30 = ssub.s32 %s17, %s24
    %s31 = sor.u32 %s29, %s30
    %p32 = scmp.eq.s32.totalorder %s31, 0
    %s34 = sadd.s32 %s33, 1
    %s35 = scalar_select %p32, %s33, %s34
    %p38 = pneg %p32
    %p39 = scmp.eq.s32.totalorder %s9, 3
    %p40 = por %p38, %p39
    %p41 = scmp.ne.s32.totalorder %s33, %s36
    %p42 = scmp.eq.s32.totalorder %s9, 0
    %p43 = por %p41, %p42
    %p44 = scmp.ne.s32.totalorder %s33, %s36
    %p45 = scmp.eq.s32.totalorder %s14, 3
    %p46 = por %p44, %p45
    %p47 = scmp.ne.s32.totalorder %s36, %s37
    %p48 = scmp.eq.s32.totalorder %s14, 0
    %p49 = por %p47, %p48
    %p50 = scmp.ne.s32.totalorder %s36, %s37
    %p51 = scmp.eq.s32.totalorder %s15, 3
    %p52 = por %p50, %p51
    %p54 = scmp.ne.s32.totalorder %s37, %s53
    %p55 = scmp.eq.s32.totalorder %s15, 0
    %p56 = por %p54, %p55
    %s58 = sadd.s32 %s57, 1
    %p61 = scmp.eq.s32.totalorder %s9, 3
    %p62 = scmp.ne.s32.totalorder %s57, %s59
    %p63 = scmp.eq.s32.totalorder %s9, 0
    %p64 = por %p62, %p63
    %p65 = scmp.ne.s32.totalorder %s57, %s59
    %p66 = scmp.eq.s32.totalorder %s14, 3
    %p67 = por %p65, %p66
    %p68 = scmp.ne.s32.totalorder %s59, %s60
    %p69 = scmp.eq.s32.totalorder %s14, 0
    %p70 = por %p68, %p69
    %p71 = scmp.ne.s32.totalorder %s59, %s60
    %p72 = scmp.eq.s32.totalorder %s15, 3
    %p73 = por %p71, %p72
    %p75 = scmp.ne.s32.totalorder %s60, %s74
    %p76 = scmp.eq.s32.totalorder %s15, 0
    %p77 = por %p75, %p76
    %s79 = sadd.s32 %s78, 1
    %p82 = scmp.eq.s32.totalorder %s9, 3
    %p83 = scmp.ne.s32.totalorder %s78, %s80
    %p84 = scmp.eq.s32.totalorder %s9, 0
    %p85 = por %p83, %p84
    %p86 = scmp.ne.s32.totalorder %s78, %s80
    %p87 = scmp.eq.s32.totalorder %s14, 3
    %p88 = por %p86, %p87
    %p89 = scmp.ne.s32.totalorder %s80, %s81
    %p90 = scmp.eq.s32.totalorder %s14, 0
    %p91 = por %p89, %p90
    %p92 = scmp.ne.s32.totalorder %s80, %s81
    %p93 = scmp.eq.s32.totalorder %s15, 3
    %p94 = por %p92, %p93
    %p96 = scmp.ne.s32.totalorder %s81, %s95
    %p97 = scmp.eq.s32.totalorder %s15, 0
    %p98 = por %p96, %p97
    %s99 = ssub.s32 %s16, %s28
    %s100 = ssub.s32 %s17, %s24
    %s101 = sor.u32 %s99, %s100
    %p102 = scmp.eq.s32.totalorder %s101, 0
    %s104 = sadd.s32 %s103, 1
    %s105 = scalar_select %p102, %s103, %s104
    %p108 = pneg %p102
    %p109 = scmp.eq.s32.totalorder %s9, 3
    %p110 = por %p108, %p109
    %p111 = scmp.ne.s32.totalorder %s103, %s106
    %p112 = scmp.eq.s32.totalorder %s9, 0
    %p113 = por %p111, %p112
    %p114 = scmp.ne.s32.totalorder %s103, %s106
    %p115 = scmp.eq.s32.totalorder %s14, 3
    %p116 = por %p114, %p115
    %p117 = scmp.ne.s32.totalorder %s106, %s107
    %p118 = scmp.eq.s32.totalorder %s14, 0
    %p119 = por %p117, %p118
    %p120 = scmp.ne.s32.totalorder %s106, %s107
    %p121 = scmp.eq.s32.totalorder %s15, 3
    %p122 = por %p120, %p121
    %p124 = scmp.ne.s32.totalorder %s107, %s123
    %p125 = scmp.eq.s32.totalorder %s15, 0
    %p126 = por %p124, %p125
    %p127 = scmp.le.s32.totalorder 1, %s9
    %p128 = scmp.lt.s32.totalorder %s9, 5
    %p129 = pnand %p127, %p128
    %p130 = pneg %p129
    // Predicated region
    $region9: #{shrinknet_forward.6} parent=5 // pred_check
      _
    $region10: #{shrinknet_forward.6} parent=5 // pred_check_branch
      %132 = sbr.rel (%p129) target = $region12
    $region11: #{shrinknet_forward.6} parent=5 // pred_region
      %s133 = ssub.s32 %s9, 1
      // Predicated region
      $region13: #{shrinknet_forward.6} parent=11 // pred_check
        %p134 = pneg %p70
      $region14: #{shrinknet_forward.6} parent=11 // pred_check_branch
        %136 = sbr.rel (%p134) target = $region16
      $region15: #{shrinknet_forward.6} parent=11 // pred_region
        _
      $region16: #{shrinknet_forward.6} parent=11 // pred_fallthru
        _
      // Predicated region
      $region17: #{shrinknet_forward.6} parent=11 // pred_check
        %p137 = pneg %p91
      $region18: #{shrinknet_forward.6} parent=11 // pred_check_branch
        %139 = sbr.rel (%p137) target = $region20
      $region19: #{shrinknet_forward.6} parent=11 // pred_region
        _
      $region20: #{shrinknet_forward.6} parent=11 // pred_fallthru
        _
    $region12: #{shrinknet_forward.6} parent=5 // pred_fallthru
      _
    %p140 = scmp.lt.s32.totalorder %s9, 4
    // Predicated region
    $region21: #{shrinknet_forward.6} parent=5 // pred_check
      %p141 = pneg %p140
    $region22: #{shrinknet_forward.6} parent=5 // pred_check_branch
      %143 = sbr.rel (%p141) target = $region24
    $region23: #{shrinknet_forward.6} parent=5 // pred_region
      // Predicated region
      $region25: #{shrinknet_forward.6} parent=23 // pred_check
        %p144 = pneg %p43
      $region26: #{shrinknet_forward.6} parent=23 // pred_check_branch
        %146 = sbr.rel (%p144) target = $region28
      $region27: #{shrinknet_forward.6} parent=23 // pred_region
        %p147 = scmp.lt.s32.totalorder %s16, 1
        %s148 = scalar_select %p147, %s16, 1
        %p149 = scmp.lt.s32.totalorder %s17, 1
        %s150 = scalar_select %p149, %s17, 1
        %s151 = smul.addr %s150, 36
        %s152 = smul.addr %s148, 72
        %s153 = sadd.s32 %s151, %s152
        %s154 = smul.addr %s153, 4
        %s155 = scalar_lea.vmem %s0, %s154
      $region28: #{shrinknet_forward.6} parent=23 // pred_fallthru
        _
    $region24: #{shrinknet_forward.6} parent=5 // pred_fallthru
      _
    %p156 = scmp.le.s32.totalorder 1, %s9
    %p157 = scmp.lt.s32.totalorder %s9, 5
    %p158 = pnand %p156, %p157
    %p159 = pneg %p158
    // Predicated region
    $region29: #{shrinknet_forward.6} parent=5 // pred_check
      _
    $region30: #{shrinknet_forward.6} parent=5 // pred_check_branch
      %161 = sbr.rel (%p158) target = $region32
    $region31: #{shrinknet_forward.6} parent=5 // pred_region
      %s162 = ssub.s32 %s9, 1
      %p163 = scmp.lt.s32.totalorder %s18, 1
      %s164 = scalar_select %p163, %s18, 1
      %p165 = scmp.lt.s32.totalorder %s19, 1
      %s166 = scalar_select %p165, %s19, 1
      %s167 = smul.addr %s166, 36
      %s168 = smul.addr %s164, 72
      %s169 = sadd.s32 %s167, %s168
      %s170 = smul.addr %s169, 4
      %s171 = scalar_lea.vmem %s0, %s170
      %p172 = pneg %p49
      %p173 = pneg %p46
      %p174 = pneg %p70
      %p175 = pneg %p67
      %p176 = pneg %p91
      %p177 = pneg %p88
      %p178 = pneg %p119
      %p179 = pneg %p116
      %s180 = smul.u32 16, %s19
      %p181 = scmp.lt.s32.totalorder %s18, 1
      %s182 = scalar_select %p181, %s18, 1
      %p183 = scmp.lt.s32.totalorder %s180, 31
      %s184 = scalar_select %p183, %s180, 31
      %s185 = smul.addr %s182, 32
      %s186 = sadd.s32 %s184, %s185
      %s187 = smul.addr %s186, 8
      %s188 = scalar_lea.vmem %s3, %s187
      %p189 = scmp.lt.s32.totalorder %s18, 1
      %s190 = scalar_select %p189, %s18, 1
      %p191 = scmp.lt.s32.totalorder %s19, 1
      %s192 = scalar_select %p191, %s19, 1
      %s193 = smul.addr %s192, 36
      %s194 = smul.addr %s190, 72
      %s195 = sadd.s32 %s193, %s194
      %s196 = smul.addr %s195, 4
      %s197 = scalar_lea.vmem %s0, %s196
      %s198 = smul.u32 16, %s19
      %p199 = scmp.lt.s32.totalorder %s18, 1
      %s200 = scalar_select %p199, %s18, 1
      %p201 = scmp.lt.s32.totalorder %s198, 31
      %s202 = scalar_select %p201, %s198, 31
      %s203 = smul.addr %s200, 32
      %s204 = sadd.s32 %s202, %s203
      %s205 = smul.addr %s204, 8
      %s206 = scalar_lea.vmem %s3, %s205
      %s207 = smul.u32 16, %s19
      %v209 = vld [vmem:[%s197] sm:$0xf]
      %v210 = vld [vmem:[%s197 + $0x4] sm:$0xf]
      %v211 = vld [vmem:[%s197 + $0x8] sm:$0x3]
      %v212 = vld [vmem:[%s197 + $0xc] sm:$0xf]
      %v213 = vld [vmem:[%s197 + $0x10] sm:$0xf]
      %v214 = vld [vmem:[%s197 + $0x14] sm:$0x3]
      %v215 = vld [vmem:[%s197 + $0x18] sm:$0xf]
      %v216 = vld [vmem:[%s197 + $0x1c] sm:$0xf]
      %v217 = vld [vmem:[%s197 + $0x20] sm:$0x3]
      %v218 = vld [vmem:[%s197 + $0x24] sm:$0xf]
      %v219 = vld [vmem:[%s197 + $0x28] sm:$0xf]
      %v220 = vld [vmem:[%s197 + $0x2c] sm:$0x3]
      %v221 = vld [vmem:[%s197 + $0x30] sm:$0xf]
      %v222 = vld [vmem:[%s197 + $0x34] sm:$0xf]
      %v223 = vld [vmem:[%s197 + $0x38] sm:$0x3]
      %v224 = vld [vmem:[%s197 + $0x3c] sm:$0xf]
      %v225 = vld [vmem:[%s197 + $0x40] sm:$0xf]
      %v226 = vld [vmem:[%s197 + $0x44] sm:$0x3]
      %v227 = vld [vmem:[%s197 + $0x48] sm:$0xf]
      %v228 = vld [vmem:[%s197 + $0x4c] sm:$0xf]
      %v229 = vld [vmem:[%s197 + $0x50] sm:$0x3]
      %v230 = vld [vmem:[%s197 + $0x54] sm:$0xf]
      %v231 = vld [vmem:[%s197 + $0x58] sm:$0xf]
      %v232 = vld [vmem:[%s197 + $0x5c] sm:$0x3]
      %v233 = vld [vmem:[%s197 + $0x60] sm:$0xf]
      %v234 = vld [vmem:[%s197 + $0x64] sm:$0xf]
      %v235 = vld [vmem:[%s197 + $0x68] sm:$0x3]
      %v236 = vld [vmem:[%s197 + $0x6c] sm:$0xf]
      %v237 = vld [vmem:[%s197 + $0x70] sm:$0xf]
      %v238 = vld [vmem:[%s197 + $0x74] sm:$0x3]
      %v239 = vld [vmem:[%s197 + $0x78] sm:$0xf]
      %v240 = vld [vmem:[%s197 + $0x7c] sm:$0xf]
      %v241 = vld [vmem:[%s197 + $0x80] sm:$0x3]
      %v242 = vld [vmem:[%s197 + $0x84] sm:$0xf]
      %v243 = vld [vmem:[%s197 + $0x88] sm:$0xf]
      %v244 = vld [vmem:[%s197 + $0x8c] sm:$0x3]
      %v261 = vunpack.c.l.b16 %v209
      %v262 = vunpack.c.l.b16 %v210
      %v263 = vunpack.c.l.b16 %v212
      %v264 = vunpack.c.l.b16 %v213
      %v265 = vunpack.c.l.b16 %v215
      %v266 = vunpack.c.l.b16 %v216
      %v267 = vunpack.c.l.b16 %v218
      %v268 = vunpack.c.l.b16 %v219
      %v269 = vunpack.c.l.b16 %v221
      %v270 = vunpack.c.l.b16 %v222
      %v271 = vunpack.c.l.b16 %v224
      %v272 = vunpack.c.l.b16 %v225
      %v273 = vunpack.c.l.b16 %v227
      %v274 = vunpack.c.l.b16 %v228
      %v275 = vunpack.c.l.b16 %v230
      %v276 = vunpack.c.l.b16 %v231
      %v277 = vpack.c.b16 %v262, %v261
      %v278 = vpack.c.b16 %v264, %v263
      %v279 = vpack.c.b16 %v266, %v265
      %v280 = vpack.c.b16 %v268, %v267
      %v281 = vpack.c.b16 %v270, %v269
      %v282 = vpack.c.b16 %v272, %v271
      %v283 = vpack.c.b16 %v274, %v273
      %v284 = vpack.c.b16 %v276, %v275
      %v293 = vunpack.c.l.b16 %v211
      %v294 = vunpack.c.l.b16 %v214
      %v295 = vunpack.c.l.b16 %v217
      %v296 = vunpack.c.l.b16 %v220
      %v297 = vunpack.c.l.b16 %v223
      %v298 = vunpack.c.l.b16 %v226
      %v299 = vunpack.c.l.b16 %v229
      %v300 = vunpack.c.l.b16 %v232
      %v301 = vpack.c.b16 %v293, %v293
      %v302 = vpack.c.b16 %v294, %v294
      %v303 = vpack.c.b16 %v295, %v295
      %v304 = vpack.c.b16 %v296, %v296
      %v305 = vpack.c.b16 %v297, %v297
      %v306 = vpack.c.b16 %v298, %v298
      %v307 = vpack.c.b16 %v299, %v299
      %v308 = vpack.c.b16 %v300, %v300
      %vm309 = vsmask.f32 7424
      %v311 = vshrl.u32 %v277, 16
      %v313 = vshll.u32 %v277, 16
      %v315 = vrot.slane %v313, 1
      %v316 = vor.u32 %v311, %v315
      %v318 = vshll.u32 %v301, 16
      %v320 = vrot.slane %v318, 1
      %v321 = vsel %vm309, %v316, %v320
      %v323 = vshrl.u32 %v278, 16
      %v325 = vshll.u32 %v278, 16
      %v327 = vrot.slane %v325, 1
      %v328 = vor.u32 %v323, %v327
      %v330 = vshll.u32 %v302, 16
      %v332 = vrot.slane %v330, 1
      %v333 = vsel %vm309, %v328, %v332
      %v335 = vshrl.u32 %v279, 16
      %v337 = vshll.u32 %v279, 16
      %v339 = vrot.slane %v337, 1
      %v340 = vor.u32 %v335, %v339
      %v342 = vshll.u32 %v303, 16
      %v344 = vrot.slane %v342, 1
      %v345 = vsel %vm309, %v340, %v344
      %v347 = vshrl.u32 %v280, 16
      %v349 = vshll.u32 %v280, 16
      %v351 = vrot.slane %v349, 1
      %v352 = vor.u32 %v347, %v351
      %v354 = vshll.u32 %v304, 16
      %v356 = vrot.slane %v354, 1
      %v357 = vsel %vm309, %v352, %v356
      %v359 = vshrl.u32 %v281, 16
      %v361 = vshll.u32 %v281, 16
      %v363 = vrot.slane %v361, 1
      %v364 = vor.u32 %v359, %v363
      %v366 = vshll.u32 %v305, 16
      %v368 = vrot.slane %v366, 1
      %v369 = vsel %vm309, %v364, %v368
      %v371 = vshrl.u32 %v282, 16
      %v373 = vshll.u32 %v282, 16
      %v375 = vrot.slane %v373, 1
      %v376 = vor.u32 %v371, %v375
      %v378 = vshll.u32 %v306, 16
      %v380 = vrot.slane %v378, 1
      %v381 = vsel %vm309, %v376, %v380
      %v383 = vshrl.u32 %v283, 16
      %v385 = vshll.u32 %v283, 16
      %v387 = vrot.slane %v385, 1
      %v388 = vor.u32 %v383, %v387
      %v390 = vshll.u32 %v307, 16
      %v392 = vrot.slane %v390, 1
      %v393 = vsel %vm309, %v388, %v392
      %v395 = vshrl.u32 %v284, 16
      %v397 = vshll.u32 %v284, 16
      %v399 = vrot.slane %v397, 1
      %v400 = vor.u32 %v395, %v399
      %v402 = vshll.u32 %v308, 16
      %v404 = vrot.slane %v402, 1
      %v405 = vsel %vm309, %v400, %v404
      %406 = vrot.lane.b32.xlu0 %v321, 56
      %v407 = vpop.permute.xlu0 %406
      %408 = vrot.lane.b32.xlu0 %v333, 56
      %v409 = vpop.permute.xlu0 %408
      %410 = vrot.lane.b32.xlu0 %v345, 56
      %v411 = vpop.permute.xlu0 %410
      %412 = vrot.lane.b32.xlu0 %v357, 56
      %v413 = vpop.permute.xlu0 %412
      %414 = vrot.lane.b32.xlu0 %v369, 56
      %v415 = vpop.permute.xlu0 %414
      %416 = vrot.lane.b32.xlu0 %v381, 56
      %v417 = vpop.permute.xlu0 %416
      %418 = vrot.lane.b32.xlu0 %v393, 56
      %v419 = vpop.permute.xlu0 %418
      %420 = vrot.lane.b32.xlu0 %v405, 56
      %v421 = vpop.permute.xlu0 %420
      %vm422 = vcmask 1046528
      %v423 = vrot.slane %v277, 1
      %v424 = vrot.slane %v301, 1
      %v425 = vsel %vm422, %v423, %v424
      %v426 = vrot.slane %v278, 1
      %v427 = vrot.slane %v302, 1
      %v428 = vsel %vm422, %v426, %v427
      %v429 = vrot.slane %v279, 1
      %v430 = vrot.slane %v303, 1
      %v431 = vsel %vm422, %v429, %v430
      %v432 = vrot.slane %v280, 1
      %v433 = vrot.slane %v304, 1
      %v434 = vsel %vm422, %v432, %v433
      %v435 = vrot.slane %v281, 1
      %v436 = vrot.slane %v305, 1
      %v437 = vsel %vm422, %v435, %v436
      %v438 = vrot.slane %v282, 1
      %v439 = vrot.slane %v306, 1
      %v440 = vsel %vm422, %v438, %v439
      %v441 = vrot.slane %v283, 1
      %v442 = vrot.slane %v307, 1
      %v443 = vsel %vm422, %v441, %v442
      %v444 = vrot.slane %v284, 1
      %v445 = vrot.slane %v308, 1
      %v446 = vsel %vm422, %v444, %v445
      %447 = vrot.lane.b32.xlu0 %v425, 112
      %v448 = vpop.permute.xlu0 %447
      %449 = vrot.lane.b32.xlu0 %v428, 112
      %v450 = vpop.permute.xlu0 %449
      %451 = vrot.lane.b32.xlu0 %v431, 112
      %v452 = vpop.permute.xlu0 %451
      %453 = vrot.lane.b32.xlu0 %v434, 112
      %v454 = vpop.permute.xlu0 %453
      %455 = vrot.lane.b32.xlu0 %v437, 112
      %v456 = vpop.permute.xlu0 %455
      %457 = vrot.lane.b32.xlu0 %v440, 112
      %v458 = vpop.permute.xlu0 %457
      %459 = vrot.lane.b32.xlu0 %v443, 112
      %v460 = vpop.permute.xlu0 %459
      %461 = vrot.lane.b32.xlu0 %v446, 112
      %v462 = vpop.permute.xlu0 %461
      %vm463 = vsmask.f32 6400
      %v464 = vrot.slane %v311, 1
      %v465 = vrot.slane %v313, 2
      %v466 = vor.u32 %v464, %v465
      %v467 = vshrl.u32 %v301, 16
      %v469 = vrot.slane %v467, 1
      %v470 = vrot.slane %v318, 2
      %v471 = vor.u32 %v469, %v470
      %v472 = vsel %vm463, %v466, %v471
      %v473 = vrot.slane %v323, 1
      %v474 = vrot.slane %v325, 2
      %v475 = vor.u32 %v473, %v474
      %v476 = vshrl.u32 %v302, 16
      %v478 = vrot.slane %v476, 1
      %v479 = vrot.slane %v330, 2
      %v480 = vor.u32 %v478, %v479
      %v481 = vsel %vm463, %v475, %v480
      %v482 = vrot.slane %v335, 1
      %v483 = vrot.slane %v337, 2
      %v484 = vor.u32 %v482, %v483
      %v485 = vshrl.u32 %v303, 16
      %v487 = vrot.slane %v485, 1
      %v488 = vrot.slane %v342, 2
      %v489 = vor.u32 %v487, %v488
      %v490 = vsel %vm463, %v484, %v489
      %v491 = vrot.slane %v347, 1
      %v492 = vrot.slane %v349, 2
      %v493 = vor.u32 %v491, %v492
      %v494 = vshrl.u32 %v304, 16
      %v496 = vrot.slane %v494, 1
      %v497 = vrot.slane %v354, 2
      %v498 = vor.u32 %v496, %v497
      %v499 = vsel %vm463, %v493, %v498
      %v500 = vrot.slane %v359, 1
      %v501 = vrot.slane %v361, 2
      %v502 = vor.u32 %v500, %v501
      %v503 = vshrl.u32 %v305, 16
      %v505 = vrot.slane %v503, 1
      %v506 = vrot.slane %v366, 2
      %v507 = vor.u32 %v505, %v506
      %v508 = vsel %vm463, %v502, %v507
      %v509 = vrot.slane %v371, 1
      %v510 = vrot.slane %v373, 2
      %v511 = vor.u32 %v509, %v510
      %v512 = vshrl.u32 %v306, 16
      %v514 = vrot.slane %v512, 1
      %v515 = vrot.slane %v378, 2
      %v516 = vor.u32 %v514, %v515
      %v517 = vsel %vm463, %v511, %v516
      %v518 = vrot.slane %v383, 1
      %v519 = vrot.slane %v385, 2
      %v520 = vor.u32 %v518, %v519
      %v521 = vshrl.u32 %v307, 16
      %v523 = vrot.slane %v521, 1
      %v524 = vrot.slane %v390, 2
      %v525 = vor.u32 %v523, %v524
      %v526 = vsel %vm463, %v520, %v525
      %v527 = vrot.slane %v395, 1
      %v528 = vrot.slane %v397, 2
      %v529 = vor.u32 %v527, %v528
      %v530 = vshrl.u32 %v308, 16
      %v532 = vrot.slane %v530, 1
      %v533 = vrot.slane %v402, 2
      %v534 = vor.u32 %v532, %v533
      %v535 = vsel %vm463, %v529, %v534
      %536 = vrot.lane.b32.xlu0 %v472, 40
      %v537 = vpop.permute.xlu0 %536
      %538 = vrot.lane.b32.xlu0 %v481, 40
      %v539 = vpop.permute.xlu0 %538
      %540 = vrot.lane.b32.xlu0 %v490, 40
      %v541 = vpop.permute.xlu0 %540
      %542 = vrot.lane.b32.xlu0 %v499, 40
      %v543 = vpop.permute.xlu0 %542
      %544 = vrot.lane.b32.xlu0 %v508, 40
      %v545 = vpop.permute.xlu0 %544
      %546 = vrot.lane.b32.xlu0 %v517, 40
      %v547 = vpop.permute.xlu0 %546
      %548 = vrot.lane.b32.xlu0 %v526, 40
      %v549 = vpop.permute.xlu0 %548
      %550 = vrot.lane.b32.xlu0 %v535, 40
      %v551 = vpop.permute.xlu0 %550
      %vm552 = vcmask 1045504
      %v553 = vrot.slane %v277, 2
      %v554 = vrot.slane %v301, 2
      %v555 = vsel %vm552, %v553, %v554
      %v556 = vrot.slane %v278, 2
      %v557 = vrot.slane %v302, 2
      %v558 = vsel %vm552, %v556, %v557
      %v559 = vrot.slane %v279, 2
      %v560 = vrot.slane %v303, 2
      %v561 = vsel %vm552, %v559, %v560
      %v562 = vrot.slane %v280, 2
      %v563 = vrot.slane %v304, 2
      %v564 = vsel %vm552, %v562, %v563
      %v565 = vrot.slane %v281, 2
      %v566 = vrot.slane %v305, 2
      %v567 = vsel %vm552, %v565, %v566
      %v568 = vrot.slane %v282, 2
      %v569 = vrot.slane %v306, 2
      %v570 = vsel %vm552, %v568, %v569
      %v571 = vrot.slane %v283, 2
      %v572 = vrot.slane %v307, 2
      %v573 = vsel %vm552, %v571, %v572
      %v574 = vrot.slane %v284, 2
      %v575 = vrot.slane %v308, 2
      %v576 = vsel %vm552, %v574, %v575
      %577 = vrot.lane.b32.xlu0 %v555, 96
      %v578 = vpop.permute.xlu0 %577
      %579 = vrot.lane.b32.xlu0 %v558, 96
      %v580 = vpop.permute.xlu0 %579
      %581 = vrot.lane.b32.xlu0 %v561, 96
      %v582 = vpop.permute.xlu0 %581
      %583 = vrot.lane.b32.xlu0 %v564, 96
      %v584 = vpop.permute.xlu0 %583
      %585 = vrot.lane.b32.xlu0 %v567, 96
      %v586 = vpop.permute.xlu0 %585
      %587 = vrot.lane.b32.xlu0 %v570, 96
      %v588 = vpop.permute.xlu0 %587
      %589 = vrot.lane.b32.xlu0 %v573, 96
      %v590 = vpop.permute.xlu0 %589
      %591 = vrot.lane.b32.xlu0 %v576, 96
      %v592 = vpop.permute.xlu0 %591
      %vm593 = vcmask 457728
      %v595 = vsel %vm593, %v277, %v407
      %v597 = vsel %vm593, %v278, %v409
      %v599 = vsel %vm593, %v279, %v411
      %v601 = vsel %vm593, %v280, %v413
      %v603 = vsel %vm593, %v281, %v415
      %v605 = vsel %vm593, %v282, %v417
      %v607 = vsel %vm593, %v283, %v419
      %v609 = vsel %vm593, %v284, %v421
      %vm610 = vcmask 916480
      %v612 = vsel %vm610, %v595, %v448
      %v615 = vsel %vm610, %v597, %v450
      %v618 = vsel %vm610, %v599, %v452
      %v621 = vsel %vm610, %v601, %v454
      %v624 = vsel %vm610, %v603, %v456
      %v627 = vsel %vm610, %v605, %v458
      %v630 = vsel %vm610, %v607, %v460
      %v633 = vsel %vm610, %v609, %v462
      %vm635 = vcmask 326656
      %v637 = vsel %vm635, %v448, %v537
      %v639 = vsel %vm635, %v450, %v539
      %v641 = vsel %vm635, %v452, %v541
      %v643 = vsel %vm635, %v454, %v543
      %v645 = vsel %vm635, %v456, %v545
      %v647 = vsel %vm635, %v458, %v547
      %v649 = vsel %vm635, %v460, %v549
      %v651 = vsel %vm635, %v462, %v551
      %vm652 = vcmask 785408
      %v654 = vsel %vm652, %v637, %v578
      %v657 = vsel %vm652, %v639, %v580
      %v660 = vsel %vm652, %v641, %v582
      %v663 = vsel %vm652, %v643, %v584
      %v666 = vsel %vm652, %v645, %v586
      %v669 = vsel %vm652, %v647, %v588
      %v672 = vsel %vm652, %v649, %v590
      %v675 = vsel %vm652, %v651, %v592
      %v679 = vunpack.c.l.b16 %v233
      %v680 = vunpack.c.l.b16 %v234
      %v681 = vpack.c.b16 %v680, %v679
      %v683 = vunpack.c.l.b16 %v235
      %v684 = vpack.c.b16 %v683, %v683
      %v686 = vshrl.u32 %v681, 16
      %v688 = vshll.u32 %v681, 16
      %v690 = vrot.slane %v688, 1
      %v691 = vor.u32 %v686, %v690
      %v693 = vshll.u32 %v684, 16
      %v695 = vrot.slane %v693, 1
      %v696 = vsel %vm309, %v691, %v695
      %697 = vrot.lane.b32.xlu0 %v696, 56
      %v698 = vpop.permute.xlu0 %697
      %v699 = vrot.slane %v681, 1
      %v700 = vrot.slane %v684, 1
      %v701 = vsel %vm422, %v699, %v700
      %702 = vrot.lane.b32.xlu0 %v701, 112
      %v703 = vpop.permute.xlu0 %702
      %v704 = vrot.slane %v686, 1
      %v705 = vrot.slane %v688, 2
      %v706 = vor.u32 %v704, %v705
      %v707 = vshrl.u32 %v684, 16
      %v709 = vrot.slane %v707, 1
      %v710 = vrot.slane %v693, 2
      %v711 = vor.u32 %v709, %v710
      %v712 = vsel %vm463, %v706, %v711
      %713 = vrot.lane.b32.xlu0 %v712, 40
      %v714 = vpop.permute.xlu0 %713
      %v715 = vrot.slane %v681, 2
      %v716 = vrot.slane %v684, 2
      %v717 = vsel %vm552, %v715, %v716
      %718 = vrot.lane.b32.xlu0 %v717, 96
      %v719 = vpop.permute.xlu0 %718
      %v721 = vsel %vm593, %v681, %v698
      %v723 = vsel %vm610, %v721, %v703
      %v725 = vsel %vm635, %v703, %v714
      %v727 = vsel %vm652, %v725, %v719
      %v730 = vunpack.c.l.b16 %v236
      %v731 = vunpack.c.l.b16 %v237
      %v732 = vpack.c.b16 %v731, %v730
      %v734 = vunpack.c.l.b16 %v238
      %v735 = vpack.c.b16 %v734, %v734
      %v737 = vshrl.u32 %v732, 16
      %v739 = vshll.u32 %v732, 16
      %v741 = vrot.slane %v739, 1
      %v742 = vor.u32 %v737, %v741
      %v744 = vshll.u32 %v735, 16
      %v746 = vrot.slane %v744, 1
      %v747 = vsel %vm309, %v742, %v746
      %748 = vrot.lane.b32.xlu0 %v747, 56
      %v749 = vpop.permute.xlu0 %748
      %v750 = vrot.slane %v732, 1
      %v751 = vrot.slane %v735, 1
      %v752 = vsel %vm422, %v750, %v751
      %753 = vrot.lane.b32.xlu0 %v752, 112
      %v754 = vpop.permute.xlu0 %753
      %v755 = vrot.slane %v737, 1
      %v756 = vrot.slane %v739, 2
      %v757 = vor.u32 %v755, %v756
      %v758 = vshrl.u32 %v735, 16
      %v760 = vrot.slane %v758, 1
      %v761 = vrot.slane %v744, 2
      %v762 = vor.u32 %v760, %v761
      %v763 = vsel %vm463, %v757, %v762
      %764 = vrot.lane.b32.xlu0 %v763, 40
      %v765 = vpop.permute.xlu0 %764
      %v766 = vrot.slane %v732, 2
      %v767 = vrot.slane %v735, 2
      %v768 = vsel %vm552, %v766, %v767
      %769 = vrot.lane.b32.xlu0 %v768, 96
      %v770 = vpop.permute.xlu0 %769
      %v772 = vsel %vm593, %v732, %v749
      %v774 = vsel %vm610, %v772, %v754
      %v776 = vsel %vm635, %v754, %v765
      %v778 = vsel %vm652, %v776, %v770
      %v781 = vunpack.c.l.b16 %v239
      %v782 = vunpack.c.l.b16 %v240
      %v783 = vpack.c.b16 %v782, %v781
      %v785 = vunpack.c.l.b16 %v241
      %v786 = vpack.c.b16 %v785, %v785
      %v788 = vshrl.u32 %v783, 16
      %v790 = vshll.u32 %v783, 16
      %v792 = vrot.slane %v790, 1
      %v793 = vor.u32 %v788, %v792
      %v795 = vshll.u32 %v786, 16
      %v797 = vrot.slane %v795, 1
      %v798 = vsel %vm309, %v793, %v797
      %799 = vrot.lane.b32.xlu0 %v798, 56
      %v800 = vpop.permute.xlu0 %799
      %v801 = vrot.slane %v783, 1
      %v802 = vrot.slane %v786, 1
      %v803 = vsel %vm422, %v801, %v802
      %804 = vrot.lane.b32.xlu0 %v803, 112
      %v805 = vpop.permute.xlu0 %804
      %v806 = vrot.slane %v788, 1
      %v807 = vrot.slane %v790, 2
      %v808 = vor.u32 %v806, %v807
      %v809 = vshrl.u32 %v786, 16
      %v811 = vrot.slane %v809, 1
      %v812 = vrot.slane %v795, 2
      %v813 = vor.u32 %v811, %v812
      %v814 = vsel %vm463, %v808, %v813
      %815 = vrot.lane.b32.xlu0 %v814, 40
      %v816 = vpop.permute.xlu0 %815
      %v817 = vrot.slane %v783, 2
      %v818 = vrot.slane %v786, 2
      %v819 = vsel %vm552, %v817, %v818
      %820 = vrot.lane.b32.xlu0 %v819, 96
      %v821 = vpop.permute.xlu0 %820
      %v823 = vsel %vm593, %v783, %v800
      %v825 = vsel %vm610, %v823, %v805
      %v827 = vsel %vm635, %v805, %v816
      %v829 = vsel %vm652, %v827, %v821
      %v832 = vunpack.c.l.b16 %v242
      %v833 = vunpack.c.l.b16 %v243
      %v834 = vpack.c.b16 %v833, %v832
      %v836 = vunpack.c.l.b16 %v244
      %v837 = vpack.c.b16 %v836, %v836
      %v839 = vshrl.u32 %v834, 16
      %v841 = vshll.u32 %v834, 16
      %v843 = vrot.slane %v841, 1
      %v844 = vor.u32 %v839, %v843
      %v846 = vshll.u32 %v837, 16
      %v848 = vrot.slane %v846, 1
      %v849 = vsel %vm309, %v844, %v848
      %850 = vrot.lane.b32.xlu0 %v849, 56
      %v851 = vpop.permute.xlu0 %850
      %v852 = vrot.slane %v834, 1
      %v853 = vrot.slane %v837, 1
      %v854 = vsel %vm422, %v852, %v853
      %855 = vrot.lane.b32.xlu0 %v854, 112
      %v856 = vpop.permute.xlu0 %855
      %v857 = vrot.slane %v839, 1
      %v858 = vrot.slane %v841, 2
      %v859 = vor.u32 %v857, %v858
      %v860 = vshrl.u32 %v837, 16
      %v862 = vrot.slane %v860, 1
      %v863 = vrot.slane %v846, 2
      %v864 = vor.u32 %v862, %v863
      %v865 = vsel %vm463, %v859, %v864
      %866 = vrot.lane.b32.xlu0 %v865, 40
      %v867 = vpop.permute.xlu0 %866
      %v868 = vrot.slane %v834, 2
      %v869 = vrot.slane %v837, 2
      %v870 = vsel %vm552, %v868, %v869
      %871 = vrot.lane.b32.xlu0 %v870, 96
      %v872 = vpop.permute.xlu0 %871
      %v874 = vsel %vm593, %v834, %v851
      %v876 = vsel %vm610, %v874, %v856
      %v878 = vsel %vm635, %v856, %v867
      %v880 = vsel %vm652, %v878, %v872
      %897 = vrot.lane.b32.xlu0 %v615, 24
      %v898 = vpop.permute.xlu0 %897
      %899 = vrot.lane.b32.xlu0 %v657, 24
      %v900 = vpop.permute.xlu0 %899
      %901 = vrot.lane.b32.xlu0 %v580, 24
      %v902 = vpop.permute.xlu0 %901
      %903 = vrot.lane.b32.xlu0 %v618, 24
      %v904 = vpop.permute.xlu0 %903
      %905 = vrot.lane.b32.xlu0 %v660, 24
      %v906 = vpop.permute.xlu0 %905
      %907 = vrot.lane.b32.xlu0 %v582, 24
      %v908 = vpop.permute.xlu0 %907
      %909 = vrot.lane.b32.xlu0 %v621, 24
      %v910 = vpop.permute.xlu0 %909
      %911 = vrot.lane.b32.xlu0 %v663, 24
      %v912 = vpop.permute.xlu0 %911
      %913 = vrot.lane.b32.xlu0 %v584, 24
      %v914 = vpop.permute.xlu0 %913
      %915 = vrot.lane.b32.xlu0 %v624, 24
      %v916 = vpop.permute.xlu0 %915
      %917 = vrot.lane.b32.xlu0 %v666, 24
      %v918 = vpop.permute.xlu0 %917
      %919 = vrot.lane.b32.xlu0 %v586, 24
      %v920 = vpop.permute.xlu0 %919
      %921 = vrot.lane.b32.xlu0 %v627, 24
      %v922 = vpop.permute.xlu0 %921
      %923 = vrot.lane.b32.xlu0 %v669, 24
      %v924 = vpop.permute.xlu0 %923
      %925 = vrot.lane.b32.xlu0 %v588, 24
      %v926 = vpop.permute.xlu0 %925
      %927 = vrot.lane.b32.xlu0 %v630, 24
      %v928 = vpop.permute.xlu0 %927
      %929 = vrot.lane.b32.xlu0 %v672, 24
      %v930 = vpop.permute.xlu0 %929
      %931 = vrot.lane.b32.xlu0 %v590, 24
      %v932 = vpop.permute.xlu0 %931
      %933 = vrot.lane.b32.xlu0 %v633, 24
      %v934 = vpop.permute.xlu0 %933
      %935 = vrot.lane.b32.xlu0 %v675, 24
      %v936 = vpop.permute.xlu0 %935
      %937 = vrot.lane.b32.xlu0 %v592, 24
      %v938 = vpop.permute.xlu0 %937
      %939 = vrot.lane.b32.xlu0 %v723, 24
      %v940 = vpop.permute.xlu0 %939
      %941 = vrot.lane.b32.xlu0 %v727, 24
      %v942 = vpop.permute.xlu0 %941
      %943 = vrot.lane.b32.xlu0 %v719, 24
      %v944 = vpop.permute.xlu0 %943
      %vm945 = vcmask 195584
      %v946 = vsel %vm945, %v898, %v900
      %v947 = vsel %vm945, %v900, %v902
      %v948 = vsel %vm945, %v904, %v906
      %v949 = vsel %vm945, %v906, %v908
      %v950 = vsel %vm945, %v910, %v912
      %v951 = vsel %vm945, %v912, %v914
      %v952 = vsel %vm945, %v916, %v918
      %v953 = vsel %vm945, %v918, %v920
      %v954 = vsel %vm945, %v922, %v924
      %v955 = vsel %vm945, %v924, %v926
      %v956 = vsel %vm945, %v928, %v930
      %v957 = vsel %vm945, %v930, %v932
      %v958 = vsel %vm945, %v934, %v936
      %v959 = vsel %vm945, %v936, %v938
      %v960 = vsel %vm945, %v940, %v942
      %v961 = vsel %vm945, %v942, %v944
      %972 = vrot.lane.b32.xlu0 %v618, 48
      %v973 = vpop.permute.xlu0 %972
      %974 = vrot.lane.b32.xlu0 %v660, 48
      %v975 = vpop.permute.xlu0 %974
      %976 = vrot.lane.b32.xlu0 %v582, 48
      %v977 = vpop.permute.xlu0 %976
      %978 = vrot.lane.b32.xlu0 %v621, 48
      %v979 = vpop.permute.xlu0 %978
      %980 = vrot.lane.b32.xlu0 %v663, 48
      %v981 = vpop.permute.xlu0 %980
      %982 = vrot.lane.b32.xlu0 %v584, 48
      %v983 = vpop.permute.xlu0 %982
      %984 = vrot.lane.b32.xlu0 %v624, 48
      %v985 = vpop.permute.xlu0 %984
      %986 = vrot.lane.b32.xlu0 %v666, 48
      %v987 = vpop.permute.xlu0 %986
      %988 = vrot.lane.b32.xlu0 %v586, 48
      %v989 = vpop.permute.xlu0 %988
      %990 = vrot.lane.b32.xlu0 %v627, 48
      %v991 = vpop.permute.xlu0 %990
      %992 = vrot.lane.b32.xlu0 %v669, 48
      %v993 = vpop.permute.xlu0 %992
      %994 = vrot.lane.b32.xlu0 %v588, 48
      %v995 = vpop.permute.xlu0 %994
      %996 = vrot.lane.b32.xlu0 %v630, 48
      %v997 = vpop.permute.xlu0 %996
      %998 = vrot.lane.b32.xlu0 %v672, 48
      %v999 = vpop.permute.xlu0 %998
      %1000 = vrot.lane.b32.xlu0 %v590, 48
      %v1001 = vpop.permute.xlu0 %1000
      %1002 = vrot.lane.b32.xlu0 %v633, 48
      %v1003 = vpop.permute.xlu0 %1002
      %1004 = vrot.lane.b32.xlu0 %v675, 48
      %v1005 = vpop.permute.xlu0 %1004
      %1006 = vrot.lane.b32.xlu0 %v592, 48
      %v1007 = vpop.permute.xlu0 %1006
      %1008 = vrot.lane.b32.xlu0 %v723, 48
      %v1009 = vpop.permute.xlu0 %1008
      %1010 = vrot.lane.b32.xlu0 %v727, 48
      %v1011 = vpop.permute.xlu0 %1010
      %1012 = vrot.lane.b32.xlu0 %v719, 48
      %v1013 = vpop.permute.xlu0 %1012
      %1014 = vrot.lane.b32.xlu0 %v774, 48
      %v1015 = vpop.permute.xlu0 %1014
      %1016 = vrot.lane.b32.xlu0 %v778, 48
      %v1017 = vpop.permute.xlu0 %1016
      %1018 = vrot.lane.b32.xlu0 %v770, 48
      %v1019 = vpop.permute.xlu0 %1018
      %vm1020 = vcmask 392192
      %v1021 = vsel %vm1020, %v973, %v975
      %v1022 = vsel %vm1020, %v975, %v977
      %v1023 = vsel %vm1020, %v979, %v981
      %v1024 = vsel %vm1020, %v981, %v983
      %v1025 = vsel %vm1020, %v985, %v987
      %v1026 = vsel %vm1020, %v987, %v989
      %v1027 = vsel %vm1020, %v991, %v993
      %v1028 = vsel %vm1020, %v993, %v995
      %v1029 = vsel %vm1020, %v997, %v999
      %v1030 = vsel %vm1020, %v999, %v1001
      %v1031 = vsel %vm1020, %v1003, %v1005
      %v1032 = vsel %vm1020, %v1005, %v1007
      %v1033 = vsel %vm1020, %v1009, %v1011
      %v1034 = vsel %vm1020, %v1011, %v1013
      %v1035 = vsel %vm1020, %v1015, %v1017
      %v1036 = vsel %vm1020, %v1017, %v1019
      %1047 = vrot.lane.b32.xlu0 %v621, 72
      %v1048 = vpop.permute.xlu0 %1047
      %1049 = vrot.lane.b32.xlu0 %v663, 72
      %v1050 = vpop.permute.xlu0 %1049
      %1051 = vrot.lane.b32.xlu0 %v584, 72
      %v1052 = vpop.permute.xlu0 %1051
      %1053 = vrot.lane.b32.xlu0 %v624, 72
      %v1054 = vpop.permute.xlu0 %1053
      %1055 = vrot.lane.b32.xlu0 %v666, 72
      %v1056 = vpop.permute.xlu0 %1055
      %1057 = vrot.lane.b32.xlu0 %v586, 72
      %v1058 = vpop.permute.xlu0 %1057
      %1059 = vrot.lane.b32.xlu0 %v627, 72
      %v1060 = vpop.permute.xlu0 %1059
      %1061 = vrot.lane.b32.xlu0 %v669, 72
      %v1062 = vpop.permute.xlu0 %1061
      %1063 = vrot.lane.b32.xlu0 %v588, 72
      %v1064 = vpop.permute.xlu0 %1063
      %1065 = vrot.lane.b32.xlu0 %v630, 72
      %v1066 = vpop.permute.xlu0 %1065
      %1067 = vrot.lane.b32.xlu0 %v672, 72
      %v1068 = vpop.permute.xlu0 %1067
      %1069 = vrot.lane.b32.xlu0 %v590, 72
      %v1070 = vpop.permute.xlu0 %1069
      %1071 = vrot.lane.b32.xlu0 %v633, 72
      %v1072 = vpop.permute.xlu0 %1071
      %1073 = vrot.lane.b32.xlu0 %v675, 72
      %v1074 = vpop.permute.xlu0 %1073
      %1075 = vrot.lane.b32.xlu0 %v592, 72
      %v1076 = vpop.permute.xlu0 %1075
      %1077 = vrot.lane.b32.xlu0 %v723, 72
      %v1078 = vpop.permute.xlu0 %1077
      %1079 = vrot.lane.b32.xlu0 %v727, 72
      %v1080 = vpop.permute.xlu0 %1079
      %1081 = vrot.lane.b32.xlu0 %v719, 72
      %v1082 = vpop.permute.xlu0 %1081
      %1083 = vrot.lane.b32.xlu0 %v774, 72
      %v1084 = vpop.permute.xlu0 %1083
      %1085 = vrot.lane.b32.xlu0 %v778, 72
      %v1086 = vpop.permute.xlu0 %1085
      %1087 = vrot.lane.b32.xlu0 %v770, 72
      %v1088 = vpop.permute.xlu0 %1087
      %1089 = vrot.lane.b32.xlu0 %v825, 72
      %v1090 = vpop.permute.xlu0 %1089
      %1091 = vrot.lane.b32.xlu0 %v829, 72
      %v1092 = vpop.permute.xlu0 %1091
      %1093 = vrot.lane.b32.xlu0 %v821, 72
      %v1094 = vpop.permute.xlu0 %1093
      %vm1095 = vcmask 588800
      %v1096 = vsel %vm1095, %v1048, %v1050
      %v1097 = vsel %vm1095, %v1050, %v1052
      %v1098 = vsel %vm1095, %v1054, %v1056
      %v1099 = vsel %vm1095, %v1056, %v1058
      %v1100 = vsel %vm1095, %v1060, %v1062
      %v1101 = vsel %vm1095, %v1062, %v1064
      %v1102 = vsel %vm1095, %v1066, %v1068
      %v1103 = vsel %vm1095, %v1068, %v1070
      %v1104 = vsel %vm1095, %v1072, %v1074
      %v1105 = vsel %vm1095, %v1074, %v1076
      %v1106 = vsel %vm1095, %v1078, %v1080
      %v1107 = vsel %vm1095, %v1080, %v1082
      %v1108 = vsel %vm1095, %v1084, %v1086
      %v1109 = vsel %vm1095, %v1086, %v1088
      %v1110 = vsel %vm1095, %v1090, %v1092
      %v1111 = vsel %vm1095, %v1092, %v1094
      %1122 = vrot.lane.b32.xlu0 %v624, 96
      %v1123 = vpop.permute.xlu0 %1122
      %1124 = vrot.lane.b32.xlu0 %v666, 96
      %v1125 = vpop.permute.xlu0 %1124
      %1126 = vrot.lane.b32.xlu0 %v586, 96
      %v1127 = vpop.permute.xlu0 %1126
      %1128 = vrot.lane.b32.xlu0 %v627, 96
      %v1129 = vpop.permute.xlu0 %1128
      %1130 = vrot.lane.b32.xlu0 %v669, 96
      %v1131 = vpop.permute.xlu0 %1130
      %1132 = vrot.lane.b32.xlu0 %v588, 96
      %v1133 = vpop.permute.xlu0 %1132
      %1134 = vrot.lane.b32.xlu0 %v630, 96
      %v1135 = vpop.permute.xlu0 %1134
      %1136 = vrot.lane.b32.xlu0 %v672, 96
      %v1137 = vpop.permute.xlu0 %1136
      %1138 = vrot.lane.b32.xlu0 %v590, 96
      %v1139 = vpop.permute.xlu0 %1138
      %1140 = vrot.lane.b32.xlu0 %v633, 96
      %v1141 = vpop.permute.xlu0 %1140
      %1142 = vrot.lane.b32.xlu0 %v675, 96
      %v1143 = vpop.permute.xlu0 %1142
      %1144 = vrot.lane.b32.xlu0 %v592, 96
      %v1145 = vpop.permute.xlu0 %1144
      %1146 = vrot.lane.b32.xlu0 %v723, 96
      %v1147 = vpop.permute.xlu0 %1146
      %1148 = vrot.lane.b32.xlu0 %v727, 96
      %v1149 = vpop.permute.xlu0 %1148
      %1150 = vrot.lane.b32.xlu0 %v719, 96
      %v1151 = vpop.permute.xlu0 %1150
      %1152 = vrot.lane.b32.xlu0 %v774, 96
      %v1153 = vpop.permute.xlu0 %1152
      %1154 = vrot.lane.b32.xlu0 %v778, 96
      %v1155 = vpop.permute.xlu0 %1154
      %1156 = vrot.lane.b32.xlu0 %v770, 96
      %v1157 = vpop.permute.xlu0 %1156
      %1158 = vrot.lane.b32.xlu0 %v825, 96
      %v1159 = vpop.permute.xlu0 %1158
      %1160 = vrot.lane.b32.xlu0 %v829, 96
      %v1161 = vpop.permute.xlu0 %1160
      %1162 = vrot.lane.b32.xlu0 %v821, 96
      %v1163 = vpop.permute.xlu0 %1162
      %1164 = vrot.lane.b32.xlu0 %v876, 96
      %v1165 = vpop.permute.xlu0 %1164
      %1166 = vrot.lane.b32.xlu0 %v880, 96
      %v1167 = vpop.permute.xlu0 %1166
      %1168 = vrot.lane.b32.xlu0 %v872, 96
      %v1169 = vpop.permute.xlu0 %1168
      %vm1170 = vcmask 785408
      %v1171 = vsel %vm1170, %v1123, %v1125
      %v1172 = vsel %vm1170, %v1125, %v1127
      %v1173 = vsel %vm1170, %v1129, %v1131
      %v1174 = vsel %vm1170, %v1131, %v1133
      %v1175 = vsel %vm1170, %v1135, %v1137
      %v1176 = vsel %vm1170, %v1137, %v1139
      %v1177 = vsel %vm1170, %v1141, %v1143
      %v1178 = vsel %vm1170, %v1143, %v1145
      %v1179 = vsel %vm1170, %v1147, %v1149
      %v1180 = vsel %vm1170, %v1149, %v1151
      %v1181 = vsel %vm1170, %v1153, %v1155
      %v1182 = vsel %vm1170, %v1155, %v1157
      %v1183 = vsel %vm1170, %v1159, %v1161
      %v1184 = vsel %vm1170, %v1161, %v1163
      %v1185 = vsel %vm1170, %v1165, %v1167
      %v1186 = vsel %vm1170, %v1167, %v1169
      %vm1195 = vcmask 195584
      %v1197 = vsel %vm1195, %v578, %v898
      %v1200 = vsel %vm1195, %v580, %v904
      %v1203 = vsel %vm1195, %v582, %v910
      %v1206 = vsel %vm1195, %v584, %v916
      %v1209 = vsel %vm1195, %v586, %v922
      %v1212 = vsel %vm1195, %v588, %v928
      %v1215 = vsel %vm1195, %v590, %v934
      %v1218 = vsel %vm1195, %v592, %v940
      %vm1220 = vcmask 392192
      %v1223 = vsel %vm1220, %v947, %v973
      %v1227 = vsel %vm1220, %v949, %v979
      %v1231 = vsel %vm1220, %v951, %v985
      %v1235 = vsel %vm1220, %v953, %v991
      %v1239 = vsel %vm1220, %v955, %v997
      %v1243 = vsel %vm1220, %v957, %v1003
      %v1247 = vsel %vm1220, %v959, %v1009
      %v1251 = vsel %vm1220, %v961, %v1015
      %vm1253 = vcmask 588800
      %v1256 = vsel %vm1253, %v1022, %v1048
      %v1260 = vsel %vm1253, %v1024, %v1054
      %v1264 = vsel %vm1253, %v1026, %v1060
      %v1268 = vsel %vm1253, %v1028, %v1066
      %v1272 = vsel %vm1253, %v1030, %v1072
      %v1276 = vsel %vm1253, %v1032, %v1078
      %v1280 = vsel %vm1253, %v1034, %v1084
      %v1284 = vsel %vm1253, %v1036, %v1090
      %v1288 = vsel %vm652, %v1097, %v1123
      %v1292 = vsel %vm652, %v1099, %v1129
      %v1296 = vsel %vm652, %v1101, %v1135
      %v1300 = vsel %vm652, %v1103, %v1141
      %v1304 = vsel %vm652, %v1105, %v1147
      %v1308 = vsel %vm652, %v1107, %v1153
      %v1312 = vsel %vm652, %v1109, %v1159
      %v1316 = vsel %vm652, %v1111, %v1165
      %v1318 = vld [vmem:[%s1] sm:$0xf]
      %v1319 = vld [vmem:[%s1 + $0x4] sm:$0xf]
      %v1320 = vld [vmem:[%s1 + $0x8] sm:$0xf]
      %v1321 = vld [vmem:[%s1 + $0xc] sm:$0xf]
      %v1322 = vld [vmem:[%s1 + $0x10] sm:$0xf]
      %v1323 = vld [vmem:[%s1 + $0x14] sm:$0xf]
      %v1324 = vld [vmem:[%s1 + $0x18] sm:$0xf]
      %v1325 = vld [vmem:[%s1 + $0x1c] sm:$0xf]
      %v1326 = vld [vmem:[%s1 + $0x20] sm:$0xf]
      %v1327 = vld [vmem:[%s1 + $0x24] sm:$0xf]
      %v1328 = vld [vmem:[%s1 + $0x28] sm:$0xf]
      %v1329 = vld [vmem:[%s1 + $0x2c] sm:$0xf]
      %v1330 = vld [vmem:[%s1 + $0x30] sm:$0xf]
      %v1331 = vld [vmem:[%s1 + $0x34] sm:$0xf]
      %v1332 = vld [vmem:[%s1 + $0x38] sm:$0xf]
      %v1333 = vld [vmem:[%s1 + $0x3c] sm:$0xf]
      %v1334 = vld [vmem:[%s1 + $0x40] sm:$0xf]
      %v1335 = vld [vmem:[%s1 + $0x44] sm:$0xf]
      %v1336 = vld [vmem:[%s1 + $0x48] sm:$0xf]
      %v1337 = vld [vmem:[%s1 + $0x4c] sm:$0xf]
      %v1338 = vld [vmem:[%s1 + $0x50] sm:$0xf]
      %v1339 = vld [vmem:[%s1 + $0x54] sm:$0xf]
      %v1340 = vld [vmem:[%s1 + $0x58] sm:$0xf]
      %v1341 = vld [vmem:[%s1 + $0x5c] sm:$0xf]
      %v1342 = vld [vmem:[%s1 + $0x60] sm:$0xf]
      %v1343 = vld [vmem:[%s1 + $0x64] sm:$0xf]
      %v1344 = vld [vmem:[%s1 + $0x68] sm:$0xf]
      %v1345 = vld [vmem:[%s1 + $0x6c] sm:$0xf]
      %v1346 = vld [vmem:[%s1 + $0x70] sm:$0xf]
      %v1347 = vld [vmem:[%s1 + $0x74] sm:$0xf]
      %v1348 = vld [vmem:[%s1 + $0x78] sm:$0xf]
      %v1349 = vld [vmem:[%s1 + $0x7c] sm:$0xf]
      %v1350 = vld [vmem:[%s1 + $0x80] sm:$0xf]
      %v1351 = vld [vmem:[%s1 + $0x84] sm:$0xf]
      %v1352 = vld [vmem:[%s1 + $0x88] sm:$0xf]
      %v1353 = vld [vmem:[%s1 + $0x8c] sm:$0xf]
      %v1354 = vld [vmem:[%s1 + $0x90] sm:$0xf]
      %v1355 = vld [vmem:[%s1 + $0x94] sm:$0xf]
      %v1356 = vld [vmem:[%s1 + $0x98] sm:$0xf]
      %v1357 = vld [vmem:[%s1 + $0x9c] sm:$0xf]
      %v1358 = vld [vmem:[%s1 + $0xa0] sm:$0xf]
      %v1359 = vld [vmem:[%s1 + $0xa4] sm:$0xf]
      %v1360 = vld [vmem:[%s1 + $0xa8] sm:$0xf]
      %v1361 = vld [vmem:[%s1 + $0xac] sm:$0xf]
      %v1362 = vld [vmem:[%s1 + $0xb0] sm:$0xf]
      %v1363 = vld [vmem:[%s1 + $0xb4] sm:$0xf]
      %v1364 = vld [vmem:[%s1 + $0xb8] sm:$0xf]
      %v1365 = vld [vmem:[%s1 + $0xbc] sm:$0xf]
      %v1366 = vld [vmem:[%s1 + $0xc0] sm:$0xf]
      %v1367 = vld [vmem:[%s1 + $0xc4] sm:$0xf]
      %v1368 = vld [vmem:[%s1 + $0xc8] sm:$0xf]
      %v1369 = vld [vmem:[%s1 + $0xcc] sm:$0xf]
      %v1370 = vld [vmem:[%s1 + $0xd0] sm:$0xf]
      %v1371 = vld [vmem:[%s1 + $0xd4] sm:$0xf]
      %v1372 = vld [vmem:[%s1 + $0xd8] sm:$0xf]
      %v1373 = vld [vmem:[%s1 + $0xdc] sm:$0xf]
      %v1374 = vld [vmem:[%s1 + $0xe0] sm:$0xf]
      %v1375 = vld [vmem:[%s1 + $0xe4] sm:$0xf]
      %v1376 = vld [vmem:[%s1 + $0xe8] sm:$0xf]
      %v1377 = vld [vmem:[%s1 + $0xec] sm:$0xf]
      %v1378 = vld [vmem:[%s1 + $0xf0] sm:$0xf]
      %v1379 = vld [vmem:[%s1 + $0xf4] sm:$0xf]
      %v1380 = vld [vmem:[%s1 + $0xf8] sm:$0xf]
      %v1381 = vld [vmem:[%s1 + $0xfc] sm:$0xf]
      %v1382 = vld [vmem:[%s1 + $0x100] sm:$0xf]
      %v1383 = vld [vmem:[%s1 + $0x104] sm:$0xf]
      %v1384 = vld [vmem:[%s1 + $0x108] sm:$0xf]
      %v1385 = vld [vmem:[%s1 + $0x10c] sm:$0xf]
      %v1386 = vld [vmem:[%s1 + $0x110] sm:$0xf]
      %v1387 = vld [vmem:[%s1 + $0x114] sm:$0xf]
      %v1388 = vld [vmem:[%s1 + $0x118] sm:$0xf]
      %v1389 = vld [vmem:[%s1 + $0x11c] sm:$0xf]
      %v1390 = vld [vmem:[%s1 + $0x120] sm:$0xf]
      %v1391 = vld [vmem:[%s1 + $0x124] sm:$0xf]
      %v1392 = vld [vmem:[%s1 + $0x128] sm:$0xf]
      %v1393 = vld [vmem:[%s1 + $0x12c] sm:$0xf]
      %v1394 = vld [vmem:[%s1 + $0x130] sm:$0xf]
      %v1395 = vld [vmem:[%s1 + $0x134] sm:$0xf]
      %v1396 = vld [vmem:[%s1 + $0x138] sm:$0xf]
      %v1397 = vld [vmem:[%s1 + $0x13c] sm:$0xf]
      %v1398 = vld [vmem:[%s1 + $0x140] sm:$0xf]
      %v1399 = vld [vmem:[%s1 + $0x144] sm:$0xf]
      %v1400 = vld [vmem:[%s1 + $0x148] sm:$0xf]
      %v1401 = vld [vmem:[%s1 + $0x14c] sm:$0xf]
      %v1402 = vld [vmem:[%s1 + $0x150] sm:$0xf]
      %v1403 = vld [vmem:[%s1 + $0x154] sm:$0xf]
      %v1404 = vld [vmem:[%s1 + $0x158] sm:$0xf]
      %v1405 = vld [vmem:[%s1 + $0x15c] sm:$0xf]
      %v1406 = vld [vmem:[%s1 + $0x160] sm:$0xf]
      %v1407 = vld [vmem:[%s1 + $0x164] sm:$0xf]
      %v1408 = vld [vmem:[%s1 + $0x168] sm:$0xf]
      %v1409 = vld [vmem:[%s1 + $0x16c] sm:$0xf]
      %v1410 = vld [vmem:[%s1 + $0x170] sm:$0xf]
      %v1411 = vld [vmem:[%s1 + $0x174] sm:$0xf]
      %v1412 = vld [vmem:[%s1 + $0x178] sm:$0xf]
      %v1413 = vld [vmem:[%s1 + $0x17c] sm:$0xf]
      %v1414 = vld [vmem:[%s1 + $0x180] sm:$0xf]
      %v1415 = vld [vmem:[%s1 + $0x184] sm:$0xf]
      %v1416 = vld [vmem:[%s1 + $0x188] sm:$0xf]
      %v1417 = vld [vmem:[%s1 + $0x18c] sm:$0xf]
      %v1418 = vld [vmem:[%s1 + $0x190] sm:$0xf]
      %v1419 = vld [vmem:[%s1 + $0x194] sm:$0xf]
      %v1420 = vld [vmem:[%s1 + $0x198] sm:$0xf]
      %v1421 = vld [vmem:[%s1 + $0x19c] sm:$0xf]
      %v1422 = vld [vmem:[%s1 + $0x1a0] sm:$0xf]
      %v1423 = vld [vmem:[%s1 + $0x1a4] sm:$0xf]
      %v1424 = vld [vmem:[%s1 + $0x1a8] sm:$0xf]
      %v1425 = vld [vmem:[%s1 + $0x1ac] sm:$0xf]
      %v1426 = vld [vmem:[%s1 + $0x1b0] sm:$0xf]
      %v1427 = vld [vmem:[%s1 + $0x1b4] sm:$0xf]
      %v1428 = vld [vmem:[%s1 + $0x1b8] sm:$0xf]
      %v1429 = vld [vmem:[%s1 + $0x1bc] sm:$0xf]
      %v1430 = vld [vmem:[%s1 + $0x1c0] sm:$0xf]
      %v1431 = vld [vmem:[%s1 + $0x1c4] sm:$0xf]
      %v1432 = vld [vmem:[%s1 + $0x1c8] sm:$0xf]
      %v1433 = vld [vmem:[%s1 + $0x1cc] sm:$0xf]
      %v1434 = vld [vmem:[%s1 + $0x1d0] sm:$0xf]
      %v1435 = vld [vmem:[%s1 + $0x1d4] sm:$0xf]
      %v1436 = vld [vmem:[%s1 + $0x1d8] sm:$0xf]
      %v1437 = vld [vmem:[%s1 + $0x1dc] sm:$0xf]
      %v1438 = vld [vmem:[%s1 + $0x1e0] sm:$0xf]
      %v1439 = vld [vmem:[%s1 + $0x1e4] sm:$0xf]
      %v1440 = vld [vmem:[%s1 + $0x1e8] sm:$0xf]
      %v1441 = vld [vmem:[%s1 + $0x1ec] sm:$0xf]
      %v1442 = vld [vmem:[%s1 + $0x1f0] sm:$0xf]
      %v1443 = vld [vmem:[%s1 + $0x1f4] sm:$0xf]
      %v1444 = vld [vmem:[%s1 + $0x1f8] sm:$0xf]
      %v1445 = vld [vmem:[%s1 + $0x1fc] sm:$0xf]
      %v1446 = vld [vmem:[%s1 + $0x200] sm:$0xf]
      %v1447 = vld [vmem:[%s1 + $0x204] sm:$0xf]
      %v1448 = vld [vmem:[%s1 + $0x208] sm:$0xf]
      %v1449 = vld [vmem:[%s1 + $0x20c] sm:$0xf]
      %v1450 = vld [vmem:[%s1 + $0x210] sm:$0xf]
      %v1451 = vld [vmem:[%s1 + $0x214] sm:$0xf]
      %v1452 = vld [vmem:[%s1 + $0x218] sm:$0xf]
      %v1453 = vld [vmem:[%s1 + $0x21c] sm:$0xf]
      %v1454 = vld [vmem:[%s1 + $0x220] sm:$0xf]
      %v1455 = vld [vmem:[%s1 + $0x224] sm:$0xf]
      %v1456 = vld [vmem:[%s1 + $0x228] sm:$0xf]
      %v1457 = vld [vmem:[%s1 + $0x22c] sm:$0xf]
      %v1458 = vld [vmem:[%s1 + $0x230] sm:$0xf]
      %v1459 = vld [vmem:[%s1 + $0x234] sm:$0xf]
      %v1460 = vld [vmem:[%s1 + $0x238] sm:$0xf]
      %v1461 = vld [vmem:[%s1 + $0x23c] sm:$0xf]
      %v1462 = vld [vmem:[%s1 + $0x240] sm:$0xf]
      %v1463 = vld [vmem:[%s1 + $0x244] sm:$0xf]
      %v1464 = vld [vmem:[%s1 + $0x248] sm:$0xf]
      %v1465 = vld [vmem:[%s1 + $0x24c] sm:$0xf]
      %v1466 = vld [vmem:[%s1 + $0x250] sm:$0xf]
      %v1467 = vld [vmem:[%s1 + $0x254] sm:$0xf]
      %v1468 = vld [vmem:[%s1 + $0x258] sm:$0xf]
      %v1469 = vld [vmem:[%s1 + $0x25c] sm:$0xf]
      %v1470 = vld [vmem:[%s1 + $0x260] sm:$0xf]
      %v1471 = vld [vmem:[%s1 + $0x264] sm:$0xf]
      %v1472 = vld [vmem:[%s1 + $0x268] sm:$0xf]
      %v1473 = vld [vmem:[%s1 + $0x26c] sm:$0xf]
      %v1474 = vld [vmem:[%s1 + $0x270] sm:$0xf]
      %v1475 = vld [vmem:[%s1 + $0x274] sm:$0xf]
      %v1476 = vld [vmem:[%s1 + $0x278] sm:$0xf]
      %v1477 = vld [vmem:[%s1 + $0x27c] sm:$0xf]
      %v1478 = vld [vmem:[%s1 + $0x280] sm:$0xf]
      %v1479 = vld [vmem:[%s1 + $0x284] sm:$0xf]
      %v1480 = vld [vmem:[%s1 + $0x288] sm:$0xf]
      %v1481 = vld [vmem:[%s1 + $0x28c] sm:$0xf]
      %v1482 = vld [vmem:[%s1 + $0x290] sm:$0xf]
      %v1483 = vld [vmem:[%s1 + $0x294] sm:$0xf]
      %v1484 = vld [vmem:[%s1 + $0x298] sm:$0xf]
      %v1485 = vld [vmem:[%s1 + $0x29c] sm:$0xf]
      %v1486 = vld [vmem:[%s1 + $0x2a0] sm:$0xf]
      %v1487 = vld [vmem:[%s1 + $0x2a4] sm:$0xf]
      %v1488 = vld [vmem:[%s1 + $0x2a8] sm:$0xf]
      %v1489 = vld [vmem:[%s1 + $0x2ac] sm:$0xf]
      %v1490 = vld [vmem:[%s1 + $0x2b0] sm:$0xf]
      %v1491 = vld [vmem:[%s1 + $0x2b4] sm:$0xf]
      %v1492 = vld [vmem:[%s1 + $0x2b8] sm:$0xf]
      %v1493 = vld [vmem:[%s2] sm:$0x1]
      %v1495 = vlaneseq
      %v1496 = vshrl.u32 %v1495, 7
      %v1497 = vsub.s32 0, %v1496
      %v1498 = vrot.slane %v1493, %v1497
      %v1675 = vunpack.c.l.b16 %v1318
      %v1676 = vunpack.c.l.b16 %v1319
      %v1677 = vunpack.c.l.b16 %v1320
      %v1678 = vunpack.c.l.b16 %v1321
      %v1679 = vunpack.c.l.b16 %v1322
      %v1680 = vunpack.c.l.b16 %v1323
      %v1681 = vunpack.c.l.b16 %v1324
      %v1682 = vunpack.c.l.b16 %v1325
      %v1683 = vunpack.c.l.b16 %v1326
      %v1684 = vunpack.c.l.b16 %v1327
      %v1685 = vunpack.c.l.b16 %v1328
      %v1686 = vunpack.c.l.b16 %v1329
      %v1687 = vunpack.c.l.b16 %v1330
      %v1688 = vunpack.c.l.b16 %v1331
      %v1689 = vunpack.c.l.b16 %v1332
      %v1690 = vunpack.c.l.b16 %v1333
      %v1691 = vunpack.c.l.b16 %v1334
      %v1692 = vunpack.c.l.b16 %v1335
      %v1693 = vunpack.c.l.b16 %v1336
      %v1694 = vunpack.c.l.b16 %v1337
      %v1695 = vunpack.c.l.b16 %v1338
      %v1696 = vunpack.c.l.b16 %v1339
      %v1697 = vunpack.c.l.b16 %v1340
      %v1698 = vunpack.c.l.b16 %v1341
      %v1699 = vunpack.c.l.b16 %v1342
      %v1700 = vunpack.c.l.b16 %v1343
      %v1701 = vunpack.c.l.b16 %v1344
      %v1702 = vunpack.c.l.b16 %v1345
      %v1703 = vunpack.c.l.b16 %v1346
      %v1704 = vunpack.c.l.b16 %v1347
      %v1705 = vunpack.c.l.b16 %v1348
      %v1706 = vunpack.c.l.b16 %v1349
      %v1707 = vunpack.c.l.b16 %v1350
      %v1708 = vunpack.c.l.b16 %v1351
      %v1709 = vunpack.c.l.b16 %v1352
      %v1710 = vunpack.c.l.b16 %v1353
      %v1711 = vunpack.c.l.b16 %v1354
      %v1712 = vunpack.c.l.b16 %v1355
      %v1713 = vunpack.c.l.b16 %v1356
      %v1714 = vunpack.c.l.b16 %v1357
      %v1715 = vunpack.c.l.b16 %v1358
      %v1716 = vunpack.c.l.b16 %v1359
      %v1717 = vunpack.c.l.b16 %v1360
      %v1718 = vunpack.c.l.b16 %v1361
      %v1719 = vunpack.c.l.b16 %v1362
      %v1720 = vunpack.c.l.b16 %v1363
      %v1721 = vunpack.c.l.b16 %v1364
      %v1722 = vunpack.c.l.b16 %v1365
      %v1723 = vunpack.c.l.b16 %v1366
      %v1724 = vunpack.c.l.b16 %v1367
      %v1725 = vunpack.c.l.b16 %v1368
      %v1726 = vunpack.c.l.b16 %v1369
      %v1727 = vunpack.c.l.b16 %v1370
      %v1728 = vunpack.c.l.b16 %v1371
      %v1729 = vunpack.c.l.b16 %v1372
      %v1730 = vunpack.c.l.b16 %v1373
      %v1731 = vunpack.c.l.b16 %v1374
      %v1732 = vunpack.c.l.b16 %v1375
      %v1733 = vunpack.c.l.b16 %v1376
      %v1734 = vunpack.c.l.b16 %v1377
      %v1735 = vunpack.c.l.b16 %v1378
      %v1736 = vunpack.c.l.b16 %v1379
      %v1737 = vunpack.c.l.b16 %v1380
      %v1738 = vunpack.c.l.b16 %v1381
      %v1739 = vunpack.c.l.b16 %v1382
      %v1740 = vunpack.c.l.b16 %v1383
      %v1741 = vunpack.c.l.b16 %v1384
      %v1742 = vunpack.c.l.b16 %v1385
      %v1743 = vunpack.c.l.b16 %v1386
      %v1744 = vunpack.c.l.b16 %v1387
      %v1745 = vunpack.c.l.b16 %v1388
      %v1746 = vunpack.c.l.b16 %v1389
      %v1747 = vunpack.c.l.b16 %v1390
      %v1748 = vunpack.c.l.b16 %v1391
      %v1749 = vunpack.c.l.b16 %v1392
      %v1750 = vunpack.c.l.b16 %v1393
      %v1751 = vunpack.c.l.b16 %v1394
      %v1752 = vunpack.c.l.b16 %v1395
      %v1753 = vunpack.c.l.b16 %v1396
      %v1754 = vunpack.c.l.b16 %v1397
      %v1755 = vunpack.c.l.b16 %v1398
      %v1756 = vunpack.c.l.b16 %v1399
      %v1757 = vunpack.c.l.b16 %v1400
      %v1758 = vunpack.c.l.b16 %v1401
      %v1759 = vunpack.c.l.b16 %v1402
      %v1760 = vunpack.c.l.b16 %v1403
      %v1761 = vunpack.c.l.b16 %v1404
      %v1762 = vunpack.c.l.b16 %v1405
      %v1763 = vunpack.c.l.b16 %v1406
      %v1764 = vunpack.c.l.b16 %v1407
      %v1765 = vunpack.c.l.b16 %v1408
      %v1766 = vunpack.c.l.b16 %v1409
      %v1767 = vunpack.c.l.b16 %v1410
      %v1768 = vunpack.c.l.b16 %v1411
      %v1769 = vunpack.c.l.b16 %v1412
      %v1770 = vunpack.c.l.b16 %v1413
      %v1771 = vunpack.c.l.b16 %v1414
      %v1772 = vunpack.c.l.b16 %v1415
      %v1773 = vunpack.c.l.b16 %v1416
      %v1774 = vunpack.c.l.b16 %v1417
      %v1775 = vunpack.c.l.b16 %v1418
      %v1776 = vunpack.c.l.b16 %v1419
      %v1777 = vunpack.c.l.b16 %v1420
      %v1778 = vunpack.c.l.b16 %v1421
      %v1779 = vunpack.c.l.b16 %v1422
      %v1780 = vunpack.c.l.b16 %v1423
      %v1781 = vunpack.c.l.b16 %v1424
      %v1782 = vunpack.c.l.b16 %v1425
      %v1783 = vunpack.c.l.b16 %v1426
      %v1784 = vunpack.c.l.b16 %v1427
      %v1785 = vunpack.c.l.b16 %v1428
      %v1786 = vunpack.c.l.b16 %v1429
      %v1787 = vunpack.c.l.b16 %v1430
      %v1788 = vunpack.c.l.b16 %v1431
      %v1789 = vunpack.c.l.b16 %v1432
      %v1790 = vunpack.c.l.b16 %v1433
      %v1791 = vunpack.c.l.b16 %v1434
      %v1792 = vunpack.c.l.b16 %v1435
      %v1793 = vunpack.c.l.b16 %v1436
      %v1794 = vunpack.c.l.b16 %v1437
      %v1795 = vunpack.c.l.b16 %v1438
      %v1796 = vunpack.c.l.b16 %v1439
      %v1797 = vunpack.c.l.b16 %v1440
      %v1798 = vunpack.c.l.b16 %v1441
      %v1799 = vunpack.c.l.b16 %v1442
      %v1800 = vunpack.c.l.b16 %v1443
      %v1801 = vunpack.c.l.b16 %v1444
      %v1802 = vunpack.c.l.b16 %v1445
      %v1803 = vunpack.c.l.b16 %v1446
      %v1804 = vunpack.c.l.b16 %v1447
      %v1805 = vunpack.c.l.b16 %v1448
      %v1806 = vunpack.c.l.b16 %v1449
      %v1807 = vunpack.c.l.b16 %v1450
      %v1808 = vunpack.c.l.b16 %v1451
      %v1809 = vunpack.c.l.b16 %v1452
      %v1810 = vunpack.c.l.b16 %v1453
      %v1811 = vunpack.c.l.b16 %v1454
      %v1812 = vunpack.c.l.b16 %v1455
      %v1813 = vunpack.c.l.b16 %v1456
      %v1814 = vunpack.c.l.b16 %v1457
      %v1815 = vunpack.c.l.b16 %v1458
      %v1816 = vunpack.c.l.b16 %v1459
      %v1817 = vunpack.c.l.b16 %v1460
      %v1818 = vunpack.c.l.b16 %v1461
      %v1819 = vunpack.c.l.b16 %v1462
      %v1820 = vunpack.c.l.b16 %v1463
      %v1821 = vunpack.c.l.b16 %v1464
      %v1822 = vunpack.c.l.b16 %v1465
      %v1823 = vunpack.c.l.b16 %v1466
      %v1824 = vunpack.c.l.b16 %v1467
      %v1825 = vunpack.c.l.b16 %v1468
      %v1826 = vunpack.c.l.b16 %v1469
      %v1827 = vunpack.c.l.b16 %v1470
      %v1828 = vunpack.c.l.b16 %v1471
      %v1829 = vunpack.c.l.b16 %v1472
      %v1830 = vunpack.c.l.b16 %v1473
      %v1831 = vunpack.c.l.b16 %v1474
      %v1832 = vunpack.c.l.b16 %v1475
      %v1833 = vunpack.c.l.b16 %v1476
      %v1834 = vunpack.c.l.b16 %v1477
      %v1835 = vunpack.c.l.b16 %v1478
      %v1836 = vunpack.c.l.b16 %v1479
      %v1837 = vunpack.c.l.b16 %v1480
      %v1838 = vunpack.c.l.b16 %v1481
      %v1839 = vunpack.c.l.b16 %v1482
      %v1840 = vunpack.c.l.b16 %v1483
      %v1841 = vunpack.c.l.b16 %v1484
      %v1842 = vunpack.c.l.b16 %v1485
      %v1843 = vunpack.c.l.b16 %v1486
      %v1844 = vunpack.c.l.b16 %v1487
      %v1845 = vunpack.c.l.b16 %v1488
      %v1846 = vunpack.c.l.b16 %v1489
      %v1847 = vunpack.c.l.b16 %v1490
      %v1848 = vunpack.c.l.b16 %v1491
      %v1849 = vunpack.c.l.b16 %v1492
      %v1850 = vpack.c.b16 %v1676, %v1675
      %v1851 = vpack.c.b16 %v1678, %v1677
      %v1852 = vpack.c.b16 %v1680, %v1679
      %v1853 = vpack.c.b16 %v1682, %v1681
      %v1854 = vpack.c.b16 %v1684, %v1683
      %v1855 = vpack.c.b16 %v1686, %v1685
      %v1856 = vpack.c.b16 %v1688, %v1687
      %v1857 = vpack.c.b16 %v1690, %v1689
      %v1858 = vpack.c.b16 %v1692, %v1691
      %v1859 = vpack.c.b16 %v1694, %v1693
      %v1860 = vpack.c.b16 %v1696, %v1695
      %v1861 = vpack.c.b16 %v1698, %v1697
      %v1862 = vpack.c.b16 %v1700, %v1699
      %v1863 = vpack.c.b16 %v1702, %v1701
      %v1864 = vpack.c.b16 %v1704, %v1703
      %v1865 = vpack.c.b16 %v1706, %v1705
      %v1866 = vpack.c.b16 %v1708, %v1707
      %v1867 = vpack.c.b16 %v1710, %v1709
      %v1868 = vpack.c.b16 %v1712, %v1711
      %v1869 = vpack.c.b16 %v1714, %v1713
      %v1870 = vpack.c.b16 %v1716, %v1715
      %v1871 = vpack.c.b16 %v1718, %v1717
      %v1872 = vpack.c.b16 %v1720, %v1719
      %v1873 = vpack.c.b16 %v1722, %v1721
      %v1874 = vpack.c.b16 %v1724, %v1723
      %v1875 = vpack.c.b16 %v1726, %v1725
      %v1876 = vpack.c.b16 %v1728, %v1727
      %v1877 = vpack.c.b16 %v1730, %v1729
      %v1878 = vpack.c.b16 %v1732, %v1731
      %v1879 = vpack.c.b16 %v1734, %v1733
      %v1880 = vpack.c.b16 %v1736, %v1735
      %v1881 = vpack.c.b16 %v1738, %v1737
      %v1882 = vpack.c.b16 %v1740, %v1739
      %v1883 = vpack.c.b16 %v1742, %v1741
      %v1884 = vpack.c.b16 %v1744, %v1743
      %v1885 = vpack.c.b16 %v1746, %v1745
      %v1886 = vpack.c.b16 %v1748, %v1747
      %v1887 = vpack.c.b16 %v1750, %v1749
      %v1888 = vpack.c.b16 %v1752, %v1751
      %v1889 = vpack.c.b16 %v1754, %v1753
      %v1890 = vpack.c.b16 %v1756, %v1755
      %v1891 = vpack.c.b16 %v1758, %v1757
      %v1892 = vpack.c.b16 %v1760, %v1759
      %v1893 = vpack.c.b16 %v1762, %v1761
      %v1894 = vpack.c.b16 %v1764, %v1763
      %v1895 = vpack.c.b16 %v1766, %v1765
      %v1896 = vpack.c.b16 %v1768, %v1767
      %v1897 = vpack.c.b16 %v1770, %v1769
      %v1898 = vpack.c.b16 %v1772, %v1771
      %v1899 = vpack.c.b16 %v1774, %v1773
      %v1900 = vpack.c.b16 %v1776, %v1775
      %v1901 = vpack.c.b16 %v1778, %v1777
      %v1902 = vpack.c.b16 %v1780, %v1779
      %v1903 = vpack.c.b16 %v1782, %v1781
      %v1904 = vpack.c.b16 %v1784, %v1783
      %v1905 = vpack.c.b16 %v1786, %v1785
      %v1906 = vpack.c.b16 %v1788, %v1787
      %v1907 = vpack.c.b16 %v1790, %v1789
      %v1908 = vpack.c.b16 %v1792, %v1791
      %v1909 = vpack.c.b16 %v1794, %v1793
      %v1910 = vpack.c.b16 %v1796, %v1795
      %v1911 = vpack.c.b16 %v1798, %v1797
      %v1912 = vpack.c.b16 %v1800, %v1799
      %v1913 = vpack.c.b16 %v1802, %v1801
      %v1914 = vpack.c.b16 %v1804, %v1803
      %v1915 = vpack.c.b16 %v1806, %v1805
      %v1916 = vpack.c.b16 %v1808, %v1807
      %v1917 = vpack.c.b16 %v1810, %v1809
      %v1918 = vpack.c.b16 %v1812, %v1811
      %v1919 = vpack.c.b16 %v1814, %v1813
      %v1920 = vpack.c.b16 %v1816, %v1815
      %v1921 = vpack.c.b16 %v1818, %v1817
      %v1922 = vpack.c.b16 %v1820, %v1819
      %v1923 = vpack.c.b16 %v1822, %v1821
      %v1924 = vpack.c.b16 %v1824, %v1823
      %v1925 = vpack.c.b16 %v1826, %v1825
      %v1926 = vpack.c.b16 %v1828, %v1827
      %v1927 = vpack.c.b16 %v1830, %v1829
      %v1928 = vpack.c.b16 %v1832, %v1831
      %v1929 = vpack.c.b16 %v1834, %v1833
      %v1930 = vpack.c.b16 %v1836, %v1835
      %v1931 = vpack.c.b16 %v1838, %v1837
      %v1932 = vpack.c.b16 %v1840, %v1839
      %v1933 = vpack.c.b16 %v1842, %v1841
      %v1934 = vpack.c.b16 %v1844, %v1843
      %v1935 = vpack.c.b16 %v1846, %v1845
      %v1936 = vpack.c.b16 %v1848, %v1847
      %v1937 = vpack.c.b16 %v1849, %v1849
      %vm2025 = vcmask 982016
      %v2027 = vsel %vm2025, %v1172, 0
      %v2030 = vsel %vm2025, %v1174, 0
      %v2033 = vsel %vm2025, %v1176, 0
      %v2036 = vsel %vm2025, %v1178, 0
      %v2039 = vsel %vm2025, %v1180, 0
      %v2042 = vsel %vm2025, %v1182, 0
      %v2045 = vsel %vm2025, %v1184, 0
      %v2048 = vsel %vm2025, %v1186, 0
      %vm2050 = vcmask 1043456
      %v2052 = vsel %vm2050, %v1937, 0
      %2054 = vmatprep.subr.bf16.mxu0 0
      %2055 = vmatpush1.bf16.msra.mxu0 %v1850
      %2056 = vmatprep.subr.bf16.mxu0 0
      %2057 = vmatpush1.bf16.msra.mxu0 %v1851
      %2058 = vmatprep.subr.bf16.mxu0 0
      %2059 = vmatpush1.bf16.msra.mxu0 %v1852
      %2060 = vmatprep.subr.bf16.mxu0 0
      %2061 = vmatpush1.bf16.msra.mxu0 %v1853
      %2062 = vmatprep.subr.bf16.mxu0 0
      %2063 = vmatpush1.bf16.msra.mxu0 %v1854
      %2064 = vmatprep.subr.bf16.mxu0 0
      %2065 = vmatpush1.bf16.msra.mxu0 %v1855
      %2066 = vmatprep.subr.bf16.mxu0 0
      %2067 = vmatpush1.bf16.msra.mxu0 %v1856
      %2068 = vmatprep.subr.bf16.mxu0 0
      %2069 = vmatpush1.bf16.msra.mxu0 %v1857
      %2070 = vmatprep.subr.bf16.mxu0 0
      %2071 = vmatpush1.bf16.msra.mxu0 %v1858
      %2072 = vmatprep.subr.bf16.mxu0 0
      %2073 = vmatpush1.bf16.msra.mxu0 %v1859
      %2074 = vmatprep.subr.bf16.mxu0 0
      %2075 = vmatpush1.bf16.msra.mxu0 %v1860
      %2076 = vmatprep.subr.bf16.mxu0 0
      %2077 = vmatpush1.bf16.msra.mxu0 %v1861
      %2078 = vmatprep.subr.bf16.mxu0 0
      %2079 = vmatpush1.bf16.msra.mxu0 %v1862
      %2080 = vmatprep.subr.bf16.mxu0 0
      %2081 = vmatpush1.bf16.msra.mxu0 %v1863
      %2082 = vmatprep.subr.bf16.mxu0 0
      %2083 = vmatpush1.bf16.msra.mxu0 %v1864
      %2084 = vmatprep.subr.bf16.mxu0 0
      %2085 = vmatpush1.bf16.msra.mxu0 %v1865
      %2086 = vmatprep.mubr.bf16.mxu0 %v654
      %2087 = vmatmul.mubr.bf16.gmra.mrb[0].mxu0 %v612
      %v2088 = vpop.f32.mrb[0].mxu0
      %v2089 = vadd.f32 %v1498, %v2088
      %v2090 = vpop.f32.mrb[0].mxu0
      %v2091 = vpop.f32.mrb[0].mxu0
      %v2092 = vadd.f32 %v1498, %v2091
      %v2093 = vpop.f32.mrb[0].mxu0
      %2094 = vmatprep.mubr.bf16.mxu0 %v657
      %2095 = vmatmul.mubr.bf16.gmra.mrb[0].mxu0 %v615
      %v2096 = vpop.f32.mrb[0].mxu0
      %v2097 = vadd.f32 %v1498, %v2096
      %v2098 = vpop.f32.mrb[0].mxu0
      %v2099 = vpop.f32.mrb[0].mxu0
      %v2100 = vadd.f32 %v1498, %v2099
      %v2101 = vpop.f32.mrb[0].mxu0
      %2102 = vmatprep.mubr.bf16.mxu0 %v660
      %2103 = vmatmul.mubr.bf16.gmra.mrb[0].mxu0 %v618
      %v2104 = vpop.f32.mrb[0].mxu0
      %v2105 = vadd.f32 %v1498, %v2104
      %v2106 = vpop.f32.mrb[0].mxu0
      %v2107 = vpop.f32.mrb[0].mxu0
      %v2108 = vadd.f32 %v1498, %v2107
      %v2109 = vpop.f32.mrb[0].mxu0
      %2110 = vmatprep.mubr.bf16.mxu0 %v663
      %2111 = vmatmul.mubr.bf16.gmra.mrb[0].mxu0 %v621
      %v2112 = vpop.f32.mrb[0].mxu0
      %v2113 = vadd.f32 %v1498, %v2112
      %v2114 = vpop.f32.mrb[0].mxu0
      %v2115 = vpop.f32.mrb[0].mxu0
      %v2116 = vadd.f32 %v1498, %v2115
      %v2117 = vpop.f32.mrb[0].mxu0
      %2118 = vmatprep.mubr.bf16.mxu0 %v666
      %2119 = vmatmul.mubr.bf16.gmra.mrb[0].mxu0 %v624
      %v2120 = vpop.f32.mrb[0].mxu0
      %v2121 = vadd.f32 %v1498, %v2120
      %v2122 = vpop.f32.mrb[0].mxu0
      %v2123 = vpop.f32.mrb[0].mxu0
      %v2124 = vadd.f32 %v1498, %v2123
      %v2125 = vpop.f32.mrb[0].mxu0
      %2126 = vmatprep.mubr.bf16.mxu0 %v669
      %2127 = vmatmul.mubr.bf16.gmra.mrb[0].mxu0 %v627
      %v2128 = vpop.f32.mrb[0].mxu0
      %v2129 = vadd.f32 %v1498, %v2128
      %v2130 = vpop.f32.mrb[0].mxu0
      %v2131 = vpop.f32.mrb[0].mxu0
      %v2132 = vadd.f32 %v1498, %v2131
      %v2133 = vpop.f32.mrb[0].mxu0
      %2134 = vmatprep.mubr.bf16.mxu0 %v672
      %2135 = vmatmul.mubr.bf16.gmra.mrb[0].mxu0 %v630
      %v2136 = vpop.f32.mrb[0].mxu0
      %v2137 = vadd.f32 %v1498, %v2136
      %v2138 = vpop.f32.mrb[0].mxu0
      %v2139 = vpop.f32.mrb[0].mxu0
      %v2140 = vadd.f32 %v1498, %v2139
      %v2141 = vpop.f32.mrb[0].mxu0
      %2142 = vmatprep.mubr.bf16.mxu0 %v675
      %2143 = vmatmul.mubr.bf16.gmra.mrb[0].mxu0 %v633
      %v2144 = vpop.f32.mrb[0].mxu0
      %v2145 = vadd.f32 %v1498, %v2144
      %v2146 = vpop.f32.mrb[0].mxu0
      %v2147 = vpop.f32.mrb[0].mxu0
      %v2148 = vadd.f32 %v1498, %v2147
      %v2149 = vpop.f32.mrb[0].mxu0
      %2150 = vdwg.mxu0
      %2151 = vmatprep.subr.bf16.mxu0 0
      %2152 = vmatpush1.bf16.msra.mxu0 %v1866
      %2153 = vmatprep.subr.bf16.mxu0 0
      %2154 = vmatpush1.bf16.msra.mxu0 %v1867
      %2155 = vmatprep.subr.bf16.mxu0 0
      %2156 = vmatpush1.bf16.msra.mxu0 %v1868
      %2157 = vmatprep.subr.bf16.mxu0 0
      %2158 = vmatpush1.bf16.msra.mxu0 %v1869
      %2159 = vmatprep.subr.bf16.mxu0 0
      %2160 = vmatpush1.bf16.msra.mxu0 %v1870
      %2161 = vmatprep.subr.bf16.mxu0 0
      %2162 = vmatpush1.bf16.msra.mxu0 %v1871
      %2163 = vmatprep.subr.bf16.mxu0 0
      %2164 = vmatpush1.bf16.msra.mxu0 %v1872
      %2165 = vmatprep.subr.bf16.mxu0 0
      %2166 = vmatpush1.bf16.msra.mxu0 %v1873
      %2167 = vmatprep.subr.bf16.mxu0 0
      %2168 = vmatpush1.bf16.msra.mxu0 %v1874
      %2169 = vmatprep.subr.bf16.mxu0 0
      %2170 = vmatpush1.bf16.msra.mxu0 %v1875
      %2171 = vmatprep.subr.bf16.mxu0 0
      %2172 = vmatpush1.bf16.msra.mxu0 %v1876
      %2173 = vmatprep.subr.bf16.mxu0 0
      %2174 = vmatpush1.bf16.msra.mxu0 %v1877
      %2175 = vmatprep.subr.bf16.mxu0 0
      %2176 = vmatpush1.bf16.msra.mxu0 %v1878
      %2177 = vmatprep.subr.bf16.mxu0 0
      %2178 = vmatpush1.bf16.msra.mxu0 %v1879
      %2179 = vmatprep.subr.bf16.mxu0 0
      %2180 = vmatpush1.bf16.msra.mxu0 %v1880
      %2181 = vmatprep.subr.bf16.mxu0 0
      %2182 = vmatpush1.bf16.msra.mxu0 %v1881
      %2183 = vmatprep.mubr.bf16.mxu0 %v946
      %2184 = vmatmul.mubr.bf16.gmra.mrb[0].mxu0 %v1197
      %v2185 = vpop.f32.mrb[0].mxu0
      %v2186 = vadd.f32 %v2089, %v2185
      %v2187 = vpop.f32.mrb[0].mxu0
      %v2188 = vpop.f32.mrb[0].mxu0
      %v2189 = vadd.f32 %v2092, %v2188
      %v2190 = vpop.f32.mrb[0].mxu0
      %2191 = vmatprep.mubr.bf16.mxu0 %v948
      %2192 = vmatmul.mubr.bf16.gmra.mrb[0].mxu0 %v1200
      %v2193 = vpop.f32.mrb[0].mxu0
      %v2194 = vadd.f32 %v2097, %v2193
      %v2195 = vpop.f32.mrb[0].mxu0
      %v2196 = vpop.f32.mrb[0].mxu0
      %v2197 = vadd.f32 %v2100, %v2196
      %v2198 = vpop.f32.mrb[0].mxu0
      %2199 = vmatprep.mubr.bf16.mxu0 %v950
      %2200 = vmatmul.mubr.bf16.gmra.mrb[0].mxu0 %v1203
      %v2201 = vpop.f32.mrb[0].mxu0
      %v2202 = vadd.f32 %v2105, %v2201
      %v2203 = vpop.f32.mrb[0].mxu0
      %v2204 = vpop.f32.mrb[0].mxu0
      %v2205 = vadd.f32 %v2108, %v2204
      %v2206 = vpop.f32.mrb[0].mxu0
      %2207 = vmatprep.mubr.bf16.mxu0 %v952
      %2208 = vmatmul.mubr.bf16.gmra.mrb[0].mxu0 %v1206
      %v2209 = vpop.f32.mrb[0].mxu0
      %v2210 = vadd.f32 %v2113, %v2209
      %v2211 = vpop.f32.mrb[0].mxu0
      %v2212 = vpop.f32.mrb[0].mxu0
      %v2213 = vadd.f32 %v2116, %v2212
      %v2214 = vpop.f32.mrb[0].mxu0
      %2215 = vmatprep.mubr.bf16.mxu0 %v954
      %2216 = vmatmul.mubr.bf16.gmra.mrb[0].mxu0 %v1209
      %v2217 = vpop.f32.mrb[0].mxu0
      %v2218 = vadd.f32 %v2121, %v2217
      %v2219 = vpop.f32.mrb[0].mxu0
      %v2220 = vpop.f32.mrb[0].mxu0
      %v2221 = vadd.f32 %v2124, %v2220
      %v2222 = vpop.f32.mrb[0].mxu0
      %2223 = vmatprep.mubr.bf16.mxu0 %v956
      %2224 = vmatmul.mubr.bf16.gmra.mrb[0].mxu0 %v1212
      %v2225 = vpop.f32.mrb[0].mxu0
      %v2226 = vadd.f32 %v2129, %v2225
      %v2227 = vpop.f32.mrb[0].mxu0
      %v2228 = vpop.f32.mrb[0].mxu0
      %v2229 = vadd.f32 %v2132, %v2228
      %v2230 = vpop.f32.mrb[0].mxu0
      %2231 = vmatprep.mubr.bf16.mxu0 %v958
      %2232 = vmatmul.mubr.bf16.gmra.mrb[0].mxu0 %v1215
      %v2233 = vpop.f32.mrb[0].mxu0
      %v2234 = vadd.f32 %v2137, %v2233
      %v2235 = vpop.f32.mrb[0].mxu0
      %v2236 = vpop.f32.mrb[0].mxu0
      %v2237 = vadd.f32 %v2140, %v2236
      %v2238 = vpop.f32.mrb[0].mxu0
      %2239 = vmatprep.mubr.bf16.mxu0 %v960
      %2240 = vmatmul.mubr.bf16.gmra.mrb[0].mxu0 %v1218
      %v2241 = vpop.f32.mrb[0].mxu0
      %v2242 = vadd.f32 %v2145, %v2241
      %v2243 = vpop.f32.mrb[0].mxu0
      %v2244 = vpop.f32.mrb[0].mxu0
      %v2245 = vadd.f32 %v2148, %v2244
      %v2246 = vpop.f32.mrb[0].mxu0
      %2247 = vdwg.mxu0
      %2248 = vmatprep.subr.bf16.mxu0 0
      %2249 = vmatpush1.bf16.msra.mxu0 %v1882
      %2250 = vmatprep.subr.bf16.mxu0 0
      %2251 = vmatpush1.bf16.msra.mxu0 %v1883
      %2252 = vmatprep.subr.bf16.mxu0 0
      %2253 = vmatpush1.bf16.msra.mxu0 %v1884
      %2254 = vmatprep.subr.bf16.mxu0 0
      %2255 = vmatpush1.bf16.msra.mxu0 %v1885
      %2256 = vmatprep.subr.bf16.mxu0 0
      %2257 = vmatpush1.bf16.msra.mxu0 %v1886
      %2258 = vmatprep.subr.bf16.mxu0 0
      %2259 = vmatpush1.bf16.msra.mxu0 %v1887
      %2260 = vmatprep.subr.bf16.mxu0 0
      %2261 = vmatpush1.bf16.msra.mxu0 %v1888
      %2262 = vmatprep.subr.bf16.mxu0 0
      %2263 = vmatpush1.bf16.msra.mxu0 %v1889
      %2264 = vmatprep.subr.bf16.mxu0 0
      %2265 = vmatpush1.bf16.msra.mxu0 %v1890
      %2266 = vmatprep.subr.bf16.mxu0 0
      %2267 = vmatpush1.bf16.msra.mxu0 %v1891
      %2268 = vmatprep.subr.bf16.mxu0 0
      %2269 = vmatpush1.bf16.msra.mxu0 %v1892
      %2270 = vmatprep.subr.bf16.mxu0 0
      %2271 = vmatpush1.bf16.msra.mxu0 %v1893
      %2272 = vmatprep.subr.bf16.mxu0 0
      %2273 = vmatpush1.bf16.msra.mxu0 %v1894
      %2274 = vmatprep.subr.bf16.mxu0 0
      %2275 = vmatpush1.bf16.msra.mxu0 %v1895
      %2276 = vmatprep.subr.bf16.mxu0 0
      %2277 = vmatpush1.bf16.msra.mxu0 %v1896
      %2278 = vmatprep.subr.bf16.mxu0 0
      %2279 = vmatpush1.bf16.msra.mxu0 %v1897
      %2280 = vmatprep.mubr.bf16.mxu0 %v1021
      %2281 = vmatmul.mubr.bf16.gmra.mrb[0].mxu0 %v1223
      %v2282 = vpop.f32.mrb[0].mxu0
      %v2283 = vadd.f32 %v2186, %v2282
      %v2284 = vpop.f32.mrb[0].mxu0
      %v2285 = vpop.f32.mrb[0].mxu0
      %v2286 = vadd.f32 %v2189, %v2285
      %v2287 = vpop.f32.mrb[0].mxu0
      %2288 = vmatprep.mubr.bf16.mxu0 %v1023
      %2289 = vmatmul.mubr.bf16.gmra.mrb[0].mxu0 %v1227
      %v2290 = vpop.f32.mrb[0].mxu0
      %v2291 = vadd.f32 %v2194, %v2290
      %v2292 = vpop.f32.mrb[0].mxu0
      %v2293 = vpop.f32.mrb[0].mxu0
      %v2294 = vadd.f32 %v2197, %v2293
      %v2295 = vpop.f32.mrb[0].mxu0
      %2296 = vmatprep.mubr.bf16.mxu0 %v1025
      %2297 = vmatmul.mubr.bf16.gmra.mrb[0].mxu0 %v1231
      %v2298 = vpop.f32.mrb[0].mxu0
      %v2299 = vadd.f32 %v2202, %v2298
      %v2300 = vpop.f32.mrb[0].mxu0
      %v2301 = vpop.f32.mrb[0].mxu0
      %v2302 = vadd.f32 %v2205, %v2301
      %v2303 = vpop.f32.mrb[0].mxu0
      %2304 = vmatprep.mubr.bf16.mxu0 %v1027
      %2305 = vmatmul.mubr.bf16.gmra.mrb[0].mxu0 %v1235
      %v2306 = vpop.f32.mrb[0].mxu0
      %v2307 = vadd.f32 %v2210, %v2306
      %v2308 = vpop.f32.mrb[0].mxu0
      %v2309 = vpop.f32.mrb[0].mxu0
      %v2310 = vadd.f32 %v2213, %v2309
      %v2311 = vpop.f32.mrb[0].mxu0
      %2312 = vmatprep.mubr.bf16.mxu0 %v1029
      %2313 = vmatmul.mubr.bf16.gmra.mrb[0].mxu0 %v1239
      %v2314 = vpop.f32.mrb[0].mxu0
      %v2315 = vadd.f32 %v2218, %v2314
      %v2316 = vpop.f32.mrb[0].mxu0
      %v2317 = vpop.f32.mrb[0].mxu0
      %v2318 = vadd.f32 %v2221, %v2317
      %v2319 = vpop.f32.mrb[0].mxu0
      %2320 = vmatprep.mubr.bf16.mxu0 %v1031
      %2321 = vmatmul.mubr.bf16.gmra.mrb[0].mxu0 %v1243
      %v2322 = vpop.f32.mrb[0].mxu0
      %v2323 = vadd.f32 %v2226, %v2322
      %v2324 = vpop.f32.mrb[0].mxu0
      %v2325 = vpop.f32.mrb[0].mxu0
      %v2326 = vadd.f32 %v2229, %v2325
      %v2327 = vpop.f32.mrb[0].mxu0
      %2328 = vmatprep.mubr.bf16.mxu0 %v1033
      %2329 = vmatmul.mubr.bf16.gmra.mrb[0].mxu0 %v1247
      %v2330 = vpop.f32.mrb[0].mxu0
      %v2331 = vadd.f32 %v2234, %v2330
      %v2332 = vpop.f32.mrb[0].mxu0
      %v2333 = vpop.f32.mrb[0].mxu0
      %v2334 = vadd.f32 %v2237, %v2333
      %v2335 = vpop.f32.mrb[0].mxu0
      %2336 = vmatprep.mubr.bf16.mxu0 %v1035
      %2337 = vmatmul.mubr.bf16.gmra.mrb[0].mxu0 %v1251
      %v2338 = vpop.f32.mrb[0].mxu0
      %v2339 = vadd.f32 %v2242, %v2338
      %v2340 = vpop.f32.mrb[0].mxu0
      %v2341 = vpop.f32.mrb[0].mxu0
      %v2342 = vadd.f32 %v2245, %v2341
      %v2343 = vpop.f32.mrb[0].mxu0
      %2344 = vdwg.mxu0
      %2345 = vmatprep.subr.bf16.mxu0 0
      %2346 = vmatpush1.bf16.msra.mxu0 %v1898
      %2347 = vmatprep.subr.bf16.mxu0 0
      %2348 = vmatpush1.bf16.msra.mxu0 %v1899
      %2349 = vmatprep.subr.bf16.mxu0 0
      %2350 = vmatpush1.bf16.msra.mxu0 %v1900
      %2351 = vmatprep.subr.bf16.mxu0 0
      %2352 = vmatpush1.bf16.msra.mxu0 %v1901
      %2353 = vmatprep.subr.bf16.mxu0 0
      %2354 = vmatpush1.bf16.msra.mxu0 %v1902
      %2355 = vmatprep.subr.bf16.mxu0 0
      %2356 = vmatpush1.bf16.msra.mxu0 %v1903
      %2357 = vmatprep.subr.bf16.mxu0 0
      %2358 = vmatpush1.bf16.msra.mxu0 %v1904
      %2359 = vmatprep.subr.bf16.mxu0 0
      %2360 = vmatpush1.bf16.msra.mxu0 %v1905
      %2361 = vmatprep.subr.bf16.mxu0 0
      %2362 = vmatpush1.bf16.msra.mxu0 %v1906
      %2363 = vmatprep.subr.bf16.mxu0 0
      %2364 = vmatpush1.bf16.msra.mxu0 %v1907
      %2365 = vmatprep.subr.bf16.mxu0 0
      %2366 = vmatpush1.bf16.msra.mxu0 %v1908
      %2367 = vmatprep.subr.bf16.mxu0 0
      %2368 = vmatpush1.bf16.msra.mxu0 %v1909
      %2369 = vmatprep.subr.bf16.mxu0 0
      %2370 = vmatpush1.bf16.msra.mxu0 %v1910
      %2371 = vmatprep.subr.bf16.mxu0 0
      %2372 = vmatpush1.bf16.msra.mxu0 %v1911
      %2373 = vmatprep.subr.bf16.mxu0 0
      %2374 = vmatpush1.bf16.msra.mxu0 %v1912
      %2375 = vmatprep.subr.bf16.mxu0 0
      %2376 = vmatpush1.bf16.msra.mxu0 %v1913
      %2377 = vmatprep.mubr.bf16.mxu0 %v1096
      %2378 = vmatmul.mubr.bf16.gmra.mrb[0].mxu0 %v1256
      %v2379 = vpop.f32.mrb[0].mxu0
      %v2380 = vadd.f32 %v2283, %v2379
      %v2381 = vpop.f32.mrb[0].mxu0
      %v2382 = vpop.f32.mrb[0].mxu0
      %v2383 = vadd.f32 %v2286, %v2382
      %v2384 = vpop.f32.mrb[0].mxu0
      %2385 = vmatprep.mubr.bf16.mxu0 %v1098
      %2386 = vmatmul.mubr.bf16.gmra.mrb[0].mxu0 %v1260
      %v2387 = vpop.f32.mrb[0].mxu0
      %v2388 = vadd.f32 %v2291, %v2387
      %v2389 = vpop.f32.mrb[0].mxu0
      %v2390 = vpop.f32.mrb[0].mxu0
      %v2391 = vadd.f32 %v2294, %v2390
      %v2392 = vpop.f32.mrb[0].mxu0
      %2393 = vmatprep.mubr.bf16.mxu0 %v1100
      %2394 = vmatmul.mubr.bf16.gmra.mrb[0].mxu0 %v1264
      %v2395 = vpop.f32.mrb[0].mxu0
      %v2396 = vadd.f32 %v2299, %v2395
      %v2397 = vpop.f32.mrb[0].mxu0
      %v2398 = vpop.f32.mrb[0].mxu0
      %v2399 = vadd.f32 %v2302, %v2398
      %v2400 = vpop.f32.mrb[0].mxu0
      %2401 = vmatprep.mubr.bf16.mxu0 %v1102
      %2402 = vmatmul.mubr.bf16.gmra.mrb[0].mxu0 %v1268
      %v2403 = vpop.f32.mrb[0].mxu0
      %v2404 = vadd.f32 %v2307, %v2403
      %v2405 = vpop.f32.mrb[0].mxu0
      %v2406 = vpop.f32.mrb[0].mxu0
      %v2407 = vadd.f32 %v2310, %v2406
      %v2408 = vpop.f32.mrb[0].mxu0
      %2409 = vmatprep.mubr.bf16.mxu0 %v1104
      %2410 = vmatmul.mubr.bf16.gmra.mrb[0].mxu0 %v1272
      %v2411 = vpop.f32.mrb[0].mxu0
      %v2412 = vadd.f32 %v2315, %v2411
      %v2413 = vpop.f32.mrb[0].mxu0
      %v2414 = vpop.f32.mrb[0].mxu0
      %v2415 = vadd.f32 %v2318, %v2414
      %v2416 = vpop.f32.mrb[0].mxu0
      %2417 = vmatprep.mubr.bf16.mxu0 %v1106
      %2418 = vmatmul.mubr.bf16.gmra.mrb[0].mxu0 %v1276
      %v2419 = vpop.f32.mrb[0].mxu0
      %v2420 = vadd.f32 %v2323, %v2419
      %v2421 = vpop.f32.mrb[0].mxu0
      %v2422 = vpop.f32.mrb[0].mxu0
      %v2423 = vadd.f32 %v2326, %v2422
      %v2424 = vpop.f32.mrb[0].mxu0
      %2425 = vmatprep.mubr.bf16.mxu0 %v1108
      %2426 = vmatmul.mubr.bf16.gmra.mrb[0].mxu0 %v1280
      %v2427 = vpop.f32.mrb[0].mxu0
      %v2428 = vadd.f32 %v2331, %v2427
      %v2429 = vpop.f32.mrb[0].mxu0
      %v2430 = vpop.f32.mrb[0].mxu0
      %v2431 = vadd.f32 %v2334, %v2430
      %v2432 = vpop.f32.mrb[0].mxu0
      %2433 = vmatprep.mubr.bf16.mxu0 %v1110
      %2434 = vmatmul.mubr.bf16.gmra.mrb[0].mxu0 %v1284
      %v2435 = vpop.f32.mrb[0].mxu0
      %v2436 = vadd.f32 %v2339, %v2435
      %v2437 = vpop.f32.mrb[0].mxu0
      %v2438 = vpop.f32.mrb[0].mxu0
      %v2439 = vadd.f32 %v2342, %v2438
      %v2440 = vpop.f32.mrb[0].mxu0
      %2441 = vdwg.mxu0
      %2442 = vmatprep.subr.bf16.mxu0 0
      %2443 = vmatpush1.bf16.msra.mxu0 %v1914
      %2444 = vmatprep.subr.bf16.mxu0 0
      %2445 = vmatpush1.bf16.msra.mxu0 %v1915
      %2446 = vmatprep.subr.bf16.mxu0 0
      %2447 = vmatpush1.bf16.msra.mxu0 %v1916
      %2448 = vmatprep.subr.bf16.mxu0 0
      %2449 = vmatpush1.bf16.msra.mxu0 %v1917
      %2450 = vmatprep.subr.bf16.mxu0 0
      %2451 = vmatpush1.bf16.msra.mxu0 %v1918
      %2452 = vmatprep.subr.bf16.mxu0 0
      %2453 = vmatpush1.bf16.msra.mxu0 %v1919
      %2454 = vmatprep.subr.bf16.mxu0 0
      %2455 = vmatpush1.bf16.msra.mxu0 %v1920
      %2456 = vmatprep.subr.bf16.mxu0 0
      %2457 = vmatpush1.bf16.msra.mxu0 %v1921
      %2458 = vmatprep.subr.bf16.mxu0 0
      %2459 = vmatpush1.bf16.msra.mxu0 %v1922
      %2460 = vmatprep.subr.bf16.mxu0 0
      %2461 = vmatpush1.bf16.msra.mxu0 %v1923
      %2462 = vmatprep.subr.bf16.mxu0 0
      %2463 = vmatpush1.bf16.msra.mxu0 %v1924
      %2464 = vmatprep.subr.bf16.mxu0 0
      %2465 = vmatpush1.bf16.msra.mxu0 %v1925
      %2466 = vmatprep.subr.bf16.mxu0 0
      %2467 = vmatpush1.bf16.msra.mxu0 %v1926
      %2468 = vmatprep.subr.bf16.mxu0 0
      %2469 = vmatpush1.bf16.msra.mxu0 %v1927
      %2470 = vmatprep.subr.bf16.mxu0 0
      %2471 = vmatpush1.bf16.msra.mxu0 %v1928
      %2472 = vmatprep.subr.bf16.mxu0 0
      %2473 = vmatpush1.bf16.msra.mxu0 %v1929
      %2474 = vmatprep.mubr.bf16.mxu0 %v1171
      %2475 = vmatmul.mubr.bf16.gmra.mrb[0].mxu0 %v1288
      %v2476 = vpop.f32.mrb[0].mxu0
      %v2477 = vadd.f32 %v2380, %v2476
      %v2478 = vpop.f32.mrb[0].mxu0
      %v2479 = vpop.f32.mrb[0].mxu0
      %v2480 = vadd.f32 %v2383, %v2479
      %v2481 = vpop.f32.mrb[0].mxu0
      %2482 = vmatprep.mubr.bf16.mxu0 %v1173
      %2483 = vmatmul.mubr.bf16.gmra.mrb[0].mxu0 %v1292
      %v2484 = vpop.f32.mrb[0].mxu0
      %v2485 = vadd.f32 %v2388, %v2484
      %v2486 = vpop.f32.mrb[0].mxu0
      %v2487 = vpop.f32.mrb[0].mxu0
      %v2488 = vadd.f32 %v2391, %v2487
      %v2489 = vpop.f32.mrb[0].mxu0
      %2490 = vmatprep.mubr.bf16.mxu0 %v1175
      %2491 = vmatmul.mubr.bf16.gmra.mrb[0].mxu0 %v1296
      %v2492 = vpop.f32.mrb[0].mxu0
      %v2493 = vadd.f32 %v2396, %v2492
      %v2494 = vpop.f32.mrb[0].mxu0
      %v2495 = vpop.f32.mrb[0].mxu0
      %v2496 = vadd.f32 %v2399, %v2495
      %v2497 = vpop.f32.mrb[0].mxu0
      %2498 = vmatprep.mubr.bf16.mxu0 %v1177
      %2499 = vmatmul.mubr.bf16.gmra.mrb[0].mxu0 %v1300
      %v2500 = vpop.f32.mrb[0].mxu0
      %v2501 = vadd.f32 %v2404, %v2500
      %v2502 = vpop.f32.mrb[0].mxu0
      %v2503 = vpop.f32.mrb[0].mxu0
      %v2504 = vadd.f32 %v2407, %v2503
      %v2505 = vpop.f32.mrb[0].mxu0
      %2506 = vmatprep.mubr.bf16.mxu0 %v1179
      %2507 = vmatmul.mubr.bf16.gmra.mrb[0].mxu0 %v1304
      %v2508 = vpop.f32.mrb[0].mxu0
      %v2509 = vadd.f32 %v2412, %v2508
      %v2510 = vpop.f32.mrb[0].mxu0
      %v2511 = vpop.f32.mrb[0].mxu0
      %v2512 = vadd.f32 %v2415, %v2511
      %v2513 = vpop.f32.mrb[0].mxu0
      %2514 = vmatprep.mubr.bf16.mxu0 %v1181
      %2515 = vmatmul.mubr.bf16.gmra.mrb[0].mxu0 %v1308
      %v2516 = vpop.f32.mrb[0].mxu0
      %v2517 = vadd.f32 %v2420, %v2516
      %v2518 = vpop.f32.mrb[0].mxu0
      %v2519 = vpop.f32.mrb[0].mxu0
      %v2520 = vadd.f32 %v2423, %v2519
      %v2521 = vpop.f32.mrb[0].mxu0
      %2522 = vmatprep.mubr.bf16.mxu0 %v1183
      %2523 = vmatmul.mubr.bf16.gmra.mrb[0].mxu0 %v1312
      %v2524 = vpop.f32.mrb[0].mxu0
      %v2525 = vadd.f32 %v2428, %v2524
      %v2526 = vpop.f32.mrb[0].mxu0
      %v2527 = vpop.f32.mrb[0].mxu0
      %v2528 = vadd.f32 %v2431, %v2527
      %v2529 = vpop.f32.mrb[0].mxu0
      %2530 = vmatprep.mubr.bf16.mxu0 %v1185
      %2531 = vmatmul.mubr.bf16.gmra.mrb[0].mxu0 %v1316
      %v2532 = vpop.f32.mrb[0].mxu0
      %v2533 = vadd.f32 %v2436, %v2532
      %v2534 = vpop.f32.mrb[0].mxu0
      %v2535 = vpop.f32.mrb[0].mxu0
      %v2536 = vadd.f32 %v2439, %v2535
      %v2537 = vpop.f32.mrb[0].mxu0
      %2538 = vdwg.mxu0
      %2539 = vmatprep.subr.bf16.mxu0 0
      %2540 = vmatpush1.bf16.msra.mxu0 %v1930
      %2541 = vmatprep.subr.bf16.mxu0 0
      %2542 = vmatpush1.bf16.msra.mxu0 %v1931
      %2543 = vmatprep.subr.bf16.mxu0 0
      %2544 = vmatpush1.bf16.msra.mxu0 %v1932
      %2545 = vmatprep.subr.bf16.mxu0 0
      %2546 = vmatpush1.bf16.msra.mxu0 %v1933
      %2547 = vmatprep.subr.bf16.mxu0 0
      %2548 = vmatpush1.bf16.msra.mxu0 %v1934
      %2549 = vmatprep.subr.bf16.mxu0 0
      %2550 = vmatpush1.bf16.msra.mxu0 %v1935
      %2551 = vmatprep.subr.bf16.mxu0 0
      %2552 = vmatpush1.bf16.msra.mxu0 %v1936
      %2553 = vmatprep.subr.bf16.mxu0 0
      %2554 = vmatpush1.bf16.msra.mxu0 %v2052
      %2555 = vmatprep.subr.bf16.mxu0 0
      %2556 = vmatpush1.bf16.msra.mxu0 0
      %2557 = vmatprep.subr.bf16.mxu0 0
      %2558 = vmatpush1.bf16.msra.mxu0 0
      %2559 = vmatprep.subr.bf16.mxu0 0
      %2560 = vmatpush1.bf16.msra.mxu0 0
      %2561 = vmatprep.subr.bf16.mxu0 0
      %2562 = vmatpush1.bf16.msra.mxu0 0
      %2563 = vmatprep.subr.bf16.mxu0 0
      %2564 = vmatpush1.bf16.msra.mxu0 0
      %2565 = vmatprep.subr.bf16.mxu0 0
      %2566 = vmatpush1.bf16.msra.mxu0 0
      %2567 = vmatprep.subr.bf16.mxu0 0
      %2568 = vmatpush1.bf16.msra.mxu0 0
      %2569 = vmatprep.subr.bf16.mxu0 0
      %2570 = vmatpush1.bf16.msra.mxu0 0
      %2571 = vmatprep.mubr.bf16.mxu0 0
      %2572 = vmatmul.mubr.bf16.gmra.mrb[0].mxu0 %v2027
      %v2573 = vpop.f32.mrb[0].mxu0
      %v2574 = vadd.f32 %v2477, %v2573
      %v2575 = vpop.f32.mrb[0].mxu0
      %v2576 = vpop.f32.mrb[0].mxu0
      %v2577 = vadd.f32 %v2480, %v2576
      %v2578 = vpop.f32.mrb[0].mxu0
      %2579 = vmatprep.mubr.bf16.mxu0 0
      %2580 = vmatmul.mubr.bf16.gmra.mrb[0].mxu0 %v2030
      %v2581 = vpop.f32.mrb[0].mxu0
      %v2582 = vadd.f32 %v2485, %v2581
      %v2583 = vpop.f32.mrb[0].mxu0
      %v2584 = vpop.f32.mrb[0].mxu0
      %v2585 = vadd.f32 %v2488, %v2584
      %v2586 = vpop.f32.mrb[0].mxu0
      %2587 = vmatprep.mubr.bf16.mxu0 0
      %2588 = vmatmul.mubr.bf16.gmra.mrb[0].mxu0 %v2033
      %v2589 = vpop.f32.mrb[0].mxu0
      %v2590 = vadd.f32 %v2493, %v2589
      %v2591 = vpop.f32.mrb[0].mxu0
      %v2592 = vpop.f32.mrb[0].mxu0
      %v2593 = vadd.f32 %v2496, %v2592
      %v2594 = vpop.f32.mrb[0].mxu0
      %2595 = vmatprep.mubr.bf16.mxu0 0
      %2596 = vmatmul.mubr.bf16.gmra.mrb[0].mxu0 %v2036
      %v2597 = vpop.f32.mrb[0].mxu0
      %v2598 = vadd.f32 %v2501, %v2597
      %v2599 = vpop.f32.mrb[0].mxu0
      %v2600 = vpop.f32.mrb[0].mxu0
      %v2601 = vadd.f32 %v2504, %v2600
      %v2602 = vpop.f32.mrb[0].mxu0
      %2603 = vmatprep.mubr.bf16.mxu0 0
      %2604 = vmatmul.mubr.bf16.gmra.mrb[0].mxu0 %v2039
      %v2605 = vpop.f32.mrb[0].mxu0
      %v2606 = vadd.f32 %v2509, %v2605
      %v2607 = vpop.f32.mrb[0].mxu0
      %v2608 = vpop.f32.mrb[0].mxu0
      %v2609 = vadd.f32 %v2512, %v2608
      %v2610 = vpop.f32.mrb[0].mxu0
      %2611 = vmatprep.mubr.bf16.mxu0 0
      %2612 = vmatmul.mubr.bf16.gmra.mrb[0].mxu0 %v2042
      %v2613 = vpop.f32.mrb[0].mxu0
      %v2614 = vadd.f32 %v2517, %v2613
      %v2615 = vpop.f32.mrb[0].mxu0
      %v2616 = vpop.f32.mrb[0].mxu0
      %v2617 = vadd.f32 %v2520, %v2616
      %v2618 = vpop.f32.mrb[0].mxu0
      %2619 = vmatprep.mubr.bf16.mxu0 0
      %2620 = vmatmul.mubr.bf16.gmra.mrb[0].mxu0 %v2045
      %v2621 = vpop.f32.mrb[0].mxu0
      %v2622 = vadd.f32 %v2525, %v2621
      %v2623 = vpop.f32.mrb[0].mxu0
      %v2624 = vpop.f32.mrb[0].mxu0
      %v2625 = vadd.f32 %v2528, %v2624
      %v2626 = vpop.f32.mrb[0].mxu0
      %2627 = vmatprep.mubr.bf16.mxu0 0
      %2628 = vmatmul.mubr.bf16.gmra.mrb[0].mxu0 %v2048
      %v2629 = vpop.f32.mrb[0].mxu0
      %v2630 = vadd.f32 %v2533, %v2629
      %v2631 = vpop.f32.mrb[0].mxu0
      %v2632 = vpop.f32.mrb[0].mxu0
      %v2633 = vadd.f32 %v2536, %v2632
      %v2634 = vpop.f32.mrb[0].mxu0
      %2635 = vdwg.mxu0
      %v2636 = vmax.f32 %v2574, 0.0
      %v2637 = vmax.f32 %v2577, 0.0
      %v2638 = vmax.f32 %v2582, 0.0
      %v2639 = vmax.f32 %v2585, 0.0
      %v2640 = vmax.f32 %v2590, 0.0
      %v2641 = vmax.f32 %v2593, 0.0
      %v2642 = vmax.f32 %v2598, 0.0
      %v2643 = vmax.f32 %v2601, 0.0
      %v2644 = vmax.f32 %v2606, 0.0
      %v2645 = vmax.f32 %v2609, 0.0
      %v2646 = vmax.f32 %v2614, 0.0
      %v2647 = vmax.f32 %v2617, 0.0
      %v2648 = vmax.f32 %v2622, 0.0
      %v2649 = vmax.f32 %v2625, 0.0
      %v2650 = vmax.f32 %v2630, 0.0
      %v2651 = vmax.f32 %v2633, 0.0
      %vm2652 = vcmask 97280
      %2653 = vst.msk [vmem:[%s206] sm:$0xff] %vm2652, %v2636
      %2654 = vst.msk [vmem:[%s206 + $0x8] sm:$0xff] %vm2652, %v2637
      %2655 = vst.msk [vmem:[%s206 + $0x10] sm:$0xff] %vm2652, %v2638
      %2656 = vst.msk [vmem:[%s206 + $0x18] sm:$0xff] %vm2652, %v2639
      %2657 = vst.msk [vmem:[%s206 + $0x20] sm:$0xff] %vm2652, %v2640
      %2658 = vst.msk [vmem:[%s206 + $0x28] sm:$0xff] %vm2652, %v2641
      %2659 = vst.msk [vmem:[%s206 + $0x30] sm:$0xff] %vm2652, %v2642
      %2660 = vst.msk [vmem:[%s206 + $0x38] sm:$0xff] %vm2652, %v2643
      %2661 = vst.msk [vmem:[%s206 + $0x40] sm:$0xff] %vm2652, %v2644
      %2662 = vst.msk [vmem:[%s206 + $0x48] sm:$0xff] %vm2652, %v2645
      %2663 = vst.msk [vmem:[%s206 + $0x50] sm:$0xff] %vm2652, %v2646
      %2664 = vst.msk [vmem:[%s206 + $0x58] sm:$0xff] %vm2652, %v2647
      %2665 = vst.msk [vmem:[%s206 + $0x60] sm:$0xff] %vm2652, %v2648
      %2666 = vst.msk [vmem:[%s206 + $0x68] sm:$0xff] %vm2652, %v2649
      %2667 = vst.msk [vmem:[%s206 + $0x70] sm:$0xff] %vm2652, %v2650
      %2668 = vst.msk [vmem:[%s206 + $0x78] sm:$0xff] %vm2652, %v2651
      %s2669 = smul.u32 16, %s19
      %p2670 = scmp.lt.s32.totalorder %s18, 1
      %s2671 = scalar_select %p2670, %s18, 1
      %p2672 = scmp.lt.s32.totalorder %s2669, 31
      %s2673 = scalar_select %p2672, %s2669, 31
      %s2674 = smul.addr %s2671, 32
      %s2675 = sadd.s32 %s2673, %s2674
      %s2676 = smul.addr %s2675, 8
      %s2677 = scalar_lea.vmem %s3, %s2676
      // Predicated region
      $region33: #{shrinknet_forward.6} parent=31 // pred_check
        %p2678 = pneg %p116
      $region34: #{shrinknet_forward.6} parent=31 // pred_check_branch
        %2680 = sbr.rel (%p2678) target = $region36
      $region35: #{shrinknet_forward.6} parent=31 // pred_region
        %s2681 = smul.u32 16, %s19
      $region36: #{shrinknet_forward.6} parent=31 // pred_fallthru
        _
    $region32: #{shrinknet_forward.6} parent=5 // pred_fallthru
      _
    %p2682 = scmp.le.s32.totalorder 2, %s9
    // Predicated region
    $region37: #{shrinknet_forward.6} parent=5 // pred_check
      %p2683 = pneg %p2682
    $region38: #{shrinknet_forward.6} parent=5 // pred_check_branch
      %2685 = sbr.rel (%p2683) target = $region40
    $region39: #{shrinknet_forward.6} parent=5 // pred_region
      %s2686 = ssub.s32 %s9, 2
      // Predicated region
      $region41: #{shrinknet_forward.6} parent=39 // pred_check
        %p2687 = pneg %p122
      $region42: #{shrinknet_forward.6} parent=39 // pred_check_branch
        %2689 = sbr.rel (%p2687) target = $region44
      $region43: #{shrinknet_forward.6} parent=39 // pred_region
        %s2690 = smul.u32 16, %s21
        %p2691 = scmp.lt.s32.totalorder %s20, 1
        %s2692 = scalar_select %p2691, %s20, 1
        %p2693 = scmp.lt.s32.totalorder %s2690, 31
        %s2694 = scalar_select %p2693, %s2690, 31
        %s2695 = smul.addr %s2692, 32
        %s2696 = sadd.s32 %s2694, %s2695
        %s2697 = smul.addr %s2696, 8
        %s2698 = scalar_lea.vmem %s3, %s2697
      $region44: #{shrinknet_forward.6} parent=39 // pred_fallthru
        _
    $region40: #{shrinknet_forward.6} parent=5 // pred_fallthru
      _
  $region6: #{shrinknet_forward.6} parent=0 // loop_footer
    %s13 = sadd.s32 1, %s9
  $region7: #{shrinknet_forward.6} parent=0 // loop_footer_branch
    %8 = sbr.rel target = $region3
  $region8: #{shrinknet_forward.6} parent=0 // loop_exit
    _

// kernel: shrinknet_forward.9
$region0: #{shrinknet_forward.9}
  #allocation0 [shape = 'u32[]', space=smem, size = 0x4, offset = 0x4, fixed_abs, tag = 'smem constant byte address 0x4 - core index']
  #allocation1 [shape = 'u32[144,128]{1,0:T(1,128)}', space=vmem, size = 0x12000, scoped, tag = 'internal scratch']
  %s0 = inlined_call_operand.vmem [shape: bf16[2,2,12,20,56], index: 0, kind: input, shape index: {}]
  %s1 = inlined_call_operand.vmem [shape: bf16[1400,4], index: 1, kind: input, shape index: {}]
  %s2 = inlined_call_operand.vmem [shape: f32[1,4], index: 2, kind: input, shape index: {}]
  %s3 = inlined_call_operand.vmem [shape: f32[2,256,4], index: 3, kind: output, shape index: {}]
  %s4 = sld [smem:[#allocation0]]
  $region45: #{shrinknet_forward.9} parent=0
    _
  %s6 = ssub.s32 1, %s4
  %s7 = scalar_select 0, %s6, %s4
  loop: start=0, step=1, limit=6
  $region2: #{shrinknet_forward.9} parent=0 // loop_pre_header
    _
  $region3: #{shrinknet_forward.9} parent=0 // loop_header
    %s9 = sphi 0, %s13
    %p10 = scmp.ge.s32.totalorder %s9, 6
    %s16 = sphi 0, %s28
    %s17 = sphi 0, %s24
    %s18 = sphi 0, %s16
    %s19 = sphi 0, %s17
    %s20 = sphi 0, %s18
    %s21 = sphi 0, %s19
    %s33 = sphi 0, %s35
    %s36 = sphi 0, %s33
    %s37 = sphi 0, %s36
    %s53 = sphi 0, %s37
    %s57 = sphi 0, %s57
    %s59 = sphi 0, %s57
    %s60 = sphi 0, %s59
    %s74 = sphi 0, %s60
    %s78 = sphi 0, %s78
    %s80 = sphi 0, %s78
    %s81 = sphi 0, %s80
    %s95 = sphi 0, %s81
    %s103 = sphi 0, %s105
    %s106 = sphi 0, %s103
    %s107 = sphi 0, %s106
    %s123 = sphi 0, %s107
  $region4: #{shrinknet_forward.9} parent=0 // loop_header_branch
    %12 = sbr.rel (%p10) target = $region8
  $region5: #{shrinknet_forward.9} parent=0 // loop_body
    %s14 = ssub.s32 %s9, 1
    %s15 = ssub.s32 %s9, 2
    %s22 = sadd.s32 1, %s17
    %p23 = scmp.ge.s32.totalorder %s22, 2
    %s24 = scalar_select %p23, 0, %s22
    %s25 = sadd.s32 1, %s16
    %s26 = scalar_select %p23, %s25, %s16
    %p27 = scmp.ge.s32.totalorder %s26, 2
    %s28 = scalar_select %p27, 0, %s26
    %s29 = ssub.s32 %s16, %s28
    %s30 = ssub.s32 %s17, %s24
    %s31 = sor.u32 %s29, %s30
    %p32 = scmp.eq.s32.totalorder %s31, 0
    %s34 = sadd.s32 %s33, 1
    %s35 = scalar_select %p32, %s33, %s34
    %p38 = pneg %p32
    %p39 = scmp.eq.s32.totalorder %s9, 3
    %p40 = por %p38, %p39
    %p41 = scmp.ne.s32.totalorder %s33, %s36
    %p42 = scmp.eq.s32.totalorder %s9, 0
    %p43 = por %p41, %p42
    %p44 = scmp.ne.s32.totalorder %s33, %s36
    %p45 = scmp.eq.s32.totalorder %s14, 3
    %p46 = por %p44, %p45
    %p47 = scmp.ne.s32.totalorder %s36, %s37
    %p48 = scmp.eq.s32.totalorder %s14, 0
    %p49 = por %p47, %p48
    %p50 = scmp.ne.s32.totalorder %s36, %s37
    %p51 = scmp.eq.s32.totalorder %s15, 3
    %p52 = por %p50, %p51
    %p54 = scmp.ne.s32.totalorder %s37, %s53
    %p55 = scmp.eq.s32.totalorder %s15, 0
    %p56 = por %p54, %p55
    %s58 = sadd.s32 %s57, 1
    %p61 = scmp.eq.s32.totalorder %s9, 3
    %p62 = scmp.ne.s32.totalorder %s57, %s59
    %p63 = scmp.eq.s32.totalorder %s9, 0
    %p64 = por %p62, %p63
    %p65 = scmp.ne.s32.totalorder %s57, %s59
    %p66 = scmp.eq.s32.totalorder %s14, 3
    %p67 = por %p65, %p66
    %p68 = scmp.ne.s32.totalorder %s59, %s60
    %p69 = scmp.eq.s32.totalorder %s14, 0
    %p70 = por %p68, %p69
    %p71 = scmp.ne.s32.totalorder %s59, %s60
    %p72 = scmp.eq.s32.totalorder %s15, 3
    %p73 = por %p71, %p72
    %p75 = scmp.ne.s32.totalorder %s60, %s74
    %p76 = scmp.eq.s32.totalorder %s15, 0
    %p77 = por %p75, %p76
    %s79 = sadd.s32 %s78, 1
    %p82 = scmp.eq.s32.totalorder %s9, 3
    %p83 = scmp.ne.s32.totalorder %s78, %s80
    %p84 = scmp.eq.s32.totalorder %s9, 0
    %p85 = por %p83, %p84
    %p86 = scmp.ne.s32.totalorder %s78, %s80
    %p87 = scmp.eq.s32.totalorder %s14, 3
    %p88 = por %p86, %p87
    %p89 = scmp.ne.s32.totalorder %s80, %s81
    %p90 = scmp.eq.s32.totalorder %s14, 0
    %p91 = por %p89, %p90
    %p92 = scmp.ne.s32.totalorder %s80, %s81
    %p93 = scmp.eq.s32.totalorder %s15, 3
    %p94 = por %p92, %p93
    %p96 = scmp.ne.s32.totalorder %s81, %s95
    %p97 = scmp.eq.s32.totalorder %s15, 0
    %p98 = por %p96, %p97
    %s99 = ssub.s32 %s16, %s28
    %s100 = ssub.s32 %s17, %s24
    %s101 = sor.u32 %s99, %s100
    %p102 = scmp.eq.s32.totalorder %s101, 0
    %s104 = sadd.s32 %s103, 1
    %s105 = scalar_select %p102, %s103, %s104
    %p108 = pneg %p102
    %p109 = scmp.eq.s32.totalorder %s9, 3
    %p110 = por %p108, %p109
    %p111 = scmp.ne.s32.totalorder %s103, %s106
    %p112 = scmp.eq.s32.totalorder %s9, 0
    %p113 = por %p111, %p112
    %p114 = scmp.ne.s32.totalorder %s103, %s106
    %p115 = scmp.eq.s32.totalorder %s14, 3
    %p116 = por %p114, %p115
    %p117 = scmp.ne.s32.totalorder %s106, %s107
    %p118 = scmp.eq.s32.totalorder %s14, 0
    %p119 = por %p117, %p118
    %p120 = scmp.ne.s32.totalorder %s106, %s107
    %p121 = scmp.eq.s32.totalorder %s15, 3
    %p122 = por %p120, %p121
    %p124 = scmp.ne.s32.totalorder %s107, %s123
    %p125 = scmp.eq.s32.totalorder %s15, 0
    %p126 = por %p124, %p125
    %p127 = scmp.le.s32.totalorder 1, %s9
    %p128 = scmp.lt.s32.totalorder %s9, 5
    %p129 = pnand %p127, %p128
    %p130 = pneg %p129
    // Predicated region
    $region9: #{shrinknet_forward.9} parent=5 // pred_check
      _
    $region10: #{shrinknet_forward.9} parent=5 // pred_check_branch
      %132 = sbr.rel (%p129) target = $region12
    $region11: #{shrinknet_forward.9} parent=5 // pred_region
      %s133 = ssub.s32 %s9, 1
      // Predicated region
      $region13: #{shrinknet_forward.9} parent=11 // pred_check
        %p134 = pneg %p70
      $region14: #{shrinknet_forward.9} parent=11 // pred_check_branch
        %136 = sbr.rel (%p134) target = $region16
      $region15: #{shrinknet_forward.9} parent=11 // pred_region
        _
      $region16: #{shrinknet_forward.9} parent=11 // pred_fallthru
        _
      // Predicated region
      $region17: #{shrinknet_forward.9} parent=11 // pred_check
        %p137 = pneg %p91
      $region18: #{shrinknet_forward.9} parent=11 // pred_check_branch
        %139 = sbr.rel (%p137) target = $region20
      $region19: #{shrinknet_forward.9} parent=11 // pred_region
        _
      $region20: #{shrinknet_forward.9} parent=11 // pred_fallthru
        _
    $region12: #{shrinknet_forward.9} parent=5 // pred_fallthru
      _
    %p140 = scmp.lt.s32.totalorder %s9, 4
    // Predicated region
    $region21: #{shrinknet_forward.9} parent=5 // pred_check
      %p141 = pneg %p140
    $region22: #{shrinknet_forward.9} parent=5 // pred_check_branch
      %143 = sbr.rel (%p141) target = $region24
    $region23: #{shrinknet_forward.9} parent=5 // pred_region
      // Predicated region
      $region25: #{shrinknet_forward.9} parent=23 // pred_check
        %p144 = pneg %p43
      $region26: #{shrinknet_forward.9} parent=23 // pred_check_branch
        %146 = sbr.rel (%p144) target = $region28
      $region27: #{shrinknet_forward.9} parent=23 // pred_region
        %p147 = scmp.lt.s32.totalorder %s16, 1
        %s148 = scalar_select %p147, %s16, 1
        %p149 = scmp.lt.s32.totalorder %s17, 1
        %s150 = scalar_select %p149, %s17, 1
        %s151 = smul.addr %s150, 36
        %s152 = smul.addr %s148, 72
        %s153 = sadd.s32 %s151, %s152
        %s154 = smul.addr %s153, 4
        %s155 = scalar_lea.vmem %s0, %s154
      $region28: #{shrinknet_forward.9} parent=23 // pred_fallthru
        _
    $region24: #{shrinknet_forward.9} parent=5 // pred_fallthru
      _
    %p156 = scmp.le.s32.totalorder 1, %s9
    %p157 = scmp.lt.s32.totalorder %s9, 5
    %p158 = pnand %p156, %p157
    %p159 = pneg %p158
    // Predicated region
    $region29: #{shrinknet_forward.9} parent=5 // pred_check
      _
    $region30: #{shrinknet_forward.9} parent=5 // pred_check_branch
      %161 = sbr.rel (%p158) target = $region32
    $region31: #{shrinknet_forward.9} parent=5 // pred_region
      %s162 = ssub.s32 %s9, 1
      %p163 = scmp.lt.s32.totalorder %s18, 1
      %s164 = scalar_select %p163, %s18, 1
      %p165 = scmp.lt.s32.totalorder %s19, 1
      %s166 = scalar_select %p165, %s19, 1
      %s167 = smul.addr %s166, 36
      %s168 = smul.addr %s164, 72
      %s169 = sadd.s32 %s167, %s168
      %s170 = smul.addr %s169, 4
      %s171 = scalar_lea.vmem %s0, %s170
      %p172 = pneg %p49
      %p173 = pneg %p46
      %p174 = pneg %p70
      %p175 = pneg %p67
      %p176 = pneg %p91
      %p177 = pneg %p88
      %p178 = pneg %p119
      %p179 = pneg %p116
      %s180 = smul.u32 16, %s19
      %p181 = scmp.lt.s32.totalorder %s18, 1
      %s182 = scalar_select %p181, %s18, 1
      %p183 = scmp.lt.s32.totalorder %s180, 31
      %s184 = scalar_select %p183, %s180, 31
      %s185 = smul.addr %s182, 32
      %s186 = sadd.s32 %s184, %s185
      %s187 = smul.addr %s186, 8
      %s188 = scalar_lea.vmem %s3, %s187
      %p189 = scmp.lt.s32.totalorder %s18, 1
      %s190 = scalar_select %p189, %s18, 1
      %p191 = scmp.lt.s32.totalorder %s19, 1
      %s192 = scalar_select %p191, %s19, 1
      %s193 = smul.addr %s192, 36
      %s194 = smul.addr %s190, 72
      %s195 = sadd.s32 %s193, %s194
      %s196 = smul.addr %s195, 4
      %s197 = scalar_lea.vmem %s0, %s196
      %s198 = smul.u32 16, %s19
      %p199 = scmp.lt.s32.totalorder %s18, 1
      %s200 = scalar_select %p199, %s18, 1
      %p201 = scmp.lt.s32.totalorder %s198, 31
      %s202 = scalar_select %p201, %s198, 31
      %s203 = smul.addr %s200, 32
      %s204 = sadd.s32 %s202, %s203
      %s205 = smul.addr %s204, 8
      %s206 = scalar_lea.vmem %s3, %s205
      %s207 = smul.u32 16, %s19
      %v209 = vld [vmem:[%s197] sm:$0xf]
      %v210 = vld [vmem:[%s197 + $0x4] sm:$0xf]
      %v211 = vld [vmem:[%s197 + $0x8] sm:$0x3]
      %v212 = vld [vmem:[%s197 + $0xc] sm:$0xf]
      %v213 = vld [vmem:[%s197 + $0x10] sm:$0xf]
      %v214 = vld [vmem:[%s197 + $0x14] sm:$0x3]
      %v215 = vld [vmem:[%s197 + $0x18] sm:$0xf]
      %v216 = vld [vmem:[%s197 + $0x1c] sm:$0xf]
      %v217 = vld [vmem:[%s197 + $0x20] sm:$0x3]
      %v218 = vld [vmem:[%s197 + $0x24] sm:$0xf]
      %v219 = vld [vmem:[%s197 + $0x28] sm:$0xf]
      %v220 = vld [vmem:[%s197 + $0x2c] sm:$0x3]
      %v221 = vld [vmem:[%s197 + $0x30] sm:$0xf]
      %v222 = vld [vmem:[%s197 + $0x34] sm:$0xf]
      %v223 = vld [vmem:[%s197 + $0x38] sm:$0x3]
      %v224 = vld [vmem:[%s197 + $0x3c] sm:$0xf]
      %v225 = vld [vmem:[%s197 + $0x40] sm:$0xf]
      %v226 = vld [vmem:[%s197 + $0x44] sm:$0x3]
      %v227 = vld [vmem:[%s197 + $0x48] sm:$0xf]
      %v228 = vld [vmem:[%s197 + $0x4c] sm:$0xf]
      %v229 = vld [vmem:[%s197 + $0x50] sm:$0x3]
      %v230 = vld [vmem:[%s197 + $0x54] sm:$0xf]
      %v231 = vld [vmem:[%s197 + $0x58] sm:$0xf]
      %v232 = vld [vmem:[%s197 + $0x5c] sm:$0x3]
      %v233 = vld [vmem:[%s197 + $0x60] sm:$0xf]
      %v234 = vld [vmem:[%s197 + $0x64] sm:$0xf]
      %v235 = vld [vmem:[%s197 + $0x68] sm:$0x3]
      %v236 = vld [vmem:[%s197 + $0x6c] sm:$0xf]
      %v237 = vld [vmem:[%s197 + $0x70] sm:$0xf]
      %v238 = vld [vmem:[%s197 + $0x74] sm:$0x3]
      %v239 = vld [vmem:[%s197 + $0x78] sm:$0xf]
      %v240 = vld [vmem:[%s197 + $0x7c] sm:$0xf]
      %v241 = vld [vmem:[%s197 + $0x80] sm:$0x3]
      %v242 = vld [vmem:[%s197 + $0x84] sm:$0xf]
      %v243 = vld [vmem:[%s197 + $0x88] sm:$0xf]
      %v244 = vld [vmem:[%s197 + $0x8c] sm:$0x3]
      %v261 = vunpack.c.l.b16 %v209
      %v262 = vunpack.c.l.b16 %v210
      %v263 = vunpack.c.l.b16 %v212
      %v264 = vunpack.c.l.b16 %v213
      %v265 = vunpack.c.l.b16 %v215
      %v266 = vunpack.c.l.b16 %v216
      %v267 = vunpack.c.l.b16 %v218
      %v268 = vunpack.c.l.b16 %v219
      %v269 = vunpack.c.l.b16 %v221
      %v270 = vunpack.c.l.b16 %v222
      %v271 = vunpack.c.l.b16 %v224
      %v272 = vunpack.c.l.b16 %v225
      %v273 = vunpack.c.l.b16 %v227
      %v274 = vunpack.c.l.b16 %v228
      %v275 = vunpack.c.l.b16 %v230
      %v276 = vunpack.c.l.b16 %v231
      %v277 = vpack.c.b16 %v262, %v261
      %v278 = vpack.c.b16 %v264, %v263
      %v279 = vpack.c.b16 %v266, %v265
      %v280 = vpack.c.b16 %v268, %v267
      %v281 = vpack.c.b16 %v270, %v269
      %v282 = vpack.c.b16 %v272, %v271
      %v283 = vpack.c.b16 %v274, %v273
      %v284 = vpack.c.b16 %v276, %v275
      %v293 = vunpack.c.l.b16 %v211
      %v294 = vunpack.c.l.b16 %v214
      %v295 = vunpack.c.l.b16 %v217
      %v296 = vunpack.c.l.b16 %v220
      %v297 = vunpack.c.l.b16 %v223
      %v298 = vunpack.c.l.b16 %v226
      %v299 = vunpack.c.l.b16 %v229
      %v300 = vunpack.c.l.b16 %v232
      %v301 = vpack.c.b16 %v293, %v293
      %v302 = vpack.c.b16 %v294, %v294
      %v303 = vpack.c.b16 %v295, %v295
      %v304 = vpack.c.b16 %v296, %v296
      %v305 = vpack.c.b16 %v297, %v297
      %v306 = vpack.c.b16 %v298, %v298
      %v307 = vpack.c.b16 %v299, %v299
      %v308 = vpack.c.b16 %v300, %v300
      %vm309 = vsmask.f32 7424
      %v311 = vshrl.u32 %v277, 16
      %v313 = vshll.u32 %v277, 16
      %v315 = vrot.slane %v313, 1
      %v316 = vor.u32 %v311, %v315
      %v318 = vshll.u32 %v301, 16
      %v320 = vrot.slane %v318, 1
      %v321 = vsel %vm309, %v316, %v320
      %v323 = vshrl.u32 %v278, 16
      %v325 = vshll.u32 %v278, 16
      %v327 = vrot.slane %v325, 1
      %v328 = vor.u32 %v323, %v327
      %v330 = vshll.u32 %v302, 16
      %v332 = vrot.slane %v330, 1
      %v333 = vsel %vm309, %v328, %v332
      %v335 = vshrl.u32 %v279, 16
      %v337 = vshll.u32 %v279, 16
      %v339 = vrot.slane %v337, 1
      %v340 = vor.u32 %v335, %v339
      %v342 = vshll.u32 %v303, 16
      %v344 = vrot.slane %v342, 1
      %v345 = vsel %vm309, %v340, %v344
      %v347 = vshrl.u32 %v280, 16
      %v349 = vshll.u32 %v280, 16
      %v351 = vrot.slane %v349, 1
      %v352 = vor.u32 %v347, %v351
      %v354 = vshll.u32 %v304, 16
      %v356 = vrot.slane %v354, 1
      %v357 = vsel %vm309, %v352, %v356
      %v359 = vshrl.u32 %v281, 16
      %v361 = vshll.u32 %v281, 16
      %v363 = vrot.slane %v361, 1
      %v364 = vor.u32 %v359, %v363
      %v366 = vshll.u32 %v305, 16
      %v368 = vrot.slane %v366, 1
      %v369 = vsel %vm309, %v364, %v368
      %v371 = vshrl.u32 %v282, 16
      %v373 = vshll.u32 %v282, 16
      %v375 = vrot.slane %v373, 1
      %v376 = vor.u32 %v371, %v375
      %v378 = vshll.u32 %v306, 16
      %v380 = vrot.slane %v378, 1
      %v381 = vsel %vm309, %v376, %v380
      %v383 = vshrl.u32 %v283, 16
      %v385 = vshll.u32 %v283, 16
      %v387 = vrot.slane %v385, 1
      %v388 = vor.u32 %v383, %v387
      %v390 = vshll.u32 %v307, 16
      %v392 = vrot.slane %v390, 1
      %v393 = vsel %vm309, %v388, %v392
      %v395 = vshrl.u32 %v284, 16
      %v397 = vshll.u32 %v284, 16
      %v399 = vrot.slane %v397, 1
      %v400 = vor.u32 %v395, %v399
      %v402 = vshll.u32 %v308, 16
      %v404 = vrot.slane %v402, 1
      %v405 = vsel %vm309, %v400, %v404
      %406 = vrot.lane.b32.xlu0 %v321, 56
      %v407 = vpop.permute.xlu0 %406
      %408 = vrot.lane.b32.xlu0 %v333, 56
      %v409 = vpop.permute.xlu0 %408
      %410 = vrot.lane.b32.xlu0 %v345, 56
      %v411 = vpop.permute.xlu0 %410
      %412 = vrot.lane.b32.xlu0 %v357, 56
      %v413 = vpop.permute.xlu0 %412
      %414 = vrot.lane.b32.xlu0 %v369, 56
      %v415 = vpop.permute.xlu0 %414
      %416 = vrot.lane.b32.xlu0 %v381, 56
      %v417 = vpop.permute.xlu0 %416
      %418 = vrot.lane.b32.xlu0 %v393, 56
      %v419 = vpop.permute.xlu0 %418
      %420 = vrot.lane.b32.xlu0 %v405, 56
      %v421 = vpop.permute.xlu0 %420
      %vm422 = vcmask 1046528
      %v423 = vrot.slane %v277, 1
      %v424 = vrot.slane %v301, 1
      %v425 = vsel %vm422, %v423, %v424
      %v426 = vrot.slane %v278, 1
      %v427 = vrot.slane %v302, 1
      %v428 = vsel %vm422, %v426, %v427
      %v429 = vrot.slane %v279, 1
      %v430 = vrot.slane %v303, 1
      %v431 = vsel %vm422, %v429, %v430
      %v432 = vrot.slane %v280, 1
      %v433 = vrot.slane %v304, 1
      %v434 = vsel %vm422, %v432, %v433
      %v435 = vrot.slane %v281, 1
      %v436 = vrot.slane %v305, 1
      %v437 = vsel %vm422, %v435, %v436
      %v438 = vrot.slane %v282, 1
      %v439 = vrot.slane %v306, 1
      %v440 = vsel %vm422, %v438, %v439
      %v441 = vrot.slane %v283, 1
      %v442 = vrot.slane %v307, 1
      %v443 = vsel %vm422, %v441, %v442
      %v444 = vrot.slane %v284, 1
      %v445 = vrot.slane %v308, 1
      %v446 = vsel %vm422, %v444, %v445
      %447 = vrot.lane.b32.xlu0 %v425, 112
      %v448 = vpop.permute.xlu0 %447
      %449 = vrot.lane.b32.xlu0 %v428, 112
      %v450 = vpop.permute.xlu0 %449
      %451 = vrot.lane.b32.xlu0 %v431, 112
      %v452 = vpop.permute.xlu0 %451
      %453 = vrot.lane.b32.xlu0 %v434, 112
      %v454 = vpop.permute.xlu0 %453
      %455 = vrot.lane.b32.xlu0 %v437, 112
      %v456 = vpop.permute.xlu0 %455
      %457 = vrot.lane.b32.xlu0 %v440, 112
      %v458 = vpop.permute.xlu0 %457
      %459 = vrot.lane.b32.xlu0 %v443, 112
      %v460 = vpop.permute.xlu0 %459
      %461 = vrot.lane.b32.xlu0 %v446, 112
      %v462 = vpop.permute.xlu0 %461
      %vm463 = vsmask.f32 6400
      %v464 = vrot.slane %v311, 1
      %v465 = vrot.slane %v313, 2
      %v466 = vor.u32 %v464, %v465
      %v467 = vshrl.u32 %v301, 16
      %v469 = vrot.slane %v467, 1
      %v470 = vrot.slane %v318, 2
      %v471 = vor.u32 %v469, %v470
      %v472 = vsel %vm463, %v466, %v471
      %v473 = vrot.slane %v323, 1
      %v474 = vrot.slane %v325, 2
      %v475 = vor.u32 %v473, %v474
      %v476 = vshrl.u32 %v302, 16
      %v478 = vrot.slane %v476, 1
      %v479 = vrot.slane %v330, 2
      %v480 = vor.u32 %v478, %v479
      %v481 = vsel %vm463, %v475, %v480
      %v482 = vrot.slane %v335, 1
      %v483 = vrot.slane %v337, 2
      %v484 = vor.u32 %v482, %v483
      %v485 = vshrl.u32 %v303, 16
      %v487 = vrot.slane %v485, 1
      %v488 = vrot.slane %v342, 2
      %v489 = vor.u32 %v487, %v488
      %v490 = vsel %vm463, %v484, %v489
      %v491 = vrot.slane %v347, 1
      %v492 = vrot.slane %v349, 2
      %v493 = vor.u32 %v491, %v492
      %v494 = vshrl.u32 %v304, 16
      %v496 = vrot.slane %v494, 1
      %v497 = vrot.slane %v354, 2
      %v498 = vor.u32 %v496, %v497
      %v499 = vsel %vm463, %v493, %v498
      %v500 = vrot.slane %v359, 1
      %v501 = vrot.slane %v361, 2
      %v502 = vor.u32 %v500, %v501
      %v503 = vshrl.u32 %v305, 16
      %v505 = vrot.slane %v503, 1
      %v506 = vrot.slane %v366, 2
      %v507 = vor.u32 %v505, %v506
      %v508 = vsel %vm463, %v502, %v507
      %v509 = vrot.slane %v371, 1
      %v510 = vrot.slane %v373, 2
      %v511 = vor.u32 %v509, %v510
      %v512 = vshrl.u32 %v306, 16
      %v514 = vrot.slane %v512, 1
      %v515 = vrot.slane %v378, 2
      %v516 = vor.u32 %v514, %v515
      %v517 = vsel %vm463, %v511, %v516
      %v518 = vrot.slane %v383, 1
      %v519 = vrot.slane %v385, 2
      %v520 = vor.u32 %v518, %v519
      %v521 = vshrl.u32 %v307, 16
      %v523 = vrot.slane %v521, 1
      %v524 = vrot.slane %v390, 2
      %v525 = vor.u32 %v523, %v524
      %v526 = vsel %vm463, %v520, %v525
      %v527 = vrot.slane %v395, 1
      %v528 = vrot.slane %v397, 2
      %v529 = vor.u32 %v527, %v528
      %v530 = vshrl.u32 %v308, 16
      %v532 = vrot.slane %v530, 1
      %v533 = vrot.slane %v402, 2
      %v534 = vor.u32 %v532, %v533
      %v535 = vsel %vm463, %v529, %v534
      %536 = vrot.lane.b32.xlu0 %v472, 40
      %v537 = vpop.permute.xlu0 %536
      %538 = vrot.lane.b32.xlu0 %v481, 40
      %v539 = vpop.permute.xlu0 %538
      %540 = vrot.lane.b32.xlu0 %v490, 40
      %v541 = vpop.permute.xlu0 %540
      %542 = vrot.lane.b32.xlu0 %v499, 40
      %v543 = vpop.permute.xlu0 %542
      %544 = vrot.lane.b32.xlu0 %v508, 40
      %v545 = vpop.permute.xlu0 %544
      %546 = vrot.lane.b32.xlu0 %v517, 40
      %v547 = vpop.permute.xlu0 %546
      %548 = vrot.lane.b32.xlu0 %v526, 40
      %v549 = vpop.permute.xlu0 %548
      %550 = vrot.lane.b32.xlu0 %v535, 40
      %v551 = vpop.permute.xlu0 %550
      %vm552 = vcmask 1045504
      %v553 = vrot.slane %v277, 2
      %v554 = vrot.slane %v301, 2
      %v555 = vsel %vm552, %v553, %v554
      %v556 = vrot.slane %v278, 2
      %v557 = vrot.slane %v302, 2
      %v558 = vsel %vm552, %v556, %v557
      %v559 = vrot.slane %v279, 2
      %v560 = vrot.slane %v303, 2
      %v561 = vsel %vm552, %v559, %v560
      %v562 = vrot.slane %v280, 2
      %v563 = vrot.slane %v304, 2
      %v564 = vsel %vm552, %v562, %v563
      %v565 = vrot.slane %v281, 2
      %v566 = vrot.slane %v305, 2
      %v567 = vsel %vm552, %v565, %v566
      %v568 = vrot.slane %v282, 2
      %v569 = vrot.slane %v306, 2
      %v570 = vsel %vm552, %v568, %v569
      %v571 = vrot.slane %v283, 2
      %v572 = vrot.slane %v307, 2
      %v573 = vsel %vm552, %v571, %v572
      %v574 = vrot.slane %v284, 2
      %v575 = vrot.slane %v308, 2
      %v576 = vsel %vm552, %v574, %v575
      %577 = vrot.lane.b32.xlu0 %v555, 96
      %v578 = vpop.permute.xlu0 %577
      %579 = vrot.lane.b32.xlu0 %v558, 96
      %v580 = vpop.permute.xlu0 %579
      %581 = vrot.lane.b32.xlu0 %v561, 96
      %v582 = vpop.permute.xlu0 %581
      %583 = vrot.lane.b32.xlu0 %v564, 96
      %v584 = vpop.permute.xlu0 %583
      %585 = vrot.lane.b32.xlu0 %v567, 96
      %v586 = vpop.permute.xlu0 %585
      %587 = vrot.lane.b32.xlu0 %v570, 96
      %v588 = vpop.permute.xlu0 %587
      %589 = vrot.lane.b32.xlu0 %v573, 96
      %v590 = vpop.permute.xlu0 %589
      %591 = vrot.lane.b32.xlu0 %v576, 96
      %v592 = vpop.permute.xlu0 %591
      %vm593 = vcmask 457728
      %v595 = vsel %vm593, %v277, %v407
      %v597 = vsel %vm593, %v278, %v409
      %v599 = vsel %vm593, %v279, %v411
      %v601 = vsel %vm593, %v280, %v413
      %v603 = vsel %vm593, %v281, %v415
      %v605 = vsel %vm593, %v282, %v417
      %v607 = vsel %vm593, %v283, %v419
      %v609 = vsel %vm593, %v284, %v421
      %vm610 = vcmask 916480
      %v612 = vsel %vm610, %v595, %v448
      %v615 = vsel %vm610, %v597, %v450
      %v618 = vsel %vm610, %v599, %v452
      %v621 = vsel %vm610, %v601, %v454
      %v624 = vsel %vm610, %v603, %v456
      %v627 = vsel %vm610, %v605, %v458
      %v630 = vsel %vm610, %v607, %v460
      %v633 = vsel %vm610, %v609, %v462
      %vm635 = vcmask 326656
      %v637 = vsel %vm635, %v448, %v537
      %v639 = vsel %vm635, %v450, %v539
      %v641 = vsel %vm635, %v452, %v541
      %v643 = vsel %vm635, %v454, %v543
      %v645 = vsel %vm635, %v456, %v545
      %v647 = vsel %vm635, %v458, %v547
      %v649 = vsel %vm635, %v460, %v549
      %v651 = vsel %vm635, %v462, %v551
      %vm652 = vcmask 785408
      %v654 = vsel %vm652, %v637, %v578
      %v657 = vsel %vm652, %v639, %v580
      %v660 = vsel %vm652, %v641, %v582
      %v663 = vsel %vm652, %v643, %v584
      %v666 = vsel %vm652, %v645, %v586
      %v669 = vsel %vm652, %v647, %v588
      %v672 = vsel %vm652, %v649, %v590
      %v675 = vsel %vm652, %v651, %v592
      %v679 = vunpack.c.l.b16 %v233
      %v680 = vunpack.c.l.b16 %v234
      %v681 = vpack.c.b16 %v680, %v679
      %v683 = vunpack.c.l.b16 %v235
      %v684 = vpack.c.b16 %v683, %v683
      %v686 = vshrl.u32 %v681, 16
      %v688 = vshll.u32 %v681, 16
      %v690 = vrot.slane %v688, 1
      %v691 = vor.u32 %v686, %v690
      %v693 = vshll.u32 %v684, 16
      %v695 = vrot.slane %v693, 1
      %v696 = vsel %vm309, %v691, %v695
      %697 = vrot.lane.b32.xlu0 %v696, 56
      %v698 = vpop.permute.xlu0 %697
      %v699 = vrot.slane %v681, 1
      %v700 = vrot.slane %v684, 1
      %v701 = vsel %vm422, %v699, %v700
      %702 = vrot.lane.b32.xlu0 %v701, 112
      %v703 = vpop.permute.xlu0 %702
      %v704 = vrot.slane %v686, 1
      %v705 = vrot.slane %v688, 2
      %v706 = vor.u32 %v704, %v705
      %v707 = vshrl.u32 %v684, 16
      %v709 = vrot.slane %v707, 1
      %v710 = vrot.slane %v693, 2
      %v711 = vor.u32 %v709, %v710
      %v712 = vsel %vm463, %v706, %v711
      %713 = vrot.lane.b32.xlu0 %v712, 40
      %v714 = vpop.permute.xlu0 %713
      %v715 = vrot.slane %v681, 2
      %v716 = vrot.slane %v684, 2
      %v717 = vsel %vm552, %v715, %v716
      %718 = vrot.lane.b32.xlu0 %v717, 96
      %v719 = vpop.permute.xlu0 %718
      %v721 = vsel %vm593, %v681, %v698
      %v723 = vsel %vm610, %v721, %v703
      %v725 = vsel %vm635, %v703, %v714
      %v727 = vsel %vm652, %v725, %v719
      %v730 = vunpack.c.l.b16 %v236
      %v731 = vunpack.c.l.b16 %v237
      %v732 = vpack.c.b16 %v731, %v730
      %v734 = vunpack.c.l.b16 %v238
      %v735 = vpack.c.b16 %v734, %v734
      %v737 = vshrl.u32 %v732, 16
      %v739 = vshll.u32 %v732, 16
      %v741 = vrot.slane %v739, 1
      %v742 = vor.u32 %v737, %v741
      %v744 = vshll.u32 %v735, 16
      %v746 = vrot.slane %v744, 1
      %v747 = vsel %vm309, %v742, %v746
      %748 = vrot.lane.b32.xlu0 %v747, 56
      %v749 = vpop.permute.xlu0 %748
      %v750 = vrot.slane %v732, 1
      %v751 = vrot.slane %v735, 1
      %v752 = vsel %vm422, %v750, %v751
      %753 = vrot.lane.b32.xlu0 %v752, 112
      %v754 = vpop.permute.xlu0 %753
      %v755 = vrot.slane %v737, 1
      %v756 = vrot.slane %v739, 2
      %v757 = vor.u32 %v755, %v756
      %v758 = vshrl.u32 %v735, 16
      %v760 = vrot.slane %v758, 1
      %v761 = vrot.slane %v744, 2
      %v762 = vor.u32 %v760, %v761
      %v763 = vsel %vm463, %v757, %v762
      %764 = vrot.lane.b32.xlu0 %v763, 40
      %v765 = vpop.permute.xlu0 %764
      %v766 = vrot.slane %v732, 2
      %v767 = vrot.slane %v735, 2
      %v768 = vsel %vm552, %v766, %v767
      %769 = vrot.lane.b32.xlu0 %v768, 96
      %v770 = vpop.permute.xlu0 %769
      %v772 = vsel %vm593, %v732, %v749
      %v774 = vsel %vm610, %v772, %v754
      %v776 = vsel %vm635, %v754, %v765
      %v778 = vsel %vm652, %v776, %v770
      %v781 = vunpack.c.l.b16 %v239
      %v782 = vunpack.c.l.b16 %v240
      %v783 = vpack.c.b16 %v782, %v781
      %v785 = vunpack.c.l.b16 %v241
      %v786 = vpack.c.b16 %v785, %v785
      %v788 = vshrl.u32 %v783, 16
      %v790 = vshll.u32 %v783, 16
      %v792 = vrot.slane %v790, 1
      %v793 = vor.u32 %v788, %v792
      %v795 = vshll.u32 %v786, 16
      %v797 = vrot.slane %v795, 1
      %v798 = vsel %vm309, %v793, %v797
      %799 = vrot.lane.b32.xlu0 %v798, 56
      %v800 = vpop.permute.xlu0 %799
      %v801 = vrot.slane %v783, 1
      %v802 = vrot.slane %v786, 1
      %v803 = vsel %vm422, %v801, %v802
      %804 = vrot.lane.b32.xlu0 %v803, 112
      %v805 = vpop.permute.xlu0 %804
      %v806 = vrot.slane %v788, 1
      %v807 = vrot.slane %v790, 2
      %v808 = vor.u32 %v806, %v807
      %v809 = vshrl.u32 %v786, 16
      %v811 = vrot.slane %v809, 1
      %v812 = vrot.slane %v795, 2
      %v813 = vor.u32 %v811, %v812
      %v814 = vsel %vm463, %v808, %v813
      %815 = vrot.lane.b32.xlu0 %v814, 40
      %v816 = vpop.permute.xlu0 %815
      %v817 = vrot.slane %v783, 2
      %v818 = vrot.slane %v786, 2
      %v819 = vsel %vm552, %v817, %v818
      %820 = vrot.lane.b32.xlu0 %v819, 96
      %v821 = vpop.permute.xlu0 %820
      %v823 = vsel %vm593, %v783, %v800
      %v825 = vsel %vm610, %v823, %v805
      %v827 = vsel %vm635, %v805, %v816
      %v829 = vsel %vm652, %v827, %v821
      %v832 = vunpack.c.l.b16 %v242
      %v833 = vunpack.c.l.b16 %v243
      %v834 = vpack.c.b16 %v833, %v832
      %v836 = vunpack.c.l.b16 %v244
      %v837 = vpack.c.b16 %v836, %v836
      %v839 = vshrl.u32 %v834, 16
      %v841 = vshll.u32 %v834, 16
      %v843 = vrot.slane %v841, 1
      %v844 = vor.u32 %v839, %v843
      %v846 = vshll.u32 %v837, 16
      %v848 = vrot.slane %v846, 1
      %v849 = vsel %vm309, %v844, %v848
      %850 = vrot.lane.b32.xlu0 %v849, 56
      %v851 = vpop.permute.xlu0 %850
      %v852 = vrot.slane %v834, 1
      %v853 = vrot.slane %v837, 1
      %v854 = vsel %vm422, %v852, %v853
      %855 = vrot.lane.b32.xlu0 %v854, 112
      %v856 = vpop.permute.xlu0 %855
      %v857 = vrot.slane %v839, 1
      %v858 = vrot.slane %v841, 2
      %v859 = vor.u32 %v857, %v858
      %v860 = vshrl.u32 %v837, 16
      %v862 = vrot.slane %v860, 1
      %v863 = vrot.slane %v846, 2
      %v864 = vor.u32 %v862, %v863
      %v865 = vsel %vm463, %v859, %v864
      %866 = vrot.lane.b32.xlu0 %v865, 40
      %v867 = vpop.permute.xlu0 %866
      %v868 = vrot.slane %v834, 2
      %v869 = vrot.slane %v837, 2
      %v870 = vsel %vm552, %v868, %v869
      %871 = vrot.lane.b32.xlu0 %v870, 96
      %v872 = vpop.permute.xlu0 %871
      %v874 = vsel %vm593, %v834, %v851
      %v876 = vsel %vm610, %v874, %v856
      %v878 = vsel %vm635, %v856, %v867
      %v880 = vsel %vm652, %v878, %v872
      %897 = vrot.lane.b32.xlu0 %v615, 24
      %v898 = vpop.permute.xlu0 %897
      %899 = vrot.lane.b32.xlu0 %v657, 24
      %v900 = vpop.permute.xlu0 %899
      %901 = vrot.lane.b32.xlu0 %v580, 24
      %v902 = vpop.permute.xlu0 %901
      %903 = vrot.lane.b32.xlu0 %v618, 24
      %v904 = vpop.permute.xlu0 %903
      %905 = vrot.lane.b32.xlu0 %v660, 24
      %v906 = vpop.permute.xlu0 %905
      %907 = vrot.lane.b32.xlu0 %v582, 24
      %v908 = vpop.permute.xlu0 %907
      %909 = vrot.lane.b32.xlu0 %v621, 24
      %v910 = vpop.permute.xlu0 %909
      %911 = vrot.lane.b32.xlu0 %v663, 24
      %v912 = vpop.permute.xlu0 %911
      %913 = vrot.lane.b32.xlu0 %v584, 24
      %v914 = vpop.permute.xlu0 %913
      %915 = vrot.lane.b32.xlu0 %v624, 24
      %v916 = vpop.permute.xlu0 %915
      %917 = vrot.lane.b32.xlu0 %v666, 24
      %v918 = vpop.permute.xlu0 %917
      %919 = vrot.lane.b32.xlu0 %v586, 24
      %v920 = vpop.permute.xlu0 %919
      %921 = vrot.lane.b32.xlu0 %v627, 24
      %v922 = vpop.permute.xlu0 %921
      %923 = vrot.lane.b32.xlu0 %v669, 24
      %v924 = vpop.permute.xlu0 %923
      %925 = vrot.lane.b32.xlu0 %v588, 24
      %v926 = vpop.permute.xlu0 %925
      %927 = vrot.lane.b32.xlu0 %v630, 24
      %v928 = vpop.permute.xlu0 %927
      %929 = vrot.lane.b32.xlu0 %v672, 24
      %v930 = vpop.permute.xlu0 %929
      %931 = vrot.lane.b32.xlu0 %v590, 24
      %v932 = vpop.permute.xlu0 %931
      %933 = vrot.lane.b32.xlu0 %v633, 24
      %v934 = vpop.permute.xlu0 %933
      %935 = vrot.lane.b32.xlu0 %v675, 24
      %v936 = vpop.permute.xlu0 %935
      %937 = vrot.lane.b32.xlu0 %v592, 24
      %v938 = vpop.permute.xlu0 %937
      %939 = vrot.lane.b32.xlu0 %v723, 24
      %v940 = vpop.permute.xlu0 %939
      %941 = vrot.lane.b32.xlu0 %v727, 24
      %v942 = vpop.permute.xlu0 %941
      %943 = vrot.lane.b32.xlu0 %v719, 24
      %v944 = vpop.permute.xlu0 %943
      %vm945 = vcmask 195584
      %v946 = vsel %vm945, %v898, %v900
      %v947 = vsel %vm945, %v900, %v902
      %v948 = vsel %vm945, %v904, %v906
      %v949 = vsel %vm945, %v906, %v908
      %v950 = vsel %vm945, %v910, %v912
      %v951 = vsel %vm945, %v912, %v914
      %v952 = vsel %vm945, %v916, %v918
      %v953 = vsel %vm945, %v918, %v920
      %v954 = vsel %vm945, %v922, %v924
      %v955 = vsel %vm945, %v924, %v926
      %v956 = vsel %vm945, %v928, %v930
      %v957 = vsel %vm945, %v930, %v932
      %v958 = vsel %vm945, %v934, %v936
      %v959 = vsel %vm945, %v936, %v938
      %v960 = vsel %vm945, %v940, %v942
      %v961 = vsel %vm945, %v942, %v944
      %972 = vrot.lane.b32.xlu0 %v618, 48
      %v973 = vpop.permute.xlu0 %972
      %974 = vrot.lane.b32.xlu0 %v660, 48
      %v975 = vpop.permute.xlu0 %974
      %976 = vrot.lane.b32.xlu0 %v582, 48
      %v977 = vpop.permute.xlu0 %976
      %978 = vrot.lane.b32.xlu0 %v621, 48
      %v979 = vpop.permute.xlu0 %978
      %980 = vrot.lane.b32.xlu0 %v663, 48
      %v981 = vpop.permute.xlu0 %980
      %982 = vrot.lane.b32.xlu0 %v584, 48
      %v983 = vpop.permute.xlu0 %982
      %984 = vrot.lane.b32.xlu0 %v624, 48
      %v985 = vpop.permute.xlu0 %984
      %986 = vrot.lane.b32.xlu0 %v666, 48
      %v987 = vpop.permute.xlu0 %986
      %988 = vrot.lane.b32.xlu0 %v586, 48
      %v989 = vpop.permute.xlu0 %988
      %990 = vrot.lane.b32.xlu0 %v627, 48
      %v991 = vpop.permute.xlu0 %990
      %992 = vrot.lane.b32.xlu0 %v669, 48
      %v993 = vpop.permute.xlu0 %992
      %994 = vrot.lane.b32.xlu0 %v588, 48
      %v995 = vpop.permute.xlu0 %994
      %996 = vrot.lane.b32.xlu0 %v630, 48
      %v997 = vpop.permute.xlu0 %996
      %998 = vrot.lane.b32.xlu0 %v672, 48
      %v999 = vpop.permute.xlu0 %998
      %1000 = vrot.lane.b32.xlu0 %v590, 48
      %v1001 = vpop.permute.xlu0 %1000
      %1002 = vrot.lane.b32.xlu0 %v633, 48
      %v1003 = vpop.permute.xlu0 %1002
      %1004 = vrot.lane.b32.xlu0 %v675, 48
      %v1005 = vpop.permute.xlu0 %1004
      %1006 = vrot.lane.b32.xlu0 %v592, 48
      %v1007 = vpop.permute.xlu0 %1006
      %1008 = vrot.lane.b32.xlu0 %v723, 48
      %v1009 = vpop.permute.xlu0 %1008
      %1010 = vrot.lane.b32.xlu0 %v727, 48
      %v1011 = vpop.permute.xlu0 %1010
      %1012 = vrot.lane.b32.xlu0 %v719, 48
      %v1013 = vpop.permute.xlu0 %1012
      %1014 = vrot.lane.b32.xlu0 %v774, 48
      %v1015 = vpop.permute.xlu0 %1014
      %1016 = vrot.lane.b32.xlu0 %v778, 48
      %v1017 = vpop.permute.xlu0 %1016
      %1018 = vrot.lane.b32.xlu0 %v770, 48
      %v1019 = vpop.permute.xlu0 %1018
      %vm1020 = vcmask 392192
      %v1021 = vsel %vm1020, %v973, %v975
      %v1022 = vsel %vm1020, %v975, %v977
      %v1023 = vsel %vm1020, %v979, %v981
      %v1024 = vsel %vm1020, %v981, %v983
      %v1025 = vsel %vm1020, %v985, %v987
      %v1026 = vsel %vm1020, %v987, %v989
      %v1027 = vsel %vm1020, %v991, %v993
      %v1028 = vsel %vm1020, %v993, %v995
      %v1029 = vsel %vm1020, %v997, %v999
      %v1030 = vsel %vm1020, %v999, %v1001
      %v1031 = vsel %vm1020, %v1003, %v1005
      %v1032 = vsel %vm1020, %v1005, %v1007
      %v1033 = vsel %vm1020, %v1009, %v1011
      %v1034 = vsel %vm1020, %v1011, %v1013
      %v1035 = vsel %vm1020, %v1015, %v1017
      %v1036 = vsel %vm1020, %v1017, %v1019
      %1047 = vrot.lane.b32.xlu0 %v621, 72
      %v1048 = vpop.permute.xlu0 %1047
      %1049 = vrot.lane.b32.xlu0 %v663, 72
      %v1050 = vpop.permute.xlu0 %1049
      %1051 = vrot.lane.b32.xlu0 %v584, 72
      %v1052 = vpop.permute.xlu0 %1051
      %1053 = vrot.lane.b32.xlu0 %v624, 72
      %v1054 = vpop.permute.xlu0 %1053
      %1055 = vrot.lane.b32.xlu0 %v666, 72
      %v1056 = vpop.permute.xlu0 %1055
      %1057 = vrot.lane.b32.xlu0 %v586, 72
      %v1058 = vpop.permute.xlu0 %1057
      %1059 = vrot.lane.b32.xlu0 %v627, 72
      %v1060 = vpop.permute.xlu0 %1059
      %1061 = vrot.lane.b32.xlu0 %v669, 72
      %v1062 = vpop.permute.xlu0 %1061
      %1063 = vrot.lane.b32.xlu0 %v588, 72
      %v1064 = vpop.permute.xlu0 %1063
      %1065 = vrot.lane.b32.xlu0 %v630, 72
      %v1066 = vpop.permute.xlu0 %1065
      %1067 = vrot.lane.b32.xlu0 %v672, 72
      %v1068 = vpop.permute.xlu0 %1067
      %1069 = vrot.lane.b32.xlu0 %v590, 72
      %v1070 = vpop.permute.xlu0 %1069
      %1071 = vrot.lane.b32.xlu0 %v633, 72
      %v1072 = vpop.permute.xlu0 %1071
      %1073 = vrot.lane.b32.xlu0 %v675, 72
      %v1074 = vpop.permute.xlu0 %1073
      %1075 = vrot.lane.b32.xlu0 %v592, 72
      %v1076 = vpop.permute.xlu0 %1075
      %1077 = vrot.lane.b32.xlu0 %v723, 72
      %v1078 = vpop.permute.xlu0 %1077
      %1079 = vrot.lane.b32.xlu0 %v727, 72
      %v1080 = vpop.permute.xlu0 %1079
      %1081 = vrot.lane.b32.xlu0 %v719, 72
      %v1082 = vpop.permute.xlu0 %1081
      %1083 = vrot.lane.b32.xlu0 %v774, 72
      %v1084 = vpop.permute.xlu0 %1083
      %1085 = vrot.lane.b32.xlu0 %v778, 72
      %v1086 = vpop.permute.xlu0 %1085
      %1087 = vrot.lane.b32.xlu0 %v770, 72
      %v1088 = vpop.permute.xlu0 %1087
      %1089 = vrot.lane.b32.xlu0 %v825, 72
      %v1090 = vpop.permute.xlu0 %1089
      %1091 = vrot.lane.b32.xlu0 %v829, 72
      %v1092 = vpop.permute.xlu0 %1091
      %1093 = vrot.lane.b32.xlu0 %v821, 72
      %v1094 = vpop.permute.xlu0 %1093
      %vm1095 = vcmask 588800
      %v1096 = vsel %vm1095, %v1048, %v1050
      %v1097 = vsel %vm1095, %v1050, %v1052
      %v1098 = vsel %vm1095, %v1054, %v1056
      %v1099 = vsel %vm1095, %v1056, %v1058
      %v1100 = vsel %vm1095, %v1060, %v1062
      %v1101 = vsel %vm1095, %v1062, %v1064
      %v1102 = vsel %vm1095, %v1066, %v1068
      %v1103 = vsel %vm1095, %v1068, %v1070
      %v1104 = vsel %vm1095, %v1072, %v1074
      %v1105 = vsel %vm1095, %v1074, %v1076
      %v1106 = vsel %vm1095, %v1078, %v1080
      %v1107 = vsel %vm1095, %v1080, %v1082
      %v1108 = vsel %vm1095, %v1084, %v1086
      %v1109 = vsel %vm1095, %v1086, %v1088
      %v1110 = vsel %vm1095, %v1090, %v1092
      %v1111 = vsel %vm1095, %v1092, %v1094
      %1122 = vrot.lane.b32.xlu0 %v624, 96
      %v1123 = vpop.permute.xlu0 %1122
      %1124 = vrot.lane.b32.xlu0 %v666, 96
      %v1125 = vpop.permute.xlu0 %1124
      %1126 = vrot.lane.b32.xlu0 %v586, 96
      %v1127 = vpop.permute.xlu0 %1126
      %1128 = vrot.lane.b32.xlu0 %v627, 96
      %v1129 = vpop.permute.xlu0 %1128
      %1130 = vrot.lane.b32.xlu0 %v669, 96
      %v1131 = vpop.permute.xlu0 %1130
      %1132 = vrot.lane.b32.xlu0 %v588, 96
      %v1133 = vpop.permute.xlu0 %1132
      %1134 = vrot.lane.b32.xlu0 %v630, 96
      %v1135 = vpop.permute.xlu0 %1134
      %1136 = vrot.lane.b32.xlu0 %v672, 96
      %v1137 = vpop.permute.xlu0 %1136
      %1138 = vrot.lane.b32.xlu0 %v590, 96
      %v1139 = vpop.permute.xlu0 %1138
      %1140 = vrot.lane.b32.xlu0 %v633, 96
      %v1141 = vpop.permute.xlu0 %1140
      %1142 = vrot.lane.b32.xlu0 %v675, 96
      %v1143 = vpop.permute.xlu0 %1142
      %1144 = vrot.lane.b32.xlu0 %v592, 96
      %v1145 = vpop.permute.xlu0 %1144
      %1146 = vrot.lane.b32.xlu0 %v723, 96
      %v1147 = vpop.permute.xlu0 %1146
      %1148 = vrot.lane.b32.xlu0 %v727, 96
      %v1149 = vpop.permute.xlu0 %1148
      %1150 = vrot.lane.b32.xlu0 %v719, 96
      %v1151 = vpop.permute.xlu0 %1150
      %1152 = vrot.lane.b32.xlu0 %v774, 96
      %v1153 = vpop.permute.xlu0 %1152
      %1154 = vrot.lane.b32.xlu0 %v778, 96
      %v1155 = vpop.permute.xlu0 %1154
      %1156 = vrot.lane.b32.xlu0 %v770, 96
      %v1157 = vpop.permute.xlu0 %1156
      %1158 = vrot.lane.b32.xlu0 %v825, 96
      %v1159 = vpop.permute.xlu0 %1158
      %1160 = vrot.lane.b32.xlu0 %v829, 96
      %v1161 = vpop.permute.xlu0 %1160
      %1162 = vrot.lane.b32.xlu0 %v821, 96
      %v1163 = vpop.permute.xlu0 %1162
      %1164 = vrot.lane.b32.xlu0 %v876, 96
      %v1165 = vpop.permute.xlu0 %1164
      %1166 = vrot.lane.b32.xlu0 %v880, 96
      %v1167 = vpop.permute.xlu0 %1166
      %1168 = vrot.lane.b32.xlu0 %v872, 96
      %v1169 = vpop.permute.xlu0 %1168
      %vm1170 = vcmask 785408
      %v1171 = vsel %vm1170, %v1123, %v1125
      %v1172 = vsel %vm1170, %v1125, %v1127
      %v1173 = vsel %vm1170, %v1129, %v1131
      %v1174 = vsel %vm1170, %v1131, %v1133
      %v1175 = vsel %vm1170, %v1135, %v1137
      %v1176 = vsel %vm1170, %v1137, %v1139
      %v1177 = vsel %vm1170, %v1141, %v1143
      %v1178 = vsel %vm1170, %v1143, %v1145
      %v1179 = vsel %vm1170, %v1147, %v1149
      %v1180 = vsel %vm1170, %v1149, %v1151
      %v1181 = vsel %vm1170, %v1153, %v1155
      %v1182 = vsel %vm1170, %v1155, %v1157
      %v1183 = vsel %vm1170, %v1159, %v1161
      %v1184 = vsel %vm1170, %v1161, %v1163
      %v1185 = vsel %vm1170, %v1165, %v1167
      %v1186 = vsel %vm1170, %v1167, %v1169
      %vm1195 = vcmask 195584
      %v1197 = vsel %vm1195, %v578, %v898
      %v1200 = vsel %vm1195, %v580, %v904
      %v1203 = vsel %vm1195, %v582, %v910
      %v1206 = vsel %vm1195, %v584, %v916
      %v1209 = vsel %vm1195, %v586, %v922
      %v1212 = vsel %vm1195, %v588, %v928
      %v1215 = vsel %vm1195, %v590, %v934
      %v1218 = vsel %vm1195, %v592, %v940
      %vm1220 = vcmask 392192
      %v1223 = vsel %vm1220, %v947, %v973
      %v1227 = vsel %vm1220, %v949, %v979
      %v1231 = vsel %vm1220, %v951, %v985
      %v1235 = vsel %vm1220, %v953, %v991
      %v1239 = vsel %vm1220, %v955, %v997
      %v1243 = vsel %vm1220, %v957, %v1003
      %v1247 = vsel %vm1220, %v959, %v1009
      %v1251 = vsel %vm1220, %v961, %v1015
      %vm1253 = vcmask 588800
      %v1256 = vsel %vm1253, %v1022, %v1048
      %v1260 = vsel %vm1253, %v1024, %v1054
      %v1264 = vsel %vm1253, %v1026, %v1060
      %v1268 = vsel %vm1253, %v1028, %v1066
      %v1272 = vsel %vm1253, %v1030, %v1072
      %v1276 = vsel %vm1253, %v1032, %v1078
      %v1280 = vsel %vm1253, %v1034, %v1084
      %v1284 = vsel %vm1253, %v1036, %v1090
      %v1288 = vsel %vm652, %v1097, %v1123
      %v1292 = vsel %vm652, %v1099, %v1129
      %v1296 = vsel %vm652, %v1101, %v1135
      %v1300 = vsel %vm652, %v1103, %v1141
      %v1304 = vsel %vm652, %v1105, %v1147
      %v1308 = vsel %vm652, %v1107, %v1153
      %v1312 = vsel %vm652, %v1109, %v1159
      %v1316 = vsel %vm652, %v1111, %v1165
      %v1318 = vld [vmem:[%s1] sm:$0xf]
      %v1319 = vld [vmem:[%s1 + $0x4] sm:$0xf]
      %v1320 = vld [vmem:[%s1 + $0x8] sm:$0xf]
      %v1321 = vld [vmem:[%s1 + $0xc] sm:$0xf]
      %v1322 = vld [vmem:[%s1 + $0x10] sm:$0xf]
      %v1323 = vld [vmem:[%s1 + $0x14] sm:$0xf]
      %v1324 = vld [vmem:[%s1 + $0x18] sm:$0xf]
      %v1325 = vld [vmem:[%s1 + $0x1c] sm:$0xf]
      %v1326 = vld [vmem:[%s1 + $0x20] sm:$0xf]
      %v1327 = vld [vmem:[%s1 + $0x24] sm:$0xf]
      %v1328 = vld [vmem:[%s1 + $0x28] sm:$0xf]
      %v1329 = vld [vmem:[%s1 + $0x2c] sm:$0xf]
      %v1330 = vld [vmem:[%s1 + $0x30] sm:$0xf]
      %v1331 = vld [vmem:[%s1 + $0x34] sm:$0xf]
      %v1332 = vld [vmem:[%s1 + $0x38] sm:$0xf]
      %v1333 = vld [vmem:[%s1 + $0x3c] sm:$0xf]
      %v1334 = vld [vmem:[%s1 + $0x40] sm:$0xf]
      %v1335 = vld [vmem:[%s1 + $0x44] sm:$0xf]
      %v1336 = vld [vmem:[%s1 + $0x48] sm:$0xf]
      %v1337 = vld [vmem:[%s1 + $0x4c] sm:$0xf]
      %v1338 = vld [vmem:[%s1 + $0x50] sm:$0xf]
      %v1339 = vld [vmem:[%s1 + $0x54] sm:$0xf]
      %v1340 = vld [vmem:[%s1 + $0x58] sm:$0xf]
      %v1341 = vld [vmem:[%s1 + $0x5c] sm:$0xf]
      %v1342 = vld [vmem:[%s1 + $0x60] sm:$0xf]
      %v1343 = vld [vmem:[%s1 + $0x64] sm:$0xf]
      %v1344 = vld [vmem:[%s1 + $0x68] sm:$0xf]
      %v1345 = vld [vmem:[%s1 + $0x6c] sm:$0xf]
      %v1346 = vld [vmem:[%s1 + $0x70] sm:$0xf]
      %v1347 = vld [vmem:[%s1 + $0x74] sm:$0xf]
      %v1348 = vld [vmem:[%s1 + $0x78] sm:$0xf]
      %v1349 = vld [vmem:[%s1 + $0x7c] sm:$0xf]
      %v1350 = vld [vmem:[%s1 + $0x80] sm:$0xf]
      %v1351 = vld [vmem:[%s1 + $0x84] sm:$0xf]
      %v1352 = vld [vmem:[%s1 + $0x88] sm:$0xf]
      %v1353 = vld [vmem:[%s1 + $0x8c] sm:$0xf]
      %v1354 = vld [vmem:[%s1 + $0x90] sm:$0xf]
      %v1355 = vld [vmem:[%s1 + $0x94] sm:$0xf]
      %v1356 = vld [vmem:[%s1 + $0x98] sm:$0xf]
      %v1357 = vld [vmem:[%s1 + $0x9c] sm:$0xf]
      %v1358 = vld [vmem:[%s1 + $0xa0] sm:$0xf]
      %v1359 = vld [vmem:[%s1 + $0xa4] sm:$0xf]
      %v1360 = vld [vmem:[%s1 + $0xa8] sm:$0xf]
      %v1361 = vld [vmem:[%s1 + $0xac] sm:$0xf]
      %v1362 = vld [vmem:[%s1 + $0xb0] sm:$0xf]
      %v1363 = vld [vmem:[%s1 + $0xb4] sm:$0xf]
      %v1364 = vld [vmem:[%s1 + $0xb8] sm:$0xf]
      %v1365 = vld [vmem:[%s1 + $0xbc] sm:$0xf]
      %v1366 = vld [vmem:[%s1 + $0xc0] sm:$0xf]
      %v1367 = vld [vmem:[%s1 + $0xc4] sm:$0xf]
      %v1368 = vld [vmem:[%s1 + $0xc8] sm:$0xf]
      %v1369 = vld [vmem:[%s1 + $0xcc] sm:$0xf]
      %v1370 = vld [vmem:[%s1 + $0xd0] sm:$0xf]
      %v1371 = vld [vmem:[%s1 + $0xd4] sm:$0xf]
      %v1372 = vld [vmem:[%s1 + $0xd8] sm:$0xf]
      %v1373 = vld [vmem:[%s1 + $0xdc] sm:$0xf]
      %v1374 = vld [vmem:[%s1 + $0xe0] sm:$0xf]
      %v1375 = vld [vmem:[%s1 + $0xe4] sm:$0xf]
      %v1376 = vld [vmem:[%s1 + $0xe8] sm:$0xf]
      %v1377 = vld [vmem:[%s1 + $0xec] sm:$0xf]
      %v1378 = vld [vmem:[%s1 + $0xf0] sm:$0xf]
      %v1379 = vld [vmem:[%s1 + $0xf4] sm:$0xf]
      %v1380 = vld [vmem:[%s1 + $0xf8] sm:$0xf]
      %v1381 = vld [vmem:[%s1 + $0xfc] sm:$0xf]
      %v1382 = vld [vmem:[%s1 + $0x100] sm:$0xf]
      %v1383 = vld [vmem:[%s1 + $0x104] sm:$0xf]
      %v1384 = vld [vmem:[%s1 + $0x108] sm:$0xf]
      %v1385 = vld [vmem:[%s1 + $0x10c] sm:$0xf]
      %v1386 = vld [vmem:[%s1 + $0x110] sm:$0xf]
      %v1387 = vld [vmem:[%s1 + $0x114] sm:$0xf]
      %v1388 = vld [vmem:[%s1 + $0x118] sm:$0xf]
      %v1389 = vld [vmem:[%s1 + $0x11c] sm:$0xf]
      %v1390 = vld [vmem:[%s1 + $0x120] sm:$0xf]
      %v1391 = vld [vmem:[%s1 + $0x124] sm:$0xf]
      %v1392 = vld [vmem:[%s1 + $0x128] sm:$0xf]
      %v1393 = vld [vmem:[%s1 + $0x12c] sm:$0xf]
      %v1394 = vld [vmem:[%s1 + $0x130] sm:$0xf]
      %v1395 = vld [vmem:[%s1 + $0x134] sm:$0xf]
      %v1396 = vld [vmem:[%s1 + $0x138] sm:$0xf]
      %v1397 = vld [vmem:[%s1 + $0x13c] sm:$0xf]
      %v1398 = vld [vmem:[%s1 + $0x140] sm:$0xf]
      %v1399 = vld [vmem:[%s1 + $0x144] sm:$0xf]
      %v1400 = vld [vmem:[%s1 + $0x148] sm:$0xf]
      %v1401 = vld [vmem:[%s1 + $0x14c] sm:$0xf]
      %v1402 = vld [vmem:[%s1 + $0x150] sm:$0xf]
      %v1403 = vld [vmem:[%s1 + $0x154] sm:$0xf]
      %v1404 = vld [vmem:[%s1 + $0x158] sm:$0xf]
      %v1405 = vld [vmem:[%s1 + $0x15c] sm:$0xf]
      %v1406 = vld [vmem:[%s1 + $0x160] sm:$0xf]
      %v1407 = vld [vmem:[%s1 + $0x164] sm:$0xf]
      %v1408 = vld [vmem:[%s1 + $0x168] sm:$0xf]
      %v1409 = vld [vmem:[%s1 + $0x16c] sm:$0xf]
      %v1410 = vld [vmem:[%s1 + $0x170] sm:$0xf]
      %v1411 = vld [vmem:[%s1 + $0x174] sm:$0xf]
      %v1412 = vld [vmem:[%s1 + $0x178] sm:$0xf]
      %v1413 = vld [vmem:[%s1 + $0x17c] sm:$0xf]
      %v1414 = vld [vmem:[%s1 + $0x180] sm:$0xf]
      %v1415 = vld [vmem:[%s1 + $0x184] sm:$0xf]
      %v1416 = vld [vmem:[%s1 + $0x188] sm:$0xf]
      %v1417 = vld [vmem:[%s1 + $0x18c] sm:$0xf]
      %v1418 = vld [vmem:[%s1 + $0x190] sm:$0xf]
      %v1419 = vld [vmem:[%s1 + $0x194] sm:$0xf]
      %v1420 = vld [vmem:[%s1 + $0x198] sm:$0xf]
      %v1421 = vld [vmem:[%s1 + $0x19c] sm:$0xf]
      %v1422 = vld [vmem:[%s1 + $0x1a0] sm:$0xf]
      %v1423 = vld [vmem:[%s1 + $0x1a4] sm:$0xf]
      %v1424 = vld [vmem:[%s1 + $0x1a8] sm:$0xf]
      %v1425 = vld [vmem:[%s1 + $0x1ac] sm:$0xf]
      %v1426 = vld [vmem:[%s1 + $0x1b0] sm:$0xf]
      %v1427 = vld [vmem:[%s1 + $0x1b4] sm:$0xf]
      %v1428 = vld [vmem:[%s1 + $0x1b8] sm:$0xf]
      %v1429 = vld [vmem:[%s1 + $0x1bc] sm:$0xf]
      %v1430 = vld [vmem:[%s1 + $0x1c0] sm:$0xf]
      %v1431 = vld [vmem:[%s1 + $0x1c4] sm:$0xf]
      %v1432 = vld [vmem:[%s1 + $0x1c8] sm:$0xf]
      %v1433 = vld [vmem:[%s1 + $0x1cc] sm:$0xf]
      %v1434 = vld [vmem:[%s1 + $0x1d0] sm:$0xf]
      %v1435 = vld [vmem:[%s1 + $0x1d4] sm:$0xf]
      %v1436 = vld [vmem:[%s1 + $0x1d8] sm:$0xf]
      %v1437 = vld [vmem:[%s1 + $0x1dc] sm:$0xf]
      %v1438 = vld [vmem:[%s1 + $0x1e0] sm:$0xf]
      %v1439 = vld [vmem:[%s1 + $0x1e4] sm:$0xf]
      %v1440 = vld [vmem:[%s1 + $0x1e8] sm:$0xf]
      %v1441 = vld [vmem:[%s1 + $0x1ec] sm:$0xf]
      %v1442 = vld [vmem:[%s1 + $0x1f0] sm:$0xf]
      %v1443 = vld [vmem:[%s1 + $0x1f4] sm:$0xf]
      %v1444 = vld [vmem:[%s1 + $0x1f8] sm:$0xf]
      %v1445 = vld [vmem:[%s1 + $0x1fc] sm:$0xf]
      %v1446 = vld [vmem:[%s1 + $0x200] sm:$0xf]
      %v1447 = vld [vmem:[%s1 + $0x204] sm:$0xf]
      %v1448 = vld [vmem:[%s1 + $0x208] sm:$0xf]
      %v1449 = vld [vmem:[%s1 + $0x20c] sm:$0xf]
      %v1450 = vld [vmem:[%s1 + $0x210] sm:$0xf]
      %v1451 = vld [vmem:[%s1 + $0x214] sm:$0xf]
      %v1452 = vld [vmem:[%s1 + $0x218] sm:$0xf]
      %v1453 = vld [vmem:[%s1 + $0x21c] sm:$0xf]
      %v1454 = vld [vmem:[%s1 + $0x220] sm:$0xf]
      %v1455 = vld [vmem:[%s1 + $0x224] sm:$0xf]
      %v1456 = vld [vmem:[%s1 + $0x228] sm:$0xf]
      %v1457 = vld [vmem:[%s1 + $0x22c] sm:$0xf]
      %v1458 = vld [vmem:[%s1 + $0x230] sm:$0xf]
      %v1459 = vld [vmem:[%s1 + $0x234] sm:$0xf]
      %v1460 = vld [vmem:[%s1 + $0x238] sm:$0xf]
      %v1461 = vld [vmem:[%s1 + $0x23c] sm:$0xf]
      %v1462 = vld [vmem:[%s1 + $0x240] sm:$0xf]
      %v1463 = vld [vmem:[%s1 + $0x244] sm:$0xf]
      %v1464 = vld [vmem:[%s1 + $0x248] sm:$0xf]
      %v1465 = vld [vmem:[%s1 + $0x24c] sm:$0xf]
      %v1466 = vld [vmem:[%s1 + $0x250] sm:$0xf]
      %v1467 = vld [vmem:[%s1 + $0x254] sm:$0xf]
      %v1468 = vld [vmem:[%s1 + $0x258] sm:$0xf]
      %v1469 = vld [vmem:[%s1 + $0x25c] sm:$0xf]
      %v1470 = vld [vmem:[%s1 + $0x260] sm:$0xf]
      %v1471 = vld [vmem:[%s1 + $0x264] sm:$0xf]
      %v1472 = vld [vmem:[%s1 + $0x268] sm:$0xf]
      %v1473 = vld [vmem:[%s1 + $0x26c] sm:$0xf]
      %v1474 = vld [vmem:[%s1 + $0x270] sm:$0xf]
      %v1475 = vld [vmem:[%s1 + $0x274] sm:$0xf]
      %v1476 = vld [vmem:[%s1 + $0x278] sm:$0xf]
      %v1477 = vld [vmem:[%s1 + $0x27c] sm:$0xf]
      %v1478 = vld [vmem:[%s1 + $0x280] sm:$0xf]
      %v1479 = vld [vmem:[%s1 + $0x284] sm:$0xf]
      %v1480 = vld [vmem:[%s1 + $0x288] sm:$0xf]
      %v1481 = vld [vmem:[%s1 + $0x28c] sm:$0xf]
      %v1482 = vld [vmem:[%s1 + $0x290] sm:$0xf]
      %v1483 = vld [vmem:[%s1 + $0x294] sm:$0xf]
      %v1484 = vld [vmem:[%s1 + $0x298] sm:$0xf]
      %v1485 = vld [vmem:[%s1 + $0x29c] sm:$0xf]
      %v1486 = vld [vmem:[%s1 + $0x2a0] sm:$0xf]
      %v1487 = vld [vmem:[%s1 + $0x2a4] sm:$0xf]
      %v1488 = vld [vmem:[%s1 + $0x2a8] sm:$0xf]
      %v1489 = vld [vmem:[%s1 + $0x2ac] sm:$0xf]
      %v1490 = vld [vmem:[%s1 + $0x2b0] sm:$0xf]
      %v1491 = vld [vmem:[%s1 + $0x2b4] sm:$0xf]
      %v1492 = vld [vmem:[%s1 + $0x2b8] sm:$0xf]
      %v1493 = vld [vmem:[%s2] sm:$0x1]
      %v1495 = vlaneseq
      %v1496 = vshrl.u32 %v1495, 7
      %v1497 = vsub.s32 0, %v1496
      %v1498 = vrot.slane %v1493, %v1497
      %v1675 = vunpack.c.l.b16 %v1318
      %v1676 = vunpack.c.l.b16 %v1319
      %v1677 = vunpack.c.l.b16 %v1320
      %v1678 = vunpack.c.l.b16 %v1321
      %v1679 = vunpack.c.l.b16 %v1322
      %v1680 = vunpack.c.l.b16 %v1323
      %v1681 = vunpack.c.l.b16 %v1324
      %v1682 = vunpack.c.l.b16 %v1325
      %v1683 = vunpack.c.l.b16 %v1326
      %v1684 = vunpack.c.l.b16 %v1327
      %v1685 = vunpack.c.l.b16 %v1328
      %v1686 = vunpack.c.l.b16 %v1329
      %v1687 = vunpack.c.l.b16 %v1330
      %v1688 = vunpack.c.l.b16 %v1331
      %v1689 = vunpack.c.l.b16 %v1332
      %v1690 = vunpack.c.l.b16 %v1333
      %v1691 = vunpack.c.l.b16 %v1334
      %v1692 = vunpack.c.l.b16 %v1335
      %v1693 = vunpack.c.l.b16 %v1336
      %v1694 = vunpack.c.l.b16 %v1337
      %v1695 = vunpack.c.l.b16 %v1338
      %v1696 = vunpack.c.l.b16 %v1339
      %v1697 = vunpack.c.l.b16 %v1340
      %v1698 = vunpack.c.l.b16 %v1341
      %v1699 = vunpack.c.l.b16 %v1342
      %v1700 = vunpack.c.l.b16 %v1343
      %v1701 = vunpack.c.l.b16 %v1344
      %v1702 = vunpack.c.l.b16 %v1345
      %v1703 = vunpack.c.l.b16 %v1346
      %v1704 = vunpack.c.l.b16 %v1347
      %v1705 = vunpack.c.l.b16 %v1348
      %v1706 = vunpack.c.l.b16 %v1349
      %v1707 = vunpack.c.l.b16 %v1350
      %v1708 = vunpack.c.l.b16 %v1351
      %v1709 = vunpack.c.l.b16 %v1352
      %v1710 = vunpack.c.l.b16 %v1353
      %v1711 = vunpack.c.l.b16 %v1354
      %v1712 = vunpack.c.l.b16 %v1355
      %v1713 = vunpack.c.l.b16 %v1356
      %v1714 = vunpack.c.l.b16 %v1357
      %v1715 = vunpack.c.l.b16 %v1358
      %v1716 = vunpack.c.l.b16 %v1359
      %v1717 = vunpack.c.l.b16 %v1360
      %v1718 = vunpack.c.l.b16 %v1361
      %v1719 = vunpack.c.l.b16 %v1362
      %v1720 = vunpack.c.l.b16 %v1363
      %v1721 = vunpack.c.l.b16 %v1364
      %v1722 = vunpack.c.l.b16 %v1365
      %v1723 = vunpack.c.l.b16 %v1366
      %v1724 = vunpack.c.l.b16 %v1367
      %v1725 = vunpack.c.l.b16 %v1368
      %v1726 = vunpack.c.l.b16 %v1369
      %v1727 = vunpack.c.l.b16 %v1370
      %v1728 = vunpack.c.l.b16 %v1371
      %v1729 = vunpack.c.l.b16 %v1372
      %v1730 = vunpack.c.l.b16 %v1373
      %v1731 = vunpack.c.l.b16 %v1374
      %v1732 = vunpack.c.l.b16 %v1375
      %v1733 = vunpack.c.l.b16 %v1376
      %v1734 = vunpack.c.l.b16 %v1377
      %v1735 = vunpack.c.l.b16 %v1378
      %v1736 = vunpack.c.l.b16 %v1379
      %v1737 = vunpack.c.l.b16 %v1380
      %v1738 = vunpack.c.l.b16 %v1381
      %v1739 = vunpack.c.l.b16 %v1382
      %v1740 = vunpack.c.l.b16 %v1383
      %v1741 = vunpack.c.l.b16 %v1384
      %v1742 = vunpack.c.l.b16 %v1385
      %v1743 = vunpack.c.l.b16 %v1386
      %v1744 = vunpack.c.l.b16 %v1387
      %v1745 = vunpack.c.l.b16 %v1388
      %v1746 = vunpack.c.l.b16 %v1389
      %v1747 = vunpack.c.l.b16 %v1390
      %v1748 = vunpack.c.l.b16 %v1391
      %v1749 = vunpack.c.l.b16 %v1392
      %v1750 = vunpack.c.l.b16 %v1393
      %v1751 = vunpack.c.l.b16 %v1394
      %v1752 = vunpack.c.l.b16 %v1395
      %v1753 = vunpack.c.l.b16 %v1396
      %v1754 = vunpack.c.l.b16 %v1397
      %v1755 = vunpack.c.l.b16 %v1398
      %v1756 = vunpack.c.l.b16 %v1399
      %v1757 = vunpack.c.l.b16 %v1400
      %v1758 = vunpack.c.l.b16 %v1401
      %v1759 = vunpack.c.l.b16 %v1402
      %v1760 = vunpack.c.l.b16 %v1403
      %v1761 = vunpack.c.l.b16 %v1404
      %v1762 = vunpack.c.l.b16 %v1405
      %v1763 = vunpack.c.l.b16 %v1406
      %v1764 = vunpack.c.l.b16 %v1407
      %v1765 = vunpack.c.l.b16 %v1408
      %v1766 = vunpack.c.l.b16 %v1409
      %v1767 = vunpack.c.l.b16 %v1410
      %v1768 = vunpack.c.l.b16 %v1411
      %v1769 = vunpack.c.l.b16 %v1412
      %v1770 = vunpack.c.l.b16 %v1413
      %v1771 = vunpack.c.l.b16 %v1414
      %v1772 = vunpack.c.l.b16 %v1415
      %v1773 = vunpack.c.l.b16 %v1416
      %v1774 = vunpack.c.l.b16 %v1417
      %v1775 = vunpack.c.l.b16 %v1418
      %v1776 = vunpack.c.l.b16 %v1419
      %v1777 = vunpack.c.l.b16 %v1420
      %v1778 = vunpack.c.l.b16 %v1421
      %v1779 = vunpack.c.l.b16 %v1422
      %v1780 = vunpack.c.l.b16 %v1423
      %v1781 = vunpack.c.l.b16 %v1424
      %v1782 = vunpack.c.l.b16 %v1425
      %v1783 = vunpack.c.l.b16 %v1426
      %v1784 = vunpack.c.l.b16 %v1427
      %v1785 = vunpack.c.l.b16 %v1428
      %v1786 = vunpack.c.l.b16 %v1429
      %v1787 = vunpack.c.l.b16 %v1430
      %v1788 = vunpack.c.l.b16 %v1431
      %v1789 = vunpack.c.l.b16 %v1432
      %v1790 = vunpack.c.l.b16 %v1433
      %v1791 = vunpack.c.l.b16 %v1434
      %v1792 = vunpack.c.l.b16 %v1435
      %v1793 = vunpack.c.l.b16 %v1436
      %v1794 = vunpack.c.l.b16 %v1437
      %v1795 = vunpack.c.l.b16 %v1438
      %v1796 = vunpack.c.l.b16 %v1439
      %v1797 = vunpack.c.l.b16 %v1440
      %v1798 = vunpack.c.l.b16 %v1441
      %v1799 = vunpack.c.l.b16 %v1442
      %v1800 = vunpack.c.l.b16 %v1443
      %v1801 = vunpack.c.l.b16 %v1444
      %v1802 = vunpack.c.l.b16 %v1445
      %v1803 = vunpack.c.l.b16 %v1446
      %v1804 = vunpack.c.l.b16 %v1447
      %v1805 = vunpack.c.l.b16 %v1448
      %v1806 = vunpack.c.l.b16 %v1449
      %v1807 = vunpack.c.l.b16 %v1450
      %v1808 = vunpack.c.l.b16 %v1451
      %v1809 = vunpack.c.l.b16 %v1452
      %v1810 = vunpack.c.l.b16 %v1453
      %v1811 = vunpack.c.l.b16 %v1454
      %v1812 = vunpack.c.l.b16 %v1455
      %v1813 = vunpack.c.l.b16 %v1456
      %v1814 = vunpack.c.l.b16 %v1457
      %v1815 = vunpack.c.l.b16 %v1458
      %v1816 = vunpack.c.l.b16 %v1459
      %v1817 = vunpack.c.l.b16 %v1460
      %v1818 = vunpack.c.l.b16 %v1461
      %v1819 = vunpack.c.l.b16 %v1462
      %v1820 = vunpack.c.l.b16 %v1463
      %v1821 = vunpack.c.l.b16 %v1464
      %v1822 = vunpack.c.l.b16 %v1465
      %v1823 = vunpack.c.l.b16 %v1466
      %v1824 = vunpack.c.l.b16 %v1467
      %v1825 = vunpack.c.l.b16 %v1468
      %v1826 = vunpack.c.l.b16 %v1469
      %v1827 = vunpack.c.l.b16 %v1470
      %v1828 = vunpack.c.l.b16 %v1471
      %v1829 = vunpack.c.l.b16 %v1472
      %v1830 = vunpack.c.l.b16 %v1473
      %v1831 = vunpack.c.l.b16 %v1474
      %v1832 = vunpack.c.l.b16 %v1475
      %v1833 = vunpack.c.l.b16 %v1476
      %v1834 = vunpack.c.l.b16 %v1477
      %v1835 = vunpack.c.l.b16 %v1478
      %v1836 = vunpack.c.l.b16 %v1479
      %v1837 = vunpack.c.l.b16 %v1480
      %v1838 = vunpack.c.l.b16 %v1481
      %v1839 = vunpack.c.l.b16 %v1482
      %v1840 = vunpack.c.l.b16 %v1483
      %v1841 = vunpack.c.l.b16 %v1484
      %v1842 = vunpack.c.l.b16 %v1485
      %v1843 = vunpack.c.l.b16 %v1486
      %v1844 = vunpack.c.l.b16 %v1487
      %v1845 = vunpack.c.l.b16 %v1488
      %v1846 = vunpack.c.l.b16 %v1489
      %v1847 = vunpack.c.l.b16 %v1490
      %v1848 = vunpack.c.l.b16 %v1491
      %v1849 = vunpack.c.l.b16 %v1492
      %v1850 = vpack.c.b16 %v1676, %v1675
      %v1851 = vpack.c.b16 %v1678, %v1677
      %v1852 = vpack.c.b16 %v1680, %v1679
      %v1853 = vpack.c.b16 %v1682, %v1681
      %v1854 = vpack.c.b16 %v1684, %v1683
      %v1855 = vpack.c.b16 %v1686, %v1685
      %v1856 = vpack.c.b16 %v1688, %v1687
      %v1857 = vpack.c.b16 %v1690, %v1689
      %v1858 = vpack.c.b16 %v1692, %v1691
      %v1859 = vpack.c.b16 %v1694, %v1693
      %v1860 = vpack.c.b16 %v1696, %v1695
      %v1861 = vpack.c.b16 %v1698, %v1697
      %v1862 = vpack.c.b16 %v1700, %v1699
      %v1863 = vpack.c.b16 %v1702, %v1701
      %v1864 = vpack.c.b16 %v1704, %v1703
      %v1865 = vpack.c.b16 %v1706, %v1705
      %v1866 = vpack.c.b16 %v1708, %v1707
      %v1867 = vpack.c.b16 %v1710, %v1709
      %v1868 = vpack.c.b16 %v1712, %v1711
      %v1869 = vpack.c.b16 %v1714, %v1713
      %v1870 = vpack.c.b16 %v1716, %v1715
      %v1871 = vpack.c.b16 %v1718, %v1717
      %v1872 = vpack.c.b16 %v1720, %v1719
      %v1873 = vpack.c.b16 %v1722, %v1721
      %v1874 = vpack.c.b16 %v1724, %v1723
      %v1875 = vpack.c.b16 %v1726, %v1725
      %v1876 = vpack.c.b16 %v1728, %v1727
      %v1877 = vpack.c.b16 %v1730, %v1729
      %v1878 = vpack.c.b16 %v1732, %v1731
      %v1879 = vpack.c.b16 %v1734, %v1733
      %v1880 = vpack.c.b16 %v1736, %v1735
      %v1881 = vpack.c.b16 %v1738, %v1737
      %v1882 = vpack.c.b16 %v1740, %v1739
      %v1883 = vpack.c.b16 %v1742, %v1741
      %v1884 = vpack.c.b16 %v1744, %v1743
      %v1885 = vpack.c.b16 %v1746, %v1745
      %v1886 = vpack.c.b16 %v1748, %v1747
      %v1887 = vpack.c.b16 %v1750, %v1749
      %v1888 = vpack.c.b16 %v1752, %v1751
      %v1889 = vpack.c.b16 %v1754, %v1753
      %v1890 = vpack.c.b16 %v1756, %v1755
      %v1891 = vpack.c.b16 %v1758, %v1757
      %v1892 = vpack.c.b16 %v1760, %v1759
      %v1893 = vpack.c.b16 %v1762, %v1761
      %v1894 = vpack.c.b16 %v1764, %v1763
      %v1895 = vpack.c.b16 %v1766, %v1765
      %v1896 = vpack.c.b16 %v1768, %v1767
      %v1897 = vpack.c.b16 %v1770, %v1769
      %v1898 = vpack.c.b16 %v1772, %v1771
      %v1899 = vpack.c.b16 %v1774, %v1773
      %v1900 = vpack.c.b16 %v1776, %v1775
      %v1901 = vpack.c.b16 %v1778, %v1777
      %v1902 = vpack.c.b16 %v1780, %v1779
      %v1903 = vpack.c.b16 %v1782, %v1781
      %v1904 = vpack.c.b16 %v1784, %v1783
      %v1905 = vpack.c.b16 %v1786, %v1785
      %v1906 = vpack.c.b16 %v1788, %v1787
      %v1907 = vpack.c.b16 %v1790, %v1789
      %v1908 = vpack.c.b16 %v1792, %v1791
      %v1909 = vpack.c.b16 %v1794, %v1793
      %v1910 = vpack.c.b16 %v1796, %v1795
      %v1911 = vpack.c.b16 %v1798, %v1797
      %v1912 = vpack.c.b16 %v1800, %v1799
      %v1913 = vpack.c.b16 %v1802, %v1801
      %v1914 = vpack.c.b16 %v1804, %v1803
      %v1915 = vpack.c.b16 %v1806, %v1805
      %v1916 = vpack.c.b16 %v1808, %v1807
      %v1917 = vpack.c.b16 %v1810, %v1809
      %v1918 = vpack.c.b16 %v1812, %v1811
      %v1919 = vpack.c.b16 %v1814, %v1813
      %v1920 = vpack.c.b16 %v1816, %v1815
      %v1921 = vpack.c.b16 %v1818, %v1817
      %v1922 = vpack.c.b16 %v1820, %v1819
      %v1923 = vpack.c.b16 %v1822, %v1821
      %v1924 = vpack.c.b16 %v1824, %v1823
      %v1925 = vpack.c.b16 %v1826, %v1825
      %v1926 = vpack.c.b16 %v1828, %v1827
      %v1927 = vpack.c.b16 %v1830, %v1829
      %v1928 = vpack.c.b16 %v1832, %v1831
      %v1929 = vpack.c.b16 %v1834, %v1833
      %v1930 = vpack.c.b16 %v1836, %v1835
      %v1931 = vpack.c.b16 %v1838, %v1837
      %v1932 = vpack.c.b16 %v1840, %v1839
      %v1933 = vpack.c.b16 %v1842, %v1841
      %v1934 = vpack.c.b16 %v1844, %v1843
      %v1935 = vpack.c.b16 %v1846, %v1845
      %v1936 = vpack.c.b16 %v1848, %v1847
      %v1937 = vpack.c.b16 %v1849, %v1849
      %vm2025 = vcmask 982016
      %v2027 = vsel %vm2025, %v1172, 0
      %v2030 = vsel %vm2025, %v1174, 0
      %v2033 = vsel %vm2025, %v1176, 0
      %v2036 = vsel %vm2025, %v1178, 0
      %v2039 = vsel %vm2025, %v1180, 0
      %v2042 = vsel %vm2025, %v1182, 0
      %v2045 = vsel %vm2025, %v1184, 0
      %v2048 = vsel %vm2025, %v1186, 0
      %vm2050 = vcmask 1043456
      %v2052 = vsel %vm2050, %v1937, 0
      %2054 = vmatprep.subr.bf16.mxu0 0
      %2055 = vmatpush1.bf16.msra.mxu0 %v1850
      %2056 = vmatprep.subr.bf16.mxu0 0
      %2057 = vmatpush1.bf16.msra.mxu0 %v1851
      %2058 = vmatprep.subr.bf16.mxu0 0
      %2059 = vmatpush1.bf16.msra.mxu0 %v1852
      %2060 = vmatprep.subr.bf16.mxu0 0
      %2061 = vmatpush1.bf16.msra.mxu0 %v1853
      %2062 = vmatprep.subr.bf16.mxu0 0
      %2063 = vmatpush1.bf16.msra.mxu0 %v1854
      %2064 = vmatprep.subr.bf16.mxu0 0
      %2065 = vmatpush1.bf16.msra.mxu0 %v1855
      %2066 = vmatprep.subr.bf16.mxu0 0
      %2067 = vmatpush1.bf16.msra.mxu0 %v1856
      %2068 = vmatprep.subr.bf16.mxu0 0
      %2069 = vmatpush1.bf16.msra.mxu0 %v1857
      %2070 = vmatprep.subr.bf16.mxu0 0
      %2071 = vmatpush1.bf16.msra.mxu0 %v1858
      %2072 = vmatprep.subr.bf16.mxu0 0
      %2073 = vmatpush1.bf16.msra.mxu0 %v1859
      %2074 = vmatprep.subr.bf16.mxu0 0
      %2075 = vmatpush1.bf16.msra.mxu0 %v1860
      %2076 = vmatprep.subr.bf16.mxu0 0
      %2077 = vmatpush1.bf16.msra.mxu0 %v1861
      %2078 = vmatprep.subr.bf16.mxu0 0
      %2079 = vmatpush1.bf16.msra.mxu0 %v1862
      %2080 = vmatprep.subr.bf16.mxu0 0
      %2081 = vmatpush1.bf16.msra.mxu0 %v1863
      %2082 = vmatprep.subr.bf16.mxu0 0
      %2083 = vmatpush1.bf16.msra.mxu0 %v1864
      %2084 = vmatprep.subr.bf16.mxu0 0
      %2085 = vmatpush1.bf16.msra.mxu0 %v1865
      %2086 = vmatprep.mubr.bf16.mxu0 %v654
      %2087 = vmatmul.mubr.bf16.gmra.mrb[0].mxu0 %v612
      %v2088 = vpop.f32.mrb[0].mxu0
      %v2089 = vadd.f32 %v1498, %v2088
      %v2090 = vpop.f32.mrb[0].mxu0
      %v2091 = vpop.f32.mrb[0].mxu0
      %v2092 = vadd.f32 %v1498, %v2091
      %v2093 = vpop.f32.mrb[0].mxu0
      %2094 = vmatprep.mubr.bf16.mxu0 %v657
      %2095 = vmatmul.mubr.bf16.gmra.mrb[0].mxu0 %v615
      %v2096 = vpop.f32.mrb[0].mxu0
      %v2097 = vadd.f32 %v1498, %v2096
      %v2098 = vpop.f32.mrb[0].mxu0
      %v2099 = vpop.f32.mrb[0].mxu0
      %v2100 = vadd.f32 %v1498, %v2099
      %v2101 = vpop.f32.mrb[0].mxu0
      %2102 = vmatprep.mubr.bf16.mxu0 %v660
      %2103 = vmatmul.mubr.bf16.gmra.mrb[0].mxu0 %v618
      %v2104 = vpop.f32.mrb[0].mxu0
      %v2105 = vadd.f32 %v1498, %v2104
      %v2106 = vpop.f32.mrb[0].mxu0
      %v2107 = vpop.f32.mrb[0].mxu0
      %v2108 = vadd.f32 %v1498, %v2107
      %v2109 = vpop.f32.mrb[0].mxu0
      %2110 = vmatprep.mubr.bf16.mxu0 %v663
      %2111 = vmatmul.mubr.bf16.gmra.mrb[0].mxu0 %v621
      %v2112 = vpop.f32.mrb[0].mxu0
      %v2113 = vadd.f32 %v1498, %v2112
      %v2114 = vpop.f32.mrb[0].mxu0
      %v2115 = vpop.f32.mrb[0].mxu0
      %v2116 = vadd.f32 %v1498, %v2115
      %v2117 = vpop.f32.mrb[0].mxu0
      %2118 = vmatprep.mubr.bf16.mxu0 %v666
      %2119 = vmatmul.mubr.bf16.gmra.mrb[0].mxu0 %v624
      %v2120 = vpop.f32.mrb[0].mxu0
      %v2121 = vadd.f32 %v1498, %v2120
      %v2122 = vpop.f32.mrb[0].mxu0
      %v2123 = vpop.f32.mrb[0].mxu0
      %v2124 = vadd.f32 %v1498, %v2123
      %v2125 = vpop.f32.mrb[0].mxu0
      %2126 = vmatprep.mubr.bf16.mxu0 %v669
      %2127 = vmatmul.mubr.bf16.gmra.mrb[0].mxu0 %v627
      %v2128 = vpop.f32.mrb[0].mxu0
      %v2129 = vadd.f32 %v1498, %v2128
      %v2130 = vpop.f32.mrb[0].mxu0
      %v2131 = vpop.f32.mrb[0].mxu0
      %v2132 = vadd.f32 %v1498, %v2131
      %v2133 = vpop.f32.mrb[0].mxu0
      %2134 = vmatprep.mubr.bf16.mxu0 %v672
      %2135 = vmatmul.mubr.bf16.gmra.mrb[0].mxu0 %v630
      %v2136 = vpop.f32.mrb[0].mxu0
      %v2137 = vadd.f32 %v1498, %v2136
      %v2138 = vpop.f32.mrb[0].mxu0
      %v2139 = vpop.f32.mrb[0].mxu0
      %v2140 = vadd.f32 %v1498, %v2139
      %v2141 = vpop.f32.mrb[0].mxu0
      %2142 = vmatprep.mubr.bf16.mxu0 %v675
      %2143 = vmatmul.mubr.bf16.gmra.mrb[0].mxu0 %v633
      %v2144 = vpop.f32.mrb[0].mxu0
      %v2145 = vadd.f32 %v1498, %v2144
      %v2146 = vpop.f32.mrb[0].mxu0
      %v2147 = vpop.f32.mrb[0].mxu0
      %v2148 = vadd.f32 %v1498, %v2147
      %v2149 = vpop.f32.mrb[0].mxu0
      %2150 = vdwg.mxu0
      %2151 = vmatprep.subr.bf16.mxu0 0
      %2152 = vmatpush1.bf16.msra.mxu0 %v1866
      %2153 = vmatprep.subr.bf16.mxu0 0
      %2154 = vmatpush1.bf16.msra.mxu0 %v1867
      %2155 = vmatprep.subr.bf16.mxu0 0
      %2156 = vmatpush1.bf16.msra.mxu0 %v1868
      %2157 = vmatprep.subr.bf16.mxu0 0
      %2158 = vmatpush1.bf16.msra.mxu0 %v1869
      %2159 = vmatprep.subr.bf16.mxu0 0
      %2160 = vmatpush1.bf16.msra.mxu0 %v1870
      %2161 = vmatprep.subr.bf16.mxu0 0
      %2162 = vmatpush1.bf16.msra.mxu0 %v1871
      %2163 = vmatprep.subr.bf16.mxu0 0
      %2164 = vmatpush1.bf16.msra.mxu0 %v1872
      %2165 = vmatprep.subr.bf16.mxu0 0
      %2166 = vmatpush1.bf16.msra.mxu0 %v1873
      %2167 = vmatprep.subr.bf16.mxu0 0
      %2168 = vmatpush1.bf16.msra.mxu0 %v1874
      %2169 = vmatprep.subr.bf16.mxu0 0
      %2170 = vmatpush1.bf16.msra.mxu0 %v1875
      %2171 = vmatprep.subr.bf16.mxu0 0
      %2172 = vmatpush1.bf16.msra.mxu0 %v1876
      %2173 = vmatprep.subr.bf16.mxu0 0
      %2174 = vmatpush1.bf16.msra.mxu0 %v1877
      %2175 = vmatprep.subr.bf16.mxu0 0
      %2176 = vmatpush1.bf16.msra.mxu0 %v1878
      %2177 = vmatprep.subr.bf16.mxu0 0
      %2178 = vmatpush1.bf16.msra.mxu0 %v1879
      %2179 = vmatprep.subr.bf16.mxu0 0
      %2180 = vmatpush1.bf16.msra.mxu0 %v1880
      %2181 = vmatprep.subr.bf16.mxu0 0
      %2182 = vmatpush1.bf16.msra.mxu0 %v1881
      %2183 = vmatprep.mubr.bf16.mxu0 %v946
      %2184 = vmatmul.mubr.bf16.gmra.mrb[0].mxu0 %v1197
      %v2185 = vpop.f32.mrb[0].mxu0
      %v2186 = vadd.f32 %v2089, %v2185
      %v2187 = vpop.f32.mrb[0].mxu0
      %v2188 = vpop.f32.mrb[0].mxu0
      %v2189 = vadd.f32 %v2092, %v2188
      %v2190 = vpop.f32.mrb[0].mxu0
      %2191 = vmatprep.mubr.bf16.mxu0 %v948
      %2192 = vmatmul.mubr.bf16.gmra.mrb[0].mxu0 %v1200
      %v2193 = vpop.f32.mrb[0].mxu0
      %v2194 = vadd.f32 %v2097, %v2193
      %v2195 = vpop.f32.mrb[0].mxu0
      %v2196 = vpop.f32.mrb[0].mxu0
      %v2197 = vadd.f32 %v2100, %v2196
      %v2198 = vpop.f32.mrb[0].mxu0
      %2199 = vmatprep.mubr.bf16.mxu0 %v950
      %2200 = vmatmul.mubr.bf16.gmra.mrb[0].mxu0 %v1203
      %v2201 = vpop.f32.mrb[0].mxu0
      %v2202 = vadd.f32 %v2105, %v2201
      %v2203 = vpop.f32.mrb[0].mxu0
      %v2204 = vpop.f32.mrb[0].mxu0
      %v2205 = vadd.f32 %v2108, %v2204
      %v2206 = vpop.f32.mrb[0].mxu0
      %2207 = vmatprep.mubr.bf16.mxu0 %v952
      %2208 = vmatmul.mubr.bf16.gmra.mrb[0].mxu0 %v1206
      %v2209 = vpop.f32.mrb[0].mxu0
      %v2210 = vadd.f32 %v2113, %v2209
      %v2211 = vpop.f32.mrb[0].mxu0
      %v2212 = vpop.f32.mrb[0].mxu0
      %v2213 = vadd.f32 %v2116, %v2212
      %v2214 = vpop.f32.mrb[0].mxu0
      %2215 = vmatprep.mubr.bf16.mxu0 %v954
      %2216 = vmatmul.mubr.bf16.gmra.mrb[0].mxu0 %v1209
      %v2217 = vpop.f32.mrb[0].mxu0
      %v2218 = vadd.f32 %v2121, %v2217
      %v2219 = vpop.f32.mrb[0].mxu0
      %v2220 = vpop.f32.mrb[0].mxu0
      %v2221 = vadd.f32 %v2124, %v2220
      %v2222 = vpop.f32.mrb[0].mxu0
      %2223 = vmatprep.mubr.bf16.mxu0 %v956
      %2224 = vmatmul.mubr.bf16.gmra.mrb[0].mxu0 %v1212
      %v2225 = vpop.f32.mrb[0].mxu0
      %v2226 = vadd.f32 %v2129, %v2225
      %v2227 = vpop.f32.mrb[0].mxu0
      %v2228 = vpop.f32.mrb[0].mxu0
      %v2229 = vadd.f32 %v2132, %v2228
      %v2230 = vpop.f32.mrb[0].mxu0
      %2231 = vmatprep.mubr.bf16.mxu0 %v958
      %2232 = vmatmul.mubr.bf16.gmra.mrb[0].mxu0 %v1215
      %v2233 = vpop.f32.mrb[0].mxu0
      %v2234 = vadd.f32 %v2137, %v2233
      %v2235 = vpop.f32.mrb[0].mxu0
      %v2236 = vpop.f32.mrb[0].mxu0
      %v2237 = vadd.f32 %v2140, %v2236
      %v2238 = vpop.f32.mrb[0].mxu0
      %2239 = vmatprep.mubr.bf16.mxu0 %v960
      %2240 = vmatmul.mubr.bf16.gmra.mrb[0].mxu0 %v1218
      %v2241 = vpop.f32.mrb[0].mxu0
      %v2242 = vadd.f32 %v2145, %v2241
      %v2243 = vpop.f32.mrb[0].mxu0
      %v2244 = vpop.f32.mrb[0].mxu0
      %v2245 = vadd.f32 %v2148, %v2244
      %v2246 = vpop.f32.mrb[0].mxu0
      %2247 = vdwg.mxu0
      %2248 = vmatprep.subr.bf16.mxu0 0
      %2249 = vmatpush1.bf16.msra.mxu0 %v1882
      %2250 = vmatprep.subr.bf16.mxu0 0
      %2251 = vmatpush1.bf16.msra.mxu0 %v1883
      %2252 = vmatprep.subr.bf16.mxu0 0
      %2253 = vmatpush1.bf16.msra.mxu0 %v1884
      %2254 = vmatprep.subr.bf16.mxu0 0
      %2255 = vmatpush1.bf16.msra.mxu0 %v1885
      %2256 = vmatprep.subr.bf16.mxu0 0
      %2257 = vmatpush1.bf16.msra.mxu0 %v1886
      %2258 = vmatprep.subr.bf16.mxu0 0
      %2259 = vmatpush1.bf16.msra.mxu0 %v1887
      %2260 = vmatprep.subr.bf16.mxu0 0
      %2261 = vmatpush1.bf16.msra.mxu0 %v1888
      %2262 = vmatprep.subr.bf16.mxu0 0
      %2263 = vmatpush1.bf16.msra.mxu0 %v1889
      %2264 = vmatprep.subr.bf16.mxu0 0
      %2265 = vmatpush1.bf16.msra.mxu0 %v1890
      %2266 = vmatprep.subr.bf16.mxu0 0
      %2267 = vmatpush1.bf16.msra.mxu0 %v1891
      %2268 = vmatprep.subr.bf16.mxu0 0
      %2269 = vmatpush1.bf16.msra.mxu0 %v1892
      %2270 = vmatprep.subr.bf16.mxu0 0
      %2271 = vmatpush1.bf16.msra.mxu0 %v1893
      %2272 = vmatprep.subr.bf16.mxu0 0
      %2273 = vmatpush1.bf16.msra.mxu0 %v1894
      %2274 = vmatprep.subr.bf16.mxu0 0
      %2275 = vmatpush1.bf16.msra.mxu0 %v1895
      %2276 = vmatprep.subr.bf16.mxu0 0
      %2277 = vmatpush1.bf16.msra.mxu0 %v1896
      %2278 = vmatprep.subr.bf16.mxu0 0
      %2279 = vmatpush1.bf16.msra.mxu0 %v1897
      %2280 = vmatprep.mubr.bf16.mxu0 %v1021
      %2281 = vmatmul.mubr.bf16.gmra.mrb[0].mxu0 %v1223
      %v2282 = vpop.f32.mrb[0].mxu0
      %v2283 = vadd.f32 %v2186, %v2282
      %v2284 = vpop.f32.mrb[0].mxu0
      %v2285 = vpop.f32.mrb[0].mxu0
      %v2286 = vadd.f32 %v2189, %v2285
      %v2287 = vpop.f32.mrb[0].mxu0
      %2288 = vmatprep.mubr.bf16.mxu0 %v1023
      %2289 = vmatmul.mubr.bf16.gmra.mrb[0].mxu0 %v1227
      %v2290 = vpop.f32.mrb[0].mxu0
      %v2291 = vadd.f32 %v2194, %v2290
      %v2292 = vpop.f32.mrb[0].mxu0
      %v2293 = vpop.f32.mrb[0].mxu0
      %v2294 = vadd.f32 %v2197, %v2293
      %v2295 = vpop.f32.mrb[0].mxu0
      %2296 = vmatprep.mubr.bf16.mxu0 %v1025
      %2297 = vmatmul.mubr.bf16.gmra.mrb[0].mxu0 %v1231
      %v2298 = vpop.f32.mrb[0].mxu0
      %v2299 = vadd.f32 %v2202, %v2298
      %v2300 = vpop.f32.mrb[0].mxu0
      %v2301 = vpop.f32.mrb[0].mxu0
      %v2302 = vadd.f32 %v2205, %v2301
      %v2303 = vpop.f32.mrb[0].mxu0
      %2304 = vmatprep.mubr.bf16.mxu0 %v1027
      %2305 = vmatmul.mubr.bf16.gmra.mrb[0].mxu0 %v1235
      %v2306 = vpop.f32.mrb[0].mxu0
      %v2307 = vadd.f32 %v2210, %v2306
      %v2308 = vpop.f32.mrb[0].mxu0
      %v2309 = vpop.f32.mrb[0].mxu0
      %v2310 = vadd.f32 %v2213, %v2309
      %v2311 = vpop.f32.mrb[0].mxu0
      %2312 = vmatprep.mubr.bf16.mxu0 %v1029
      %2313 = vmatmul.mubr.bf16.gmra.mrb[0].mxu0 %v1239
      %v2314 = vpop.f32.mrb[0].mxu0
      %v2315 = vadd.f32 %v2218, %v2314
      %v2316 = vpop.f32.mrb[0].mxu0
      %v2317 = vpop.f32.mrb[0].mxu0
      %v2318 = vadd.f32 %v2221, %v2317
      %v2319 = vpop.f32.mrb[0].mxu0
      %2320 = vmatprep.mubr.bf16.mxu0 %v1031
      %2321 = vmatmul.mubr.bf16.gmra.mrb[0].mxu0 %v1243
      %v2322 = vpop.f32.mrb[0].mxu0
      %v2323 = vadd.f32 %v2226, %v2322
      %v2324 = vpop.f32.mrb[0].mxu0
      %v2325 = vpop.f32.mrb[0].mxu0
      %v2326 = vadd.f32 %v2229, %v2325
      %v2327 = vpop.f32.mrb[0].mxu0
      %2328 = vmatprep.mubr.bf16.mxu0 %v1033
      %2329 = vmatmul.mubr.bf16.gmra.mrb[0].mxu0 %v1247
      %v2330 = vpop.f32.mrb[0].mxu0
      %v2331 = vadd.f32 %v2234, %v2330
      %v2332 = vpop.f32.mrb[0].mxu0
      %v2333 = vpop.f32.mrb[0].mxu0
      %v2334 = vadd.f32 %v2237, %v2333
      %v2335 = vpop.f32.mrb[0].mxu0
      %2336 = vmatprep.mubr.bf16.mxu0 %v1035
      %2337 = vmatmul.mubr.bf16.gmra.mrb[0].mxu0 %v1251
      %v2338 = vpop.f32.mrb[0].mxu0
      %v2339 = vadd.f32 %v2242, %v2338
      %v2340 = vpop.f32.mrb[0].mxu0
      %v2341 = vpop.f32.mrb[0].mxu0
      %v2342 = vadd.f32 %v2245, %v2341
      %v2343 = vpop.f32.mrb[0].mxu0
      %2344 = vdwg.mxu0
      %2345 = vmatprep.subr.bf16.mxu0 0
      %2346 = vmatpush1.bf16.msra.mxu0 %v1898
      %2347 = vmatprep.subr.bf16.mxu0 0
      %2348 = vmatpush1.bf16.msra.mxu0 %v1899
      %2349 = vmatprep.subr.bf16.mxu0 0
      %2350 = vmatpush1.bf16.msra.mxu0 %v1900
      %2351 = vmatprep.subr.bf16.mxu0 0
      %2352 = vmatpush1.bf16.msra.mxu0 %v1901
      %2353 = vmatprep.subr.bf16.mxu0 0
      %2354 = vmatpush1.bf16.msra.mxu0 %v1902
      %2355 = vmatprep.subr.bf16.mxu0 0
      %2356 = vmatpush1.bf16.msra.mxu0 %v1903
      %2357 = vmatprep.subr.bf16.mxu0 0
      %2358 = vmatpush1.bf16.msra.mxu0 %v1904
      %2359 = vmatprep.subr.bf16.mxu0 0
      %2360 = vmatpush1.bf16.msra.mxu0 %v1905
      %2361 = vmatprep.subr.bf16.mxu0 0
      %2362 = vmatpush1.bf16.msra.mxu0 %v1906
      %2363 = vmatprep.subr.bf16.mxu0 0
      %2364 = vmatpush1.bf16.msra.mxu0 %v1907
      %2365 = vmatprep.subr.bf16.mxu0 0
      %2366 = vmatpush1.bf16.msra.mxu0 %v1908
      %2367 = vmatprep.subr.bf16.mxu0 0
      %2368 = vmatpush1.bf16.msra.mxu0 %v1909
      %2369 = vmatprep.subr.bf16.mxu0 0
      %2370 = vmatpush1.bf16.msra.mxu0 %v1910
      %2371 = vmatprep.subr.bf16.mxu0 0
      %2372 = vmatpush1.bf16.msra.mxu0 %v1911
      %2373 = vmatprep.subr.bf16.mxu0 0
      %2374 = vmatpush1.bf16.msra.mxu0 %v1912
      %2375 = vmatprep.subr.bf16.mxu0 0
      %2376 = vmatpush1.bf16.msra.mxu0 %v1913
      %2377 = vmatprep.mubr.bf16.mxu0 %v1096
      %2378 = vmatmul.mubr.bf16.gmra.mrb[0].mxu0 %v1256
      %v2379 = vpop.f32.mrb[0].mxu0
      %v2380 = vadd.f32 %v2283, %v2379
      %v2381 = vpop.f32.mrb[0].mxu0
      %v2382 = vpop.f32.mrb[0].mxu0
      %v2383 = vadd.f32 %v2286, %v2382
      %v2384 = vpop.f32.mrb[0].mxu0
      %2385 = vmatprep.mubr.bf16.mxu0 %v1098
      %2386 = vmatmul.mubr.bf16.gmra.mrb[0].mxu0 %v1260
      %v2387 = vpop.f32.mrb[0].mxu0
      %v2388 = vadd.f32 %v2291, %v2387
      %v2389 = vpop.f32.mrb[0].mxu0
      %v2390 = vpop.f32.mrb[0].mxu0
      %v2391 = vadd.f32 %v2294, %v2390
      %v2392 = vpop.f32.mrb[0].mxu0
      %2393 = vmatprep.mubr.bf16.mxu0 %v1100
      %2394 = vmatmul.mubr.bf16.gmra.mrb[0].mxu0 %v1264
      %v2395 = vpop.f32.mrb[0].mxu0
      %v2396 = vadd.f32 %v2299, %v2395
      %v2397 = vpop.f32.mrb[0].mxu0
      %v2398 = vpop.f32.mrb[0].mxu0
      %v2399 = vadd.f32 %v2302, %v2398
      %v2400 = vpop.f32.mrb[0].mxu0
      %2401 = vmatprep.mubr.bf16.mxu0 %v1102
      %2402 = vmatmul.mubr.bf16.gmra.mrb[0].mxu0 %v1268
      %v2403 = vpop.f32.mrb[0].mxu0
      %v2404 = vadd.f32 %v2307, %v2403
      %v2405 = vpop.f32.mrb[0].mxu0
      %v2406 = vpop.f32.mrb[0].mxu0
      %v2407 = vadd.f32 %v2310, %v2406
      %v2408 = vpop.f32.mrb[0].mxu0
      %2409 = vmatprep.mubr.bf16.mxu0 %v1104
      %2410 = vmatmul.mubr.bf16.gmra.mrb[0].mxu0 %v1272
      %v2411 = vpop.f32.mrb[0].mxu0
      %v2412 = vadd.f32 %v2315, %v2411
      %v2413 = vpop.f32.mrb[0].mxu0
      %v2414 = vpop.f32.mrb[0].mxu0
      %v2415 = vadd.f32 %v2318, %v2414
      %v2416 = vpop.f32.mrb[0].mxu0
      %2417 = vmatprep.mubr.bf16.mxu0 %v1106
      %2418 = vmatmul.mubr.bf16.gmra.mrb[0].mxu0 %v1276
      %v2419 = vpop.f32.mrb[0].mxu0
      %v2420 = vadd.f32 %v2323, %v2419
      %v2421 = vpop.f32.mrb[0].mxu0
      %v2422 = vpop.f32.mrb[0].mxu0
      %v2423 = vadd.f32 %v2326, %v2422
      %v2424 = vpop.f32.mrb[0].mxu0
      %2425 = vmatprep.mubr.bf16.mxu0 %v1108
      %2426 = vmatmul.mubr.bf16.gmra.mrb[0].mxu0 %v1280
      %v2427 = vpop.f32.mrb[0].mxu0
      %v2428 = vadd.f32 %v2331, %v2427
      %v2429 = vpop.f32.mrb[0].mxu0
      %v2430 = vpop.f32.mrb[0].mxu0
      %v2431 = vadd.f32 %v2334, %v2430
      %v2432 = vpop.f32.mrb[0].mxu0
      %2433 = vmatprep.mubr.bf16.mxu0 %v1110
      %2434 = vmatmul.mubr.bf16.gmra.mrb[0].mxu0 %v1284
      %v2435 = vpop.f32.mrb[0].mxu0
      %v2436 = vadd.f32 %v2339, %v2435
      %v2437 = vpop.f32.mrb[0].mxu0
      %v2438 = vpop.f32.mrb[0].mxu0
      %v2439 = vadd.f32 %v2342, %v2438
      %v2440 = vpop.f32.mrb[0].mxu0
      %2441 = vdwg.mxu0
      %2442 = vmatprep.subr.bf16.mxu0 0
      %2443 = vmatpush1.bf16.msra.mxu0 %v1914
      %2444 = vmatprep.subr.bf16.mxu0 0
      %2445 = vmatpush1.bf16.msra.mxu0 %v1915
      %2446 = vmatprep.subr.bf16.mxu0 0
      %2447 = vmatpush1.bf16.msra.mxu0 %v1916
      %2448 = vmatprep.subr.bf16.mxu0 0
      %2449 = vmatpush1.bf16.msra.mxu0 %v1917
      %2450 = vmatprep.subr.bf16.mxu0 0
      %2451 = vmatpush1.bf16.msra.mxu0 %v1918
      %2452 = vmatprep.subr.bf16.mxu0 0
      %2453 = vmatpush1.bf16.msra.mxu0 %v1919
      %2454 = vmatprep.subr.bf16.mxu0 0
      %2455 = vmatpush1.bf16.msra.mxu0 %v1920
      %2456 = vmatprep.subr.bf16.mxu0 0
      %2457 = vmatpush1.bf16.msra.mxu0 %v1921
      %2458 = vmatprep.subr.bf16.mxu0 0
      %2459 = vmatpush1.bf16.msra.mxu0 %v1922
      %2460 = vmatprep.subr.bf16.mxu0 0
      %2461 = vmatpush1.bf16.msra.mxu0 %v1923
      %2462 = vmatprep.subr.bf16.mxu0 0
      %2463 = vmatpush1.bf16.msra.mxu0 %v1924
      %2464 = vmatprep.subr.bf16.mxu0 0
      %2465 = vmatpush1.bf16.msra.mxu0 %v1925
      %2466 = vmatprep.subr.bf16.mxu0 0
      %2467 = vmatpush1.bf16.msra.mxu0 %v1926
      %2468 = vmatprep.subr.bf16.mxu0 0
      %2469 = vmatpush1.bf16.msra.mxu0 %v1927
      %2470 = vmatprep.subr.bf16.mxu0 0
      %2471 = vmatpush1.bf16.msra.mxu0 %v1928
      %2472 = vmatprep.subr.bf16.mxu0 0
      %2473 = vmatpush1.bf16.msra.mxu0 %v1929
      %2474 = vmatprep.mubr.bf16.mxu0 %v1171
      %2475 = vmatmul.mubr.bf16.gmra.mrb[0].mxu0 %v1288
      %v2476 = vpop.f32.mrb[0].mxu0
      %v2477 = vadd.f32 %v2380, %v2476
      %v2478 = vpop.f32.mrb[0].mxu0
      %v2479 = vpop.f32.mrb[0].mxu0
      %v2480 = vadd.f32 %v2383, %v2479
      %v2481 = vpop.f32.mrb[0].mxu0
      %2482 = vmatprep.mubr.bf16.mxu0 %v1173
      %2483 = vmatmul.mubr.bf16.gmra.mrb[0].mxu0 %v1292
      %v2484 = vpop.f32.mrb[0].mxu0
      %v2485 = vadd.f32 %v2388, %v2484
      %v2486 = vpop.f32.mrb[0].mxu0
      %v2487 = vpop.f32.mrb[0].mxu0
      %v2488 = vadd.f32 %v2391, %v2487
      %v2489 = vpop.f32.mrb[0].mxu0
      %2490 = vmatprep.mubr.bf16.mxu0 %v1175
      %2491 = vmatmul.mubr.bf16.gmra.mrb[0].mxu0 %v1296
      %v2492 = vpop.f32.mrb[0].mxu0
      %v2493 = vadd.f32 %v2396, %v2492
      %v2494 = vpop.f32.mrb[0].mxu0
      %v2495 = vpop.f32.mrb[0].mxu0
      %v2496 = vadd.f32 %v2399, %v2495
      %v2497 = vpop.f32.mrb[0].mxu0
      %2498 = vmatprep.mubr.bf16.mxu0 %v1177
      %2499 = vmatmul.mubr.bf16.gmra.mrb[0].mxu0 %v1300
      %v2500 = vpop.f32.mrb[0].mxu0
      %v2501 = vadd.f32 %v2404, %v2500
      %v2502 = vpop.f32.mrb[0].mxu0
      %v2503 = vpop.f32.mrb[0].mxu0
      %v2504 = vadd.f32 %v2407, %v2503
      %v2505 = vpop.f32.mrb[0].mxu0
      %2506 = vmatprep.mubr.bf16.mxu0 %v1179
      %2507 = vmatmul.mubr.bf16.gmra.mrb[0].mxu0 %v1304
      %v2508 = vpop.f32.mrb[0].mxu0
      %v2509 = vadd.f32 %v2412, %v2508
      %v2510 = vpop.f32.mrb[0].mxu0
      %v2511 = vpop.f32.mrb[0].mxu0
      %v2512 = vadd.f32 %v2415, %v2511
      %v2513 = vpop.f32.mrb[0].mxu0
      %2514 = vmatprep.mubr.bf16.mxu0 %v1181
      %2515 = vmatmul.mubr.bf16.gmra.mrb[0].mxu0 %v1308
      %v2516 = vpop.f32.mrb[0].mxu0
      %v2517 = vadd.f32 %v2420, %v2516
      %v2518 = vpop.f32.mrb[0].mxu0
      %v2519 = vpop.f32.mrb[0].mxu0
      %v2520 = vadd.f32 %v2423, %v2519
      %v2521 = vpop.f32.mrb[0].mxu0
      %2522 = vmatprep.mubr.bf16.mxu0 %v1183
      %2523 = vmatmul.mubr.bf16.gmra.mrb[0].mxu0 %v1312
      %v2524 = vpop.f32.mrb[0].mxu0
      %v2525 = vadd.f32 %v2428, %v2524
      %v2526 = vpop.f32.mrb[0].mxu0
      %v2527 = vpop.f32.mrb[0].mxu0
      %v2528 = vadd.f32 %v2431, %v2527
      %v2529 = vpop.f32.mrb[0].mxu0
      %2530 = vmatprep.mubr.bf16.mxu0 %v1185
      %2531 = vmatmul.mubr.bf16.gmra.mrb[0].mxu0 %v1316
      %v2532 = vpop.f32.mrb[0].mxu0
      %v2533 = vadd.f32 %v2436, %v2532
      %v2534 = vpop.f32.mrb[0].mxu0
      %v2535 = vpop.f32.mrb[0].mxu0
      %v2536 = vadd.f32 %v2439, %v2535
      %v2537 = vpop.f32.mrb[0].mxu0
      %2538 = vdwg.mxu0
      %2539 = vmatprep.subr.bf16.mxu0 0
      %2540 = vmatpush1.bf16.msra.mxu0 %v1930
      %2541 = vmatprep.subr.bf16.mxu0 0
      %2542 = vmatpush1.bf16.msra.mxu0 %v1931
      %2543 = vmatprep.subr.bf16.mxu0 0
      %2544 = vmatpush1.bf16.msra.mxu0 %v1932
      %2545 = vmatprep.subr.bf16.mxu0 0
      %2546 = vmatpush1.bf16.msra.mxu0 %v1933
      %2547 = vmatprep.subr.bf16.mxu0 0
      %2548 = vmatpush1.bf16.msra.mxu0 %v1934
      %2549 = vmatprep.subr.bf16.mxu0 0
      %2550 = vmatpush1.bf16.msra.mxu0 %v1935
      %2551 = vmatprep.subr.bf16.mxu0 0
      %2552 = vmatpush1.bf16.msra.mxu0 %v1936
      %2553 = vmatprep.subr.bf16.mxu0 0
      %2554 = vmatpush1.bf16.msra.mxu0 %v2052
      %2555 = vmatprep.subr.bf16.mxu0 0
      %2556 = vmatpush1.bf16.msra.mxu0 0
      %2557 = vmatprep.subr.bf16.mxu0 0
      %2558 = vmatpush1.bf16.msra.mxu0 0
      %2559 = vmatprep.subr.bf16.mxu0 0
      %2560 = vmatpush1.bf16.msra.mxu0 0
      %2561 = vmatprep.subr.bf16.mxu0 0
      %2562 = vmatpush1.bf16.msra.mxu0 0
      %2563 = vmatprep.subr.bf16.mxu0 0
      %2564 = vmatpush1.bf16.msra.mxu0 0
      %2565 = vmatprep.subr.bf16.mxu0 0
      %2566 = vmatpush1.bf16.msra.mxu0 0
      %2567 = vmatprep.subr.bf16.mxu0 0
      %2568 = vmatpush1.bf16.msra.mxu0 0
      %2569 = vmatprep.subr.bf16.mxu0 0
      %2570 = vmatpush1.bf16.msra.mxu0 0
      %2571 = vmatprep.mubr.bf16.mxu0 0
      %2572 = vmatmul.mubr.bf16.gmra.mrb[0].mxu0 %v2027
      %v2573 = vpop.f32.mrb[0].mxu0
      %v2574 = vadd.f32 %v2477, %v2573
      %v2575 = vpop.f32.mrb[0].mxu0
      %v2576 = vpop.f32.mrb[0].mxu0
      %v2577 = vadd.f32 %v2480, %v2576
      %v2578 = vpop.f32.mrb[0].mxu0
      %2579 = vmatprep.mubr.bf16.mxu0 0
      %2580 = vmatmul.mubr.bf16.gmra.mrb[0].mxu0 %v2030
      %v2581 = vpop.f32.mrb[0].mxu0
      %v2582 = vadd.f32 %v2485, %v2581
      %v2583 = vpop.f32.mrb[0].mxu0
      %v2584 = vpop.f32.mrb[0].mxu0
      %v2585 = vadd.f32 %v2488, %v2584
      %v2586 = vpop.f32.mrb[0].mxu0
      %2587 = vmatprep.mubr.bf16.mxu0 0
      %2588 = vmatmul.mubr.bf16.gmra.mrb[0].mxu0 %v2033
      %v2589 = vpop.f32.mrb[0].mxu0
      %v2590 = vadd.f32 %v2493, %v2589
      %v2591 = vpop.f32.mrb[0].mxu0
      %v2592 = vpop.f32.mrb[0].mxu0
      %v2593 = vadd.f32 %v2496, %v2592
      %v2594 = vpop.f32.mrb[0].mxu0
      %2595 = vmatprep.mubr.bf16.mxu0 0
      %2596 = vmatmul.mubr.bf16.gmra.mrb[0].mxu0 %v2036
      %v2597 = vpop.f32.mrb[0].mxu0
      %v2598 = vadd.f32 %v2501, %v2597
      %v2599 = vpop.f32.mrb[0].mxu0
      %v2600 = vpop.f32.mrb[0].mxu0
      %v2601 = vadd.f32 %v2504, %v2600
      %v2602 = vpop.f32.mrb[0].mxu0
      %2603 = vmatprep.mubr.bf16.mxu0 0
      %2604 = vmatmul.mubr.bf16.gmra.mrb[0].mxu0 %v2039
      %v2605 = vpop.f32.mrb[0].mxu0
      %v2606 = vadd.f32 %v2509, %v2605
      %v2607 = vpop.f32.mrb[0].mxu0
      %v2608 = vpop.f32.mrb[0].mxu0
      %v2609 = vadd.f32 %v2512, %v2608
      %v2610 = vpop.f32.mrb[0].mxu0
      %2611 = vmatprep.mubr.bf16.mxu0 0
      %2612 = vmatmul.mubr.bf16.gmra.mrb[0].mxu0 %v2042
      %v2613 = vpop.f32.mrb[0].mxu0
      %v2614 = vadd.f32 %v2517, %v2613
      %v2615 = vpop.f32.mrb[0].mxu0
      %v2616 = vpop.f32.mrb[0].mxu0
      %v2617 = vadd.f32 %v2520, %v2616
      %v2618 = vpop.f32.mrb[0].mxu0
      %2619 = vmatprep.mubr.bf16.mxu0 0
      %2620 = vmatmul.mubr.bf16.gmra.mrb[0].mxu0 %v2045
      %v2621 = vpop.f32.mrb[0].mxu0
      %v2622 = vadd.f32 %v2525, %v2621
      %v2623 = vpop.f32.mrb[0].mxu0
      %v2624 = vpop.f32.mrb[0].mxu0
      %v2625 = vadd.f32 %v2528, %v2624
      %v2626 = vpop.f32.mrb[0].mxu0
      %2627 = vmatprep.mubr.bf16.mxu0 0
      %2628 = vmatmul.mubr.bf16.gmra.mrb[0].mxu0 %v2048
      %v2629 = vpop.f32.mrb[0].mxu0
      %v2630 = vadd.f32 %v2533, %v2629
      %v2631 = vpop.f32.mrb[0].mxu0
      %v2632 = vpop.f32.mrb[0].mxu0
      %v2633 = vadd.f32 %v2536, %v2632
      %v2634 = vpop.f32.mrb[0].mxu0
      %2635 = vdwg.mxu0
      %vm2636 = vcmask 31744
      %2637 = vst.msk [vmem:[%s206] sm:$0xff] %vm2636, %v2574
      %2638 = vst.msk [vmem:[%s206 + $0x8] sm:$0xff] %vm2636, %v2577
      %2639 = vst.msk [vmem:[%s206 + $0x10] sm:$0xff] %vm2636, %v2582
      %2640 = vst.msk [vmem:[%s206 + $0x18] sm:$0xff] %vm2636, %v2585
      %2641 = vst.msk [vmem:[%s206 + $0x20] sm:$0xff] %vm2636, %v2590
      %2642 = vst.msk [vmem:[%s206 + $0x28] sm:$0xff] %vm2636, %v2593
      %2643 = vst.msk [vmem:[%s206 + $0x30] sm:$0xff] %vm2636, %v2598
      %2644 = vst.msk [vmem:[%s206 + $0x38] sm:$0xff] %vm2636, %v2601
      %2645 = vst.msk [vmem:[%s206 + $0x40] sm:$0xff] %vm2636, %v2606
      %2646 = vst.msk [vmem:[%s206 + $0x48] sm:$0xff] %vm2636, %v2609
      %2647 = vst.msk [vmem:[%s206 + $0x50] sm:$0xff] %vm2636, %v2614
      %2648 = vst.msk [vmem:[%s206 + $0x58] sm:$0xff] %vm2636, %v2617
      %2649 = vst.msk [vmem:[%s206 + $0x60] sm:$0xff] %vm2636, %v2622
      %2650 = vst.msk [vmem:[%s206 + $0x68] sm:$0xff] %vm2636, %v2625
      %2651 = vst.msk [vmem:[%s206 + $0x70] sm:$0xff] %vm2636, %v2630
      %2652 = vst.msk [vmem:[%s206 + $0x78] sm:$0xff] %vm2636, %v2633
      %s2653 = smul.u32 16, %s19
      %p2654 = scmp.lt.s32.totalorder %s18, 1
      %s2655 = scalar_select %p2654, %s18, 1
      %p2656 = scmp.lt.s32.totalorder %s2653, 31
      %s2657 = scalar_select %p2656, %s2653, 31
      %s2658 = smul.addr %s2655, 32
      %s2659 = sadd.s32 %s2657, %s2658
      %s2660 = smul.addr %s2659, 8
      %s2661 = scalar_lea.vmem %s3, %s2660
      // Predicated region
      $region33: #{shrinknet_forward.9} parent=31 // pred_check
        %p2662 = pneg %p116
      $region34: #{shrinknet_forward.9} parent=31 // pred_check_branch
        %2664 = sbr.rel (%p2662) target = $region36
      $region35: #{shrinknet_forward.9} parent=31 // pred_region
        %s2665 = smul.u32 16, %s19
      $region36: #{shrinknet_forward.9} parent=31 // pred_fallthru
        _
    $region32: #{shrinknet_forward.9} parent=5 // pred_fallthru
      _
    %p2666 = scmp.le.s32.totalorder 2, %s9
    // Predicated region
    $region37: #{shrinknet_forward.9} parent=5 // pred_check
      %p2667 = pneg %p2666
    $region38: #{shrinknet_forward.9} parent=5 // pred_check_branch
      %2669 = sbr.rel (%p2667) target = $region40
    $region39: #{shrinknet_forward.9} parent=5 // pred_region
      %s2670 = ssub.s32 %s9, 2
      // Predicated region
      $region41: #{shrinknet_forward.9} parent=39 // pred_check
        %p2671 = pneg %p122
      $region42: #{shrinknet_forward.9} parent=39 // pred_check_branch
        %2673 = sbr.rel (%p2671) target = $region44
      $region43: #{shrinknet_forward.9} parent=39 // pred_region
        %s2674 = smul.u32 16, %s21
        %p2675 = scmp.lt.s32.totalorder %s20, 1
        %s2676 = scalar_select %p2675, %s20, 1
        %p2677 = scmp.lt.s32.totalorder %s2674, 31
        %s2678 = scalar_select %p2677, %s2674, 31
        %s2679 = smul.addr %s2676, 32
        %s2680 = sadd.s32 %s2678, %s2679
        %s2681 = smul.addr %s2680, 8
        %s2682 = scalar_lea.vmem %s3, %s2681
      $region44: #{shrinknet_forward.9} parent=39 // pred_fallthru
        _
    $region40: #{shrinknet_forward.9} parent=5 // pred_fallthru
      _
  $region6: #{shrinknet_forward.9} parent=0 // loop_footer
    %s13 = sadd.s32 1, %s9
  $region7: #{shrinknet_forward.9} parent=0 // loop_footer_branch
    %8 = sbr.rel target = $region3
  $region8: #{shrinknet_forward.9} parent=0 // loop_exit
    _

</llo_original>
